<compile_context>
chip_gen: v7x
topology: tpu7x:2x2x1
jax: 0.10.0
libtpu: 0.0.40
codegen_flags: <defaults>
</compile_context>

<pallas_src>
import math
from functools import partial

import jax
import jax.numpy as jnp
from jax import lax
from jax.experimental import pallas as pl
from jax.experimental.pallas import tpu as pltpu


# ------------------------------- helpers -------------------------------------
def _layer_norm(v, w, b, eps=1e-5):
    mu = jnp.mean(v, axis=-1, keepdims=True)
    var = jnp.mean(jnp.square(v - mu), axis=-1, keepdims=True)
    return (v - mu) * lax.rsqrt(var + eps) * w + b


# ----------------------------- Pallas kernel ----------------------------------
def decoder_kernel(x_ref, pe_ref, w_in_ref,
                   wqkv_ref, bqkv_ref, wo_ref, bo_ref, ln1w_ref, ln1b_ref,
                   cross_ref, ln2w_ref, ln2b_ref,
                   w1_ref, b1_ref, w2_ref, b2_ref, ln3w_ref, ln3b_ref,
                   wout_ref, bout_ref, o_ref, *,
                   nhead, seq_len, out_vec, approx_recip):
    # x_ref block: (1, R, I) with R = Bt * S rows (Bt batch elements per grid
    # step, rows ordered (b, s) inside the tile).
    R, I = x_ref.shape[1], x_ref.shape[2]
    S = seq_len
    Bt = R // S
    H = ln1w_ref.shape[-1]
    hd = H // nhead
    scale = 1.0 / math.sqrt(hd)
    cdt = wqkv_ref.dtype          # MXU operand dtype: f32, or bf16 (fast_math)

    x = x_ref[0]                                            # (R, I) f32

    # ---- input_fc (+ PE, input bias folded into pe_ref); dropout = identity ----
    if I == 1:
        h = x * w_in_ref[...]                               # (R,1)*(1,H) on the VPU
    else:
        h = jnp.dot(x.astype(cdt), w_in_ref[...],
                    preferred_element_type=jnp.float32)
    h = h + pe_ref[...]                                     # (R, H) f32

    # ---- fused QKV projection: ONE full-width MXU pass (R,H)@(H,3H) ------------
    qkv = jnp.dot(h.astype(cdt), wqkv_ref[...],
                  preferred_element_type=jnp.float32) + bqkv_ref[...]   # (R, 3H)

    # ---- causal mask generated in-kernel (no (R,R) mask constant / DMA) --------
    rows = lax.broadcasted_iota(jnp.int32, (S, S), 0)
    cols = lax.broadcasted_iota(jnp.int32, (S, S), 1)
    neg_mask = jnp.where(cols <= rows, 0.0, -1e30).astype(jnp.float32)  # (S, S)

    # ---- per-(head, batch-element) SxS self-attention ---------------------------
    # TODO(synk): for long sequences, tile the key/value axis flash-style with a
    # running max/denominator instead of materializing (Bt, S, S) scores.
    ctx_heads = []
    for n in range(nhead):                                  # static, small unroll
        qh = qkv[:, n * hd:(n + 1) * hd].reshape(Bt, S, hd)
        kh = qkv[:, H + n * hd:H + (n + 1) * hd].reshape(Bt, S, hd)
        vh = qkv[:, 2 * H + n * hd:2 * H + (n + 1) * hd].reshape(Bt, S, hd)
        s = jnp.einsum('bqd,bkd->bqk', qh.astype(cdt), kh.astype(cdt),
                       preferred_element_type=jnp.float32) * scale      # (Bt,S,S)
        s = s + neg_mask                                    # broadcast over Bt
        m = jnp.max(s, axis=-1, keepdims=True)
        e = jnp.exp(s - m)
        p = e * pl.reciprocal(jnp.sum(e, axis=-1, keepdims=True),
                              approx=approx_recip)
        ctx_heads.append(jnp.einsum('bqk,bkd->bqd', p.astype(cdt), vh.astype(cdt),
                                    preferred_element_type=jnp.float32))

    # heads re-assembled along lanes -> one out-projection matmul with K = H
    ctx = jnp.concatenate(ctx_heads, axis=-1).reshape(R, H)
    attn = jnp.dot(ctx.astype(cdt), wo_ref[...],
                   preferred_element_type=jnp.float32) + bo_ref[...]
    h = _layer_norm(h + attn, ln1w_ref[...], ln1b_ref[...])

    # ---- cross-attention over an all-zero memory collapses to out_proj(v_bias);
    #      precomputed in the wrapper to a single (1, H) row ----------------------
    h = _layer_norm(h + cross_ref[...], ln2w_ref[...], ln2b_ref[...])

    # ---- feed-forward: linear2(relu(linear1(x))) --------------------------------
    f = jnp.dot(h.astype(cdt), w1_ref[...],
                preferred_element_type=jnp.float32) + b1_ref[...]
    f = jnp.maximum(f, 0.0)
    f = jnp.dot(f.astype(cdt), w2_ref[...],
                preferred_element_type=jnp.float32) + b2_ref[...]
    h = _layer_norm(h + f, ln3w_ref[...], ln3b_ref[...])

    # ---- output_fc ---------------------------------------------------------------
    if out_vec:
        # O == 1: contract H against the single output row and emit a lane-dense
        # (1, R) slab instead of a lane-width-1 (R, 1) masked store.
        y = lax.dot_general(wout_ref[...], h.astype(cdt),
                            dimension_numbers=(((1,), (1,)), ((), ())),
                            preferred_element_type=jnp.float32) + bout_ref[...]
        o_ref[0] = y.astype(o_ref.dtype)                    # (1, R)
    else:
        y = jnp.dot(h.astype(cdt), wout_ref[...],
                    preferred_element_type=jnp.float32) + bout_ref[...]
        o_ref[0] = y.astype(o_ref.dtype)                    # (R, O)


# ------------------------------ parameters ------------------------------------
def positional_encoding_table(S, d_model):
    position = jnp.arange(S, dtype=jnp.float32)[:, None]
    div_term = jnp.exp(jnp.arange(0, d_model, 2, dtype=jnp.float32)
                       * (-math.log(10000.0) / d_model))
    pe = jnp.zeros((S, d_model), jnp.float32)
    pe = pe.at[:, 0::2].set(jnp.sin(position * div_term))
    pe = pe.at[:, 1::2].set(jnp.cos(position * div_term))
    return pe


def init_params(key, hidden_size, nhead, input_dim=1, output_dim=1, dim_ff=2048):
    ks = jax.random.split(key, 8)

    def lin(k, out_f, in_f):
        w = jax.random.normal(k, (out_f, in_f), jnp.float32) * 0.05
        b = jax.random.normal(jax.random.fold_in(k, 1), (out_f,), jnp.float32) * 0.05
        return w, b

    p = {}
    p["in_fc"] = lin(ks[0], hidden_size, input_dim)
    p["sa_in_w"], p["sa_in_b"] = lin(ks[1], 3 * hidden_size, hidden_size)
    p["sa_out"] = lin(ks[2], hidden_size, hidden_size)
    p["ca_in_w"], p["ca_in_b"] = lin(ks[3], 3 * hidden_size, hidden_size)
    p["ca_out"] = lin(ks[4], hidden_size, hidden_size)
    p["lin1"] = lin(ks[5], dim_ff, hidden_size)
    p["lin2"] = lin(ks[6], hidden_size, dim_ff)
    p["out_fc"] = lin(ks[7], output_dim, hidden_size)
    for name in ("ln1", "ln2", "ln3"):           # PyTorch LayerNorm default init
        p[name] = (jnp.ones((hidden_size,), jnp.float32),
                   jnp.zeros((hidden_size,), jnp.float32))
    return p


# --------------------------- VMEM-aware tiling ---------------------------------
def _vmem_capacity_bytes():
    try:
        return int(pltpu.get_tpu_info().vmem_capacity_bytes)
    except Exception:
        return 64 * 1024 * 1024      # assume the smallest (v7x per-core) VMEM


def _vmem_estimate_bytes(Bt, S, H, I, O, dff, wbytes):
    f32 = 4
    R = Bt * S
    # pipelined per-step blocks (double buffered); the (1, R, I) x block is
    # lane-padded to 128 lanes in VMEM, so count the padded size.
    blocks = 2 * (R * max(I, 128) + R * max(O, 1)) * f32
    # resident operands (worst-case double buffered)
    consts = 2 * (R * H * f32
                  + (4 * H * H + 2 * H * dff + H * (I + O)) * wbytes)
    # live activations in the kernel body
    acts = (6 * R * H + R * dff) * f32
    attn = (6 * Bt * S * S + R * H) * f32
    return blocks + consts + acts + attn


def _pick_block_b(B, S, H, I, O, dff, wbytes, vmem_budget,
                  target_rows=512, min_grid_steps=2):
    """Largest divisor of B whose working set fits the VMEM budget, keeping at
    least `min_grid_steps` grid steps so the 'parallel' axis can shard across
    both v7x TensorCores."""
    best = 1
    for d in range(1, B + 1):
        if B % d:
            continue
        if B >= min_grid_steps and (B // d) < min_grid_steps:
            continue
        if _vmem_estimate_bytes(d, S, H, I, O, dff, wbytes) > vmem_budget:
            continue
        best = d
        if d * S >= target_rows:
            break
    return best


# ------------------------------ wrapper -----------------------------------------
def transformer_forward(x, params, *, hidden_size, nhead, input_dim=1, output_dim=1,
                        block_b=None, fast_math=False):
    """Forward pass matching TransformerModel.forward (eval mode).

    fast_math=True casts MXU operands to bf16 (f32 accumulation) and uses the
    approximate EUP reciprocal for the softmax denominator; layernorm/softmax
    math stays in f32 (important for v5e which has no bf16 VPU/EUP)."""
    B = x.shape[0]
    H, I, O = hidden_size, input_dim, output_dim
    assert H % nhead == 0
    dff = params["lin1"][0].shape[0]

    x_seq = x.reshape(-1, B, I)                  # torch: x.view(-1, batch, input_dim)
    S = x_seq.shape[0]
    x_bsi = jnp.transpose(x_seq, (1, 0, 2))      # (B, S, I)

    cdt = jnp.bfloat16 if fast_math else jnp.float32
    wbytes = 2 if fast_math else 4

    cap = _vmem_capacity_bytes()
    budget = int(0.55 * cap)                     # headroom for compiler scratch
    Bt = (_pick_block_b(B, S, H, I, O, dff, wbytes, budget)
          if block_b is None else block_b)
    assert B % Bt == 0
    nb = B // Bt
    R = Bt * S
    x_blk = x_bsi.reshape(nb, R, I).astype(jnp.float32)

    # --- parameters rearranged for the kernel ------------------------------------
    w_in, b_in = params["in_fc"]
    sa_w, sa_b = params["sa_in_w"], params["sa_in_b"]
    wo, bo = params["sa_out"]
    bvc = params["ca_in_b"][2 * H:]              # only the V bias of cross-attn matters
    wco, bco = params["ca_out"]
    w1, b1 = params["lin1"]
    w2, b2 = params["lin2"]
    wout, bout = params["out_fc"]
    ln1w, ln1b = params["ln1"]
    ln2w, ln2b = params["ln2"]
    ln3w, ln3b = params["ln3"]

    # fused [Q | K | V] projection weight, (H, 3H); the per-head column grouping
    # (head = col // hd) is already PyTorch's, so no rearrangement is needed.
    wqkv = sa_w.T
    bqkv = sa_b.reshape(1, 3 * H).astype(jnp.float32)

    # positional encoding with the input_fc bias folded in, tiled to Bt*S rows
    pe_blk = jnp.tile(positional_encoding_table(S, H) + b_in, (Bt, 1))   # (R, H)

    # cross-attention over a zero memory collapses to out_proj(v_bias): a constant
    cross = bvc @ wco.T + bco                                            # (H,)

    row = lambda a: a.reshape(1, -1).astype(jnp.float32)
    mx = lambda a: a.astype(cdt)                  # MXU operand dtype

    out_vec = (O == 1)
    w_in_k = w_in.reshape(1, H).astype(jnp.float32) if I == 1 else mx(w_in.T)
    wout_k = mx(wout.reshape(1, H)) if out_vec else mx(wout.T)
    bout_k = bout.reshape(1, 1).astype(jnp.float32) if out_vec else row(bout)

    args = (x_blk, pe_blk, w_in_k,
            mx(wqkv), bqkv, mx(wo.T), row(bo), row(ln1w), row(ln1b),
            row(cross), row(ln2w), row(ln2b),
            mx(w1.T), row(b1), mx(w2.T), row(b2), row(ln3w), row(ln3b),
            wout_k, bout_k)

    if out_vec:
        out_shape = jax.ShapeDtypeStruct((nb, 1, R), jnp.float32)
        out_spec = pl.BlockSpec((1, 1, R), lambda i: (i, 0, 0))
    else:
        out_shape = jax.ShapeDtypeStruct((nb, R, O), jnp.float32)
        out_spec = pl.BlockSpec((1, R, O), lambda i: (i, 0, 0))

    est = _vmem_estimate_bytes(Bt, S, H, I, O, dff, wbytes)
    vmem_limit = int(min(0.9 * cap, max(32 * 1024 * 1024, 1.5 * est)))

    kernel_fn = partial(decoder_kernel, nhead=nhead, seq_len=S,
                        out_vec=out_vec, approx_recip=fast_math)

    def build_and_call(single_buffer_consts):
        def const_spec(shape):
            zeros = (0,) * len(shape)
            if single_buffer_consts:
                return pl.BlockSpec(shape, lambda i: zeros,
                                    pipeline_mode=pl.Buffered(1))
            return pl.BlockSpec(shape, lambda i: zeros)

        in_specs = ([pl.BlockSpec((1, R, I), lambda i: (i, 0, 0))]
                    + [const_spec(a.shape) for a in args[1:]])
        return pl.pallas_call(
            kernel_fn,
            out_shape=out_shape,
            grid=(nb,),
            in_specs=in_specs,
            out_specs=out_spec,
            compiler_params=pltpu.CompilerParams(
                dimension_semantics=("parallel",),
                vmem_limit_bytes=vmem_limit),
        )(*args)

    try:
        # grid-invariant operands single-buffered (halves their VMEM footprint)
        out = build_and_call(True)
    except Exception:
        # TODO(synk): pl.Buffered(1) single-buffering unsupported on this jax
        # build; fall back to default double-buffered constant operands.
        out = build_and_call(False)

    # back to torch layout: (S, B, O), then x.view(batch_size, -1)
    o_bso = out.reshape(B, S, O)
    o_sbo = jnp.transpose(o_bso, (1, 0, 2))
    y = o_sbo.reshape(B, -1)
    return y, None


# ------------------------- pure-JAX reference -----------------------------------
def reference_forward(x, params, *, hidden_size, nhead, input_dim=1, output_dim=1):
    B = x.shape[0]
    H = hidden_size
    x_seq = x.reshape(-1, B, input_dim)
    S = x_seq.shape[0]
    w_in, b_in = params["in_fc"]
    h = x_seq @ w_in.T + b_in
    h = h + positional_encoding_table(S, H)[:, None, :]

    sa_w, sa_b = params["sa_in_w"], params["sa_in_b"]
    wq, wk, wv = sa_w[:H], sa_w[H:2 * H], sa_w[2 * H:]
    bq, bk, bv = sa_b[:H], sa_b[H:2 * H], sa_b[2 * H:]
    wo, bo = params["sa_out"]
    hd = H // nhead
    q, k, v = h @ wq.T + bq, h @ wk.T + bk, h @ wv.T + bv

    def split(t):
        return jnp.transpose(t.reshape(S, B, nhead, hd), (1, 2, 0, 3))
    qh, kh, vh = split(q), split(k), split(v)
    scores = jnp.einsum('bnqd,bnkd->bnqk', qh, kh) / math.sqrt(hd)
    mask = jnp.where(jnp.arange(S)[None, :] > jnp.arange(S)[:, None], -jnp.inf, 0.0)
    p = jax.nn.softmax(scores + mask, axis=-1)
    a = jnp.einsum('bnqk,bnkd->bnqd', p, vh)
    a = jnp.transpose(a, (2, 0, 1, 3)).reshape(S, B, H)
    a = a @ wo.T + bo

    def ln(v_, w_, b_):
        mu = v_.mean(-1, keepdims=True)
        var = ((v_ - mu) ** 2).mean(-1, keepdims=True)
        return (v_ - mu) / jnp.sqrt(var + 1e-5) * w_ + b_

    h = ln(h + a, *params["ln1"])
    bvc = params["ca_in_b"][2 * H:]
    wco, bco = params["ca_out"]
    h = ln(h + (bvc @ wco.T + bco), *params["ln2"])
    w1, b1 = params["lin1"]
    w2, b2 = params["lin2"]
    f = jnp.maximum(h @ w1.T + b1, 0.0) @ w2.T + b2
    h = ln(h + f, *params["ln3"])
    wout, bout = params["out_fc"]
    o = h @ wout.T + bout
    return o.reshape(B, -1), None


if __name__ == "__main__":
    key = jax.random.PRNGKey(0)
    kx, kp = jax.random.split(key)
    H, NHEAD = 32, 4
    params = init_params(kp, H, NHEAD)

    # config 1: B=2, L=16 -> auto picker keeps nb=2 grid steps (two v7x TCs)
    B, L = 2, 16
    x = jax.random.normal(kx, (B, L), jnp.float32)
    y, aux = transformer_forward(x, params, hidden_size=H, nhead=NHEAD)
    y = jax.block_until_ready(y)
    assert y.shape == (B, L) and aux is None
    y_ref, _ = reference_forward(x, params, hidden_size=H, nhead=NHEAD)
    err = float(jnp.max(jnp.abs(y - y_ref)))
    assert jnp.allclose(y, y_ref, rtol=1e-4, atol=1e-4), err

    # config 2: multiple batch elements per grid step (Bt=2, nb=2)
    B2 = 4
    x2 = jax.random.normal(jax.random.fold_in(kx, 1), (B2, L), jnp.float32)
    y2, _ = transformer_forward(x2, params, hidden_size=H, nhead=NHEAD, block_b=2)
    y2 = jax.block_until_ready(y2)
    y2_ref, _ = reference_forward(x2, params, hidden_size=H, nhead=NHEAD)
    err2 = float(jnp.max(jnp.abs(y2 - y2_ref)))
    assert jnp.allclose(y2, y2_ref, rtol=1e-4, atol=1e-4), err2

    # fast-math path: bf16 MXU operands (f32 accumulation) + approx reciprocal
    y3, _ = transformer_forward(x, params, hidden_size=H, nhead=NHEAD, fast_math=True)
    y3 = jax.block_until_ready(y3)
    err3 = float(jnp.max(jnp.abs(y3 - y_ref)))
    assert jnp.allclose(y3, y_ref, rtol=5e-2, atol=5e-2), err3

    print("KERNEL_OK")
</pallas_src>

<mosaic_0001>
module attributes {stable_mosaic.version = 11 : i64} {
  func.func @decoder_kernel(%arg0: i32, %arg1: memref<1x16x1xf32, #tpu.memory_space<vmem>>, %arg2: memref<16x32xf32, #tpu.memory_space<vmem>>, %arg3: memref<1x32xf32, #tpu.memory_space<vmem>>, %arg4: memref<32x96xf32, #tpu.memory_space<vmem>>, %arg5: memref<1x96xf32, #tpu.memory_space<vmem>>, %arg6: memref<32x32xf32, #tpu.memory_space<vmem>>, %arg7: memref<1x32xf32, #tpu.memory_space<vmem>>, %arg8: memref<1x32xf32, #tpu.memory_space<vmem>>, %arg9: memref<1x32xf32, #tpu.memory_space<vmem>>, %arg10: memref<1x32xf32, #tpu.memory_space<vmem>>, %arg11: memref<1x32xf32, #tpu.memory_space<vmem>>, %arg12: memref<1x32xf32, #tpu.memory_space<vmem>>, %arg13: memref<32x2048xf32, #tpu.memory_space<vmem>>, %arg14: memref<1x2048xf32, #tpu.memory_space<vmem>>, %arg15: memref<2048x32xf32, #tpu.memory_space<vmem>>, %arg16: memref<1x32xf32, #tpu.memory_space<vmem>>, %arg17: memref<1x32xf32, #tpu.memory_space<vmem>>, %arg18: memref<1x32xf32, #tpu.memory_space<vmem>>, %arg19: memref<1x32xf32, #tpu.memory_space<vmem>>, %arg20: memref<1x1xf32, #tpu.memory_space<vmem>>, %arg21: memref<1x1x16xf32, #tpu.memory_space<vmem>>) attributes {dimension_semantics = [#tpu.dimension_semantics<parallel>], iteration_bounds = array<i64: 2>, scalar_prefetch = 0 : i64, scratch_operands = 0 : i64, tpu.core_type = #tpu.core_type<tc>, window_params = [{transform_indices = @transform_0, window_bounds = array<i64: 1, 16, 1>}, {pipeline_mode = #tpu.pipeline_mode<synchronous>, transform_indices = @transform_1, window_bounds = array<i64: 16, 32>}, {pipeline_mode = #tpu.pipeline_mode<synchronous>, transform_indices = @transform_2, window_bounds = array<i64: 1, 32>}, {pipeline_mode = #tpu.pipeline_mode<synchronous>, transform_indices = @transform_3, window_bounds = array<i64: 32, 96>}, {pipeline_mode = #tpu.pipeline_mode<synchronous>, transform_indices = @transform_4, window_bounds = array<i64: 1, 96>}, {pipeline_mode = #tpu.pipeline_mode<synchronous>, transform_indices = @transform_5, window_bounds = array<i64: 32, 32>}, {pipeline_mode = #tpu.pipeline_mode<synchronous>, transform_indices = @transform_6, window_bounds = array<i64: 1, 32>}, {pipeline_mode = #tpu.pipeline_mode<synchronous>, transform_indices = @transform_7, window_bounds = array<i64: 1, 32>}, {pipeline_mode = #tpu.pipeline_mode<synchronous>, transform_indices = @transform_8, window_bounds = array<i64: 1, 32>}, {pipeline_mode = #tpu.pipeline_mode<synchronous>, transform_indices = @transform_9, window_bounds = array<i64: 1, 32>}, {pipeline_mode = #tpu.pipeline_mode<synchronous>, transform_indices = @transform_10, window_bounds = array<i64: 1, 32>}, {pipeline_mode = #tpu.pipeline_mode<synchronous>, transform_indices = @transform_11, window_bounds = array<i64: 1, 32>}, {pipeline_mode = #tpu.pipeline_mode<synchronous>, transform_indices = @transform_12, window_bounds = array<i64: 32, 2048>}, {pipeline_mode = #tpu.pipeline_mode<synchronous>, transform_indices = @transform_13, window_bounds = array<i64: 1, 2048>}, {pipeline_mode = #tpu.pipeline_mode<synchronous>, transform_indices = @transform_14, window_bounds = array<i64: 2048, 32>}, {pipeline_mode = #tpu.pipeline_mode<synchronous>, transform_indices = @transform_15, window_bounds = array<i64: 1, 32>}, {pipeline_mode = #tpu.pipeline_mode<synchronous>, transform_indices = @transform_16, window_bounds = array<i64: 1, 32>}, {pipeline_mode = #tpu.pipeline_mode<synchronous>, transform_indices = @transform_17, window_bounds = array<i64: 1, 32>}, {pipeline_mode = #tpu.pipeline_mode<synchronous>, transform_indices = @transform_18, window_bounds = array<i64: 1, 32>}, {pipeline_mode = #tpu.pipeline_mode<synchronous>, transform_indices = @transform_19, window_bounds = array<i64: 1, 1>}, {transform_indices = @transform_20, window_bounds = array<i64: 1, 1, 16>}]} {
    %c0 = arith.constant 0 : index
    %c0_0 = arith.constant 0 : index
    %c0_1 = arith.constant 0 : index
    %0 = vector.load %arg1[%c0, %c0_0, %c0_1] : memref<1x16x1xf32, #tpu.memory_space<vmem>>, vector<1x16x1xf32>
    %1 = vector.shape_cast %0 : vector<1x16x1xf32> to vector<16x1xf32>
    %c0_2 = arith.constant 0 : index
    %c0_3 = arith.constant 0 : index
    %2 = vector.load %arg3[%c0_2, %c0_3] : memref<1x32xf32, #tpu.memory_space<vmem>>, vector<1x32xf32>
    %3 = vector.broadcast %1 : vector<16x1xf32> to vector<16x32xf32>
    %4 = vector.broadcast %2 : vector<1x32xf32> to vector<16x32xf32>
    %5 = arith.mulf %3, %4 : vector<16x32xf32>
    %c0_4 = arith.constant 0 : index
    %c0_5 = arith.constant 0 : index
    %6 = vector.load %arg2[%c0_4, %c0_5] : memref<16x32xf32, #tpu.memory_space<vmem>>, vector<16x32xf32>
    %7 = arith.addf %5, %6 : vector<16x32xf32>
    %c0_6 = arith.constant 0 : index
    %c0_7 = arith.constant 0 : index
    %8 = vector.load %arg4[%c0_6, %c0_7] : memref<32x96xf32, #tpu.memory_space<vmem>>, vector<32x96xf32>
    %cst = arith.constant dense<0.000000e+00> : vector<16x96xf32>
    %9 = tpu.matmul %7, %8, %cst {dimension_numbers = #tpu.dot_dimension_numbers<[1], [0], [0], [1], [0, 0, 1, 1], [], []>} : vector<16x32xf32>, vector<32x96xf32>, vector<16x96xf32> -> vector<16x96xf32>
    %c0_8 = arith.constant 0 : index
    %c0_9 = arith.constant 0 : index
    %10 = vector.load %arg5[%c0_8, %c0_9] : memref<1x96xf32, #tpu.memory_space<vmem>>, vector<1x96xf32>
    %11 = vector.broadcast %10 : vector<1x96xf32> to vector<16x96xf32>
    %12 = arith.addf %9, %11 : vector<16x96xf32>
    %13 = tpu.iota {dimensions = array<i32: 0>} : vector<16x16xi32>
    %14 = tpu.iota {dimensions = array<i32: 1>} : vector<16x16xi32>
    %15 = arith.cmpi sle, %14, %13 : vector<16x16xi32>
    %cst_10 = arith.constant 0.000000e+00 : f32
    %cst_11 = arith.constant -1.000000e+30 : f32
    %16 = vector.broadcast %cst_10 : f32 to vector<16x16xf32>
    %17 = vector.broadcast %cst_11 : f32 to vector<16x16xf32>
    %18 = arith.select %15, %16, %17 : vector<16x16xi1>, vector<16x16xf32>
    %19 = vector.extract_strided_slice %12 {offsets = [0, 0], sizes = [16, 8], strides = [1, 1]} : vector<16x96xf32> to vector<16x8xf32>
    %20 = vector.shape_cast %19 : vector<16x8xf32> to vector<1x16x8xf32>
    %21 = vector.extract_strided_slice %12 {offsets = [0, 32], sizes = [16, 8], strides = [1, 1]} : vector<16x96xf32> to vector<16x8xf32>
    %22 = vector.shape_cast %21 : vector<16x8xf32> to vector<1x16x8xf32>
    %23 = vector.extract_strided_slice %12 {offsets = [0, 64], sizes = [16, 8], strides = [1, 1]} : vector<16x96xf32> to vector<16x8xf32>
    %24 = vector.shape_cast %23 : vector<16x8xf32> to vector<1x16x8xf32>
    "tpu.trace_start"() <{level = 10 : i32, message = "bqd,bkd->bqk"}> : () -> ()
    %cst_12 = arith.constant dense<0.000000e+00> : vector<1x16x16xf32>
    %25 = tpu.matmul %20, %22, %cst_12 {dimension_numbers = #tpu.dot_dimension_numbers<[2], [2], [1], [1], [0, 0, 0, 1, 1, 1], [0], [0]>} : vector<1x16x8xf32>, vector<1x16x8xf32>, vector<1x16x16xf32> -> vector<1x16x16xf32>
    "tpu.trace_stop"() : () -> ()
    %cst_13 = arith.constant 0.353553385 : f32
    %26 = vector.broadcast %cst_13 : f32 to vector<1x16x16xf32>
    %27 = arith.mulf %25, %26 : vector<1x16x16xf32>
    %28 = vector.shape_cast %18 : vector<16x16xf32> to vector<1x16x16xf32>
    %29 = arith.addf %27, %28 : vector<1x16x16xf32>
    %cst_14 = arith.constant dense<0xFF800000> : vector<1x16xf32>
    %30 = vector.multi_reduction <maximumf>, %29, %cst_14 [2] : vector<1x16x16xf32> to vector<1x16xf32>
    %31 = vector.shape_cast %30 : vector<1x16xf32> to vector<1x16x1xf32>
    %32 = vector.broadcast %31 : vector<1x16x1xf32> to vector<1x16x16xf32>
    %33 = arith.subf %29, %32 : vector<1x16x16xf32>
    %34 = math.exp %33 : vector<1x16x16xf32>
    %cst_15 = arith.constant dense<0.000000e+00> : vector<1x16xf32>
    %35 = vector.multi_reduction <add>, %34, %cst_15 [2] : vector<1x16x16xf32> to vector<1x16xf32>
    %36 = vector.shape_cast %35 : vector<1x16xf32> to vector<1x16x1xf32>
    %37 = tpu.reciprocal %36 : vector<1x16x1xf32> -> vector<1x16x1xf32>
    %38 = vector.broadcast %37 : vector<1x16x1xf32> to vector<1x16x16xf32>
    %39 = arith.mulf %34, %38 : vector<1x16x16xf32>
    "tpu.trace_start"() <{level = 10 : i32, message = "bqk,bkd->bqd"}> : () -> ()
    %cst_16 = arith.constant dense<0.000000e+00> : vector<1x16x8xf32>
    %40 = tpu.matmul %39, %24, %cst_16 {dimension_numbers = #tpu.dot_dimension_numbers<[2], [1], [1], [2], [0, 0, 0, 1, 1, 2], [0], [0]>} : vector<1x16x16xf32>, vector<1x16x8xf32>, vector<1x16x8xf32> -> vector<1x16x8xf32>
    "tpu.trace_stop"() : () -> ()
    %41 = vector.extract_strided_slice %12 {offsets = [0, 8], sizes = [16, 8], strides = [1, 1]} : vector<16x96xf32> to vector<16x8xf32>
    %42 = vector.shape_cast %41 : vector<16x8xf32> to vector<1x16x8xf32>
    %43 = vector.extract_strided_slice %12 {offsets = [0, 40], sizes = [16, 8], strides = [1, 1]} : vector<16x96xf32> to vector<16x8xf32>
    %44 = vector.shape_cast %43 : vector<16x8xf32> to vector<1x16x8xf32>
    %45 = vector.extract_strided_slice %12 {offsets = [0, 72], sizes = [16, 8], strides = [1, 1]} : vector<16x96xf32> to vector<16x8xf32>
    %46 = vector.shape_cast %45 : vector<16x8xf32> to vector<1x16x8xf32>
    "tpu.trace_start"() <{level = 10 : i32, message = "bqd,bkd->bqk"}> : () -> ()
    %cst_17 = arith.constant dense<0.000000e+00> : vector<1x16x16xf32>
    %47 = tpu.matmul %42, %44, %cst_17 {dimension_numbers = #tpu.dot_dimension_numbers<[2], [2], [1], [1], [0, 0, 0, 1, 1, 1], [0], [0]>} : vector<1x16x8xf32>, vector<1x16x8xf32>, vector<1x16x16xf32> -> vector<1x16x16xf32>
    "tpu.trace_stop"() : () -> ()
    %cst_18 = arith.constant 0.353553385 : f32
    %48 = vector.broadcast %cst_18 : f32 to vector<1x16x16xf32>
    %49 = arith.mulf %47, %48 : vector<1x16x16xf32>
    %50 = vector.shape_cast %18 : vector<16x16xf32> to vector<1x16x16xf32>
    %51 = arith.addf %49, %50 : vector<1x16x16xf32>
    %cst_19 = arith.constant dense<0xFF800000> : vector<1x16xf32>
    %52 = vector.multi_reduction <maximumf>, %51, %cst_19 [2] : vector<1x16x16xf32> to vector<1x16xf32>
    %53 = vector.shape_cast %52 : vector<1x16xf32> to vector<1x16x1xf32>
    %54 = vector.broadcast %53 : vector<1x16x1xf32> to vector<1x16x16xf32>
    %55 = arith.subf %51, %54 : vector<1x16x16xf32>
    %56 = math.exp %55 : vector<1x16x16xf32>
    %cst_20 = arith.constant dense<0.000000e+00> : vector<1x16xf32>
    %57 = vector.multi_reduction <add>, %56, %cst_20 [2] : vector<1x16x16xf32> to vector<1x16xf32>
    %58 = vector.shape_cast %57 : vector<1x16xf32> to vector<1x16x1xf32>
    %59 = tpu.reciprocal %58 : vector<1x16x1xf32> -> vector<1x16x1xf32>
    %60 = vector.broadcast %59 : vector<1x16x1xf32> to vector<1x16x16xf32>
    %61 = arith.mulf %56, %60 : vector<1x16x16xf32>
    "tpu.trace_start"() <{level = 10 : i32, message = "bqk,bkd->bqd"}> : () -> ()
    %cst_21 = arith.constant dense<0.000000e+00> : vector<1x16x8xf32>
    %62 = tpu.matmul %61, %46, %cst_21 {dimension_numbers = #tpu.dot_dimension_numbers<[2], [1], [1], [2], [0, 0, 0, 1, 1, 2], [0], [0]>} : vector<1x16x16xf32>, vector<1x16x8xf32>, vector<1x16x8xf32> -> vector<1x16x8xf32>
    "tpu.trace_stop"() : () -> ()
    %63 = vector.extract_strided_slice %12 {offsets = [0, 16], sizes = [16, 8], strides = [1, 1]} : vector<16x96xf32> to vector<16x8xf32>
    %64 = vector.shape_cast %63 : vector<16x8xf32> to vector<1x16x8xf32>
    %65 = vector.extract_strided_slice %12 {offsets = [0, 48], sizes = [16, 8], strides = [1, 1]} : vector<16x96xf32> to vector<16x8xf32>
    %66 = vector.shape_cast %65 : vector<16x8xf32> to vector<1x16x8xf32>
    %67 = vector.extract_strided_slice %12 {offsets = [0, 80], sizes = [16, 8], strides = [1, 1]} : vector<16x96xf32> to vector<16x8xf32>
    %68 = vector.shape_cast %67 : vector<16x8xf32> to vector<1x16x8xf32>
    "tpu.trace_start"() <{level = 10 : i32, message = "bqd,bkd->bqk"}> : () -> ()
    %cst_22 = arith.constant dense<0.000000e+00> : vector<1x16x16xf32>
    %69 = tpu.matmul %64, %66, %cst_22 {dimension_numbers = #tpu.dot_dimension_numbers<[2], [2], [1], [1], [0, 0, 0, 1, 1, 1], [0], [0]>} : vector<1x16x8xf32>, vector<1x16x8xf32>, vector<1x16x16xf32> -> vector<1x16x16xf32>
    "tpu.trace_stop"() : () -> ()
    %cst_23 = arith.constant 0.353553385 : f32
    %70 = vector.broadcast %cst_23 : f32 to vector<1x16x16xf32>
    %71 = arith.mulf %69, %70 : vector<1x16x16xf32>
    %72 = vector.shape_cast %18 : vector<16x16xf32> to vector<1x16x16xf32>
    %73 = arith.addf %71, %72 : vector<1x16x16xf32>
    %cst_24 = arith.constant dense<0xFF800000> : vector<1x16xf32>
    %74 = vector.multi_reduction <maximumf>, %73, %cst_24 [2] : vector<1x16x16xf32> to vector<1x16xf32>
    %75 = vector.shape_cast %74 : vector<1x16xf32> to vector<1x16x1xf32>
    %76 = vector.broadcast %75 : vector<1x16x1xf32> to vector<1x16x16xf32>
    %77 = arith.subf %73, %76 : vector<1x16x16xf32>
    %78 = math.exp %77 : vector<1x16x16xf32>
    %cst_25 = arith.constant dense<0.000000e+00> : vector<1x16xf32>
    %79 = vector.multi_reduction <add>, %78, %cst_25 [2] : vector<1x16x16xf32> to vector<1x16xf32>
    %80 = vector.shape_cast %79 : vector<1x16xf32> to vector<1x16x1xf32>
    %81 = tpu.reciprocal %80 : vector<1x16x1xf32> -> vector<1x16x1xf32>
    %82 = vector.broadcast %81 : vector<1x16x1xf32> to vector<1x16x16xf32>
    %83 = arith.mulf %78, %82 : vector<1x16x16xf32>
    "tpu.trace_start"() <{level = 10 : i32, message = "bqk,bkd->bqd"}> : () -> ()
    %cst_26 = arith.constant dense<0.000000e+00> : vector<1x16x8xf32>
    %84 = tpu.matmul %83, %68, %cst_26 {dimension_numbers = #tpu.dot_dimension_numbers<[2], [1], [1], [2], [0, 0, 0, 1, 1, 2], [0], [0]>} : vector<1x16x16xf32>, vector<1x16x8xf32>, vector<1x16x8xf32> -> vector<1x16x8xf32>
    "tpu.trace_stop"() : () -> ()
    %85 = vector.extract_strided_slice %12 {offsets = [0, 24], sizes = [16, 8], strides = [1, 1]} : vector<16x96xf32> to vector<16x8xf32>
    %86 = vector.shape_cast %85 : vector<16x8xf32> to vector<1x16x8xf32>
    %87 = vector.extract_strided_slice %12 {offsets = [0, 56], sizes = [16, 8], strides = [1, 1]} : vector<16x96xf32> to vector<16x8xf32>
    %88 = vector.shape_cast %87 : vector<16x8xf32> to vector<1x16x8xf32>
    %89 = vector.extract_strided_slice %12 {offsets = [0, 88], sizes = [16, 8], strides = [1, 1]} : vector<16x96xf32> to vector<16x8xf32>
    %90 = vector.shape_cast %89 : vector<16x8xf32> to vector<1x16x8xf32>
    "tpu.trace_start"() <{level = 10 : i32, message = "bqd,bkd->bqk"}> : () -> ()
    %cst_27 = arith.constant dense<0.000000e+00> : vector<1x16x16xf32>
    %91 = tpu.matmul %86, %88, %cst_27 {dimension_numbers = #tpu.dot_dimension_numbers<[2], [2], [1], [1], [0, 0, 0, 1, 1, 1], [0], [0]>} : vector<1x16x8xf32>, vector<1x16x8xf32>, vector<1x16x16xf32> -> vector<1x16x16xf32>
    "tpu.trace_stop"() : () -> ()
    %cst_28 = arith.constant 0.353553385 : f32
    %92 = vector.broadcast %cst_28 : f32 to vector<1x16x16xf32>
    %93 = arith.mulf %91, %92 : vector<1x16x16xf32>
    %94 = vector.shape_cast %18 : vector<16x16xf32> to vector<1x16x16xf32>
    %95 = arith.addf %93, %94 : vector<1x16x16xf32>
    %cst_29 = arith.constant dense<0xFF800000> : vector<1x16xf32>
    %96 = vector.multi_reduction <maximumf>, %95, %cst_29 [2] : vector<1x16x16xf32> to vector<1x16xf32>
    %97 = vector.shape_cast %96 : vector<1x16xf32> to vector<1x16x1xf32>
    %98 = vector.broadcast %97 : vector<1x16x1xf32> to vector<1x16x16xf32>
    %99 = arith.subf %95, %98 : vector<1x16x16xf32>
    %100 = math.exp %99 : vector<1x16x16xf32>
    %cst_30 = arith.constant dense<0.000000e+00> : vector<1x16xf32>
    %101 = vector.multi_reduction <add>, %100, %cst_30 [2] : vector<1x16x16xf32> to vector<1x16xf32>
    %102 = vector.shape_cast %101 : vector<1x16xf32> to vector<1x16x1xf32>
    %103 = tpu.reciprocal %102 : vector<1x16x1xf32> -> vector<1x16x1xf32>
    %104 = vector.broadcast %103 : vector<1x16x1xf32> to vector<1x16x16xf32>
    %105 = arith.mulf %100, %104 : vector<1x16x16xf32>
    "tpu.trace_start"() <{level = 10 : i32, message = "bqk,bkd->bqd"}> : () -> ()
    %cst_31 = arith.constant dense<0.000000e+00> : vector<1x16x8xf32>
    %106 = tpu.matmul %105, %90, %cst_31 {dimension_numbers = #tpu.dot_dimension_numbers<[2], [1], [1], [2], [0, 0, 0, 1, 1, 2], [0], [0]>} : vector<1x16x16xf32>, vector<1x16x8xf32>, vector<1x16x8xf32> -> vector<1x16x8xf32>
    "tpu.trace_stop"() : () -> ()
    %107 = tpu.concatenate %40, %62, %84, %106 in 2 : vector<1x16x8xf32>, vector<1x16x8xf32>, vector<1x16x8xf32>, vector<1x16x8xf32> -> vector<1x16x32xf32>
    %108 = vector.shape_cast %107 : vector<1x16x32xf32> to vector<16x32xf32>
    %c0_32 = arith.constant 0 : index
    %c0_33 = arith.constant 0 : index
    %109 = vector.load %arg6[%c0_32, %c0_33] : memref<32x32xf32, #tpu.memory_space<vmem>>, vector<32x32xf32>
    %cst_34 = arith.constant dense<0.000000e+00> : vector<16x32xf32>
    %110 = tpu.matmul %108, %109, %cst_34 {dimension_numbers = #tpu.dot_dimension_numbers<[1], [0], [0], [1], [0, 0, 1, 1], [], []>} : vector<16x32xf32>, vector<32x32xf32>, vector<16x32xf32> -> vector<16x32xf32>
    %c0_35 = arith.constant 0 : index
    %c0_36 = arith.constant 0 : index
    %111 = vector.load %arg7[%c0_35, %c0_36] : memref<1x32xf32, #tpu.memory_space<vmem>>, vector<1x32xf32>
    %112 = vector.broadcast %111 : vector<1x32xf32> to vector<16x32xf32>
    %113 = arith.addf %110, %112 : vector<16x32xf32>
    %114 = arith.addf %7, %113 : vector<16x32xf32>
    %c0_37 = arith.constant 0 : index
    %c0_38 = arith.constant 0 : index
    %115 = vector.load %arg8[%c0_37, %c0_38] : memref<1x32xf32, #tpu.memory_space<vmem>>, vector<1x32xf32>
    %c0_39 = arith.constant 0 : index
    %c0_40 = arith.constant 0 : index
    %116 = vector.load %arg9[%c0_39, %c0_40] : memref<1x32xf32, #tpu.memory_space<vmem>>, vector<1x32xf32>
    %cst_41 = arith.constant dense<0.000000e+00> : vector<16xf32>
    %117 = vector.multi_reduction <add>, %114, %cst_41 [1] : vector<16x32xf32> to vector<16xf32>
    %118 = vector.shape_cast %117 : vector<16xf32> to vector<16x1xf32>
    %cst_42 = arith.constant 3.200000e+01 : f32
    %119 = vector.broadcast %cst_42 : f32 to vector<16x1xf32>
    %120 = arith.divf %118, %119 : vector<16x1xf32>
    %121 = vector.broadcast %120 : vector<16x1xf32> to vector<16x32xf32>
    %122 = arith.subf %114, %121 : vector<16x32xf32>
    %123 = arith.mulf %122, %122 : vector<16x32xf32>
    %cst_43 = arith.constant dense<0.000000e+00> : vector<16xf32>
    %124 = vector.multi_reduction <add>, %123, %cst_43 [1] : vector<16x32xf32> to vector<16xf32>
    %125 = vector.shape_cast %124 : vector<16xf32> to vector<16x1xf32>
    %cst_44 = arith.constant 3.200000e+01 : f32
    %126 = vector.broadcast %cst_44 : f32 to vector<16x1xf32>
    %127 = arith.divf %125, %126 : vector<16x1xf32>
    %128 = vector.broadcast %120 : vector<16x1xf32> to vector<16x32xf32>
    %129 = arith.subf %114, %128 : vector<16x32xf32>
    %cst_45 = arith.constant 9.99999974E-6 : f32
    %130 = vector.broadcast %cst_45 : f32 to vector<16x1xf32>
    %131 = arith.addf %127, %130 : vector<16x1xf32>
    %132 = math.rsqrt %131 : vector<16x1xf32>
    %133 = vector.broadcast %132 : vector<16x1xf32> to vector<16x32xf32>
    %134 = arith.mulf %129, %133 : vector<16x32xf32>
    %135 = vector.broadcast %115 : vector<1x32xf32> to vector<16x32xf32>
    %136 = arith.mulf %134, %135 : vector<16x32xf32>
    %137 = vector.broadcast %116 : vector<1x32xf32> to vector<16x32xf32>
    %138 = arith.addf %136, %137 : vector<16x32xf32>
    %c0_46 = arith.constant 0 : index
    %c0_47 = arith.constant 0 : index
    %139 = vector.load %arg10[%c0_46, %c0_47] : memref<1x32xf32, #tpu.memory_space<vmem>>, vector<1x32xf32>
    %140 = vector.broadcast %139 : vector<1x32xf32> to vector<16x32xf32>
    %141 = arith.addf %138, %140 : vector<16x32xf32>
    %c0_48 = arith.constant 0 : index
    %c0_49 = arith.constant 0 : index
    %142 = vector.load %arg11[%c0_48, %c0_49] : memref<1x32xf32, #tpu.memory_space<vmem>>, vector<1x32xf32>
    %c0_50 = arith.constant 0 : index
    %c0_51 = arith.constant 0 : index
    %143 = vector.load %arg12[%c0_50, %c0_51] : memref<1x32xf32, #tpu.memory_space<vmem>>, vector<1x32xf32>
    %cst_52 = arith.constant dense<0.000000e+00> : vector<16xf32>
    %144 = vector.multi_reduction <add>, %141, %cst_52 [1] : vector<16x32xf32> to vector<16xf32>
    %145 = vector.shape_cast %144 : vector<16xf32> to vector<16x1xf32>
    %cst_53 = arith.constant 3.200000e+01 : f32
    %146 = vector.broadcast %cst_53 : f32 to vector<16x1xf32>
    %147 = arith.divf %145, %146 : vector<16x1xf32>
    %148 = vector.broadcast %147 : vector<16x1xf32> to vector<16x32xf32>
    %149 = arith.subf %141, %148 : vector<16x32xf32>
    %150 = arith.mulf %149, %149 : vector<16x32xf32>
    %cst_54 = arith.constant dense<0.000000e+00> : vector<16xf32>
    %151 = vector.multi_reduction <add>, %150, %cst_54 [1] : vector<16x32xf32> to vector<16xf32>
    %152 = vector.shape_cast %151 : vector<16xf32> to vector<16x1xf32>
    %cst_55 = arith.constant 3.200000e+01 : f32
    %153 = vector.broadcast %cst_55 : f32 to vector<16x1xf32>
    %154 = arith.divf %152, %153 : vector<16x1xf32>
    %155 = vector.broadcast %147 : vector<16x1xf32> to vector<16x32xf32>
    %156 = arith.subf %141, %155 : vector<16x32xf32>
    %cst_56 = arith.constant 9.99999974E-6 : f32
    %157 = vector.broadcast %cst_56 : f32 to vector<16x1xf32>
    %158 = arith.addf %154, %157 : vector<16x1xf32>
    %159 = math.rsqrt %158 : vector<16x1xf32>
    %160 = vector.broadcast %159 : vector<16x1xf32> to vector<16x32xf32>
    %161 = arith.mulf %156, %160 : vector<16x32xf32>
    %162 = vector.broadcast %142 : vector<1x32xf32> to vector<16x32xf32>
    %163 = arith.mulf %161, %162 : vector<16x32xf32>
    %164 = vector.broadcast %143 : vector<1x32xf32> to vector<16x32xf32>
    %165 = arith.addf %163, %164 : vector<16x32xf32>
    %c0_57 = arith.constant 0 : index
    %c0_58 = arith.constant 0 : index
    %166 = vector.load %arg13[%c0_57, %c0_58] : memref<32x2048xf32, #tpu.memory_space<vmem>>, vector<32x2048xf32>
    %cst_59 = arith.constant dense<0.000000e+00> : vector<16x2048xf32>
    %167 = tpu.matmul %165, %166, %cst_59 {dimension_numbers = #tpu.dot_dimension_numbers<[1], [0], [0], [1], [0, 0, 1, 1], [], []>} : vector<16x32xf32>, vector<32x2048xf32>, vector<16x2048xf32> -> vector<16x2048xf32>
    %c0_60 = arith.constant 0 : index
    %c0_61 = arith.constant 0 : index
    %168 = vector.load %arg14[%c0_60, %c0_61] : memref<1x2048xf32, #tpu.memory_space<vmem>>, vector<1x2048xf32>
    %169 = vector.broadcast %168 : vector<1x2048xf32> to vector<16x2048xf32>
    %170 = arith.addf %167, %169 : vector<16x2048xf32>
    %cst_62 = arith.constant 0.000000e+00 : f32
    %171 = vector.broadcast %cst_62 : f32 to vector<16x2048xf32>
    %172 = arith.maximumf %170, %171 : vector<16x2048xf32>
    %c0_63 = arith.constant 0 : index
    %c0_64 = arith.constant 0 : index
    %173 = vector.load %arg15[%c0_63, %c0_64] : memref<2048x32xf32, #tpu.memory_space<vmem>>, vector<2048x32xf32>
    %cst_65 = arith.constant dense<0.000000e+00> : vector<16x32xf32>
    %174 = tpu.matmul %172, %173, %cst_65 {dimension_numbers = #tpu.dot_dimension_numbers<[1], [0], [0], [1], [0, 0, 1, 1], [], []>} : vector<16x2048xf32>, vector<2048x32xf32>, vector<16x32xf32> -> vector<16x32xf32>
    %c0_66 = arith.constant 0 : index
    %c0_67 = arith.constant 0 : index
    %175 = vector.load %arg16[%c0_66, %c0_67] : memref<1x32xf32, #tpu.memory_space<vmem>>, vector<1x32xf32>
    %176 = vector.broadcast %175 : vector<1x32xf32> to vector<16x32xf32>
    %177 = arith.addf %174, %176 : vector<16x32xf32>
    %178 = arith.addf %165, %177 : vector<16x32xf32>
    %c0_68 = arith.constant 0 : index
    %c0_69 = arith.constant 0 : index
    %179 = vector.load %arg17[%c0_68, %c0_69] : memref<1x32xf32, #tpu.memory_space<vmem>>, vector<1x32xf32>
    %c0_70 = arith.constant 0 : index
    %c0_71 = arith.constant 0 : index
    %180 = vector.load %arg18[%c0_70, %c0_71] : memref<1x32xf32, #tpu.memory_space<vmem>>, vector<1x32xf32>
    %cst_72 = arith.constant dense<0.000000e+00> : vector<16xf32>
    %181 = vector.multi_reduction <add>, %178, %cst_72 [1] : vector<16x32xf32> to vector<16xf32>
    %182 = vector.shape_cast %181 : vector<16xf32> to vector<16x1xf32>
    %cst_73 = arith.constant 3.200000e+01 : f32
    %183 = vector.broadcast %cst_73 : f32 to vector<16x1xf32>
    %184 = arith.divf %182, %183 : vector<16x1xf32>
    %185 = vector.broadcast %184 : vector<16x1xf32> to vector<16x32xf32>
    %186 = arith.subf %178, %185 : vector<16x32xf32>
    %187 = arith.mulf %186, %186 : vector<16x32xf32>
    %cst_74 = arith.constant dense<0.000000e+00> : vector<16xf32>
    %188 = vector.multi_reduction <add>, %187, %cst_74 [1] : vector<16x32xf32> to vector<16xf32>
    %189 = vector.shape_cast %188 : vector<16xf32> to vector<16x1xf32>
    %cst_75 = arith.constant 3.200000e+01 : f32
    %190 = vector.broadcast %cst_75 : f32 to vector<16x1xf32>
    %191 = arith.divf %189, %190 : vector<16x1xf32>
    %192 = vector.broadcast %184 : vector<16x1xf32> to vector<16x32xf32>
    %193 = arith.subf %178, %192 : vector<16x32xf32>
    %cst_76 = arith.constant 9.99999974E-6 : f32
    %194 = vector.broadcast %cst_76 : f32 to vector<16x1xf32>
    %195 = arith.addf %191, %194 : vector<16x1xf32>
    %196 = math.rsqrt %195 : vector<16x1xf32>
    %197 = vector.broadcast %196 : vector<16x1xf32> to vector<16x32xf32>
    %198 = arith.mulf %193, %197 : vector<16x32xf32>
    %199 = vector.broadcast %179 : vector<1x32xf32> to vector<16x32xf32>
    %200 = arith.mulf %198, %199 : vector<16x32xf32>
    %201 = vector.broadcast %180 : vector<1x32xf32> to vector<16x32xf32>
    %202 = arith.addf %200, %201 : vector<16x32xf32>
    %c0_77 = arith.constant 0 : index
    %c0_78 = arith.constant 0 : index
    %203 = vector.load %arg19[%c0_77, %c0_78] : memref<1x32xf32, #tpu.memory_space<vmem>>, vector<1x32xf32>
    %cst_79 = arith.constant dense<0.000000e+00> : vector<1x16xf32>
    %204 = tpu.matmul %203, %202, %cst_79 {dimension_numbers = #tpu.dot_dimension_numbers<[1], [1], [0], [0], [0, 0, 1, 0], [], []>} : vector<1x32xf32>, vector<16x32xf32>, vector<1x16xf32> -> vector<1x16xf32>
    %c0_80 = arith.constant 0 : index
    %c0_81 = arith.constant 0 : index
    %205 = vector.load %arg20[%c0_80, %c0_81] : memref<1x1xf32, #tpu.memory_space<vmem>>, vector<1x1xf32>
    %206 = vector.broadcast %205 : vector<1x1xf32> to vector<1x16xf32>
    %207 = arith.addf %204, %206 : vector<1x16xf32>
    %c0_82 = arith.constant 0 : index
    %c0_83 = arith.constant 0 : index
    %c0_84 = arith.constant 0 : index
    %208 = vector.load %arg21[%c0_82, %c0_83, %c0_84] : memref<1x1x16xf32, #tpu.memory_space<vmem>>, vector<1x1x16xf32>
    %209 = vector.shape_cast %208 : vector<1x1x16xf32> to vector<1x16xf32>
    %210 = vector.shape_cast %207 : vector<1x16xf32> to vector<1x1x16xf32>
    tpu.vector_store %arg21[%c0_82, %c0_83, %c0_84], %210 {strides = array<i32>} : memref<1x1x16xf32, #tpu.memory_space<vmem>>, vector<1x1x16xf32>,
    return
  }
  func.func @transform_0(%arg0: i32) -> (i32, i32, i32) {
    %c0_i32 = arith.constant 0 : i32
    %c0_i32_0 = arith.constant 0 : i32
    %c0_i32_1 = arith.constant 0 : i32
    return %arg0, %c0_i32, %c0_i32_0 : i32, i32, i32
  }
  func.func @transform_1(%arg0: i32) -> (i32, i32) {
    %c0_i32 = arith.constant 0 : i32
    %c0_i32_0 = arith.constant 0 : i32
    %c0_i32_1 = arith.constant 0 : i32
    return %c0_i32, %c0_i32_0 : i32, i32
  }
  func.func @transform_2(%arg0: i32) -> (i32, i32) {
    %c0_i32 = arith.constant 0 : i32
    %c0_i32_0 = arith.constant 0 : i32
    %c0_i32_1 = arith.constant 0 : i32
    return %c0_i32, %c0_i32_0 : i32, i32
  }
  func.func @transform_3(%arg0: i32) -> (i32, i32) {
    %c0_i32 = arith.constant 0 : i32
    %c0_i32_0 = arith.constant 0 : i32
    %c0_i32_1 = arith.constant 0 : i32
    return %c0_i32, %c0_i32_0 : i32, i32
  }
  func.func @transform_4(%arg0: i32) -> (i32, i32) {
    %c0_i32 = arith.constant 0 : i32
    %c0_i32_0 = arith.constant 0 : i32
    %c0_i32_1 = arith.constant 0 : i32
    return %c0_i32, %c0_i32_0 : i32, i32
  }
  func.func @transform_5(%arg0: i32) -> (i32, i32) {
    %c0_i32 = arith.constant 0 : i32
    %c0_i32_0 = arith.constant 0 : i32
    %c0_i32_1 = arith.constant 0 : i32
    return %c0_i32, %c0_i32_0 : i32, i32
  }
  func.func @transform_6(%arg0: i32) -> (i32, i32) {
    %c0_i32 = arith.constant 0 : i32
    %c0_i32_0 = arith.constant 0 : i32
    %c0_i32_1 = arith.constant 0 : i32
    return %c0_i32, %c0_i32_0 : i32, i32
  }
  func.func @transform_7(%arg0: i32) -> (i32, i32) {
    %c0_i32 = arith.constant 0 : i32
    %c0_i32_0 = arith.constant 0 : i32
    %c0_i32_1 = arith.constant 0 : i32
    return %c0_i32, %c0_i32_0 : i32, i32
  }
  func.func @transform_8(%arg0: i32) -> (i32, i32) {
    %c0_i32 = arith.constant 0 : i32
    %c0_i32_0 = arith.constant 0 : i32
    %c0_i32_1 = arith.constant 0 : i32
    return %c0_i32, %c0_i32_0 : i32, i32
  }
  func.func @transform_9(%arg0: i32) -> (i32, i32) {
    %c0_i32 = arith.constant 0 : i32
    %c0_i32_0 = arith.constant 0 : i32
    %c0_i32_1 = arith.constant 0 : i32
    return %c0_i32, %c0_i32_0 : i32, i32
  }
  func.func @transform_10(%arg0: i32) -> (i32, i32) {
    %c0_i32 = arith.constant 0 : i32
    %c0_i32_0 = arith.constant 0 : i32
    %c0_i32_1 = arith.constant 0 : i32
    return %c0_i32, %c0_i32_0 : i32, i32
  }
  func.func @transform_11(%arg0: i32) -> (i32, i32) {
    %c0_i32 = arith.constant 0 : i32
    %c0_i32_0 = arith.constant 0 : i32
    %c0_i32_1 = arith.constant 0 : i32
    return %c0_i32, %c0_i32_0 : i32, i32
  }
  func.func @transform_12(%arg0: i32) -> (i32, i32) {
    %c0_i32 = arith.constant 0 : i32
    %c0_i32_0 = arith.constant 0 : i32
    %c0_i32_1 = arith.constant 0 : i32
    return %c0_i32, %c0_i32_0 : i32, i32
  }
  func.func @transform_13(%arg0: i32) -> (i32, i32) {
    %c0_i32 = arith.constant 0 : i32
    %c0_i32_0 = arith.constant 0 : i32
    %c0_i32_1 = arith.constant 0 : i32
    return %c0_i32, %c0_i32_0 : i32, i32
  }
  func.func @transform_14(%arg0: i32) -> (i32, i32) {
    %c0_i32 = arith.constant 0 : i32
    %c0_i32_0 = arith.constant 0 : i32
    %c0_i32_1 = arith.constant 0 : i32
    return %c0_i32, %c0_i32_0 : i32, i32
  }
  func.func @transform_15(%arg0: i32) -> (i32, i32) {
    %c0_i32 = arith.constant 0 : i32
    %c0_i32_0 = arith.constant 0 : i32
    %c0_i32_1 = arith.constant 0 : i32
    return %c0_i32, %c0_i32_0 : i32, i32
  }
  func.func @transform_16(%arg0: i32) -> (i32, i32) {
    %c0_i32 = arith.constant 0 : i32
    %c0_i32_0 = arith.constant 0 : i32
    %c0_i32_1 = arith.constant 0 : i32
    return %c0_i32, %c0_i32_0 : i32, i32
  }
  func.func @transform_17(%arg0: i32) -> (i32, i32) {
    %c0_i32 = arith.constant 0 : i32
    %c0_i32_0 = arith.constant 0 : i32
    %c0_i32_1 = arith.constant 0 : i32
    return %c0_i32, %c0_i32_0 : i32, i32
  }
  func.func @transform_18(%arg0: i32) -> (i32, i32) {
    %c0_i32 = arith.constant 0 : i32
    %c0_i32_0 = arith.constant 0 : i32
    %c0_i32_1 = arith.constant 0 : i32
    return %c0_i32, %c0_i32_0 : i32, i32
  }
  func.func @transform_19(%arg0: i32) -> (i32, i32) {
    %c0_i32 = arith.constant 0 : i32
    %c0_i32_0 = arith.constant 0 : i32
    %c0_i32_1 = arith.constant 0 : i32
    return %c0_i32, %c0_i32_0 : i32, i32
  }
  func.func @transform_20(%arg0: i32) -> (i32, i32, i32) {
    %c0_i32 = arith.constant 0 : i32
    %c0_i32_0 = arith.constant 0 : i32
    %c0_i32_1 = arith.constant 0 : i32
    return %arg0, %c0_i32, %c0_i32_0 : i32, i32, i32
  }
}

module attributes {stable_mosaic.version = 11 : i64} {
  func.func @decoder_kernel(%arg0: i32, %arg1: memref<1x16x1xf32, #tpu.memory_space<vmem>>, %arg2: memref<16x32xf32, #tpu.memory_space<vmem>>, %arg3: memref<1x32xf32, #tpu.memory_space<vmem>>, %arg4: memref<32x96xf32, #tpu.memory_space<vmem>>, %arg5: memref<1x96xf32, #tpu.memory_space<vmem>>, %arg6: memref<32x32xf32, #tpu.memory_space<vmem>>, %arg7: memref<1x32xf32, #tpu.memory_space<vmem>>, %arg8: memref<1x32xf32, #tpu.memory_space<vmem>>, %arg9: memref<1x32xf32, #tpu.memory_space<vmem>>, %arg10: memref<1x32xf32, #tpu.memory_space<vmem>>, %arg11: memref<1x32xf32, #tpu.memory_space<vmem>>, %arg12: memref<1x32xf32, #tpu.memory_space<vmem>>, %arg13: memref<32x2048xf32, #tpu.memory_space<vmem>>, %arg14: memref<1x2048xf32, #tpu.memory_space<vmem>>, %arg15: memref<2048x32xf32, #tpu.memory_space<vmem>>, %arg16: memref<1x32xf32, #tpu.memory_space<vmem>>, %arg17: memref<1x32xf32, #tpu.memory_space<vmem>>, %arg18: memref<1x32xf32, #tpu.memory_space<vmem>>, %arg19: memref<1x32xf32, #tpu.memory_space<vmem>>, %arg20: memref<1x1xf32, #tpu.memory_space<vmem>>, %arg21: memref<1x1x16xf32, #tpu.memory_space<vmem>>) attributes {dimension_semantics = [#tpu.dimension_semantics<parallel>], iteration_bounds = array<i64: 2>, scalar_prefetch = 0 : i64, scratch_operands = 0 : i64, tpu.core_type = #tpu.core_type<tc>, window_params = [{transform_indices = @transform_0, window_bounds = array<i64: 1, 16, 1>}, {pipeline_mode = #tpu.pipeline_mode<synchronous>, transform_indices = @transform_1, window_bounds = array<i64: 16, 32>}, {pipeline_mode = #tpu.pipeline_mode<synchronous>, transform_indices = @transform_2, window_bounds = array<i64: 1, 32>}, {pipeline_mode = #tpu.pipeline_mode<synchronous>, transform_indices = @transform_3, window_bounds = array<i64: 32, 96>}, {pipeline_mode = #tpu.pipeline_mode<synchronous>, transform_indices = @transform_4, window_bounds = array<i64: 1, 96>}, {pipeline_mode = #tpu.pipeline_mode<synchronous>, transform_indices = @transform_5, window_bounds = array<i64: 32, 32>}, {pipeline_mode = #tpu.pipeline_mode<synchronous>, transform_indices = @transform_6, window_bounds = array<i64: 1, 32>}, {pipeline_mode = #tpu.pipeline_mode<synchronous>, transform_indices = @transform_7, window_bounds = array<i64: 1, 32>}, {pipeline_mode = #tpu.pipeline_mode<synchronous>, transform_indices = @transform_8, window_bounds = array<i64: 1, 32>}, {pipeline_mode = #tpu.pipeline_mode<synchronous>, transform_indices = @transform_9, window_bounds = array<i64: 1, 32>}, {pipeline_mode = #tpu.pipeline_mode<synchronous>, transform_indices = @transform_10, window_bounds = array<i64: 1, 32>}, {pipeline_mode = #tpu.pipeline_mode<synchronous>, transform_indices = @transform_11, window_bounds = array<i64: 1, 32>}, {pipeline_mode = #tpu.pipeline_mode<synchronous>, transform_indices = @transform_12, window_bounds = array<i64: 32, 2048>}, {pipeline_mode = #tpu.pipeline_mode<synchronous>, transform_indices = @transform_13, window_bounds = array<i64: 1, 2048>}, {pipeline_mode = #tpu.pipeline_mode<synchronous>, transform_indices = @transform_14, window_bounds = array<i64: 2048, 32>}, {pipeline_mode = #tpu.pipeline_mode<synchronous>, transform_indices = @transform_15, window_bounds = array<i64: 1, 32>}, {pipeline_mode = #tpu.pipeline_mode<synchronous>, transform_indices = @transform_16, window_bounds = array<i64: 1, 32>}, {pipeline_mode = #tpu.pipeline_mode<synchronous>, transform_indices = @transform_17, window_bounds = array<i64: 1, 32>}, {pipeline_mode = #tpu.pipeline_mode<synchronous>, transform_indices = @transform_18, window_bounds = array<i64: 1, 32>}, {pipeline_mode = #tpu.pipeline_mode<synchronous>, transform_indices = @transform_19, window_bounds = array<i64: 1, 1>}, {transform_indices = @transform_20, window_bounds = array<i64: 1, 1, 16>}]} {
    %c0 = arith.constant 0 : index
    %c0_0 = arith.constant 0 : index
    %c0_1 = arith.constant 0 : index
    %0 = vector.load %arg1[%c0, %c0_0, %c0_1] : memref<1x16x1xf32, #tpu.memory_space<vmem>>, vector<1x16x1xf32>
    %1 = vector.shape_cast %0 : vector<1x16x1xf32> to vector<16x1xf32>
    %c0_2 = arith.constant 0 : index
    %c0_3 = arith.constant 0 : index
    %2 = vector.load %arg3[%c0_2, %c0_3] : memref<1x32xf32, #tpu.memory_space<vmem>>, vector<1x32xf32>
    %3 = vector.broadcast %1 : vector<16x1xf32> to vector<16x32xf32>
    %4 = vector.broadcast %2 : vector<1x32xf32> to vector<16x32xf32>
    %5 = arith.mulf %3, %4 : vector<16x32xf32>
    %c0_4 = arith.constant 0 : index
    %c0_5 = arith.constant 0 : index
    %6 = vector.load %arg2[%c0_4, %c0_5] : memref<16x32xf32, #tpu.memory_space<vmem>>, vector<16x32xf32>
    %7 = arith.addf %5, %6 : vector<16x32xf32>
    %c0_6 = arith.constant 0 : index
    %c0_7 = arith.constant 0 : index
    %8 = vector.load %arg4[%c0_6, %c0_7] : memref<32x96xf32, #tpu.memory_space<vmem>>, vector<32x96xf32>
    %cst = arith.constant dense<0.000000e+00> : vector<16x96xf32>
    %9 = tpu.matmul %7, %8, %cst {dimension_numbers = #tpu.dot_dimension_numbers<[1], [0], [0], [1], [0, 0, 1, 1], [], []>} : vector<16x32xf32>, vector<32x96xf32>, vector<16x96xf32> -> vector<16x96xf32>
    %c0_8 = arith.constant 0 : index
    %c0_9 = arith.constant 0 : index
    %10 = vector.load %arg5[%c0_8, %c0_9] : memref<1x96xf32, #tpu.memory_space<vmem>>, vector<1x96xf32>
    %11 = vector.broadcast %10 : vector<1x96xf32> to vector<16x96xf32>
    %12 = arith.addf %9, %11 : vector<16x96xf32>
    %13 = tpu.iota {dimensions = array<i32: 0>} : vector<16x16xi32>
    %14 = tpu.iota {dimensions = array<i32: 1>} : vector<16x16xi32>
    %15 = arith.cmpi sle, %14, %13 : vector<16x16xi32>
    %cst_10 = arith.constant 0.000000e+00 : f32
    %cst_11 = arith.constant -1.000000e+30 : f32
    %16 = vector.broadcast %cst_10 : f32 to vector<16x16xf32>
    %17 = vector.broadcast %cst_11 : f32 to vector<16x16xf32>
    %18 = arith.select %15, %16, %17 : vector<16x16xi1>, vector<16x16xf32>
    %19 = vector.extract_strided_slice %12 {offsets = [0, 0], sizes = [16, 8], strides = [1, 1]} : vector<16x96xf32> to vector<16x8xf32>
    %20 = vector.shape_cast %19 : vector<16x8xf32> to vector<1x16x8xf32>
    %21 = vector.extract_strided_slice %12 {offsets = [0, 32], sizes = [16, 8], strides = [1, 1]} : vector<16x96xf32> to vector<16x8xf32>
    %22 = vector.shape_cast %21 : vector<16x8xf32> to vector<1x16x8xf32>
    %23 = vector.extract_strided_slice %12 {offsets = [0, 64], sizes = [16, 8], strides = [1, 1]} : vector<16x96xf32> to vector<16x8xf32>
    %24 = vector.shape_cast %23 : vector<16x8xf32> to vector<1x16x8xf32>
    "tpu.trace_start"() <{level = 10 : i32, message = "bqd,bkd->bqk"}> : () -> ()
    %cst_12 = arith.constant dense<0.000000e+00> : vector<1x16x16xf32>
    %25 = tpu.matmul %20, %22, %cst_12 {dimension_numbers = #tpu.dot_dimension_numbers<[2], [2], [1], [1], [0, 0, 0, 1, 1, 1], [0], [0]>} : vector<1x16x8xf32>, vector<1x16x8xf32>, vector<1x16x16xf32> -> vector<1x16x16xf32>
    "tpu.trace_stop"() : () -> ()
    %cst_13 = arith.constant 0.353553385 : f32
    %26 = vector.broadcast %cst_13 : f32 to vector<1x16x16xf32>
    %27 = arith.mulf %25, %26 : vector<1x16x16xf32>
    %28 = vector.shape_cast %18 : vector<16x16xf32> to vector<1x16x16xf32>
    %29 = arith.addf %27, %28 : vector<1x16x16xf32>
    %cst_14 = arith.constant dense<0xFF800000> : vector<1x16xf32>
    %30 = vector.multi_reduction <maximumf>, %29, %cst_14 [2] : vector<1x16x16xf32> to vector<1x16xf32>
    %31 = vector.shape_cast %30 : vector<1x16xf32> to vector<1x16x1xf32>
    %32 = vector.broadcast %31 : vector<1x16x1xf32> to vector<1x16x16xf32>
    %33 = arith.subf %29, %32 : vector<1x16x16xf32>
    %34 = math.exp %33 : vector<1x16x16xf32>
    %cst_15 = arith.constant dense<0.000000e+00> : vector<1x16xf32>
    %35 = vector.multi_reduction <add>, %34, %cst_15 [2] : vector<1x16x16xf32> to vector<1x16xf32>
    %36 = vector.shape_cast %35 : vector<1x16xf32> to vector<1x16x1xf32>
    %37 = tpu.reciprocal %36 : vector<1x16x1xf32> -> vector<1x16x1xf32>
    %38 = vector.broadcast %37 : vector<1x16x1xf32> to vector<1x16x16xf32>
    %39 = arith.mulf %34, %38 : vector<1x16x16xf32>
    "tpu.trace_start"() <{level = 10 : i32, message = "bqk,bkd->bqd"}> : () -> ()
    %cst_16 = arith.constant dense<0.000000e+00> : vector<1x16x8xf32>
    %40 = tpu.matmul %39, %24, %cst_16 {dimension_numbers = #tpu.dot_dimension_numbers<[2], [1], [1], [2], [0, 0, 0, 1, 1, 2], [0], [0]>} : vector<1x16x16xf32>, vector<1x16x8xf32>, vector<1x16x8xf32> -> vector<1x16x8xf32>
    "tpu.trace_stop"() : () -> ()
    %41 = vector.extract_strided_slice %12 {offsets = [0, 8], sizes = [16, 8], strides = [1, 1]} : vector<16x96xf32> to vector<16x8xf32>
    %42 = vector.shape_cast %41 : vector<16x8xf32> to vector<1x16x8xf32>
    %43 = vector.extract_strided_slice %12 {offsets = [0, 40], sizes = [16, 8], strides = [1, 1]} : vector<16x96xf32> to vector<16x8xf32>
    %44 = vector.shape_cast %43 : vector<16x8xf32> to vector<1x16x8xf32>
    %45 = vector.extract_strided_slice %12 {offsets = [0, 72], sizes = [16, 8], strides = [1, 1]} : vector<16x96xf32> to vector<16x8xf32>
    %46 = vector.shape_cast %45 : vector<16x8xf32> to vector<1x16x8xf32>
    "tpu.trace_start"() <{level = 10 : i32, message = "bqd,bkd->bqk"}> : () -> ()
    %cst_17 = arith.constant dense<0.000000e+00> : vector<1x16x16xf32>
    %47 = tpu.matmul %42, %44, %cst_17 {dimension_numbers = #tpu.dot_dimension_numbers<[2], [2], [1], [1], [0, 0, 0, 1, 1, 1], [0], [0]>} : vector<1x16x8xf32>, vector<1x16x8xf32>, vector<1x16x16xf32> -> vector<1x16x16xf32>
    "tpu.trace_stop"() : () -> ()
    %cst_18 = arith.constant 0.353553385 : f32
    %48 = vector.broadcast %cst_18 : f32 to vector<1x16x16xf32>
    %49 = arith.mulf %47, %48 : vector<1x16x16xf32>
    %50 = vector.shape_cast %18 : vector<16x16xf32> to vector<1x16x16xf32>
    %51 = arith.addf %49, %50 : vector<1x16x16xf32>
    %cst_19 = arith.constant dense<0xFF800000> : vector<1x16xf32>
    %52 = vector.multi_reduction <maximumf>, %51, %cst_19 [2] : vector<1x16x16xf32> to vector<1x16xf32>
    %53 = vector.shape_cast %52 : vector<1x16xf32> to vector<1x16x1xf32>
    %54 = vector.broadcast %53 : vector<1x16x1xf32> to vector<1x16x16xf32>
    %55 = arith.subf %51, %54 : vector<1x16x16xf32>
    %56 = math.exp %55 : vector<1x16x16xf32>
    %cst_20 = arith.constant dense<0.000000e+00> : vector<1x16xf32>
    %57 = vector.multi_reduction <add>, %56, %cst_20 [2] : vector<1x16x16xf32> to vector<1x16xf32>
    %58 = vector.shape_cast %57 : vector<1x16xf32> to vector<1x16x1xf32>
    %59 = tpu.reciprocal %58 : vector<1x16x1xf32> -> vector<1x16x1xf32>
    %60 = vector.broadcast %59 : vector<1x16x1xf32> to vector<1x16x16xf32>
    %61 = arith.mulf %56, %60 : vector<1x16x16xf32>
    "tpu.trace_start"() <{level = 10 : i32, message = "bqk,bkd->bqd"}> : () -> ()
    %cst_21 = arith.constant dense<0.000000e+00> : vector<1x16x8xf32>
    %62 = tpu.matmul %61, %46, %cst_21 {dimension_numbers = #tpu.dot_dimension_numbers<[2], [1], [1], [2], [0, 0, 0, 1, 1, 2], [0], [0]>} : vector<1x16x16xf32>, vector<1x16x8xf32>, vector<1x16x8xf32> -> vector<1x16x8xf32>
    "tpu.trace_stop"() : () -> ()
    %63 = vector.extract_strided_slice %12 {offsets = [0, 16], sizes = [16, 8], strides = [1, 1]} : vector<16x96xf32> to vector<16x8xf32>
    %64 = vector.shape_cast %63 : vector<16x8xf32> to vector<1x16x8xf32>
    %65 = vector.extract_strided_slice %12 {offsets = [0, 48], sizes = [16, 8], strides = [1, 1]} : vector<16x96xf32> to vector<16x8xf32>
    %66 = vector.shape_cast %65 : vector<16x8xf32> to vector<1x16x8xf32>
    %67 = vector.extract_strided_slice %12 {offsets = [0, 80], sizes = [16, 8], strides = [1, 1]} : vector<16x96xf32> to vector<16x8xf32>
    %68 = vector.shape_cast %67 : vector<16x8xf32> to vector<1x16x8xf32>
    "tpu.trace_start"() <{level = 10 : i32, message = "bqd,bkd->bqk"}> : () -> ()
    %cst_22 = arith.constant dense<0.000000e+00> : vector<1x16x16xf32>
    %69 = tpu.matmul %64, %66, %cst_22 {dimension_numbers = #tpu.dot_dimension_numbers<[2], [2], [1], [1], [0, 0, 0, 1, 1, 1], [0], [0]>} : vector<1x16x8xf32>, vector<1x16x8xf32>, vector<1x16x16xf32> -> vector<1x16x16xf32>
    "tpu.trace_stop"() : () -> ()
    %cst_23 = arith.constant 0.353553385 : f32
    %70 = vector.broadcast %cst_23 : f32 to vector<1x16x16xf32>
    %71 = arith.mulf %69, %70 : vector<1x16x16xf32>
    %72 = vector.shape_cast %18 : vector<16x16xf32> to vector<1x16x16xf32>
    %73 = arith.addf %71, %72 : vector<1x16x16xf32>
    %cst_24 = arith.constant dense<0xFF800000> : vector<1x16xf32>
    %74 = vector.multi_reduction <maximumf>, %73, %cst_24 [2] : vector<1x16x16xf32> to vector<1x16xf32>
    %75 = vector.shape_cast %74 : vector<1x16xf32> to vector<1x16x1xf32>
    %76 = vector.broadcast %75 : vector<1x16x1xf32> to vector<1x16x16xf32>
    %77 = arith.subf %73, %76 : vector<1x16x16xf32>
    %78 = math.exp %77 : vector<1x16x16xf32>
    %cst_25 = arith.constant dense<0.000000e+00> : vector<1x16xf32>
    %79 = vector.multi_reduction <add>, %78, %cst_25 [2] : vector<1x16x16xf32> to vector<1x16xf32>
    %80 = vector.shape_cast %79 : vector<1x16xf32> to vector<1x16x1xf32>
    %81 = tpu.reciprocal %80 : vector<1x16x1xf32> -> vector<1x16x1xf32>
    %82 = vector.broadcast %81 : vector<1x16x1xf32> to vector<1x16x16xf32>
    %83 = arith.mulf %78, %82 : vector<1x16x16xf32>
    "tpu.trace_start"() <{level = 10 : i32, message = "bqk,bkd->bqd"}> : () -> ()
    %cst_26 = arith.constant dense<0.000000e+00> : vector<1x16x8xf32>
    %84 = tpu.matmul %83, %68, %cst_26 {dimension_numbers = #tpu.dot_dimension_numbers<[2], [1], [1], [2], [0, 0, 0, 1, 1, 2], [0], [0]>} : vector<1x16x16xf32>, vector<1x16x8xf32>, vector<1x16x8xf32> -> vector<1x16x8xf32>
    "tpu.trace_stop"() : () -> ()
    %85 = vector.extract_strided_slice %12 {offsets = [0, 24], sizes = [16, 8], strides = [1, 1]} : vector<16x96xf32> to vector<16x8xf32>
    %86 = vector.shape_cast %85 : vector<16x8xf32> to vector<1x16x8xf32>
    %87 = vector.extract_strided_slice %12 {offsets = [0, 56], sizes = [16, 8], strides = [1, 1]} : vector<16x96xf32> to vector<16x8xf32>
    %88 = vector.shape_cast %87 : vector<16x8xf32> to vector<1x16x8xf32>
    %89 = vector.extract_strided_slice %12 {offsets = [0, 88], sizes = [16, 8], strides = [1, 1]} : vector<16x96xf32> to vector<16x8xf32>
    %90 = vector.shape_cast %89 : vector<16x8xf32> to vector<1x16x8xf32>
    "tpu.trace_start"() <{level = 10 : i32, message = "bqd,bkd->bqk"}> : () -> ()
    %cst_27 = arith.constant dense<0.000000e+00> : vector<1x16x16xf32>
    %91 = tpu.matmul %86, %88, %cst_27 {dimension_numbers = #tpu.dot_dimension_numbers<[2], [2], [1], [1], [0, 0, 0, 1, 1, 1], [0], [0]>} : vector<1x16x8xf32>, vector<1x16x8xf32>, vector<1x16x16xf32> -> vector<1x16x16xf32>
    "tpu.trace_stop"() : () -> ()
    %cst_28 = arith.constant 0.353553385 : f32
    %92 = vector.broadcast %cst_28 : f32 to vector<1x16x16xf32>
    %93 = arith.mulf %91, %92 : vector<1x16x16xf32>
    %94 = vector.shape_cast %18 : vector<16x16xf32> to vector<1x16x16xf32>
    %95 = arith.addf %93, %94 : vector<1x16x16xf32>
    %cst_29 = arith.constant dense<0xFF800000> : vector<1x16xf32>
    %96 = vector.multi_reduction <maximumf>, %95, %cst_29 [2] : vector<1x16x16xf32> to vector<1x16xf32>
    %97 = vector.shape_cast %96 : vector<1x16xf32> to vector<1x16x1xf32>
    %98 = vector.broadcast %97 : vector<1x16x1xf32> to vector<1x16x16xf32>
    %99 = arith.subf %95, %98 : vector<1x16x16xf32>
    %100 = math.exp %99 : vector<1x16x16xf32>
    %cst_30 = arith.constant dense<0.000000e+00> : vector<1x16xf32>
    %101 = vector.multi_reduction <add>, %100, %cst_30 [2] : vector<1x16x16xf32> to vector<1x16xf32>
    %102 = vector.shape_cast %101 : vector<1x16xf32> to vector<1x16x1xf32>
    %103 = tpu.reciprocal %102 : vector<1x16x1xf32> -> vector<1x16x1xf32>
    %104 = vector.broadcast %103 : vector<1x16x1xf32> to vector<1x16x16xf32>
    %105 = arith.mulf %100, %104 : vector<1x16x16xf32>
    "tpu.trace_start"() <{level = 10 : i32, message = "bqk,bkd->bqd"}> : () -> ()
    %cst_31 = arith.constant dense<0.000000e+00> : vector<1x16x8xf32>
    %106 = tpu.matmul %105, %90, %cst_31 {dimension_numbers = #tpu.dot_dimension_numbers<[2], [1], [1], [2], [0, 0, 0, 1, 1, 2], [0], [0]>} : vector<1x16x16xf32>, vector<1x16x8xf32>, vector<1x16x8xf32> -> vector<1x16x8xf32>
    "tpu.trace_stop"() : () -> ()
    %107 = tpu.concatenate %40, %62, %84, %106 in 2 : vector<1x16x8xf32>, vector<1x16x8xf32>, vector<1x16x8xf32>, vector<1x16x8xf32> -> vector<1x16x32xf32>
    %108 = vector.shape_cast %107 : vector<1x16x32xf32> to vector<16x32xf32>
    %c0_32 = arith.constant 0 : index
    %c0_33 = arith.constant 0 : index
    %109 = vector.load %arg6[%c0_32, %c0_33] : memref<32x32xf32, #tpu.memory_space<vmem>>, vector<32x32xf32>
    %cst_34 = arith.constant dense<0.000000e+00> : vector<16x32xf32>
    %110 = tpu.matmul %108, %109, %cst_34 {dimension_numbers = #tpu.dot_dimension_numbers<[1], [0], [0], [1], [0, 0, 1, 1], [], []>} : vector<16x32xf32>, vector<32x32xf32>, vector<16x32xf32> -> vector<16x32xf32>
    %c0_35 = arith.constant 0 : index
    %c0_36 = arith.constant 0 : index
    %111 = vector.load %arg7[%c0_35, %c0_36] : memref<1x32xf32, #tpu.memory_space<vmem>>, vector<1x32xf32>
    %112 = vector.broadcast %111 : vector<1x32xf32> to vector<16x32xf32>
    %113 = arith.addf %110, %112 : vector<16x32xf32>
    %114 = arith.addf %7, %113 : vector<16x32xf32>
    %c0_37 = arith.constant 0 : index
    %c0_38 = arith.constant 0 : index
    %115 = vector.load %arg8[%c0_37, %c0_38] : memref<1x32xf32, #tpu.memory_space<vmem>>, vector<1x32xf32>
    %c0_39 = arith.constant 0 : index
    %c0_40 = arith.constant 0 : index
    %116 = vector.load %arg9[%c0_39, %c0_40] : memref<1x32xf32, #tpu.memory_space<vmem>>, vector<1x32xf32>
    %cst_41 = arith.constant dense<0.000000e+00> : vector<16xf32>
    %117 = vector.multi_reduction <add>, %114, %cst_41 [1] : vector<16x32xf32> to vector<16xf32>
    %118 = vector.shape_cast %117 : vector<16xf32> to vector<16x1xf32>
    %cst_42 = arith.constant 3.200000e+01 : f32
    %119 = vector.broadcast %cst_42 : f32 to vector<16x1xf32>
    %120 = arith.divf %118, %119 : vector<16x1xf32>
    %121 = vector.broadcast %120 : vector<16x1xf32> to vector<16x32xf32>
    %122 = arith.subf %114, %121 : vector<16x32xf32>
    %123 = arith.mulf %122, %122 : vector<16x32xf32>
    %cst_43 = arith.constant dense<0.000000e+00> : vector<16xf32>
    %124 = vector.multi_reduction <add>, %123, %cst_43 [1] : vector<16x32xf32> to vector<16xf32>
    %125 = vector.shape_cast %124 : vector<16xf32> to vector<16x1xf32>
    %cst_44 = arith.constant 3.200000e+01 : f32
    %126 = vector.broadcast %cst_44 : f32 to vector<16x1xf32>
    %127 = arith.divf %125, %126 : vector<16x1xf32>
    %128 = vector.broadcast %120 : vector<16x1xf32> to vector<16x32xf32>
    %129 = arith.subf %114, %128 : vector<16x32xf32>
    %cst_45 = arith.constant 9.99999974E-6 : f32
    %130 = vector.broadcast %cst_45 : f32 to vector<16x1xf32>
    %131 = arith.addf %127, %130 : vector<16x1xf32>
    %132 = math.rsqrt %131 : vector<16x1xf32>
    %133 = vector.broadcast %132 : vector<16x1xf32> to vector<16x32xf32>
    %134 = arith.mulf %129, %133 : vector<16x32xf32>
    %135 = vector.broadcast %115 : vector<1x32xf32> to vector<16x32xf32>
    %136 = arith.mulf %134, %135 : vector<16x32xf32>
    %137 = vector.broadcast %116 : vector<1x32xf32> to vector<16x32xf32>
    %138 = arith.addf %136, %137 : vector<16x32xf32>
    %c0_46 = arith.constant 0 : index
    %c0_47 = arith.constant 0 : index
    %139 = vector.load %arg10[%c0_46, %c0_47] : memref<1x32xf32, #tpu.memory_space<vmem>>, vector<1x32xf32>
    %140 = vector.broadcast %139 : vector<1x32xf32> to vector<16x32xf32>
    %141 = arith.addf %138, %140 : vector<16x32xf32>
    %c0_48 = arith.constant 0 : index
    %c0_49 = arith.constant 0 : index
    %142 = vector.load %arg11[%c0_48, %c0_49] : memref<1x32xf32, #tpu.memory_space<vmem>>, vector<1x32xf32>
    %c0_50 = arith.constant 0 : index
    %c0_51 = arith.constant 0 : index
    %143 = vector.load %arg12[%c0_50, %c0_51] : memref<1x32xf32, #tpu.memory_space<vmem>>, vector<1x32xf32>
    %cst_52 = arith.constant dense<0.000000e+00> : vector<16xf32>
    %144 = vector.multi_reduction <add>, %141, %cst_52 [1] : vector<16x32xf32> to vector<16xf32>
    %145 = vector.shape_cast %144 : vector<16xf32> to vector<16x1xf32>
    %cst_53 = arith.constant 3.200000e+01 : f32
    %146 = vector.broadcast %cst_53 : f32 to vector<16x1xf32>
    %147 = arith.divf %145, %146 : vector<16x1xf32>
    %148 = vector.broadcast %147 : vector<16x1xf32> to vector<16x32xf32>
    %149 = arith.subf %141, %148 : vector<16x32xf32>
    %150 = arith.mulf %149, %149 : vector<16x32xf32>
    %cst_54 = arith.constant dense<0.000000e+00> : vector<16xf32>
    %151 = vector.multi_reduction <add>, %150, %cst_54 [1] : vector<16x32xf32> to vector<16xf32>
    %152 = vector.shape_cast %151 : vector<16xf32> to vector<16x1xf32>
    %cst_55 = arith.constant 3.200000e+01 : f32
    %153 = vector.broadcast %cst_55 : f32 to vector<16x1xf32>
    %154 = arith.divf %152, %153 : vector<16x1xf32>
    %155 = vector.broadcast %147 : vector<16x1xf32> to vector<16x32xf32>
    %156 = arith.subf %141, %155 : vector<16x32xf32>
    %cst_56 = arith.constant 9.99999974E-6 : f32
    %157 = vector.broadcast %cst_56 : f32 to vector<16x1xf32>
    %158 = arith.addf %154, %157 : vector<16x1xf32>
    %159 = math.rsqrt %158 : vector<16x1xf32>
    %160 = vector.broadcast %159 : vector<16x1xf32> to vector<16x32xf32>
    %161 = arith.mulf %156, %160 : vector<16x32xf32>
    %162 = vector.broadcast %142 : vector<1x32xf32> to vector<16x32xf32>
    %163 = arith.mulf %161, %162 : vector<16x32xf32>
    %164 = vector.broadcast %143 : vector<1x32xf32> to vector<16x32xf32>
    %165 = arith.addf %163, %164 : vector<16x32xf32>
    %c0_57 = arith.constant 0 : index
    %c0_58 = arith.constant 0 : index
    %166 = vector.load %arg13[%c0_57, %c0_58] : memref<32x2048xf32, #tpu.memory_space<vmem>>, vector<32x2048xf32>
    %cst_59 = arith.constant dense<0.000000e+00> : vector<16x2048xf32>
    %167 = tpu.matmul %165, %166, %cst_59 {dimension_numbers = #tpu.dot_dimension_numbers<[1], [0], [0], [1], [0, 0, 1, 1], [], []>} : vector<16x32xf32>, vector<32x2048xf32>, vector<16x2048xf32> -> vector<16x2048xf32>
    %c0_60 = arith.constant 0 : index
    %c0_61 = arith.constant 0 : index
    %168 = vector.load %arg14[%c0_60, %c0_61] : memref<1x2048xf32, #tpu.memory_space<vmem>>, vector<1x2048xf32>
    %169 = vector.broadcast %168 : vector<1x2048xf32> to vector<16x2048xf32>
    %170 = arith.addf %167, %169 : vector<16x2048xf32>
    %cst_62 = arith.constant 0.000000e+00 : f32
    %171 = vector.broadcast %cst_62 : f32 to vector<16x2048xf32>
    %172 = arith.maximumf %170, %171 : vector<16x2048xf32>
    %c0_63 = arith.constant 0 : index
    %c0_64 = arith.constant 0 : index
    %173 = vector.load %arg15[%c0_63, %c0_64] : memref<2048x32xf32, #tpu.memory_space<vmem>>, vector<2048x32xf32>
    %cst_65 = arith.constant dense<0.000000e+00> : vector<16x32xf32>
    %174 = tpu.matmul %172, %173, %cst_65 {dimension_numbers = #tpu.dot_dimension_numbers<[1], [0], [0], [1], [0, 0, 1, 1], [], []>} : vector<16x2048xf32>, vector<2048x32xf32>, vector<16x32xf32> -> vector<16x32xf32>
    %c0_66 = arith.constant 0 : index
    %c0_67 = arith.constant 0 : index
    %175 = vector.load %arg16[%c0_66, %c0_67] : memref<1x32xf32, #tpu.memory_space<vmem>>, vector<1x32xf32>
    %176 = vector.broadcast %175 : vector<1x32xf32> to vector<16x32xf32>
    %177 = arith.addf %174, %176 : vector<16x32xf32>
    %178 = arith.addf %165, %177 : vector<16x32xf32>
    %c0_68 = arith.constant 0 : index
    %c0_69 = arith.constant 0 : index
    %179 = vector.load %arg17[%c0_68, %c0_69] : memref<1x32xf32, #tpu.memory_space<vmem>>, vector<1x32xf32>
    %c0_70 = arith.constant 0 : index
    %c0_71 = arith.constant 0 : index
    %180 = vector.load %arg18[%c0_70, %c0_71] : memref<1x32xf32, #tpu.memory_space<vmem>>, vector<1x32xf32>
    %cst_72 = arith.constant dense<0.000000e+00> : vector<16xf32>
    %181 = vector.multi_reduction <add>, %178, %cst_72 [1] : vector<16x32xf32> to vector<16xf32>
    %182 = vector.shape_cast %181 : vector<16xf32> to vector<16x1xf32>
    %cst_73 = arith.constant 3.200000e+01 : f32
    %183 = vector.broadcast %cst_73 : f32 to vector<16x1xf32>
    %184 = arith.divf %182, %183 : vector<16x1xf32>
    %185 = vector.broadcast %184 : vector<16x1xf32> to vector<16x32xf32>
    %186 = arith.subf %178, %185 : vector<16x32xf32>
    %187 = arith.mulf %186, %186 : vector<16x32xf32>
    %cst_74 = arith.constant dense<0.000000e+00> : vector<16xf32>
    %188 = vector.multi_reduction <add>, %187, %cst_74 [1] : vector<16x32xf32> to vector<16xf32>
    %189 = vector.shape_cast %188 : vector<16xf32> to vector<16x1xf32>
    %cst_75 = arith.constant 3.200000e+01 : f32
    %190 = vector.broadcast %cst_75 : f32 to vector<16x1xf32>
    %191 = arith.divf %189, %190 : vector<16x1xf32>
    %192 = vector.broadcast %184 : vector<16x1xf32> to vector<16x32xf32>
    %193 = arith.subf %178, %192 : vector<16x32xf32>
    %cst_76 = arith.constant 9.99999974E-6 : f32
    %194 = vector.broadcast %cst_76 : f32 to vector<16x1xf32>
    %195 = arith.addf %191, %194 : vector<16x1xf32>
    %196 = math.rsqrt %195 : vector<16x1xf32>
    %197 = vector.broadcast %196 : vector<16x1xf32> to vector<16x32xf32>
    %198 = arith.mulf %193, %197 : vector<16x32xf32>
    %199 = vector.broadcast %179 : vector<1x32xf32> to vector<16x32xf32>
    %200 = arith.mulf %198, %199 : vector<16x32xf32>
    %201 = vector.broadcast %180 : vector<1x32xf32> to vector<16x32xf32>
    %202 = arith.addf %200, %201 : vector<16x32xf32>
    %c0_77 = arith.constant 0 : index
    %c0_78 = arith.constant 0 : index
    %203 = vector.load %arg19[%c0_77, %c0_78] : memref<1x32xf32, #tpu.memory_space<vmem>>, vector<1x32xf32>
    %cst_79 = arith.constant dense<0.000000e+00> : vector<1x16xf32>
    %204 = tpu.matmul %203, %202, %cst_79 {dimension_numbers = #tpu.dot_dimension_numbers<[1], [1], [0], [0], [0, 0, 1, 0], [], []>} : vector<1x32xf32>, vector<16x32xf32>, vector<1x16xf32> -> vector<1x16xf32>
    %c0_80 = arith.constant 0 : index
    %c0_81 = arith.constant 0 : index
    %205 = vector.load %arg20[%c0_80, %c0_81] : memref<1x1xf32, #tpu.memory_space<vmem>>, vector<1x1xf32>
    %206 = vector.broadcast %205 : vector<1x1xf32> to vector<1x16xf32>
    %207 = arith.addf %204, %206 : vector<1x16xf32>
    %c0_82 = arith.constant 0 : index
    %c0_83 = arith.constant 0 : index
    %c0_84 = arith.constant 0 : index
    %208 = vector.load %arg21[%c0_82, %c0_83, %c0_84] : memref<1x1x16xf32, #tpu.memory_space<vmem>>, vector<1x1x16xf32>
    %209 = vector.shape_cast %208 : vector<1x1x16xf32> to vector<1x16xf32>
    %210 = vector.shape_cast %207 : vector<1x16xf32> to vector<1x1x16xf32>
    tpu.vector_store %arg21[%c0_82, %c0_83, %c0_84], %210 {strides = array<i32>} : memref<1x1x16xf32, #tpu.memory_space<vmem>>, vector<1x1x16xf32>,
    return
  }
  func.func @transform_0(%arg0: i32) -> (i32, i32, i32) {
    %c0_i32 = arith.constant 0 : i32
    %c0_i32_0 = arith.constant 0 : i32
    %c0_i32_1 = arith.constant 0 : i32
    return %arg0, %c0_i32, %c0_i32_0 : i32, i32, i32
  }
  func.func @transform_1(%arg0: i32) -> (i32, i32) {
    %c0_i32 = arith.constant 0 : i32
    %c0_i32_0 = arith.constant 0 : i32
    %c0_i32_1 = arith.constant 0 : i32
    return %c0_i32, %c0_i32_0 : i32, i32
  }
  func.func @transform_2(%arg0: i32) -> (i32, i32) {
    %c0_i32 = arith.constant 0 : i32
    %c0_i32_0 = arith.constant 0 : i32
    %c0_i32_1 = arith.constant 0 : i32
    return %c0_i32, %c0_i32_0 : i32, i32
  }
  func.func @transform_3(%arg0: i32) -> (i32, i32) {
    %c0_i32 = arith.constant 0 : i32
    %c0_i32_0 = arith.constant 0 : i32
    %c0_i32_1 = arith.constant 0 : i32
    return %c0_i32, %c0_i32_0 : i32, i32
  }
  func.func @transform_4(%arg0: i32) -> (i32, i32) {
    %c0_i32 = arith.constant 0 : i32
    %c0_i32_0 = arith.constant 0 : i32
    %c0_i32_1 = arith.constant 0 : i32
    return %c0_i32, %c0_i32_0 : i32, i32
  }
  func.func @transform_5(%arg0: i32) -> (i32, i32) {
    %c0_i32 = arith.constant 0 : i32
    %c0_i32_0 = arith.constant 0 : i32
    %c0_i32_1 = arith.constant 0 : i32
    return %c0_i32, %c0_i32_0 : i32, i32
  }
  func.func @transform_6(%arg0: i32) -> (i32, i32) {
    %c0_i32 = arith.constant 0 : i32
    %c0_i32_0 = arith.constant 0 : i32
    %c0_i32_1 = arith.constant 0 : i32
    return %c0_i32, %c0_i32_0 : i32, i32
  }
  func.func @transform_7(%arg0: i32) -> (i32, i32) {
    %c0_i32 = arith.constant 0 : i32
    %c0_i32_0 = arith.constant 0 : i32
    %c0_i32_1 = arith.constant 0 : i32
    return %c0_i32, %c0_i32_0 : i32, i32
  }
  func.func @transform_8(%arg0: i32) -> (i32, i32) {
    %c0_i32 = arith.constant 0 : i32
    %c0_i32_0 = arith.constant 0 : i32
    %c0_i32_1 = arith.constant 0 : i32
    return %c0_i32, %c0_i32_0 : i32, i32
  }
  func.func @transform_9(%arg0: i32) -> (i32, i32) {
    %c0_i32 = arith.constant 0 : i32
    %c0_i32_0 = arith.constant 0 : i32
    %c0_i32_1 = arith.constant 0 : i32
    return %c0_i32, %c0_i32_0 : i32, i32
  }
  func.func @transform_10(%arg0: i32) -> (i32, i32) {
    %c0_i32 = arith.constant 0 : i32
    %c0_i32_0 = arith.constant 0 : i32
    %c0_i32_1 = arith.constant 0 : i32
    return %c0_i32, %c0_i32_0 : i32, i32
  }
  func.func @transform_11(%arg0: i32) -> (i32, i32) {
    %c0_i32 = arith.constant 0 : i32
    %c0_i32_0 = arith.constant 0 : i32
    %c0_i32_1 = arith.constant 0 : i32
    return %c0_i32, %c0_i32_0 : i32, i32
  }
  func.func @transform_12(%arg0: i32) -> (i32, i32) {
    %c0_i32 = arith.constant 0 : i32
    %c0_i32_0 = arith.constant 0 : i32
    %c0_i32_1 = arith.constant 0 : i32
    return %c0_i32, %c0_i32_0 : i32, i32
  }
  func.func @transform_13(%arg0: i32) -> (i32, i32) {
    %c0_i32 = arith.constant 0 : i32
    %c0_i32_0 = arith.constant 0 : i32
    %c0_i32_1 = arith.constant 0 : i32
    return %c0_i32, %c0_i32_0 : i32, i32
  }
  func.func @transform_14(%arg0: i32) -> (i32, i32) {
    %c0_i32 = arith.constant 0 : i32
    %c0_i32_0 = arith.constant 0 : i32
    %c0_i32_1 = arith.constant 0 : i32
    return %c0_i32, %c0_i32_0 : i32, i32
  }
  func.func @transform_15(%arg0: i32) -> (i32, i32) {
    %c0_i32 = arith.constant 0 : i32
    %c0_i32_0 = arith.constant 0 : i32
    %c0_i32_1 = arith.constant 0 : i32
    return %c0_i32, %c0_i32_0 : i32, i32
  }
  func.func @transform_16(%arg0: i32) -> (i32, i32) {
    %c0_i32 = arith.constant 0 : i32
    %c0_i32_0 = arith.constant 0 : i32
    %c0_i32_1 = arith.constant 0 : i32
    return %c0_i32, %c0_i32_0 : i32, i32
  }
  func.func @transform_17(%arg0: i32) -> (i32, i32) {
    %c0_i32 = arith.constant 0 : i32
    %c0_i32_0 = arith.constant 0 : i32
    %c0_i32_1 = arith.constant 0 : i32
    return %c0_i32, %c0_i32_0 : i32, i32
  }
  func.func @transform_18(%arg0: i32) -> (i32, i32) {
    %c0_i32 = arith.constant 0 : i32
    %c0_i32_0 = arith.constant 0 : i32
    %c0_i32_1 = arith.constant 0 : i32
    return %c0_i32, %c0_i32_0 : i32, i32
  }
  func.func @transform_19(%arg0: i32) -> (i32, i32) {
    %c0_i32 = arith.constant 0 : i32
    %c0_i32_0 = arith.constant 0 : i32
    %c0_i32_1 = arith.constant 0 : i32
    return %c0_i32, %c0_i32_0 : i32, i32
  }
  func.func @transform_20(%arg0: i32) -> (i32, i32, i32) {
    %c0_i32 = arith.constant 0 : i32
    %c0_i32_0 = arith.constant 0 : i32
    %c0_i32_1 = arith.constant 0 : i32
    return %arg0, %c0_i32, %c0_i32_0 : i32, i32, i32
  }
}

</mosaic_0001>

<llo_original>
// kernel: tpu_custom_call.1
$region0: #{tpu_custom_call.1}
  #allocation0 [shape = 'u32[]', space=smem, size = 0x4, offset = 0x4, fixed_abs, tag = 'smem constant byte address 0x4 - core index']
  #allocation1 [shape = 'u32[144,128]{1,0:T(1,128)}', space=vmem, size = 0x12000, scoped, tag = 'internal scratch']
  #allocation2 [shape = 'f32[1,1]{1,0:T(1,128)S(1)}', space=vmem, size = 0x200, scoped, tag = 'scoped memory for tpu_custom_call.1']
  %s0 = inlined_call_operand.vmem [shape: f32[2,16,1], index: 0, kind: input, shape index: {}]
  %s1 = inlined_call_operand.vmem [shape: f32[16,32], index: 1, kind: input, shape index: {}]
  %s2 = inlined_call_operand.vmem [shape: f32[1,32], index: 2, kind: input, shape index: {}]
  %s3 = inlined_call_operand.vmem [shape: f32[32,96], index: 3, kind: input, shape index: {}]
  %s4 = inlined_call_operand.vmem [shape: f32[1,96], index: 4, kind: input, shape index: {}]
  %s5 = inlined_call_operand.vmem [shape: f32[32,32], index: 5, kind: input, shape index: {}]
  %s6 = inlined_call_operand.vmem [shape: f32[1,32], index: 6, kind: input, shape index: {}]
  %s7 = inlined_call_operand.vmem [shape: f32[1,32], index: 7, kind: input, shape index: {}]
  %s8 = inlined_call_operand.vmem [shape: f32[1,32], index: 8, kind: input, shape index: {}]
  %s9 = inlined_call_operand.vmem [shape: f32[1,32], index: 9, kind: input, shape index: {}]
  %s10 = inlined_call_operand.vmem [shape: f32[1,32], index: 10, kind: input, shape index: {}]
  %s11 = inlined_call_operand.vmem [shape: f32[1,32], index: 11, kind: input, shape index: {}]
  %s12 = inlined_call_operand.vmem [shape: f32[32,2048], index: 12, kind: input, shape index: {}]
  %s13 = inlined_call_operand.vmem [shape: f32[1,2048], index: 13, kind: input, shape index: {}]
  %s14 = inlined_call_operand.vmem [shape: f32[2048,32], index: 14, kind: input, shape index: {}]
  %s15 = inlined_call_operand.vmem [shape: f32[1,32], index: 15, kind: input, shape index: {}]
  %s16 = inlined_call_operand.vmem [shape: f32[1,32], index: 16, kind: input, shape index: {}]
  %s17 = inlined_call_operand.vmem [shape: f32[1,32], index: 17, kind: input, shape index: {}]
  %s18 = inlined_call_operand.vmem [shape: f32[1,32], index: 18, kind: input, shape index: {}]
  %s19 = inlined_call_operand.<no memory space> [shape: f32[1,1], index: 19, kind: input, shape index: {}]
  %s20 = inlined_call_operand.hbm [shape: f32[2,1,16], index: 20, kind: output, shape index: {}]
  %s21 = sld [smem:[#allocation0]]
  $region113: #{tpu_custom_call.1} parent=0
    _
  %s23 = ssub.s32 1, %s21
  %s24 = scalar_select 0, %s23, %s21
  %v25 = vstv %s19
  %26 = vst [vmem:[#allocation2] sm:$0x1] %v25
  $region1: #{tpu_custom_call.1} parent=0
    #allocation3 [shape = 'u8[1024]{0}', space=vmem, size = 0x400, scoped, tag = 'output window, operand 0']
    #allocation4 [shape = 's32[2]{0}', space=sflag, size = 0x8, scoped, tag = 'scoped memory for tpu_custom_call.1']
    %27 = vsyncpa [#allocation4], 0
    %s28 = scalar_lea.sflag [#allocation4], 1
    %29 = vsyncpa %s28, 0
    loop: start=0, step=1, limit=4
    $region2: #{tpu_custom_call.1} parent=1 // loop_pre_header
      _
    $region3: #{tpu_custom_call.1} parent=1 // loop_header
      %s31 = sphi 0, %s35
      %p32 = scmp.ge.s32.totalorder %s31, 4
      %s41 = sphi 0, %s43
      %s44 = sphi 0, %s41
      %s45 = sphi 0, %s44
      %s61 = sphi 0, %s45
      %s65 = sphi 0, %s65
      %s67 = sphi 0, %s65
      %s68 = sphi 0, %s67
      %s82 = sphi 0, %s68
      %s86 = sphi 0, %s86
      %s88 = sphi 0, %s86
      %s89 = sphi 0, %s88
      %s103 = sphi 0, %s89
      %s107 = sphi 0, %s107
      %s109 = sphi 0, %s107
      %s110 = sphi 0, %s109
      %s124 = sphi 0, %s110
      %s128 = sphi 0, %s128
      %s130 = sphi 0, %s128
      %s131 = sphi 0, %s130
      %s145 = sphi 0, %s131
      %s149 = sphi 0, %s149
      %s151 = sphi 0, %s149
      %s152 = sphi 0, %s151
      %s166 = sphi 0, %s152
      %s170 = sphi 0, %s170
      %s172 = sphi 0, %s170
      %s173 = sphi 0, %s172
      %s187 = sphi 0, %s173
      %s191 = sphi 0, %s191
      %s193 = sphi 0, %s191
      %s194 = sphi 0, %s193
      %s208 = sphi 0, %s194
      %s212 = sphi 0, %s212
      %s214 = sphi 0, %s212
      %s215 = sphi 0, %s214
      %s229 = sphi 0, %s215
      %s233 = sphi 0, %s233
      %s235 = sphi 0, %s233
      %s236 = sphi 0, %s235
      %s250 = sphi 0, %s236
      %s254 = sphi 0, %s254
      %s256 = sphi 0, %s254
      %s257 = sphi 0, %s256
      %s271 = sphi 0, %s257
      %s275 = sphi 0, %s275
      %s277 = sphi 0, %s275
      %s278 = sphi 0, %s277
      %s292 = sphi 0, %s278
      %s296 = sphi 0, %s296
      %s298 = sphi 0, %s296
      %s299 = sphi 0, %s298
      %s313 = sphi 0, %s299
      %s317 = sphi 0, %s317
      %s319 = sphi 0, %s317
      %s320 = sphi 0, %s319
      %s334 = sphi 0, %s320
      %s338 = sphi 0, %s338
      %s340 = sphi 0, %s338
      %s341 = sphi 0, %s340
      %s355 = sphi 0, %s341
      %s359 = sphi 0, %s359
      %s361 = sphi 0, %s359
      %s362 = sphi 0, %s361
      %s376 = sphi 0, %s362
      %s380 = sphi 0, %s380
      %s382 = sphi 0, %s380
      %s383 = sphi 0, %s382
      %s397 = sphi 0, %s383
      %s401 = sphi 0, %s401
      %s403 = sphi 0, %s401
      %s404 = sphi 0, %s403
      %s418 = sphi 0, %s404
      %s422 = sphi 0, %s422
      %s424 = sphi 0, %s422
      %s425 = sphi 0, %s424
      %s439 = sphi 0, %s425
      %s443 = sphi 0, %s443
      %s445 = sphi 0, %s443
      %s446 = sphi 0, %s445
      %s460 = sphi 0, %s446
      %s466 = sphi 0, %s468
      %s469 = sphi 0, %s466
      %s470 = sphi 0, %s469
      %s486 = sphi 0, %s470
    $region4: #{tpu_custom_call.1} parent=1 // loop_header_branch
      %34 = sbr.rel (%p32) target = $region8
    $region5: #{tpu_custom_call.1} parent=1 // loop_body
      %s36 = ssub.s32 %s31, 1
      %s37 = ssub.s32 %s31, 2
      %s38 = sadd.s32 %s31, 1
      %s39 = ssub.s32 %s31, %s38
      %p40 = scmp.eq.s32.totalorder %s39, 0
      %s42 = sadd.s32 %s41, 1
      %s43 = scalar_select %p40, %s41, %s42
      %p46 = pneg %p40
      %p47 = scmp.eq.s32.totalorder %s31, 1
      %p48 = por %p46, %p47
      %p49 = scmp.ne.s32.totalorder %s41, %s44
      %p50 = scmp.eq.s32.totalorder %s31, 0
      %p51 = por %p49, %p50
      %p52 = scmp.ne.s32.totalorder %s41, %s44
      %p53 = scmp.eq.s32.totalorder %s36, 1
      %p54 = por %p52, %p53
      %p55 = scmp.ne.s32.totalorder %s44, %s45
      %p56 = scmp.eq.s32.totalorder %s36, 0
      %p57 = por %p55, %p56
      %p58 = scmp.ne.s32.totalorder %s44, %s45
      %p59 = scmp.eq.s32.totalorder %s37, 1
      %p60 = por %p58, %p59
      %p62 = scmp.ne.s32.totalorder %s45, %s61
      %p63 = scmp.eq.s32.totalorder %s37, 0
      %p64 = por %p62, %p63
      %s66 = sadd.s32 %s65, 1
      %p69 = scmp.eq.s32.totalorder %s31, 1
      %p70 = scmp.ne.s32.totalorder %s65, %s67
      %p71 = scmp.eq.s32.totalorder %s31, 0
      %p72 = por %p70, %p71
      %p73 = scmp.ne.s32.totalorder %s65, %s67
      %p74 = scmp.eq.s32.totalorder %s36, 1
      %p75 = por %p73, %p74
      %p76 = scmp.ne.s32.totalorder %s67, %s68
      %p77 = scmp.eq.s32.totalorder %s36, 0
      %p78 = por %p76, %p77
      %p79 = scmp.ne.s32.totalorder %s67, %s68
      %p80 = scmp.eq.s32.totalorder %s37, 1
      %p81 = por %p79, %p80
      %p83 = scmp.ne.s32.totalorder %s68, %s82
      %p84 = scmp.eq.s32.totalorder %s37, 0
      %p85 = por %p83, %p84
      %s87 = sadd.s32 %s86, 1
      %p90 = scmp.eq.s32.totalorder %s31, 1
      %p91 = scmp.ne.s32.totalorder %s86, %s88
      %p92 = scmp.eq.s32.totalorder %s31, 0
      %p93 = por %p91, %p92
      %p94 = scmp.ne.s32.totalorder %s86, %s88
      %p95 = scmp.eq.s32.totalorder %s36, 1
      %p96 = por %p94, %p95
      %p97 = scmp.ne.s32.totalorder %s88, %s89
      %p98 = scmp.eq.s32.totalorder %s36, 0
      %p99 = por %p97, %p98
      %p100 = scmp.ne.s32.totalorder %s88, %s89
      %p101 = scmp.eq.s32.totalorder %s37, 1
      %p102 = por %p100, %p101
      %p104 = scmp.ne.s32.totalorder %s89, %s103
      %p105 = scmp.eq.s32.totalorder %s37, 0
      %p106 = por %p104, %p105
      %s108 = sadd.s32 %s107, 1
      %p111 = scmp.eq.s32.totalorder %s31, 1
      %p112 = scmp.ne.s32.totalorder %s107, %s109
      %p113 = scmp.eq.s32.totalorder %s31, 0
      %p114 = por %p112, %p113
      %p115 = scmp.ne.s32.totalorder %s107, %s109
      %p116 = scmp.eq.s32.totalorder %s36, 1
      %p117 = por %p115, %p116
      %p118 = scmp.ne.s32.totalorder %s109, %s110
      %p119 = scmp.eq.s32.totalorder %s36, 0
      %p120 = por %p118, %p119
      %p121 = scmp.ne.s32.totalorder %s109, %s110
      %p122 = scmp.eq.s32.totalorder %s37, 1
      %p123 = por %p121, %p122
      %p125 = scmp.ne.s32.totalorder %s110, %s124
      %p126 = scmp.eq.s32.totalorder %s37, 0
      %p127 = por %p125, %p126
      %s129 = sadd.s32 %s128, 1
      %p132 = scmp.eq.s32.totalorder %s31, 1
      %p133 = scmp.ne.s32.totalorder %s128, %s130
      %p134 = scmp.eq.s32.totalorder %s31, 0
      %p135 = por %p133, %p134
      %p136 = scmp.ne.s32.totalorder %s128, %s130
      %p137 = scmp.eq.s32.totalorder %s36, 1
      %p138 = por %p136, %p137
      %p139 = scmp.ne.s32.totalorder %s130, %s131
      %p140 = scmp.eq.s32.totalorder %s36, 0
      %p141 = por %p139, %p140
      %p142 = scmp.ne.s32.totalorder %s130, %s131
      %p143 = scmp.eq.s32.totalorder %s37, 1
      %p144 = por %p142, %p143
      %p146 = scmp.ne.s32.totalorder %s131, %s145
      %p147 = scmp.eq.s32.totalorder %s37, 0
      %p148 = por %p146, %p147
      %s150 = sadd.s32 %s149, 1
      %p153 = scmp.eq.s32.totalorder %s31, 1
      %p154 = scmp.ne.s32.totalorder %s149, %s151
      %p155 = scmp.eq.s32.totalorder %s31, 0
      %p156 = por %p154, %p155
      %p157 = scmp.ne.s32.totalorder %s149, %s151
      %p158 = scmp.eq.s32.totalorder %s36, 1
      %p159 = por %p157, %p158
      %p160 = scmp.ne.s32.totalorder %s151, %s152
      %p161 = scmp.eq.s32.totalorder %s36, 0
      %p162 = por %p160, %p161
      %p163 = scmp.ne.s32.totalorder %s151, %s152
      %p164 = scmp.eq.s32.totalorder %s37, 1
      %p165 = por %p163, %p164
      %p167 = scmp.ne.s32.totalorder %s152, %s166
      %p168 = scmp.eq.s32.totalorder %s37, 0
      %p169 = por %p167, %p168
      %s171 = sadd.s32 %s170, 1
      %p174 = scmp.eq.s32.totalorder %s31, 1
      %p175 = scmp.ne.s32.totalorder %s170, %s172
      %p176 = scmp.eq.s32.totalorder %s31, 0
      %p177 = por %p175, %p176
      %p178 = scmp.ne.s32.totalorder %s170, %s172
      %p179 = scmp.eq.s32.totalorder %s36, 1
      %p180 = por %p178, %p179
      %p181 = scmp.ne.s32.totalorder %s172, %s173
      %p182 = scmp.eq.s32.totalorder %s36, 0
      %p183 = por %p181, %p182
      %p184 = scmp.ne.s32.totalorder %s172, %s173
      %p185 = scmp.eq.s32.totalorder %s37, 1
      %p186 = por %p184, %p185
      %p188 = scmp.ne.s32.totalorder %s173, %s187
      %p189 = scmp.eq.s32.totalorder %s37, 0
      %p190 = por %p188, %p189
      %s192 = sadd.s32 %s191, 1
      %p195 = scmp.eq.s32.totalorder %s31, 1
      %p196 = scmp.ne.s32.totalorder %s191, %s193
      %p197 = scmp.eq.s32.totalorder %s31, 0
      %p198 = por %p196, %p197
      %p199 = scmp.ne.s32.totalorder %s191, %s193
      %p200 = scmp.eq.s32.totalorder %s36, 1
      %p201 = por %p199, %p200
      %p202 = scmp.ne.s32.totalorder %s193, %s194
      %p203 = scmp.eq.s32.totalorder %s36, 0
      %p204 = por %p202, %p203
      %p205 = scmp.ne.s32.totalorder %s193, %s194
      %p206 = scmp.eq.s32.totalorder %s37, 1
      %p207 = por %p205, %p206
      %p209 = scmp.ne.s32.totalorder %s194, %s208
      %p210 = scmp.eq.s32.totalorder %s37, 0
      %p211 = por %p209, %p210
      %s213 = sadd.s32 %s212, 1
      %p216 = scmp.eq.s32.totalorder %s31, 1
      %p217 = scmp.ne.s32.totalorder %s212, %s214
      %p218 = scmp.eq.s32.totalorder %s31, 0
      %p219 = por %p217, %p218
      %p220 = scmp.ne.s32.totalorder %s212, %s214
      %p221 = scmp.eq.s32.totalorder %s36, 1
      %p222 = por %p220, %p221
      %p223 = scmp.ne.s32.totalorder %s214, %s215
      %p224 = scmp.eq.s32.totalorder %s36, 0
      %p225 = por %p223, %p224
      %p226 = scmp.ne.s32.totalorder %s214, %s215
      %p227 = scmp.eq.s32.totalorder %s37, 1
      %p228 = por %p226, %p227
      %p230 = scmp.ne.s32.totalorder %s215, %s229
      %p231 = scmp.eq.s32.totalorder %s37, 0
      %p232 = por %p230, %p231
      %s234 = sadd.s32 %s233, 1
      %p237 = scmp.eq.s32.totalorder %s31, 1
      %p238 = scmp.ne.s32.totalorder %s233, %s235
      %p239 = scmp.eq.s32.totalorder %s31, 0
      %p240 = por %p238, %p239
      %p241 = scmp.ne.s32.totalorder %s233, %s235
      %p242 = scmp.eq.s32.totalorder %s36, 1
      %p243 = por %p241, %p242
      %p244 = scmp.ne.s32.totalorder %s235, %s236
      %p245 = scmp.eq.s32.totalorder %s36, 0
      %p246 = por %p244, %p245
      %p247 = scmp.ne.s32.totalorder %s235, %s236
      %p248 = scmp.eq.s32.totalorder %s37, 1
      %p249 = por %p247, %p248
      %p251 = scmp.ne.s32.totalorder %s236, %s250
      %p252 = scmp.eq.s32.totalorder %s37, 0
      %p253 = por %p251, %p252
      %s255 = sadd.s32 %s254, 1
      %p258 = scmp.eq.s32.totalorder %s31, 1
      %p259 = scmp.ne.s32.totalorder %s254, %s256
      %p260 = scmp.eq.s32.totalorder %s31, 0
      %p261 = por %p259, %p260
      %p262 = scmp.ne.s32.totalorder %s254, %s256
      %p263 = scmp.eq.s32.totalorder %s36, 1
      %p264 = por %p262, %p263
      %p265 = scmp.ne.s32.totalorder %s256, %s257
      %p266 = scmp.eq.s32.totalorder %s36, 0
      %p267 = por %p265, %p266
      %p268 = scmp.ne.s32.totalorder %s256, %s257
      %p269 = scmp.eq.s32.totalorder %s37, 1
      %p270 = por %p268, %p269
      %p272 = scmp.ne.s32.totalorder %s257, %s271
      %p273 = scmp.eq.s32.totalorder %s37, 0
      %p274 = por %p272, %p273
      %s276 = sadd.s32 %s275, 1
      %p279 = scmp.eq.s32.totalorder %s31, 1
      %p280 = scmp.ne.s32.totalorder %s275, %s277
      %p281 = scmp.eq.s32.totalorder %s31, 0
      %p282 = por %p280, %p281
      %p283 = scmp.ne.s32.totalorder %s275, %s277
      %p284 = scmp.eq.s32.totalorder %s36, 1
      %p285 = por %p283, %p284
      %p286 = scmp.ne.s32.totalorder %s277, %s278
      %p287 = scmp.eq.s32.totalorder %s36, 0
      %p288 = por %p286, %p287
      %p289 = scmp.ne.s32.totalorder %s277, %s278
      %p290 = scmp.eq.s32.totalorder %s37, 1
      %p291 = por %p289, %p290
      %p293 = scmp.ne.s32.totalorder %s278, %s292
      %p294 = scmp.eq.s32.totalorder %s37, 0
      %p295 = por %p293, %p294
      %s297 = sadd.s32 %s296, 1
      %p300 = scmp.eq.s32.totalorder %s31, 1
      %p301 = scmp.ne.s32.totalorder %s296, %s298
      %p302 = scmp.eq.s32.totalorder %s31, 0
      %p303 = por %p301, %p302
      %p304 = scmp.ne.s32.totalorder %s296, %s298
      %p305 = scmp.eq.s32.totalorder %s36, 1
      %p306 = por %p304, %p305
      %p307 = scmp.ne.s32.totalorder %s298, %s299
      %p308 = scmp.eq.s32.totalorder %s36, 0
      %p309 = por %p307, %p308
      %p310 = scmp.ne.s32.totalorder %s298, %s299
      %p311 = scmp.eq.s32.totalorder %s37, 1
      %p312 = por %p310, %p311
      %p314 = scmp.ne.s32.totalorder %s299, %s313
      %p315 = scmp.eq.s32.totalorder %s37, 0
      %p316 = por %p314, %p315
      %s318 = sadd.s32 %s317, 1
      %p321 = scmp.eq.s32.totalorder %s31, 1
      %p322 = scmp.ne.s32.totalorder %s317, %s319
      %p323 = scmp.eq.s32.totalorder %s31, 0
      %p324 = por %p322, %p323
      %p325 = scmp.ne.s32.totalorder %s317, %s319
      %p326 = scmp.eq.s32.totalorder %s36, 1
      %p327 = por %p325, %p326
      %p328 = scmp.ne.s32.totalorder %s319, %s320
      %p329 = scmp.eq.s32.totalorder %s36, 0
      %p330 = por %p328, %p329
      %p331 = scmp.ne.s32.totalorder %s319, %s320
      %p332 = scmp.eq.s32.totalorder %s37, 1
      %p333 = por %p331, %p332
      %p335 = scmp.ne.s32.totalorder %s320, %s334
      %p336 = scmp.eq.s32.totalorder %s37, 0
      %p337 = por %p335, %p336
      %s339 = sadd.s32 %s338, 1
      %p342 = scmp.eq.s32.totalorder %s31, 1
      %p343 = scmp.ne.s32.totalorder %s338, %s340
      %p344 = scmp.eq.s32.totalorder %s31, 0
      %p345 = por %p343, %p344
      %p346 = scmp.ne.s32.totalorder %s338, %s340
      %p347 = scmp.eq.s32.totalorder %s36, 1
      %p348 = por %p346, %p347
      %p349 = scmp.ne.s32.totalorder %s340, %s341
      %p350 = scmp.eq.s32.totalorder %s36, 0
      %p351 = por %p349, %p350
      %p352 = scmp.ne.s32.totalorder %s340, %s341
      %p353 = scmp.eq.s32.totalorder %s37, 1
      %p354 = por %p352, %p353
      %p356 = scmp.ne.s32.totalorder %s341, %s355
      %p357 = scmp.eq.s32.totalorder %s37, 0
      %p358 = por %p356, %p357
      %s360 = sadd.s32 %s359, 1
      %p363 = scmp.eq.s32.totalorder %s31, 1
      %p364 = scmp.ne.s32.totalorder %s359, %s361
      %p365 = scmp.eq.s32.totalorder %s31, 0
      %p366 = por %p364, %p365
      %p367 = scmp.ne.s32.totalorder %s359, %s361
      %p368 = scmp.eq.s32.totalorder %s36, 1
      %p369 = por %p367, %p368
      %p370 = scmp.ne.s32.totalorder %s361, %s362
      %p371 = scmp.eq.s32.totalorder %s36, 0
      %p372 = por %p370, %p371
      %p373 = scmp.ne.s32.totalorder %s361, %s362
      %p374 = scmp.eq.s32.totalorder %s37, 1
      %p375 = por %p373, %p374
      %p377 = scmp.ne.s32.totalorder %s362, %s376
      %p378 = scmp.eq.s32.totalorder %s37, 0
      %p379 = por %p377, %p378
      %s381 = sadd.s32 %s380, 1
      %p384 = scmp.eq.s32.totalorder %s31, 1
      %p385 = scmp.ne.s32.totalorder %s380, %s382
      %p386 = scmp.eq.s32.totalorder %s31, 0
      %p387 = por %p385, %p386
      %p388 = scmp.ne.s32.totalorder %s380, %s382
      %p389 = scmp.eq.s32.totalorder %s36, 1
      %p390 = por %p388, %p389
      %p391 = scmp.ne.s32.totalorder %s382, %s383
      %p392 = scmp.eq.s32.totalorder %s36, 0
      %p393 = por %p391, %p392
      %p394 = scmp.ne.s32.totalorder %s382, %s383
      %p395 = scmp.eq.s32.totalorder %s37, 1
      %p396 = por %p394, %p395
      %p398 = scmp.ne.s32.totalorder %s383, %s397
      %p399 = scmp.eq.s32.totalorder %s37, 0
      %p400 = por %p398, %p399
      %s402 = sadd.s32 %s401, 1
      %p405 = scmp.eq.s32.totalorder %s31, 1
      %p406 = scmp.ne.s32.totalorder %s401, %s403
      %p407 = scmp.eq.s32.totalorder %s31, 0
      %p408 = por %p406, %p407
      %p409 = scmp.ne.s32.totalorder %s401, %s403
      %p410 = scmp.eq.s32.totalorder %s36, 1
      %p411 = por %p409, %p410
      %p412 = scmp.ne.s32.totalorder %s403, %s404
      %p413 = scmp.eq.s32.totalorder %s36, 0
      %p414 = por %p412, %p413
      %p415 = scmp.ne.s32.totalorder %s403, %s404
      %p416 = scmp.eq.s32.totalorder %s37, 1
      %p417 = por %p415, %p416
      %p419 = scmp.ne.s32.totalorder %s404, %s418
      %p420 = scmp.eq.s32.totalorder %s37, 0
      %p421 = por %p419, %p420
      %s423 = sadd.s32 %s422, 1
      %p426 = scmp.eq.s32.totalorder %s31, 1
      %p427 = scmp.ne.s32.totalorder %s422, %s424
      %p428 = scmp.eq.s32.totalorder %s31, 0
      %p429 = por %p427, %p428
      %p430 = scmp.ne.s32.totalorder %s422, %s424
      %p431 = scmp.eq.s32.totalorder %s36, 1
      %p432 = por %p430, %p431
      %p433 = scmp.ne.s32.totalorder %s424, %s425
      %p434 = scmp.eq.s32.totalorder %s36, 0
      %p435 = por %p433, %p434
      %p436 = scmp.ne.s32.totalorder %s424, %s425
      %p437 = scmp.eq.s32.totalorder %s37, 1
      %p438 = por %p436, %p437
      %p440 = scmp.ne.s32.totalorder %s425, %s439
      %p441 = scmp.eq.s32.totalorder %s37, 0
      %p442 = por %p440, %p441
      %s444 = sadd.s32 %s443, 1
      %p447 = scmp.eq.s32.totalorder %s31, 1
      %p448 = scmp.ne.s32.totalorder %s443, %s445
      %p449 = scmp.eq.s32.totalorder %s31, 0
      %p450 = por %p448, %p449
      %p451 = scmp.ne.s32.totalorder %s443, %s445
      %p452 = scmp.eq.s32.totalorder %s36, 1
      %p453 = por %p451, %p452
      %p454 = scmp.ne.s32.totalorder %s445, %s446
      %p455 = scmp.eq.s32.totalorder %s36, 0
      %p456 = por %p454, %p455
      %p457 = scmp.ne.s32.totalorder %s445, %s446
      %p458 = scmp.eq.s32.totalorder %s37, 1
      %p459 = por %p457, %p458
      %p461 = scmp.ne.s32.totalorder %s446, %s460
      %p462 = scmp.eq.s32.totalorder %s37, 0
      %p463 = por %p461, %p462
      %s464 = ssub.s32 %s31, %s38
      %p465 = scmp.eq.s32.totalorder %s464, 0
      %s467 = sadd.s32 %s466, 1
      %s468 = scalar_select %p465, %s466, %s467
      %p471 = pneg %p465
      %p472 = scmp.eq.s32.totalorder %s31, 1
      %p473 = por %p471, %p472
      %p474 = scmp.ne.s32.totalorder %s466, %s469
      %p475 = scmp.eq.s32.totalorder %s31, 0
      %p476 = por %p474, %p475
      %p477 = scmp.ne.s32.totalorder %s466, %s469
      %p478 = scmp.eq.s32.totalorder %s36, 1
      %p479 = por %p477, %p478
      %p480 = scmp.ne.s32.totalorder %s469, %s470
      %p481 = scmp.eq.s32.totalorder %s36, 0
      %p482 = por %p480, %p481
      %p483 = scmp.ne.s32.totalorder %s469, %s470
      %p484 = scmp.eq.s32.totalorder %s37, 1
      %p485 = por %p483, %p484
      %p487 = scmp.ne.s32.totalorder %s470, %s486
      %p488 = scmp.eq.s32.totalorder %s37, 0
      %p489 = por %p487, %p488
      %p490 = scmp.le.s32.totalorder 1, %s31
      %p491 = scmp.lt.s32.totalorder %s31, 3
      %p492 = pnand %p490, %p491
      %p493 = pneg %p492
      // Predicated region
      $region9: #{tpu_custom_call.1} parent=5 // pred_check
        _
      $region10: #{tpu_custom_call.1} parent=5 // pred_check_branch
        %495 = sbr.rel (%p492) target = $region12
      $region11: #{tpu_custom_call.1} parent=5 // pred_region
        %s496 = ssub.s32 %s31, 1
        // Predicated region
        $region13: #{tpu_custom_call.1} parent=11 // pred_check
          %p497 = pneg %p78
        $region14: #{tpu_custom_call.1} parent=11 // pred_check_branch
          %499 = sbr.rel (%p497) target = $region16
        $region15: #{tpu_custom_call.1} parent=11 // pred_region
          _
        $region16: #{tpu_custom_call.1} parent=11 // pred_fallthru
          _
        // Predicated region
        $region17: #{tpu_custom_call.1} parent=11 // pred_check
          %p500 = pneg %p99
        $region18: #{tpu_custom_call.1} parent=11 // pred_check_branch
          %502 = sbr.rel (%p500) target = $region20
        $region19: #{tpu_custom_call.1} parent=11 // pred_region
          _
        $region20: #{tpu_custom_call.1} parent=11 // pred_fallthru
          _
        // Predicated region
        $region21: #{tpu_custom_call.1} parent=11 // pred_check
          %p503 = pneg %p120
        $region22: #{tpu_custom_call.1} parent=11 // pred_check_branch
          %505 = sbr.rel (%p503) target = $region24
        $region23: #{tpu_custom_call.1} parent=11 // pred_region
          _
        $region24: #{tpu_custom_call.1} parent=11 // pred_fallthru
          _
        // Predicated region
        $region25: #{tpu_custom_call.1} parent=11 // pred_check
          %p506 = pneg %p141
        $region26: #{tpu_custom_call.1} parent=11 // pred_check_branch
          %508 = sbr.rel (%p506) target = $region28
        $region27: #{tpu_custom_call.1} parent=11 // pred_region
          _
        $region28: #{tpu_custom_call.1} parent=11 // pred_fallthru
          _
        // Predicated region
        $region29: #{tpu_custom_call.1} parent=11 // pred_check
          %p509 = pneg %p162
        $region30: #{tpu_custom_call.1} parent=11 // pred_check_branch
          %511 = sbr.rel (%p509) target = $region32
        $region31: #{tpu_custom_call.1} parent=11 // pred_region
          _
        $region32: #{tpu_custom_call.1} parent=11 // pred_fallthru
          _
        // Predicated region
        $region33: #{tpu_custom_call.1} parent=11 // pred_check
          %p512 = pneg %p183
        $region34: #{tpu_custom_call.1} parent=11 // pred_check_branch
          %514 = sbr.rel (%p512) target = $region36
        $region35: #{tpu_custom_call.1} parent=11 // pred_region
          _
        $region36: #{tpu_custom_call.1} parent=11 // pred_fallthru
          _
        // Predicated region
        $region37: #{tpu_custom_call.1} parent=11 // pred_check
          %p515 = pneg %p204
        $region38: #{tpu_custom_call.1} parent=11 // pred_check_branch
          %517 = sbr.rel (%p515) target = $region40
        $region39: #{tpu_custom_call.1} parent=11 // pred_region
          _
        $region40: #{tpu_custom_call.1} parent=11 // pred_fallthru
          _
        // Predicated region
        $region41: #{tpu_custom_call.1} parent=11 // pred_check
          %p518 = pneg %p225
        $region42: #{tpu_custom_call.1} parent=11 // pred_check_branch
          %520 = sbr.rel (%p518) target = $region44
        $region43: #{tpu_custom_call.1} parent=11 // pred_region
          _
        $region44: #{tpu_custom_call.1} parent=11 // pred_fallthru
          _
        // Predicated region
        $region45: #{tpu_custom_call.1} parent=11 // pred_check
          %p521 = pneg %p246
        $region46: #{tpu_custom_call.1} parent=11 // pred_check_branch
          %523 = sbr.rel (%p521) target = $region48
        $region47: #{tpu_custom_call.1} parent=11 // pred_region
          _
        $region48: #{tpu_custom_call.1} parent=11 // pred_fallthru
          _
        // Predicated region
        $region49: #{tpu_custom_call.1} parent=11 // pred_check
          %p524 = pneg %p267
        $region50: #{tpu_custom_call.1} parent=11 // pred_check_branch
          %526 = sbr.rel (%p524) target = $region52
        $region51: #{tpu_custom_call.1} parent=11 // pred_region
          _
        $region52: #{tpu_custom_call.1} parent=11 // pred_fallthru
          _
        // Predicated region
        $region53: #{tpu_custom_call.1} parent=11 // pred_check
          %p527 = pneg %p288
        $region54: #{tpu_custom_call.1} parent=11 // pred_check_branch
          %529 = sbr.rel (%p527) target = $region56
        $region55: #{tpu_custom_call.1} parent=11 // pred_region
          _
        $region56: #{tpu_custom_call.1} parent=11 // pred_fallthru
          _
        // Predicated region
        $region57: #{tpu_custom_call.1} parent=11 // pred_check
          %p530 = pneg %p309
        $region58: #{tpu_custom_call.1} parent=11 // pred_check_branch
          %532 = sbr.rel (%p530) target = $region60
        $region59: #{tpu_custom_call.1} parent=11 // pred_region
          _
        $region60: #{tpu_custom_call.1} parent=11 // pred_fallthru
          _
        // Predicated region
        $region61: #{tpu_custom_call.1} parent=11 // pred_check
          %p533 = pneg %p330
        $region62: #{tpu_custom_call.1} parent=11 // pred_check_branch
          %535 = sbr.rel (%p533) target = $region64
        $region63: #{tpu_custom_call.1} parent=11 // pred_region
          _
        $region64: #{tpu_custom_call.1} parent=11 // pred_fallthru
          _
        // Predicated region
        $region65: #{tpu_custom_call.1} parent=11 // pred_check
          %p536 = pneg %p351
        $region66: #{tpu_custom_call.1} parent=11 // pred_check_branch
          %538 = sbr.rel (%p536) target = $region68
        $region67: #{tpu_custom_call.1} parent=11 // pred_region
          _
        $region68: #{tpu_custom_call.1} parent=11 // pred_fallthru
          _
        // Predicated region
        $region69: #{tpu_custom_call.1} parent=11 // pred_check
          %p539 = pneg %p372
        $region70: #{tpu_custom_call.1} parent=11 // pred_check_branch
          %541 = sbr.rel (%p539) target = $region72
        $region71: #{tpu_custom_call.1} parent=11 // pred_region
          _
        $region72: #{tpu_custom_call.1} parent=11 // pred_fallthru
          _
        // Predicated region
        $region73: #{tpu_custom_call.1} parent=11 // pred_check
          %p542 = pneg %p393
        $region74: #{tpu_custom_call.1} parent=11 // pred_check_branch
          %544 = sbr.rel (%p542) target = $region76
        $region75: #{tpu_custom_call.1} parent=11 // pred_region
          _
        $region76: #{tpu_custom_call.1} parent=11 // pred_fallthru
          _
        // Predicated region
        $region77: #{tpu_custom_call.1} parent=11 // pred_check
          %p545 = pneg %p414
        $region78: #{tpu_custom_call.1} parent=11 // pred_check_branch
          %547 = sbr.rel (%p545) target = $region80
        $region79: #{tpu_custom_call.1} parent=11 // pred_region
          _
        $region80: #{tpu_custom_call.1} parent=11 // pred_fallthru
          _
        // Predicated region
        $region81: #{tpu_custom_call.1} parent=11 // pred_check
          %p548 = pneg %p435
        $region82: #{tpu_custom_call.1} parent=11 // pred_check_branch
          %550 = sbr.rel (%p548) target = $region84
        $region83: #{tpu_custom_call.1} parent=11 // pred_region
          _
        $region84: #{tpu_custom_call.1} parent=11 // pred_fallthru
          _
        // Predicated region
        $region85: #{tpu_custom_call.1} parent=11 // pred_check
          %p551 = pneg %p456
        $region86: #{tpu_custom_call.1} parent=11 // pred_check_branch
          %553 = sbr.rel (%p551) target = $region88
        $region87: #{tpu_custom_call.1} parent=11 // pred_region
          _
        $region88: #{tpu_custom_call.1} parent=11 // pred_fallthru
          _
      $region12: #{tpu_custom_call.1} parent=5 // pred_fallthru
        _
      %p554 = scmp.lt.s32.totalorder %s31, 2
      // Predicated region
      $region89: #{tpu_custom_call.1} parent=5 // pred_check
        %p555 = pneg %p554
      $region90: #{tpu_custom_call.1} parent=5 // pred_check_branch
        %557 = sbr.rel (%p555) target = $region92
      $region91: #{tpu_custom_call.1} parent=5 // pred_region
        // Predicated region
        $region93: #{tpu_custom_call.1} parent=91 // pred_check
          %p558 = pneg %p51
        $region94: #{tpu_custom_call.1} parent=91 // pred_check_branch
          %560 = sbr.rel (%p558) target = $region96
        $region95: #{tpu_custom_call.1} parent=91 // pred_region
          %p561 = scmp.lt.s32.totalorder %s31, 1
          %s562 = scalar_select %p561, %s31, 1
          %s563 = smul.addr %s562, 2
          %s564 = smul.addr %s563, 8
          %s565 = scalar_lea.vmem %s0, %s564
        $region96: #{tpu_custom_call.1} parent=91 // pred_fallthru
          _
      $region92: #{tpu_custom_call.1} parent=5 // pred_fallthru
        _
      %p566 = scmp.le.s32.totalorder 1, %s31
      %p567 = scmp.lt.s32.totalorder %s31, 3
      %p568 = pnand %p566, %p567
      %p569 = pneg %p568
      // Predicated region
      $region97: #{tpu_custom_call.1} parent=5 // pred_check
        _
      $region98: #{tpu_custom_call.1} parent=5 // pred_check_branch
        %571 = sbr.rel (%p568) target = $region100
      $region99: #{tpu_custom_call.1} parent=5 // pred_region
        %s572 = ssub.s32 %s31, 1
        %p573 = scmp.lt.s32.totalorder %s36, 1
        %s574 = scalar_select %p573, %s36, 1
        %s575 = smul.addr %s574, 2
        %s576 = smul.addr %s575, 8
        %s577 = scalar_lea.vmem %s0, %s576
        %p578 = pneg %p57
        %p579 = pneg %p54
        %p580 = pneg %p78
        %p581 = pneg %p75
        %p582 = pneg %p99
        %p583 = pneg %p96
        %p584 = pneg %p120
        %p585 = pneg %p117
        %p586 = pneg %p141
        %p587 = pneg %p138
        %p588 = pneg %p162
        %p589 = pneg %p159
        %p590 = pneg %p183
        %p591 = pneg %p180
        %p592 = pneg %p204
        %p593 = pneg %p201
        %p594 = pneg %p225
        %p595 = pneg %p222
        %p596 = pneg %p246
        %p597 = pneg %p243
        %p598 = pneg %p267
        %p599 = pneg %p264
        %p600 = pneg %p288
        %p601 = pneg %p285
        %p602 = pneg %p309
        %p603 = pneg %p306
        %p604 = pneg %p330
        %p605 = pneg %p327
        %p606 = pneg %p351
        %p607 = pneg %p348
        %p608 = pneg %p372
        %p609 = pneg %p369
        %p610 = pneg %p393
        %p611 = pneg %p390
        %p612 = pneg %p414
        %p613 = pneg %p411
        %p614 = pneg %p435
        %p615 = pneg %p432
        %p616 = pneg %p456
        %p617 = pneg %p453
        %p618 = pneg %p482
        %p619 = pneg %p479
        %s620 = sand.u32 %s469, 1
        %s621 = scalar_lea.sflag [#allocation4], %s620
        %s622 = sand.u32 %s469, 1
        %s623 = scalar_lea.vmem [#allocation3], %s622
        %p624 = scmp.lt.s32.totalorder %s36, 1
        %s625 = scalar_select %p624, %s36, 1
        %s626 = smul.addr %s625, 2
        %s627 = smul.addr %s626, 8
        %s628 = scalar_lea.vmem %s0, %s627
        %v629 = vld [vmem:[%s628] sm:$0xff]
        %v630 = vld [vmem:[%s628 + $0x8] sm:$0xff]
        %v631 = vld [vmem:[%s2] sm:$0x1]
        %633 = vset.pattern.permute.xlu0 0
        %634 = vperm.xlu0 %633, %v629
        %v635 = vpop.permute.xlu0 %634
        %638 = vset.pattern.permute.xlu0 0
        %639 = vperm.xlu0 %638, %v630
        %v640 = vpop.permute.xlu0 %639
        %v643 = vlaneseq
        %v644 = vshrl.u32 %v643, 7
        %v645 = vsub.s32 0, %v644
        %v646 = vrot.slane %v631, %v645
        %v648 = vmul.f32 %v635, %v646
        %v649 = vmul.f32 %v640, %v646
        %v650 = vld [vmem:[%s1] sm:$0xff]
        %v651 = vld [vmem:[%s1 + $0x8] sm:$0xff]
        %v652 = vadd.f32 %v648, %v650
        %v653 = vadd.f32 %v649, %v651
        %v654 = vld [vmem:[%s3] sm:$0xff]
        %v655 = vld [vmem:[%s3 + $0x8] sm:$0xff]
        %v656 = vld [vmem:[%s3 + $0x10] sm:$0xff]
        %v657 = vld [vmem:[%s3 + $0x18] sm:$0xff]
        %v658 = vld [vmem:[%s4] sm:$0x1]
        %v660 = vlaneseq
        %v661 = vshrl.u32 %v660, 7
        %v662 = vsub.s32 0, %v661
        %v663 = vrot.slane %v658, %v662
        %vm665 = vcmask 261120
        %v667 = vsel %vm665, %v652, 0
        %v670 = vsel %vm665, %v653, 0
        %672 = vmatprep.subr.mxu0 0.0
        %673 = vmatpush1.msra.mxu0 %v654
        %674 = vmatprep.subr.mxu0 0.0
        %675 = vmatpush1.msra.mxu0 %v655
        %676 = vmatprep.subr.mxu0 0.0
        %677 = vmatpush1.msra.mxu0 %v656
        %678 = vmatprep.subr.mxu0 0.0
        %679 = vmatpush1.msra.mxu0 %v657
        %680 = vmatprep.subr.mxu0 0.0
        %681 = vmatpush1.msra.mxu0 0.0
        %682 = vmatprep.subr.mxu0 0.0
        %683 = vmatpush1.msra.mxu0 0.0
        %684 = vmatprep.subr.mxu0 0.0
        %685 = vmatpush1.msra.mxu0 0.0
        %686 = vmatprep.subr.mxu0 0.0
        %687 = vmatpush1.msra.mxu0 0.0
        %688 = vmatprep.subr.mxu0 0.0
        %689 = vmatpush1.msra.mxu0 0.0
        %690 = vmatprep.subr.mxu0 0.0
        %691 = vmatpush1.msra.mxu0 0.0
        %692 = vmatprep.subr.mxu0 0.0
        %693 = vmatpush1.msra.mxu0 0.0
        %694 = vmatprep.subr.mxu0 0.0
        %695 = vmatpush1.msra.mxu0 0.0
        %696 = vmatprep.subr.mxu0 0.0
        %697 = vmatpush1.msra.mxu0 0.0
        %698 = vmatprep.subr.mxu0 0.0
        %699 = vmatpush1.msra.mxu0 0.0
        %700 = vmatprep.subr.mxu0 0.0
        %701 = vmatpush1.msra.mxu0 0.0
        %702 = vmatprep.subr.mxu0 0.0
        %703 = vmatpush1.msra.mxu0 0.0
        %704 = vmatprep.subr.mxu0 0.0
        %705 = vmatpush1.msra.mxu0 0.0
        %706 = vmatprep.subr.mxu0 0.0
        %707 = vmatpush1.msra.mxu0 0.0
        %708 = vmatprep.subr.mxu0 0.0
        %709 = vmatpush1.msra.mxu0 0.0
        %710 = vmatprep.subr.mxu0 0.0
        %711 = vmatpush1.msra.mxu0 0.0
        %712 = vmatprep.subr.mxu0 0.0
        %713 = vmatpush1.msra.mxu0 0.0
        %714 = vmatprep.subr.mxu0 0.0
        %715 = vmatpush1.msra.mxu0 0.0
        %716 = vmatprep.subr.mxu0 0.0
        %717 = vmatpush1.msra.mxu0 0.0
        %718 = vmatprep.subr.mxu0 0.0
        %719 = vmatpush1.msra.mxu0 0.0
        %720 = vmatprep.subr.mxu0 0.0
        %721 = vmatpush1.msra.mxu0 0.0
        %722 = vmatprep.subr.mxu0 0.0
        %723 = vmatpush1.msra.mxu0 0.0
        %724 = vmatprep.subr.mxu0 0.0
        %725 = vmatpush1.msra.mxu0 0.0
        %726 = vmatprep.subr.mxu0 0.0
        %727 = vmatpush1.msra.mxu0 0.0
        %728 = vmatprep.subr.mxu0 0.0
        %729 = vmatpush1.msra.mxu0 0.0
        %730 = vmatprep.subr.mxu0 0.0
        %731 = vmatpush1.msra.mxu0 0.0
        %732 = vmatprep.subr.mxu0 0.0
        %733 = vmatpush1.msra.mxu0 0.0
        %734 = vmatprep.subr.mxu0 0.0
        %735 = vmatpush1.msra.mxu0 0.0
        %736 = vmatprep.mubr.f32.mxu0 0.0
        %737 = vmatmul.mubr.f32.gmra.mrb[0].mxu0 %v667
        %v738 = vpop.f32.mrb[0].mxu0
        %v739 = vadd.f32 %v663, %v738
        %v740 = vpop.f32.mrb[0].mxu0
        %741 = vmatprep.mubr.f32.mxu0 0.0
        %742 = vmatmul.mubr.f32.gmra.mrb[0].mxu0 %v670
        %v743 = vpop.f32.mrb[0].mxu0
        %v744 = vadd.f32 %v663, %v743
        %v745 = vpop.f32.mrb[0].mxu0
        %746 = vdwg.mxu0
        %v747 = vlaneseq
        %v748 = vshrl.u32 %v747, 7
        %v749 = vadd.s32 %v748, 8
        %v750 = vlaneseq
        %v751 = vand.u32 %v750, 127
        %vm752 = vcmp.le.s32.totalorder %v751, %v748
        %vm753 = vcmp.le.s32.totalorder %v751, %v749
        %v754 = vsel %vm752, 0.0, -1e+30
        %v755 = vsel %vm753, 0.0, -1e+30
        %758 = vrot.lane.b32.xlu0 %v739, 96
        %v759 = vpop.permute.xlu0 %758
        %760 = vrot.lane.b32.xlu0 %v744, 96
        %v761 = vpop.permute.xlu0 %760
        %vm762 = vcmask 64512
        %v763 = vsel %vm762, %v739, 0
        %v765 = vsel %vm762, %v744, 0
        %v767 = vsel %vm762, %v759, 0
        %v769 = vsel %vm762, %v761, 0
        %771 = vmatprep.subr.mxu0 0.0
        %772 = vmatpush1.xpose.msra.mxu0 %v767
        %773 = vmatprep.subr.mxu0 0.0
        %774 = vmatpush1.xpose.msra.mxu0 %v769
        %775 = vmatprep.subr.mxu0 0.0
        %776 = vmatpush1.xpose.msra.mxu0 0.0
        %777 = vmatprep.subr.mxu0 0.0
        %778 = vmatpush1.xpose.msra.mxu0 0.0
        %779 = vmatprep.subr.mxu0 0.0
        %780 = vmatpush1.xpose.msra.mxu0 0.0
        %781 = vmatprep.subr.mxu0 0.0
        %782 = vmatpush1.xpose.msra.mxu0 0.0
        %783 = vmatprep.subr.mxu0 0.0
        %784 = vmatpush1.xpose.msra.mxu0 0.0
        %785 = vmatprep.subr.mxu0 0.0
        %786 = vmatpush1.xpose.msra.mxu0 0.0
        %787 = vmatprep.subr.mxu0 0.0
        %788 = vmatpush1.xpose.msra.mxu0 0.0
        %789 = vmatprep.subr.mxu0 0.0
        %790 = vmatpush1.xpose.msra.mxu0 0.0
        %791 = vmatprep.subr.mxu0 0.0
        %792 = vmatpush1.xpose.msra.mxu0 0.0
        %793 = vmatprep.subr.mxu0 0.0
        %794 = vmatpush1.xpose.msra.mxu0 0.0
        %795 = vmatprep.subr.mxu0 0.0
        %796 = vmatpush1.xpose.msra.mxu0 0.0
        %797 = vmatprep.subr.mxu0 0.0
        %798 = vmatpush1.xpose.msra.mxu0 0.0
        %799 = vmatprep.subr.mxu0 0.0
        %800 = vmatpush1.xpose.msra.mxu0 0.0
        %801 = vmatprep.subr.mxu0 0.0
        %802 = vmatpush1.xpose.msra.mxu0 0.0
        %803 = vmatprep.subr.mxu0 0.0
        %804 = vmatpush1.xpose.msra.mxu0 0.0
        %805 = vmatprep.subr.mxu0 0.0
        %806 = vmatpush1.xpose.msra.mxu0 0.0
        %807 = vmatprep.subr.mxu0 0.0
        %808 = vmatpush1.xpose.msra.mxu0 0.0
        %809 = vmatprep.subr.mxu0 0.0
        %810 = vmatpush1.xpose.msra.mxu0 0.0
        %811 = vmatprep.subr.mxu0 0.0
        %812 = vmatpush1.xpose.msra.mxu0 0.0
        %813 = vmatprep.subr.mxu0 0.0
        %814 = vmatpush1.xpose.msra.mxu0 0.0
        %815 = vmatprep.subr.mxu0 0.0
        %816 = vmatpush1.xpose.msra.mxu0 0.0
        %817 = vmatprep.subr.mxu0 0.0
        %818 = vmatpush1.xpose.msra.mxu0 0.0
        %819 = vmatprep.subr.mxu0 0.0
        %820 = vmatpush1.xpose.msra.mxu0 0.0
        %821 = vmatprep.subr.mxu0 0.0
        %822 = vmatpush1.xpose.msra.mxu0 0.0
        %823 = vmatprep.subr.mxu0 0.0
        %824 = vmatpush1.xpose.msra.mxu0 0.0
        %825 = vmatprep.subr.mxu0 0.0
        %826 = vmatpush1.xpose.msra.mxu0 0.0
        %827 = vmatprep.subr.mxu0 0.0
        %828 = vmatpush1.xpose.msra.mxu0 0.0
        %829 = vmatprep.subr.mxu0 0.0
        %830 = vmatpush1.xpose.msra.mxu0 0.0
        %831 = vmatprep.subr.mxu0 0.0
        %832 = vmatpush1.xpose.msra.mxu0 0.0
        %833 = vmatprep.subr.mxu0 0.0
        %834 = vmatpush1.xpose.msra.mxu0 0.0
        %835 = vmatprep.mubr.f32.mxu0 0.0
        %836 = vmatmul.mubr.f32.gmra.mrb[0].mxu0 %v763
        %v837 = vpop.f32.mrb[0].mxu0
        %v838 = vadd.f32 0.0, %v837
        %v839 = vpop.f32.mrb[0].mxu0
        %840 = vmatprep.mubr.f32.mxu0 0.0
        %841 = vmatmul.mubr.f32.gmra.mrb[0].mxu0 %v765
        %v842 = vpop.f32.mrb[0].mxu0
        %v843 = vadd.f32 0.0, %v842
        %v844 = vpop.f32.mrb[0].mxu0
        %845 = vdwg.mxu0
        %v846 = vmul.f32 %v838, 0.35355338
        %v847 = vmul.f32 %v843, 0.35355338
        %v848 = vadd.f32 %v846, %v754
        %v849 = vadd.f32 %v847, %v755
        %vm850 = vcmask 130048
        %v851 = vsel %vm850, %v848, -inf
        %852 = vmax.xlane.f32.xlu0 %v851
        %v853 = vpop.xlane.xlu0 %852
        %v854 = vsel %vm850, %v849, -inf
        %855 = vmax.xlane.f32.xlu0 %v854
        %v856 = vpop.xlane.xlu0 %855
        %v857 = vsub.f32 %v848, %v853
        %v858 = vsub.f32 %v849, %v856
        %v859 = vmul.f32 %v857, 1.442695
        %v860 = vpow.pop %v859
        %v861 = vmul.f32 %v858, 1.442695
        %v862 = vpow.pop %v861
        %v863 = vsel %vm850, %v860, 0.0
        %864 = vadd.xlane.f32.xlu0 %v863
        %v865 = vpop.xlane.xlu0 %864
        %v866 = vsel %vm850, %v862, 0.0
        %867 = vadd.xlane.f32.xlu0 %v866
        %v868 = vpop.xlane.xlu0 %867
        %v869 = vrcp.pop %v865
        %v870 = vrcp.pop %v868
        %v871 = vmul.f32 %v860, %v869
        %v872 = vmul.f32 %v862, %v870
        %873 = vrot.lane.b32.xlu0 %v739, 64
        %v874 = vpop.permute.xlu0 %873
        %875 = vrot.lane.b32.xlu0 %v744, 64
        %v876 = vpop.permute.xlu0 %875
        %v880 = vsel %vm850, %v871, 0
        %v883 = vsel %vm850, %v872, 0
        %885 = vmatprep.subr.mxu0 0.0
        %886 = vmatpush1.msra.mxu0 %v874
        %887 = vmatprep.subr.mxu0 0.0
        %888 = vmatpush1.msra.mxu0 %v876
        %889 = vmatprep.subr.mxu0 0.0
        %890 = vmatpush1.msra.mxu0 0.0
        %891 = vmatprep.subr.mxu0 0.0
        %892 = vmatpush1.msra.mxu0 0.0
        %893 = vmatprep.subr.mxu0 0.0
        %894 = vmatpush1.msra.mxu0 0.0
        %895 = vmatprep.subr.mxu0 0.0
        %896 = vmatpush1.msra.mxu0 0.0
        %897 = vmatprep.subr.mxu0 0.0
        %898 = vmatpush1.msra.mxu0 0.0
        %899 = vmatprep.subr.mxu0 0.0
        %900 = vmatpush1.msra.mxu0 0.0
        %901 = vmatprep.subr.mxu0 0.0
        %902 = vmatpush1.msra.mxu0 0.0
        %903 = vmatprep.subr.mxu0 0.0
        %904 = vmatpush1.msra.mxu0 0.0
        %905 = vmatprep.subr.mxu0 0.0
        %906 = vmatpush1.msra.mxu0 0.0
        %907 = vmatprep.subr.mxu0 0.0
        %908 = vmatpush1.msra.mxu0 0.0
        %909 = vmatprep.subr.mxu0 0.0
        %910 = vmatpush1.msra.mxu0 0.0
        %911 = vmatprep.subr.mxu0 0.0
        %912 = vmatpush1.msra.mxu0 0.0
        %913 = vmatprep.subr.mxu0 0.0
        %914 = vmatpush1.msra.mxu0 0.0
        %915 = vmatprep.subr.mxu0 0.0
        %916 = vmatpush1.msra.mxu0 0.0
        %917 = vmatprep.subr.mxu0 0.0
        %918 = vmatpush1.msra.mxu0 0.0
        %919 = vmatprep.subr.mxu0 0.0
        %920 = vmatpush1.msra.mxu0 0.0
        %921 = vmatprep.subr.mxu0 0.0
        %922 = vmatpush1.msra.mxu0 0.0
        %923 = vmatprep.subr.mxu0 0.0
        %924 = vmatpush1.msra.mxu0 0.0
        %925 = vmatprep.subr.mxu0 0.0
        %926 = vmatpush1.msra.mxu0 0.0
        %927 = vmatprep.subr.mxu0 0.0
        %928 = vmatpush1.msra.mxu0 0.0
        %929 = vmatprep.subr.mxu0 0.0
        %930 = vmatpush1.msra.mxu0 0.0
        %931 = vmatprep.subr.mxu0 0.0
        %932 = vmatpush1.msra.mxu0 0.0
        %933 = vmatprep.subr.mxu0 0.0
        %934 = vmatpush1.msra.mxu0 0.0
        %935 = vmatprep.subr.mxu0 0.0
        %936 = vmatpush1.msra.mxu0 0.0
        %937 = vmatprep.subr.mxu0 0.0
        %938 = vmatpush1.msra.mxu0 0.0
        %939 = vmatprep.subr.mxu0 0.0
        %940 = vmatpush1.msra.mxu0 0.0
        %941 = vmatprep.subr.mxu0 0.0
        %942 = vmatpush1.msra.mxu0 0.0
        %943 = vmatprep.subr.mxu0 0.0
        %944 = vmatpush1.msra.mxu0 0.0
        %945 = vmatprep.subr.mxu0 0.0
        %946 = vmatpush1.msra.mxu0 0.0
        %947 = vmatprep.subr.mxu0 0.0
        %948 = vmatpush1.msra.mxu0 0.0
        %949 = vmatprep.mubr.f32.mxu0 0.0
        %950 = vmatmul.mubr.f32.gmra.mrb[0].mxu0 %v880
        %v951 = vpop.f32.mrb[0].mxu0
        %v952 = vadd.f32 0.0, %v951
        %v953 = vpop.f32.mrb[0].mxu0
        %954 = vmatprep.mubr.f32.mxu0 0.0
        %955 = vmatmul.mubr.f32.gmra.mrb[0].mxu0 %v883
        %v956 = vpop.f32.mrb[0].mxu0
        %v957 = vadd.f32 0.0, %v956
        %v958 = vpop.f32.mrb[0].mxu0
        %959 = vdwg.mxu0
        %960 = vrot.lane.b32.xlu0 %v739, 120
        %v961 = vpop.permute.xlu0 %960
        %962 = vrot.lane.b32.xlu0 %v744, 120
        %v963 = vpop.permute.xlu0 %962
        %964 = vrot.lane.b32.xlu0 %v739, 88
        %v965 = vpop.permute.xlu0 %964
        %966 = vrot.lane.b32.xlu0 %v744, 88
        %v967 = vpop.permute.xlu0 %966
        %v968 = vsel %vm762, %v961, 0
        %v970 = vsel %vm762, %v963, 0
        %v972 = vsel %vm762, %v965, 0
        %v974 = vsel %vm762, %v967, 0
        %976 = vmatprep.subr.mxu0 0.0
        %977 = vmatpush1.xpose.msra.mxu0 %v972
        %978 = vmatprep.subr.mxu0 0.0
        %979 = vmatpush1.xpose.msra.mxu0 %v974
        %980 = vmatprep.subr.mxu0 0.0
        %981 = vmatpush1.xpose.msra.mxu0 0.0
        %982 = vmatprep.subr.mxu0 0.0
        %983 = vmatpush1.xpose.msra.mxu0 0.0
        %984 = vmatprep.subr.mxu0 0.0
        %985 = vmatpush1.xpose.msra.mxu0 0.0
        %986 = vmatprep.subr.mxu0 0.0
        %987 = vmatpush1.xpose.msra.mxu0 0.0
        %988 = vmatprep.subr.mxu0 0.0
        %989 = vmatpush1.xpose.msra.mxu0 0.0
        %990 = vmatprep.subr.mxu0 0.0
        %991 = vmatpush1.xpose.msra.mxu0 0.0
        %992 = vmatprep.subr.mxu0 0.0
        %993 = vmatpush1.xpose.msra.mxu0 0.0
        %994 = vmatprep.subr.mxu0 0.0
        %995 = vmatpush1.xpose.msra.mxu0 0.0
        %996 = vmatprep.subr.mxu0 0.0
        %997 = vmatpush1.xpose.msra.mxu0 0.0
        %998 = vmatprep.subr.mxu0 0.0
        %999 = vmatpush1.xpose.msra.mxu0 0.0
        %1000 = vmatprep.subr.mxu0 0.0
        %1001 = vmatpush1.xpose.msra.mxu0 0.0
        %1002 = vmatprep.subr.mxu0 0.0
        %1003 = vmatpush1.xpose.msra.mxu0 0.0
        %1004 = vmatprep.subr.mxu0 0.0
        %1005 = vmatpush1.xpose.msra.mxu0 0.0
        %1006 = vmatprep.subr.mxu0 0.0
        %1007 = vmatpush1.xpose.msra.mxu0 0.0
        %1008 = vmatprep.subr.mxu0 0.0
        %1009 = vmatpush1.xpose.msra.mxu0 0.0
        %1010 = vmatprep.subr.mxu0 0.0
        %1011 = vmatpush1.xpose.msra.mxu0 0.0
        %1012 = vmatprep.subr.mxu0 0.0
        %1013 = vmatpush1.xpose.msra.mxu0 0.0
        %1014 = vmatprep.subr.mxu0 0.0
        %1015 = vmatpush1.xpose.msra.mxu0 0.0
        %1016 = vmatprep.subr.mxu0 0.0
        %1017 = vmatpush1.xpose.msra.mxu0 0.0
        %1018 = vmatprep.subr.mxu0 0.0
        %1019 = vmatpush1.xpose.msra.mxu0 0.0
        %1020 = vmatprep.subr.mxu0 0.0
        %1021 = vmatpush1.xpose.msra.mxu0 0.0
        %1022 = vmatprep.subr.mxu0 0.0
        %1023 = vmatpush1.xpose.msra.mxu0 0.0
        %1024 = vmatprep.subr.mxu0 0.0
        %1025 = vmatpush1.xpose.msra.mxu0 0.0
        %1026 = vmatprep.subr.mxu0 0.0
        %1027 = vmatpush1.xpose.msra.mxu0 0.0
        %1028 = vmatprep.subr.mxu0 0.0
        %1029 = vmatpush1.xpose.msra.mxu0 0.0
        %1030 = vmatprep.subr.mxu0 0.0
        %1031 = vmatpush1.xpose.msra.mxu0 0.0
        %1032 = vmatprep.subr.mxu0 0.0
        %1033 = vmatpush1.xpose.msra.mxu0 0.0
        %1034 = vmatprep.subr.mxu0 0.0
        %1035 = vmatpush1.xpose.msra.mxu0 0.0
        %1036 = vmatprep.subr.mxu0 0.0
        %1037 = vmatpush1.xpose.msra.mxu0 0.0
        %1038 = vmatprep.subr.mxu0 0.0
        %1039 = vmatpush1.xpose.msra.mxu0 0.0
        %1040 = vmatprep.mubr.f32.mxu0 0.0
        %1041 = vmatmul.mubr.f32.gmra.mrb[0].mxu0 %v968
        %v1042 = vpop.f32.mrb[0].mxu0
        %v1043 = vadd.f32 0.0, %v1042
        %v1044 = vpop.f32.mrb[0].mxu0
        %1045 = vmatprep.mubr.f32.mxu0 0.0
        %1046 = vmatmul.mubr.f32.gmra.mrb[0].mxu0 %v970
        %v1047 = vpop.f32.mrb[0].mxu0
        %v1048 = vadd.f32 0.0, %v1047
        %v1049 = vpop.f32.mrb[0].mxu0
        %1050 = vdwg.mxu0
        %v1051 = vmul.f32 %v1043, 0.35355338
        %v1052 = vmul.f32 %v1048, 0.35355338
        %v1053 = vadd.f32 %v1051, %v754
        %v1054 = vadd.f32 %v1052, %v755
        %v1055 = vsel %vm850, %v1053, -inf
        %1056 = vmax.xlane.f32.xlu0 %v1055
        %v1057 = vpop.xlane.xlu0 %1056
        %v1058 = vsel %vm850, %v1054, -inf
        %1059 = vmax.xlane.f32.xlu0 %v1058
        %v1060 = vpop.xlane.xlu0 %1059
        %v1061 = vsub.f32 %v1053, %v1057
        %v1062 = vsub.f32 %v1054, %v1060
        %v1063 = vmul.f32 %v1061, 1.442695
        %v1064 = vpow.pop %v1063
        %v1065 = vmul.f32 %v1062, 1.442695
        %v1066 = vpow.pop %v1065
        %v1067 = vsel %vm850, %v1064, 0.0
        %1068 = vadd.xlane.f32.xlu0 %v1067
        %v1069 = vpop.xlane.xlu0 %1068
        %v1070 = vsel %vm850, %v1066, 0.0
        %1071 = vadd.xlane.f32.xlu0 %v1070
        %v1072 = vpop.xlane.xlu0 %1071
        %v1073 = vrcp.pop %v1069
        %v1074 = vrcp.pop %v1072
        %v1075 = vmul.f32 %v1064, %v1073
        %v1076 = vmul.f32 %v1066, %v1074
        %1077 = vrot.lane.b32.xlu0 %v739, 56
        %v1078 = vpop.permute.xlu0 %1077
        %1079 = vrot.lane.b32.xlu0 %v744, 56
        %v1080 = vpop.permute.xlu0 %1079
        %v1084 = vsel %vm850, %v1075, 0
        %v1087 = vsel %vm850, %v1076, 0
        %1089 = vmatprep.subr.mxu0 0.0
        %1090 = vmatpush1.msra.mxu0 %v1078
        %1091 = vmatprep.subr.mxu0 0.0
        %1092 = vmatpush1.msra.mxu0 %v1080
        %1093 = vmatprep.subr.mxu0 0.0
        %1094 = vmatpush1.msra.mxu0 0.0
        %1095 = vmatprep.subr.mxu0 0.0
        %1096 = vmatpush1.msra.mxu0 0.0
        %1097 = vmatprep.subr.mxu0 0.0
        %1098 = vmatpush1.msra.mxu0 0.0
        %1099 = vmatprep.subr.mxu0 0.0
        %1100 = vmatpush1.msra.mxu0 0.0
        %1101 = vmatprep.subr.mxu0 0.0
        %1102 = vmatpush1.msra.mxu0 0.0
        %1103 = vmatprep.subr.mxu0 0.0
        %1104 = vmatpush1.msra.mxu0 0.0
        %1105 = vmatprep.subr.mxu0 0.0
        %1106 = vmatpush1.msra.mxu0 0.0
        %1107 = vmatprep.subr.mxu0 0.0
        %1108 = vmatpush1.msra.mxu0 0.0
        %1109 = vmatprep.subr.mxu0 0.0
        %1110 = vmatpush1.msra.mxu0 0.0
        %1111 = vmatprep.subr.mxu0 0.0
        %1112 = vmatpush1.msra.mxu0 0.0
        %1113 = vmatprep.subr.mxu0 0.0
        %1114 = vmatpush1.msra.mxu0 0.0
        %1115 = vmatprep.subr.mxu0 0.0
        %1116 = vmatpush1.msra.mxu0 0.0
        %1117 = vmatprep.subr.mxu0 0.0
        %1118 = vmatpush1.msra.mxu0 0.0
        %1119 = vmatprep.subr.mxu0 0.0
        %1120 = vmatpush1.msra.mxu0 0.0
        %1121 = vmatprep.subr.mxu0 0.0
        %1122 = vmatpush1.msra.mxu0 0.0
        %1123 = vmatprep.subr.mxu0 0.0
        %1124 = vmatpush1.msra.mxu0 0.0
        %1125 = vmatprep.subr.mxu0 0.0
        %1126 = vmatpush1.msra.mxu0 0.0
        %1127 = vmatprep.subr.mxu0 0.0
        %1128 = vmatpush1.msra.mxu0 0.0
        %1129 = vmatprep.subr.mxu0 0.0
        %1130 = vmatpush1.msra.mxu0 0.0
        %1131 = vmatprep.subr.mxu0 0.0
        %1132 = vmatpush1.msra.mxu0 0.0
        %1133 = vmatprep.subr.mxu0 0.0
        %1134 = vmatpush1.msra.mxu0 0.0
        %1135 = vmatprep.subr.mxu0 0.0
        %1136 = vmatpush1.msra.mxu0 0.0
        %1137 = vmatprep.subr.mxu0 0.0
        %1138 = vmatpush1.msra.mxu0 0.0
        %1139 = vmatprep.subr.mxu0 0.0
        %1140 = vmatpush1.msra.mxu0 0.0
        %1141 = vmatprep.subr.mxu0 0.0
        %1142 = vmatpush1.msra.mxu0 0.0
        %1143 = vmatprep.subr.mxu0 0.0
        %1144 = vmatpush1.msra.mxu0 0.0
        %1145 = vmatprep.subr.mxu0 0.0
        %1146 = vmatpush1.msra.mxu0 0.0
        %1147 = vmatprep.subr.mxu0 0.0
        %1148 = vmatpush1.msra.mxu0 0.0
        %1149 = vmatprep.subr.mxu0 0.0
        %1150 = vmatpush1.msra.mxu0 0.0
        %1151 = vmatprep.subr.mxu0 0.0
        %1152 = vmatpush1.msra.mxu0 0.0
        %1153 = vmatprep.mubr.f32.mxu0 0.0
        %1154 = vmatmul.mubr.f32.gmra.mrb[0].mxu0 %v1084
        %v1155 = vpop.f32.mrb[0].mxu0
        %v1156 = vadd.f32 0.0, %v1155
        %v1157 = vpop.f32.mrb[0].mxu0
        %1158 = vmatprep.mubr.f32.mxu0 0.0
        %1159 = vmatmul.mubr.f32.gmra.mrb[0].mxu0 %v1087
        %v1160 = vpop.f32.mrb[0].mxu0
        %v1161 = vadd.f32 0.0, %v1160
        %v1162 = vpop.f32.mrb[0].mxu0
        %1163 = vdwg.mxu0
        %1164 = vrot.lane.b32.xlu0 %v739, 112
        %v1165 = vpop.permute.xlu0 %1164
        %1166 = vrot.lane.b32.xlu0 %v744, 112
        %v1167 = vpop.permute.xlu0 %1166
        %1168 = vrot.lane.b32.xlu0 %v739, 80
        %v1169 = vpop.permute.xlu0 %1168
        %1170 = vrot.lane.b32.xlu0 %v744, 80
        %v1171 = vpop.permute.xlu0 %1170
        %v1172 = vsel %vm762, %v1165, 0
        %v1174 = vsel %vm762, %v1167, 0
        %v1176 = vsel %vm762, %v1169, 0
        %v1178 = vsel %vm762, %v1171, 0
        %1180 = vmatprep.subr.mxu0 0.0
        %1181 = vmatpush1.xpose.msra.mxu0 %v1176
        %1182 = vmatprep.subr.mxu0 0.0
        %1183 = vmatpush1.xpose.msra.mxu0 %v1178
        %1184 = vmatprep.subr.mxu0 0.0
        %1185 = vmatpush1.xpose.msra.mxu0 0.0
        %1186 = vmatprep.subr.mxu0 0.0
        %1187 = vmatpush1.xpose.msra.mxu0 0.0
        %1188 = vmatprep.subr.mxu0 0.0
        %1189 = vmatpush1.xpose.msra.mxu0 0.0
        %1190 = vmatprep.subr.mxu0 0.0
        %1191 = vmatpush1.xpose.msra.mxu0 0.0
        %1192 = vmatprep.subr.mxu0 0.0
        %1193 = vmatpush1.xpose.msra.mxu0 0.0
        %1194 = vmatprep.subr.mxu0 0.0
        %1195 = vmatpush1.xpose.msra.mxu0 0.0
        %1196 = vmatprep.subr.mxu0 0.0
        %1197 = vmatpush1.xpose.msra.mxu0 0.0
        %1198 = vmatprep.subr.mxu0 0.0
        %1199 = vmatpush1.xpose.msra.mxu0 0.0
        %1200 = vmatprep.subr.mxu0 0.0
        %1201 = vmatpush1.xpose.msra.mxu0 0.0
        %1202 = vmatprep.subr.mxu0 0.0
        %1203 = vmatpush1.xpose.msra.mxu0 0.0
        %1204 = vmatprep.subr.mxu0 0.0
        %1205 = vmatpush1.xpose.msra.mxu0 0.0
        %1206 = vmatprep.subr.mxu0 0.0
        %1207 = vmatpush1.xpose.msra.mxu0 0.0
        %1208 = vmatprep.subr.mxu0 0.0
        %1209 = vmatpush1.xpose.msra.mxu0 0.0
        %1210 = vmatprep.subr.mxu0 0.0
        %1211 = vmatpush1.xpose.msra.mxu0 0.0
        %1212 = vmatprep.subr.mxu0 0.0
        %1213 = vmatpush1.xpose.msra.mxu0 0.0
        %1214 = vmatprep.subr.mxu0 0.0
        %1215 = vmatpush1.xpose.msra.mxu0 0.0
        %1216 = vmatprep.subr.mxu0 0.0
        %1217 = vmatpush1.xpose.msra.mxu0 0.0
        %1218 = vmatprep.subr.mxu0 0.0
        %1219 = vmatpush1.xpose.msra.mxu0 0.0
        %1220 = vmatprep.subr.mxu0 0.0
        %1221 = vmatpush1.xpose.msra.mxu0 0.0
        %1222 = vmatprep.subr.mxu0 0.0
        %1223 = vmatpush1.xpose.msra.mxu0 0.0
        %1224 = vmatprep.subr.mxu0 0.0
        %1225 = vmatpush1.xpose.msra.mxu0 0.0
        %1226 = vmatprep.subr.mxu0 0.0
        %1227 = vmatpush1.xpose.msra.mxu0 0.0
        %1228 = vmatprep.subr.mxu0 0.0
        %1229 = vmatpush1.xpose.msra.mxu0 0.0
        %1230 = vmatprep.subr.mxu0 0.0
        %1231 = vmatpush1.xpose.msra.mxu0 0.0
        %1232 = vmatprep.subr.mxu0 0.0
        %1233 = vmatpush1.xpose.msra.mxu0 0.0
        %1234 = vmatprep.subr.mxu0 0.0
        %1235 = vmatpush1.xpose.msra.mxu0 0.0
        %1236 = vmatprep.subr.mxu0 0.0
        %1237 = vmatpush1.xpose.msra.mxu0 0.0
        %1238 = vmatprep.subr.mxu0 0.0
        %1239 = vmatpush1.xpose.msra.mxu0 0.0
        %1240 = vmatprep.subr.mxu0 0.0
        %1241 = vmatpush1.xpose.msra.mxu0 0.0
        %1242 = vmatprep.subr.mxu0 0.0
        %1243 = vmatpush1.xpose.msra.mxu0 0.0
        %1244 = vmatprep.mubr.f32.mxu0 0.0
        %1245 = vmatmul.mubr.f32.gmra.mrb[0].mxu0 %v1172
        %v1246 = vpop.f32.mrb[0].mxu0
        %v1247 = vadd.f32 0.0, %v1246
        %v1248 = vpop.f32.mrb[0].mxu0
        %1249 = vmatprep.mubr.f32.mxu0 0.0
        %1250 = vmatmul.mubr.f32.gmra.mrb[0].mxu0 %v1174
        %v1251 = vpop.f32.mrb[0].mxu0
        %v1252 = vadd.f32 0.0, %v1251
        %v1253 = vpop.f32.mrb[0].mxu0
        %1254 = vdwg.mxu0
        %v1255 = vmul.f32 %v1247, 0.35355338
        %v1256 = vmul.f32 %v1252, 0.35355338
        %v1257 = vadd.f32 %v1255, %v754
        %v1258 = vadd.f32 %v1256, %v755
        %v1259 = vsel %vm850, %v1257, -inf
        %1260 = vmax.xlane.f32.xlu0 %v1259
        %v1261 = vpop.xlane.xlu0 %1260
        %v1262 = vsel %vm850, %v1258, -inf
        %1263 = vmax.xlane.f32.xlu0 %v1262
        %v1264 = vpop.xlane.xlu0 %1263
        %v1265 = vsub.f32 %v1257, %v1261
        %v1266 = vsub.f32 %v1258, %v1264
        %v1267 = vmul.f32 %v1265, 1.442695
        %v1268 = vpow.pop %v1267
        %v1269 = vmul.f32 %v1266, 1.442695
        %v1270 = vpow.pop %v1269
        %v1271 = vsel %vm850, %v1268, 0.0
        %1272 = vadd.xlane.f32.xlu0 %v1271
        %v1273 = vpop.xlane.xlu0 %1272
        %v1274 = vsel %vm850, %v1270, 0.0
        %1275 = vadd.xlane.f32.xlu0 %v1274
        %v1276 = vpop.xlane.xlu0 %1275
        %v1277 = vrcp.pop %v1273
        %v1278 = vrcp.pop %v1276
        %v1279 = vmul.f32 %v1268, %v1277
        %v1280 = vmul.f32 %v1270, %v1278
        %1281 = vrot.lane.b32.xlu0 %v739, 48
        %v1282 = vpop.permute.xlu0 %1281
        %1283 = vrot.lane.b32.xlu0 %v744, 48
        %v1284 = vpop.permute.xlu0 %1283
        %v1288 = vsel %vm850, %v1279, 0
        %v1291 = vsel %vm850, %v1280, 0
        %1293 = vmatprep.subr.mxu0 0.0
        %1294 = vmatpush1.msra.mxu0 %v1282
        %1295 = vmatprep.subr.mxu0 0.0
        %1296 = vmatpush1.msra.mxu0 %v1284
        %1297 = vmatprep.subr.mxu0 0.0
        %1298 = vmatpush1.msra.mxu0 0.0
        %1299 = vmatprep.subr.mxu0 0.0
        %1300 = vmatpush1.msra.mxu0 0.0
        %1301 = vmatprep.subr.mxu0 0.0
        %1302 = vmatpush1.msra.mxu0 0.0
        %1303 = vmatprep.subr.mxu0 0.0
        %1304 = vmatpush1.msra.mxu0 0.0
        %1305 = vmatprep.subr.mxu0 0.0
        %1306 = vmatpush1.msra.mxu0 0.0
        %1307 = vmatprep.subr.mxu0 0.0
        %1308 = vmatpush1.msra.mxu0 0.0
        %1309 = vmatprep.subr.mxu0 0.0
        %1310 = vmatpush1.msra.mxu0 0.0
        %1311 = vmatprep.subr.mxu0 0.0
        %1312 = vmatpush1.msra.mxu0 0.0
        %1313 = vmatprep.subr.mxu0 0.0
        %1314 = vmatpush1.msra.mxu0 0.0
        %1315 = vmatprep.subr.mxu0 0.0
        %1316 = vmatpush1.msra.mxu0 0.0
        %1317 = vmatprep.subr.mxu0 0.0
        %1318 = vmatpush1.msra.mxu0 0.0
        %1319 = vmatprep.subr.mxu0 0.0
        %1320 = vmatpush1.msra.mxu0 0.0
        %1321 = vmatprep.subr.mxu0 0.0
        %1322 = vmatpush1.msra.mxu0 0.0
        %1323 = vmatprep.subr.mxu0 0.0
        %1324 = vmatpush1.msra.mxu0 0.0
        %1325 = vmatprep.subr.mxu0 0.0
        %1326 = vmatpush1.msra.mxu0 0.0
        %1327 = vmatprep.subr.mxu0 0.0
        %1328 = vmatpush1.msra.mxu0 0.0
        %1329 = vmatprep.subr.mxu0 0.0
        %1330 = vmatpush1.msra.mxu0 0.0
        %1331 = vmatprep.subr.mxu0 0.0
        %1332 = vmatpush1.msra.mxu0 0.0
        %1333 = vmatprep.subr.mxu0 0.0
        %1334 = vmatpush1.msra.mxu0 0.0
        %1335 = vmatprep.subr.mxu0 0.0
        %1336 = vmatpush1.msra.mxu0 0.0
        %1337 = vmatprep.subr.mxu0 0.0
        %1338 = vmatpush1.msra.mxu0 0.0
        %1339 = vmatprep.subr.mxu0 0.0
        %1340 = vmatpush1.msra.mxu0 0.0
        %1341 = vmatprep.subr.mxu0 0.0
        %1342 = vmatpush1.msra.mxu0 0.0
        %1343 = vmatprep.subr.mxu0 0.0
        %1344 = vmatpush1.msra.mxu0 0.0
        %1345 = vmatprep.subr.mxu0 0.0
        %1346 = vmatpush1.msra.mxu0 0.0
        %1347 = vmatprep.subr.mxu0 0.0
        %1348 = vmatpush1.msra.mxu0 0.0
        %1349 = vmatprep.subr.mxu0 0.0
        %1350 = vmatpush1.msra.mxu0 0.0
        %1351 = vmatprep.subr.mxu0 0.0
        %1352 = vmatpush1.msra.mxu0 0.0
        %1353 = vmatprep.subr.mxu0 0.0
        %1354 = vmatpush1.msra.mxu0 0.0
        %1355 = vmatprep.subr.mxu0 0.0
        %1356 = vmatpush1.msra.mxu0 0.0
        %1357 = vmatprep.mubr.f32.mxu0 0.0
        %1358 = vmatmul.mubr.f32.gmra.mrb[0].mxu0 %v1288
        %v1359 = vpop.f32.mrb[0].mxu0
        %v1360 = vadd.f32 0.0, %v1359
        %v1361 = vpop.f32.mrb[0].mxu0
        %1362 = vmatprep.mubr.f32.mxu0 0.0
        %1363 = vmatmul.mubr.f32.gmra.mrb[0].mxu0 %v1291
        %v1364 = vpop.f32.mrb[0].mxu0
        %v1365 = vadd.f32 0.0, %v1364
        %v1366 = vpop.f32.mrb[0].mxu0
        %1367 = vdwg.mxu0
        %1368 = vrot.lane.b32.xlu0 %v739, 104
        %v1369 = vpop.permute.xlu0 %1368
        %1370 = vrot.lane.b32.xlu0 %v744, 104
        %v1371 = vpop.permute.xlu0 %1370
        %1372 = vrot.lane.b32.xlu0 %v739, 72
        %v1373 = vpop.permute.xlu0 %1372
        %1374 = vrot.lane.b32.xlu0 %v744, 72
        %v1375 = vpop.permute.xlu0 %1374
        %v1376 = vsel %vm762, %v1369, 0
        %v1378 = vsel %vm762, %v1371, 0
        %v1380 = vsel %vm762, %v1373, 0
        %v1382 = vsel %vm762, %v1375, 0
        %1384 = vmatprep.subr.mxu0 0.0
        %1385 = vmatpush1.xpose.msra.mxu0 %v1380
        %1386 = vmatprep.subr.mxu0 0.0
        %1387 = vmatpush1.xpose.msra.mxu0 %v1382
        %1388 = vmatprep.subr.mxu0 0.0
        %1389 = vmatpush1.xpose.msra.mxu0 0.0
        %1390 = vmatprep.subr.mxu0 0.0
        %1391 = vmatpush1.xpose.msra.mxu0 0.0
        %1392 = vmatprep.subr.mxu0 0.0
        %1393 = vmatpush1.xpose.msra.mxu0 0.0
        %1394 = vmatprep.subr.mxu0 0.0
        %1395 = vmatpush1.xpose.msra.mxu0 0.0
        %1396 = vmatprep.subr.mxu0 0.0
        %1397 = vmatpush1.xpose.msra.mxu0 0.0
        %1398 = vmatprep.subr.mxu0 0.0
        %1399 = vmatpush1.xpose.msra.mxu0 0.0
        %1400 = vmatprep.subr.mxu0 0.0
        %1401 = vmatpush1.xpose.msra.mxu0 0.0
        %1402 = vmatprep.subr.mxu0 0.0
        %1403 = vmatpush1.xpose.msra.mxu0 0.0
        %1404 = vmatprep.subr.mxu0 0.0
        %1405 = vmatpush1.xpose.msra.mxu0 0.0
        %1406 = vmatprep.subr.mxu0 0.0
        %1407 = vmatpush1.xpose.msra.mxu0 0.0
        %1408 = vmatprep.subr.mxu0 0.0
        %1409 = vmatpush1.xpose.msra.mxu0 0.0
        %1410 = vmatprep.subr.mxu0 0.0
        %1411 = vmatpush1.xpose.msra.mxu0 0.0
        %1412 = vmatprep.subr.mxu0 0.0
        %1413 = vmatpush1.xpose.msra.mxu0 0.0
        %1414 = vmatprep.subr.mxu0 0.0
        %1415 = vmatpush1.xpose.msra.mxu0 0.0
        %1416 = vmatprep.subr.mxu0 0.0
        %1417 = vmatpush1.xpose.msra.mxu0 0.0
        %1418 = vmatprep.subr.mxu0 0.0
        %1419 = vmatpush1.xpose.msra.mxu0 0.0
        %1420 = vmatprep.subr.mxu0 0.0
        %1421 = vmatpush1.xpose.msra.mxu0 0.0
        %1422 = vmatprep.subr.mxu0 0.0
        %1423 = vmatpush1.xpose.msra.mxu0 0.0
        %1424 = vmatprep.subr.mxu0 0.0
        %1425 = vmatpush1.xpose.msra.mxu0 0.0
        %1426 = vmatprep.subr.mxu0 0.0
        %1427 = vmatpush1.xpose.msra.mxu0 0.0
        %1428 = vmatprep.subr.mxu0 0.0
        %1429 = vmatpush1.xpose.msra.mxu0 0.0
        %1430 = vmatprep.subr.mxu0 0.0
        %1431 = vmatpush1.xpose.msra.mxu0 0.0
        %1432 = vmatprep.subr.mxu0 0.0
        %1433 = vmatpush1.xpose.msra.mxu0 0.0
        %1434 = vmatprep.subr.mxu0 0.0
        %1435 = vmatpush1.xpose.msra.mxu0 0.0
        %1436 = vmatprep.subr.mxu0 0.0
        %1437 = vmatpush1.xpose.msra.mxu0 0.0
        %1438 = vmatprep.subr.mxu0 0.0
        %1439 = vmatpush1.xpose.msra.mxu0 0.0
        %1440 = vmatprep.subr.mxu0 0.0
        %1441 = vmatpush1.xpose.msra.mxu0 0.0
        %1442 = vmatprep.subr.mxu0 0.0
        %1443 = vmatpush1.xpose.msra.mxu0 0.0
        %1444 = vmatprep.subr.mxu0 0.0
        %1445 = vmatpush1.xpose.msra.mxu0 0.0
        %1446 = vmatprep.subr.mxu0 0.0
        %1447 = vmatpush1.xpose.msra.mxu0 0.0
        %1448 = vmatprep.mubr.f32.mxu0 0.0
        %1449 = vmatmul.mubr.f32.gmra.mrb[0].mxu0 %v1376
        %v1450 = vpop.f32.mrb[0].mxu0
        %v1451 = vadd.f32 0.0, %v1450
        %v1452 = vpop.f32.mrb[0].mxu0
        %1453 = vmatprep.mubr.f32.mxu0 0.0
        %1454 = vmatmul.mubr.f32.gmra.mrb[0].mxu0 %v1378
        %v1455 = vpop.f32.mrb[0].mxu0
        %v1456 = vadd.f32 0.0, %v1455
        %v1457 = vpop.f32.mrb[0].mxu0
        %1458 = vdwg.mxu0
        %v1459 = vmul.f32 %v1451, 0.35355338
        %v1460 = vmul.f32 %v1456, 0.35355338
        %v1461 = vadd.f32 %v1459, %v754
        %v1462 = vadd.f32 %v1460, %v755
        %v1463 = vsel %vm850, %v1461, -inf
        %1464 = vmax.xlane.f32.xlu0 %v1463
        %v1465 = vpop.xlane.xlu0 %1464
        %v1466 = vsel %vm850, %v1462, -inf
        %1467 = vmax.xlane.f32.xlu0 %v1466
        %v1468 = vpop.xlane.xlu0 %1467
        %v1469 = vsub.f32 %v1461, %v1465
        %v1470 = vsub.f32 %v1462, %v1468
        %v1471 = vmul.f32 %v1469, 1.442695
        %v1472 = vpow.pop %v1471
        %v1473 = vmul.f32 %v1470, 1.442695
        %v1474 = vpow.pop %v1473
        %v1475 = vsel %vm850, %v1472, 0.0
        %1476 = vadd.xlane.f32.xlu0 %v1475
        %v1477 = vpop.xlane.xlu0 %1476
        %v1478 = vsel %vm850, %v1474, 0.0
        %1479 = vadd.xlane.f32.xlu0 %v1478
        %v1480 = vpop.xlane.xlu0 %1479
        %v1481 = vrcp.pop %v1477
        %v1482 = vrcp.pop %v1480
        %v1483 = vmul.f32 %v1472, %v1481
        %v1484 = vmul.f32 %v1474, %v1482
        %1485 = vrot.lane.b32.xlu0 %v739, 40
        %v1486 = vpop.permute.xlu0 %1485
        %1487 = vrot.lane.b32.xlu0 %v744, 40
        %v1488 = vpop.permute.xlu0 %1487
        %v1492 = vsel %vm850, %v1483, 0
        %v1495 = vsel %vm850, %v1484, 0
        %1497 = vmatprep.subr.mxu0 0.0
        %1498 = vmatpush1.msra.mxu0 %v1486
        %1499 = vmatprep.subr.mxu0 0.0
        %1500 = vmatpush1.msra.mxu0 %v1488
        %1501 = vmatprep.subr.mxu0 0.0
        %1502 = vmatpush1.msra.mxu0 0.0
        %1503 = vmatprep.subr.mxu0 0.0
        %1504 = vmatpush1.msra.mxu0 0.0
        %1505 = vmatprep.subr.mxu0 0.0
        %1506 = vmatpush1.msra.mxu0 0.0
        %1507 = vmatprep.subr.mxu0 0.0
        %1508 = vmatpush1.msra.mxu0 0.0
        %1509 = vmatprep.subr.mxu0 0.0
        %1510 = vmatpush1.msra.mxu0 0.0
        %1511 = vmatprep.subr.mxu0 0.0
        %1512 = vmatpush1.msra.mxu0 0.0
        %1513 = vmatprep.subr.mxu0 0.0
        %1514 = vmatpush1.msra.mxu0 0.0
        %1515 = vmatprep.subr.mxu0 0.0
        %1516 = vmatpush1.msra.mxu0 0.0
        %1517 = vmatprep.subr.mxu0 0.0
        %1518 = vmatpush1.msra.mxu0 0.0
        %1519 = vmatprep.subr.mxu0 0.0
        %1520 = vmatpush1.msra.mxu0 0.0
        %1521 = vmatprep.subr.mxu0 0.0
        %1522 = vmatpush1.msra.mxu0 0.0
        %1523 = vmatprep.subr.mxu0 0.0
        %1524 = vmatpush1.msra.mxu0 0.0
        %1525 = vmatprep.subr.mxu0 0.0
        %1526 = vmatpush1.msra.mxu0 0.0
        %1527 = vmatprep.subr.mxu0 0.0
        %1528 = vmatpush1.msra.mxu0 0.0
        %1529 = vmatprep.subr.mxu0 0.0
        %1530 = vmatpush1.msra.mxu0 0.0
        %1531 = vmatprep.subr.mxu0 0.0
        %1532 = vmatpush1.msra.mxu0 0.0
        %1533 = vmatprep.subr.mxu0 0.0
        %1534 = vmatpush1.msra.mxu0 0.0
        %1535 = vmatprep.subr.mxu0 0.0
        %1536 = vmatpush1.msra.mxu0 0.0
        %1537 = vmatprep.subr.mxu0 0.0
        %1538 = vmatpush1.msra.mxu0 0.0
        %1539 = vmatprep.subr.mxu0 0.0
        %1540 = vmatpush1.msra.mxu0 0.0
        %1541 = vmatprep.subr.mxu0 0.0
        %1542 = vmatpush1.msra.mxu0 0.0
        %1543 = vmatprep.subr.mxu0 0.0
        %1544 = vmatpush1.msra.mxu0 0.0
        %1545 = vmatprep.subr.mxu0 0.0
        %1546 = vmatpush1.msra.mxu0 0.0
        %1547 = vmatprep.subr.mxu0 0.0
        %1548 = vmatpush1.msra.mxu0 0.0
        %1549 = vmatprep.subr.mxu0 0.0
        %1550 = vmatpush1.msra.mxu0 0.0
        %1551 = vmatprep.subr.mxu0 0.0
        %1552 = vmatpush1.msra.mxu0 0.0
        %1553 = vmatprep.subr.mxu0 0.0
        %1554 = vmatpush1.msra.mxu0 0.0
        %1555 = vmatprep.subr.mxu0 0.0
        %1556 = vmatpush1.msra.mxu0 0.0
        %1557 = vmatprep.subr.mxu0 0.0
        %1558 = vmatpush1.msra.mxu0 0.0
        %1559 = vmatprep.subr.mxu0 0.0
        %1560 = vmatpush1.msra.mxu0 0.0
        %1561 = vmatprep.mubr.f32.mxu0 0.0
        %1562 = vmatmul.mubr.f32.gmra.mrb[0].mxu0 %v1492
        %v1563 = vpop.f32.mrb[0].mxu0
        %v1564 = vadd.f32 0.0, %v1563
        %v1565 = vpop.f32.mrb[0].mxu0
        %1566 = vmatprep.mubr.f32.mxu0 0.0
        %1567 = vmatmul.mubr.f32.gmra.mrb[0].mxu0 %v1495
        %v1568 = vpop.f32.mrb[0].mxu0
        %v1569 = vadd.f32 0.0, %v1568
        %v1570 = vpop.f32.mrb[0].mxu0
        %1571 = vdwg.mxu0
        %1574 = vrot.lane.b32.xlu0 %v1156, 8
        %v1575 = vpop.permute.xlu0 %1574
        %1576 = vrot.lane.b32.xlu0 %v1161, 8
        %v1577 = vpop.permute.xlu0 %1576
        %1582 = vrot.lane.b32.xlu0 %v1360, 16
        %v1583 = vpop.permute.xlu0 %1582
        %1584 = vrot.lane.b32.xlu0 %v1365, 16
        %v1585 = vpop.permute.xlu0 %1584
        %1590 = vrot.lane.b32.xlu0 %v1564, 24
        %v1591 = vpop.permute.xlu0 %1590
        %1592 = vrot.lane.b32.xlu0 %v1569, 24
        %v1593 = vpop.permute.xlu0 %1592
        %v1596 = vsel %vm762, %v952, %v1575
        %v1597 = vsel %vm762, %v957, %v1577
        %v1598 = vsel %vm850, %v1596, %v1583
        %v1599 = vsel %vm850, %v1597, %v1585
        %vm1600 = vcmask 195584
        %v1601 = vsel %vm1600, %v1598, %v1591
        %v1602 = vsel %vm1600, %v1599, %v1593
        %v1603 = vld [vmem:[%s5] sm:$0xff]
        %v1604 = vld [vmem:[%s5 + $0x8] sm:$0xff]
        %v1605 = vld [vmem:[%s5 + $0x10] sm:$0xff]
        %v1606 = vld [vmem:[%s5 + $0x18] sm:$0xff]
        %v1607 = vld [vmem:[%s6] sm:$0x1]
        %v1609 = vlaneseq
        %v1610 = vshrl.u32 %v1609, 7
        %v1611 = vsub.s32 0, %v1610
        %v1612 = vrot.slane %v1607, %v1611
        %v1615 = vsel %vm665, %v1601, 0
        %v1618 = vsel %vm665, %v1602, 0
        %1620 = vmatprep.subr.mxu0 0.0
        %1621 = vmatpush1.msra.mxu0 %v1603
        %1622 = vmatprep.subr.mxu0 0.0
        %1623 = vmatpush1.msra.mxu0 %v1604
        %1624 = vmatprep.subr.mxu0 0.0
        %1625 = vmatpush1.msra.mxu0 %v1605
        %1626 = vmatprep.subr.mxu0 0.0
        %1627 = vmatpush1.msra.mxu0 %v1606
        %1628 = vmatprep.subr.mxu0 0.0
        %1629 = vmatpush1.msra.mxu0 0.0
        %1630 = vmatprep.subr.mxu0 0.0
        %1631 = vmatpush1.msra.mxu0 0.0
        %1632 = vmatprep.subr.mxu0 0.0
        %1633 = vmatpush1.msra.mxu0 0.0
        %1634 = vmatprep.subr.mxu0 0.0
        %1635 = vmatpush1.msra.mxu0 0.0
        %1636 = vmatprep.subr.mxu0 0.0
        %1637 = vmatpush1.msra.mxu0 0.0
        %1638 = vmatprep.subr.mxu0 0.0
        %1639 = vmatpush1.msra.mxu0 0.0
        %1640 = vmatprep.subr.mxu0 0.0
        %1641 = vmatpush1.msra.mxu0 0.0
        %1642 = vmatprep.subr.mxu0 0.0
        %1643 = vmatpush1.msra.mxu0 0.0
        %1644 = vmatprep.subr.mxu0 0.0
        %1645 = vmatpush1.msra.mxu0 0.0
        %1646 = vmatprep.subr.mxu0 0.0
        %1647 = vmatpush1.msra.mxu0 0.0
        %1648 = vmatprep.subr.mxu0 0.0
        %1649 = vmatpush1.msra.mxu0 0.0
        %1650 = vmatprep.subr.mxu0 0.0
        %1651 = vmatpush1.msra.mxu0 0.0
        %1652 = vmatprep.subr.mxu0 0.0
        %1653 = vmatpush1.msra.mxu0 0.0
        %1654 = vmatprep.subr.mxu0 0.0
        %1655 = vmatpush1.msra.mxu0 0.0
        %1656 = vmatprep.subr.mxu0 0.0
        %1657 = vmatpush1.msra.mxu0 0.0
        %1658 = vmatprep.subr.mxu0 0.0
        %1659 = vmatpush1.msra.mxu0 0.0
        %1660 = vmatprep.subr.mxu0 0.0
        %1661 = vmatpush1.msra.mxu0 0.0
        %1662 = vmatprep.subr.mxu0 0.0
        %1663 = vmatpush1.msra.mxu0 0.0
        %1664 = vmatprep.subr.mxu0 0.0
        %1665 = vmatpush1.msra.mxu0 0.0
        %1666 = vmatprep.subr.mxu0 0.0
        %1667 = vmatpush1.msra.mxu0 0.0
        %1668 = vmatprep.subr.mxu0 0.0
        %1669 = vmatpush1.msra.mxu0 0.0
        %1670 = vmatprep.subr.mxu0 0.0
        %1671 = vmatpush1.msra.mxu0 0.0
        %1672 = vmatprep.subr.mxu0 0.0
        %1673 = vmatpush1.msra.mxu0 0.0
        %1674 = vmatprep.subr.mxu0 0.0
        %1675 = vmatpush1.msra.mxu0 0.0
        %1676 = vmatprep.subr.mxu0 0.0
        %1677 = vmatpush1.msra.mxu0 0.0
        %1678 = vmatprep.subr.mxu0 0.0
        %1679 = vmatpush1.msra.mxu0 0.0
        %1680 = vmatprep.subr.mxu0 0.0
        %1681 = vmatpush1.msra.mxu0 0.0
        %1682 = vmatprep.subr.mxu0 0.0
        %1683 = vmatpush1.msra.mxu0 0.0
        %1684 = vmatprep.mubr.f32.mxu0 0.0
        %1685 = vmatmul.mubr.f32.gmra.mrb[0].mxu0 %v1615
        %v1686 = vpop.f32.mrb[0].mxu0
        %v1687 = vadd.f32 %v1612, %v1686
        %v1688 = vpop.f32.mrb[0].mxu0
        %1689 = vmatprep.mubr.f32.mxu0 0.0
        %1690 = vmatmul.mubr.f32.gmra.mrb[0].mxu0 %v1618
        %v1691 = vpop.f32.mrb[0].mxu0
        %v1692 = vadd.f32 %v1612, %v1691
        %v1693 = vpop.f32.mrb[0].mxu0
        %1694 = vdwg.mxu0
        %v1695 = vadd.f32 %v652, %v1687
        %v1696 = vadd.f32 %v653, %v1692
        %v1697 = vld [vmem:[%s7] sm:$0x1]
        %v1698 = vld [vmem:[%s8] sm:$0x1]
        %v1699 = vsel %vm665, %v1695, 0.0
        %1700 = vadd.xlane.f32.xlu0 %v1699
        %v1701 = vpop.xlane.xlu0 %1700
        %v1702 = vsel %vm665, %v1696, 0.0
        %1703 = vadd.xlane.f32.xlu0 %v1702
        %v1704 = vpop.xlane.xlu0 %1703
        %v1705 = vrcp.pop 32.0
        %v1706 = vmul.f32 %v1701, %v1705
        %v1707 = vmul.f32 %v1704, %v1705
        %v1708 = vsub.f32 %v1695, %v1706
        %v1709 = vsub.f32 %v1696, %v1707
        %v1710 = vmul.f32 %v1708, %v1708
        %v1711 = vmul.f32 %v1709, %v1709
        %v1712 = vsel %vm665, %v1710, 0.0
        %1713 = vadd.xlane.f32.xlu0 %v1712
        %v1714 = vpop.xlane.xlu0 %1713
        %v1715 = vsel %vm665, %v1711, 0.0
        %1716 = vadd.xlane.f32.xlu0 %v1715
        %v1717 = vpop.xlane.xlu0 %1716
        %v1718 = vmul.f32 %v1714, %v1705
        %v1719 = vmul.f32 %v1717, %v1705
        %v1720 = vadd.f32 %v1718, 1e-05
        %v1721 = vadd.f32 %v1719, 1e-05
        %v1722 = vrsqrt.pop %v1720
        %v1723 = vrsqrt.pop %v1721
        %v1724 = vmul.f32 %v1708, %v1722
        %v1725 = vmul.f32 %v1709, %v1723
        %v1727 = vlaneseq
        %v1728 = vshrl.u32 %v1727, 7
        %v1729 = vsub.s32 0, %v1728
        %v1730 = vrot.slane %v1697, %v1729
        %v1732 = vmul.f32 %v1724, %v1730
        %v1733 = vmul.f32 %v1725, %v1730
        %v1735 = vlaneseq
        %v1736 = vshrl.u32 %v1735, 7
        %v1737 = vsub.s32 0, %v1736
        %v1738 = vrot.slane %v1698, %v1737
        %v1740 = vadd.f32 %v1732, %v1738
        %v1741 = vadd.f32 %v1733, %v1738
        %v1742 = vld [vmem:[%s9] sm:$0x1]
        %v1744 = vlaneseq
        %v1745 = vshrl.u32 %v1744, 7
        %v1746 = vsub.s32 0, %v1745
        %v1747 = vrot.slane %v1742, %v1746
        %v1749 = vadd.f32 %v1740, %v1747
        %v1750 = vadd.f32 %v1741, %v1747
        %v1751 = vld [vmem:[%s10] sm:$0x1]
        %v1752 = vld [vmem:[%s11] sm:$0x1]
        %v1753 = vsel %vm665, %v1749, 0.0
        %1754 = vadd.xlane.f32.xlu0 %v1753
        %v1755 = vpop.xlane.xlu0 %1754
        %v1756 = vsel %vm665, %v1750, 0.0
        %1757 = vadd.xlane.f32.xlu0 %v1756
        %v1758 = vpop.xlane.xlu0 %1757
        %v1759 = vmul.f32 %v1755, %v1705
        %v1760 = vmul.f32 %v1758, %v1705
        %v1761 = vsub.f32 %v1749, %v1759
        %v1762 = vsub.f32 %v1750, %v1760
        %v1763 = vmul.f32 %v1761, %v1761
        %v1764 = vmul.f32 %v1762, %v1762
        %v1765 = vsel %vm665, %v1763, 0.0
        %1766 = vadd.xlane.f32.xlu0 %v1765
        %v1767 = vpop.xlane.xlu0 %1766
        %v1768 = vsel %vm665, %v1764, 0.0
        %1769 = vadd.xlane.f32.xlu0 %v1768
        %v1770 = vpop.xlane.xlu0 %1769
        %v1771 = vmul.f32 %v1767, %v1705
        %v1772 = vmul.f32 %v1770, %v1705
        %v1773 = vadd.f32 %v1771, 1e-05
        %v1774 = vadd.f32 %v1772, 1e-05
        %v1775 = vrsqrt.pop %v1773
        %v1776 = vrsqrt.pop %v1774
        %v1777 = vmul.f32 %v1761, %v1775
        %v1778 = vmul.f32 %v1762, %v1776
        %v1780 = vlaneseq
        %v1781 = vshrl.u32 %v1780, 7
        %v1782 = vsub.s32 0, %v1781
        %v1783 = vrot.slane %v1751, %v1782
        %v1785 = vmul.f32 %v1777, %v1783
        %v1786 = vmul.f32 %v1778, %v1783
        %v1788 = vlaneseq
        %v1789 = vshrl.u32 %v1788, 7
        %v1790 = vsub.s32 0, %v1789
        %v1791 = vrot.slane %v1752, %v1790
        %v1793 = vadd.f32 %v1785, %v1791
        %v1794 = vadd.f32 %v1786, %v1791
        %v1795 = vld [vmem:[%s12] sm:$0xff]
        %v1796 = vld [vmem:[%s12 + $0x8] sm:$0xff]
        %v1797 = vld [vmem:[%s12 + $0x10] sm:$0xff]
        %v1798 = vld [vmem:[%s12 + $0x18] sm:$0xff]
        %v1799 = vld [vmem:[%s12 + $0x20] sm:$0xff]
        %v1800 = vld [vmem:[%s12 + $0x28] sm:$0xff]
        %v1801 = vld [vmem:[%s12 + $0x30] sm:$0xff]
        %v1802 = vld [vmem:[%s12 + $0x38] sm:$0xff]
        %v1803 = vld [vmem:[%s12 + $0x40] sm:$0xff]
        %v1804 = vld [vmem:[%s12 + $0x48] sm:$0xff]
        %v1805 = vld [vmem:[%s12 + $0x50] sm:$0xff]
        %v1806 = vld [vmem:[%s12 + $0x58] sm:$0xff]
        %v1807 = vld [vmem:[%s12 + $0x60] sm:$0xff]
        %v1808 = vld [vmem:[%s12 + $0x68] sm:$0xff]
        %v1809 = vld [vmem:[%s12 + $0x70] sm:$0xff]
        %v1810 = vld [vmem:[%s12 + $0x78] sm:$0xff]
        %v1811 = vld [vmem:[%s12 + $0x80] sm:$0xff]
        %v1812 = vld [vmem:[%s12 + $0x88] sm:$0xff]
        %v1813 = vld [vmem:[%s12 + $0x90] sm:$0xff]
        %v1814 = vld [vmem:[%s12 + $0x98] sm:$0xff]
        %v1815 = vld [vmem:[%s12 + $0xa0] sm:$0xff]
        %v1816 = vld [vmem:[%s12 + $0xa8] sm:$0xff]
        %v1817 = vld [vmem:[%s12 + $0xb0] sm:$0xff]
        %v1818 = vld [vmem:[%s12 + $0xb8] sm:$0xff]
        %v1819 = vld [vmem:[%s12 + $0xc0] sm:$0xff]
        %v1820 = vld [vmem:[%s12 + $0xc8] sm:$0xff]
        %v1821 = vld [vmem:[%s12 + $0xd0] sm:$0xff]
        %v1822 = vld [vmem:[%s12 + $0xd8] sm:$0xff]
        %v1823 = vld [vmem:[%s12 + $0xe0] sm:$0xff]
        %v1824 = vld [vmem:[%s12 + $0xe8] sm:$0xff]
        %v1825 = vld [vmem:[%s12 + $0xf0] sm:$0xff]
        %v1826 = vld [vmem:[%s12 + $0xf8] sm:$0xff]
        %v1827 = vld [vmem:[%s12 + $0x100] sm:$0xff]
        %v1828 = vld [vmem:[%s12 + $0x108] sm:$0xff]
        %v1829 = vld [vmem:[%s12 + $0x110] sm:$0xff]
        %v1830 = vld [vmem:[%s12 + $0x118] sm:$0xff]
        %v1831 = vld [vmem:[%s12 + $0x120] sm:$0xff]
        %v1832 = vld [vmem:[%s12 + $0x128] sm:$0xff]
        %v1833 = vld [vmem:[%s12 + $0x130] sm:$0xff]
        %v1834 = vld [vmem:[%s12 + $0x138] sm:$0xff]
        %v1835 = vld [vmem:[%s12 + $0x140] sm:$0xff]
        %v1836 = vld [vmem:[%s12 + $0x148] sm:$0xff]
        %v1837 = vld [vmem:[%s12 + $0x150] sm:$0xff]
        %v1838 = vld [vmem:[%s12 + $0x158] sm:$0xff]
        %v1839 = vld [vmem:[%s12 + $0x160] sm:$0xff]
        %v1840 = vld [vmem:[%s12 + $0x168] sm:$0xff]
        %v1841 = vld [vmem:[%s12 + $0x170] sm:$0xff]
        %v1842 = vld [vmem:[%s12 + $0x178] sm:$0xff]
        %v1843 = vld [vmem:[%s12 + $0x180] sm:$0xff]
        %v1844 = vld [vmem:[%s12 + $0x188] sm:$0xff]
        %v1845 = vld [vmem:[%s12 + $0x190] sm:$0xff]
        %v1846 = vld [vmem:[%s12 + $0x198] sm:$0xff]
        %v1847 = vld [vmem:[%s12 + $0x1a0] sm:$0xff]
        %v1848 = vld [vmem:[%s12 + $0x1a8] sm:$0xff]
        %v1849 = vld [vmem:[%s12 + $0x1b0] sm:$0xff]
        %v1850 = vld [vmem:[%s12 + $0x1b8] sm:$0xff]
        %v1851 = vld [vmem:[%s12 + $0x1c0] sm:$0xff]
        %v1852 = vld [vmem:[%s12 + $0x1c8] sm:$0xff]
        %v1853 = vld [vmem:[%s12 + $0x1d0] sm:$0xff]
        %v1854 = vld [vmem:[%s12 + $0x1d8] sm:$0xff]
        %v1855 = vld [vmem:[%s12 + $0x1e0] sm:$0xff]
        %v1856 = vld [vmem:[%s12 + $0x1e8] sm:$0xff]
        %v1857 = vld [vmem:[%s12 + $0x1f0] sm:$0xff]
        %v1858 = vld [vmem:[%s12 + $0x1f8] sm:$0xff]
        %v1859 = vld [vmem:[%s13] sm:$0xff]
        %v1860 = vld [vmem:[%s13 + $0x8] sm:$0xff]
        %v1863 = vlaneseq
        %v1864 = vshrl.u32 %v1863, 7
        %v1865 = vsub.s32 0, %v1864
        %v1866 = vrot.slane %v1859, %v1865
        %v1867 = vlaneseq
        %v1868 = vshrl.u32 %v1867, 7
        %v1869 = vsub.s32 1, %v1868
        %v1870 = vrot.slane %v1859, %v1869
        %v1871 = vlaneseq
        %v1872 = vshrl.u32 %v1871, 7
        %v1873 = vsub.s32 2, %v1872
        %v1874 = vrot.slane %v1859, %v1873
        %v1875 = vlaneseq
        %v1876 = vshrl.u32 %v1875, 7
        %v1877 = vsub.s32 3, %v1876
        %v1878 = vrot.slane %v1859, %v1877
        %v1879 = vlaneseq
        %v1880 = vshrl.u32 %v1879, 7
        %v1881 = vsub.s32 4, %v1880
        %v1882 = vrot.slane %v1859, %v1881
        %v1883 = vlaneseq
        %v1884 = vshrl.u32 %v1883, 7
        %v1885 = vsub.s32 5, %v1884
        %v1886 = vrot.slane %v1859, %v1885
        %v1887 = vlaneseq
        %v1888 = vshrl.u32 %v1887, 7
        %v1889 = vsub.s32 6, %v1888
        %v1890 = vrot.slane %v1859, %v1889
        %v1891 = vlaneseq
        %v1892 = vshrl.u32 %v1891, 7
        %v1893 = vsub.s32 7, %v1892
        %v1894 = vrot.slane %v1859, %v1893
        %v1895 = vlaneseq
        %v1896 = vshrl.u32 %v1895, 7
        %v1897 = vsub.s32 0, %v1896
        %v1898 = vrot.slane %v1860, %v1897
        %v1899 = vlaneseq
        %v1900 = vshrl.u32 %v1899, 7
        %v1901 = vsub.s32 1, %v1900
        %v1902 = vrot.slane %v1860, %v1901
        %v1903 = vlaneseq
        %v1904 = vshrl.u32 %v1903, 7
        %v1905 = vsub.s32 2, %v1904
        %v1906 = vrot.slane %v1860, %v1905
        %v1907 = vlaneseq
        %v1908 = vshrl.u32 %v1907, 7
        %v1909 = vsub.s32 3, %v1908
        %v1910 = vrot.slane %v1860, %v1909
        %v1911 = vlaneseq
        %v1912 = vshrl.u32 %v1911, 7
        %v1913 = vsub.s32 4, %v1912
        %v1914 = vrot.slane %v1860, %v1913
        %v1915 = vlaneseq
        %v1916 = vshrl.u32 %v1915, 7
        %v1917 = vsub.s32 5, %v1916
        %v1918 = vrot.slane %v1860, %v1917
        %v1919 = vlaneseq
        %v1920 = vshrl.u32 %v1919, 7
        %v1921 = vsub.s32 6, %v1920
        %v1922 = vrot.slane %v1860, %v1921
        %v1923 = vlaneseq
        %v1924 = vshrl.u32 %v1923, 7
        %v1925 = vsub.s32 7, %v1924
        %v1926 = vrot.slane %v1860, %v1925
        %v1944 = vsel %vm665, %v1793, 0
        %v1947 = vsel %vm665, %v1794, 0
        %1949 = vmatprep.subr.mxu0 %v1796
        %1950 = vmatpush1.msra.mxu0 %v1795
        %1951 = vmatprep.subr.mxu0 %v1812
        %1952 = vmatpush1.msra.mxu0 %v1811
        %1953 = vmatprep.subr.mxu0 %v1828
        %1954 = vmatpush1.msra.mxu0 %v1827
        %1955 = vmatprep.subr.mxu0 %v1844
        %1956 = vmatpush1.msra.mxu0 %v1843
        %1957 = vmatprep.subr.mxu0 0.0
        %1958 = vmatpush1.msra.mxu0 0.0
        %1959 = vmatprep.subr.mxu0 0.0
        %1960 = vmatpush1.msra.mxu0 0.0
        %1961 = vmatprep.subr.mxu0 0.0
        %1962 = vmatpush1.msra.mxu0 0.0
        %1963 = vmatprep.subr.mxu0 0.0
        %1964 = vmatpush1.msra.mxu0 0.0
        %1965 = vmatprep.subr.mxu0 0.0
        %1966 = vmatpush1.msra.mxu0 0.0
        %1967 = vmatprep.subr.mxu0 0.0
        %1968 = vmatpush1.msra.mxu0 0.0
        %1969 = vmatprep.subr.mxu0 0.0
        %1970 = vmatpush1.msra.mxu0 0.0
        %1971 = vmatprep.subr.mxu0 0.0
        %1972 = vmatpush1.msra.mxu0 0.0
        %1973 = vmatprep.subr.mxu0 0.0
        %1974 = vmatpush1.msra.mxu0 0.0
        %1975 = vmatprep.subr.mxu0 0.0
        %1976 = vmatpush1.msra.mxu0 0.0
        %1977 = vmatprep.subr.mxu0 0.0
        %1978 = vmatpush1.msra.mxu0 0.0
        %1979 = vmatprep.subr.mxu0 0.0
        %1980 = vmatpush1.msra.mxu0 0.0
        %1981 = vmatprep.subr.mxu0 0.0
        %1982 = vmatpush1.msra.mxu0 0.0
        %1983 = vmatprep.subr.mxu0 0.0
        %1984 = vmatpush1.msra.mxu0 0.0
        %1985 = vmatprep.subr.mxu0 0.0
        %1986 = vmatpush1.msra.mxu0 0.0
        %1987 = vmatprep.subr.mxu0 0.0
        %1988 = vmatpush1.msra.mxu0 0.0
        %1989 = vmatprep.subr.mxu0 0.0
        %1990 = vmatpush1.msra.mxu0 0.0
        %1991 = vmatprep.subr.mxu0 0.0
        %1992 = vmatpush1.msra.mxu0 0.0
        %1993 = vmatprep.subr.mxu0 0.0
        %1994 = vmatpush1.msra.mxu0 0.0
        %1995 = vmatprep.subr.mxu0 0.0
        %1996 = vmatpush1.msra.mxu0 0.0
        %1997 = vmatprep.subr.mxu0 0.0
        %1998 = vmatpush1.msra.mxu0 0.0
        %1999 = vmatprep.subr.mxu0 0.0
        %2000 = vmatpush1.msra.mxu0 0.0
        %2001 = vmatprep.subr.mxu0 0.0
        %2002 = vmatpush1.msra.mxu0 0.0
        %2003 = vmatprep.subr.mxu0 0.0
        %2004 = vmatpush1.msra.mxu0 0.0
        %2005 = vmatprep.subr.mxu0 0.0
        %2006 = vmatpush1.msra.mxu0 0.0
        %2007 = vmatprep.subr.mxu0 0.0
        %2008 = vmatpush1.msra.mxu0 0.0
        %2009 = vmatprep.subr.mxu0 0.0
        %2010 = vmatpush1.msra.mxu0 0.0
        %2011 = vmatprep.subr.mxu0 0.0
        %2012 = vmatpush1.msra.mxu0 0.0
        %2013 = vmatprep.mubr.f32.mxu0 0.0
        %2014 = vmatmul.mubr.f32.gmra.mrb[0].mxu0 %v1944
        %v2015 = vpop.f32.mrb[0].mxu0
        %v2016 = vadd.f32 %v1866, %v2015
        %v2017 = vpop.f32.mrb[0].mxu0
        %v2018 = vadd.f32 %v1870, %v2017
        %2019 = vmatprep.mubr.f32.mxu0 0.0
        %2020 = vmatmul.mubr.f32.gmra.mrb[0].mxu0 %v1947
        %v2021 = vpop.f32.mrb[0].mxu0
        %v2022 = vadd.f32 %v1866, %v2021
        %v2023 = vpop.f32.mrb[0].mxu0
        %v2024 = vadd.f32 %v1870, %v2023
        %2025 = vdwg.mxu0
        %2026 = vmatprep.subr.mxu0 %v1798
        %2027 = vmatpush1.msra.mxu0 %v1797
        %2028 = vmatprep.subr.mxu0 %v1814
        %2029 = vmatpush1.msra.mxu0 %v1813
        %2030 = vmatprep.subr.mxu0 %v1830
        %2031 = vmatpush1.msra.mxu0 %v1829
        %2032 = vmatprep.subr.mxu0 %v1846
        %2033 = vmatpush1.msra.mxu0 %v1845
        %2034 = vmatprep.subr.mxu0 0.0
        %2035 = vmatpush1.msra.mxu0 0.0
        %2036 = vmatprep.subr.mxu0 0.0
        %2037 = vmatpush1.msra.mxu0 0.0
        %2038 = vmatprep.subr.mxu0 0.0
        %2039 = vmatpush1.msra.mxu0 0.0
        %2040 = vmatprep.subr.mxu0 0.0
        %2041 = vmatpush1.msra.mxu0 0.0
        %2042 = vmatprep.subr.mxu0 0.0
        %2043 = vmatpush1.msra.mxu0 0.0
        %2044 = vmatprep.subr.mxu0 0.0
        %2045 = vmatpush1.msra.mxu0 0.0
        %2046 = vmatprep.subr.mxu0 0.0
        %2047 = vmatpush1.msra.mxu0 0.0
        %2048 = vmatprep.subr.mxu0 0.0
        %2049 = vmatpush1.msra.mxu0 0.0
        %2050 = vmatprep.subr.mxu0 0.0
        %2051 = vmatpush1.msra.mxu0 0.0
        %2052 = vmatprep.subr.mxu0 0.0
        %2053 = vmatpush1.msra.mxu0 0.0
        %2054 = vmatprep.subr.mxu0 0.0
        %2055 = vmatpush1.msra.mxu0 0.0
        %2056 = vmatprep.subr.mxu0 0.0
        %2057 = vmatpush1.msra.mxu0 0.0
        %2058 = vmatprep.subr.mxu0 0.0
        %2059 = vmatpush1.msra.mxu0 0.0
        %2060 = vmatprep.subr.mxu0 0.0
        %2061 = vmatpush1.msra.mxu0 0.0
        %2062 = vmatprep.subr.mxu0 0.0
        %2063 = vmatpush1.msra.mxu0 0.0
        %2064 = vmatprep.subr.mxu0 0.0
        %2065 = vmatpush1.msra.mxu0 0.0
        %2066 = vmatprep.subr.mxu0 0.0
        %2067 = vmatpush1.msra.mxu0 0.0
        %2068 = vmatprep.subr.mxu0 0.0
        %2069 = vmatpush1.msra.mxu0 0.0
        %2070 = vmatprep.subr.mxu0 0.0
        %2071 = vmatpush1.msra.mxu0 0.0
        %2072 = vmatprep.subr.mxu0 0.0
        %2073 = vmatpush1.msra.mxu0 0.0
        %2074 = vmatprep.subr.mxu0 0.0
        %2075 = vmatpush1.msra.mxu0 0.0
        %2076 = vmatprep.subr.mxu0 0.0
        %2077 = vmatpush1.msra.mxu0 0.0
        %2078 = vmatprep.subr.mxu0 0.0
        %2079 = vmatpush1.msra.mxu0 0.0
        %2080 = vmatprep.subr.mxu0 0.0
        %2081 = vmatpush1.msra.mxu0 0.0
        %2082 = vmatprep.subr.mxu0 0.0
        %2083 = vmatpush1.msra.mxu0 0.0
        %2084 = vmatprep.subr.mxu0 0.0
        %2085 = vmatpush1.msra.mxu0 0.0
        %2086 = vmatprep.subr.mxu0 0.0
        %2087 = vmatpush1.msra.mxu0 0.0
        %2088 = vmatprep.subr.mxu0 0.0
        %2089 = vmatpush1.msra.mxu0 0.0
        %2090 = vmatprep.mubr.f32.mxu0 0.0
        %2091 = vmatmul.mubr.f32.gmra.mrb[0].mxu0 %v1944
        %v2092 = vpop.f32.mrb[0].mxu0
        %v2093 = vadd.f32 %v1874, %v2092
        %v2094 = vpop.f32.mrb[0].mxu0
        %v2095 = vadd.f32 %v1878, %v2094
        %2096 = vmatprep.mubr.f32.mxu0 0.0
        %2097 = vmatmul.mubr.f32.gmra.mrb[0].mxu0 %v1947
        %v2098 = vpop.f32.mrb[0].mxu0
        %v2099 = vadd.f32 %v1874, %v2098
        %v2100 = vpop.f32.mrb[0].mxu0
        %v2101 = vadd.f32 %v1878, %v2100
        %2102 = vdwg.mxu0
        %2103 = vmatprep.subr.mxu0 %v1800
        %2104 = vmatpush1.msra.mxu0 %v1799
        %2105 = vmatprep.subr.mxu0 %v1816
        %2106 = vmatpush1.msra.mxu0 %v1815
        %2107 = vmatprep.subr.mxu0 %v1832
        %2108 = vmatpush1.msra.mxu0 %v1831
        %2109 = vmatprep.subr.mxu0 %v1848
        %2110 = vmatpush1.msra.mxu0 %v1847
        %2111 = vmatprep.subr.mxu0 0.0
        %2112 = vmatpush1.msra.mxu0 0.0
        %2113 = vmatprep.subr.mxu0 0.0
        %2114 = vmatpush1.msra.mxu0 0.0
        %2115 = vmatprep.subr.mxu0 0.0
        %2116 = vmatpush1.msra.mxu0 0.0
        %2117 = vmatprep.subr.mxu0 0.0
        %2118 = vmatpush1.msra.mxu0 0.0
        %2119 = vmatprep.subr.mxu0 0.0
        %2120 = vmatpush1.msra.mxu0 0.0
        %2121 = vmatprep.subr.mxu0 0.0
        %2122 = vmatpush1.msra.mxu0 0.0
        %2123 = vmatprep.subr.mxu0 0.0
        %2124 = vmatpush1.msra.mxu0 0.0
        %2125 = vmatprep.subr.mxu0 0.0
        %2126 = vmatpush1.msra.mxu0 0.0
        %2127 = vmatprep.subr.mxu0 0.0
        %2128 = vmatpush1.msra.mxu0 0.0
        %2129 = vmatprep.subr.mxu0 0.0
        %2130 = vmatpush1.msra.mxu0 0.0
        %2131 = vmatprep.subr.mxu0 0.0
        %2132 = vmatpush1.msra.mxu0 0.0
        %2133 = vmatprep.subr.mxu0 0.0
        %2134 = vmatpush1.msra.mxu0 0.0
        %2135 = vmatprep.subr.mxu0 0.0
        %2136 = vmatpush1.msra.mxu0 0.0
        %2137 = vmatprep.subr.mxu0 0.0
        %2138 = vmatpush1.msra.mxu0 0.0
        %2139 = vmatprep.subr.mxu0 0.0
        %2140 = vmatpush1.msra.mxu0 0.0
        %2141 = vmatprep.subr.mxu0 0.0
        %2142 = vmatpush1.msra.mxu0 0.0
        %2143 = vmatprep.subr.mxu0 0.0
        %2144 = vmatpush1.msra.mxu0 0.0
        %2145 = vmatprep.subr.mxu0 0.0
        %2146 = vmatpush1.msra.mxu0 0.0
        %2147 = vmatprep.subr.mxu0 0.0
        %2148 = vmatpush1.msra.mxu0 0.0
        %2149 = vmatprep.subr.mxu0 0.0
        %2150 = vmatpush1.msra.mxu0 0.0
        %2151 = vmatprep.subr.mxu0 0.0
        %2152 = vmatpush1.msra.mxu0 0.0
        %2153 = vmatprep.subr.mxu0 0.0
        %2154 = vmatpush1.msra.mxu0 0.0
        %2155 = vmatprep.subr.mxu0 0.0
        %2156 = vmatpush1.msra.mxu0 0.0
        %2157 = vmatprep.subr.mxu0 0.0
        %2158 = vmatpush1.msra.mxu0 0.0
        %2159 = vmatprep.subr.mxu0 0.0
        %2160 = vmatpush1.msra.mxu0 0.0
        %2161 = vmatprep.subr.mxu0 0.0
        %2162 = vmatpush1.msra.mxu0 0.0
        %2163 = vmatprep.subr.mxu0 0.0
        %2164 = vmatpush1.msra.mxu0 0.0
        %2165 = vmatprep.subr.mxu0 0.0
        %2166 = vmatpush1.msra.mxu0 0.0
        %2167 = vmatprep.mubr.f32.mxu0 0.0
        %2168 = vmatmul.mubr.f32.gmra.mrb[0].mxu0 %v1944
        %v2169 = vpop.f32.mrb[0].mxu0
        %v2170 = vadd.f32 %v1882, %v2169
        %v2171 = vpop.f32.mrb[0].mxu0
        %v2172 = vadd.f32 %v1886, %v2171
        %2173 = vmatprep.mubr.f32.mxu0 0.0
        %2174 = vmatmul.mubr.f32.gmra.mrb[0].mxu0 %v1947
        %v2175 = vpop.f32.mrb[0].mxu0
        %v2176 = vadd.f32 %v1882, %v2175
        %v2177 = vpop.f32.mrb[0].mxu0
        %v2178 = vadd.f32 %v1886, %v2177
        %2179 = vdwg.mxu0
        %2180 = vmatprep.subr.mxu0 %v1802
        %2181 = vmatpush1.msra.mxu0 %v1801
        %2182 = vmatprep.subr.mxu0 %v1818
        %2183 = vmatpush1.msra.mxu0 %v1817
        %2184 = vmatprep.subr.mxu0 %v1834
        %2185 = vmatpush1.msra.mxu0 %v1833
        %2186 = vmatprep.subr.mxu0 %v1850
        %2187 = vmatpush1.msra.mxu0 %v1849
        %2188 = vmatprep.subr.mxu0 0.0
        %2189 = vmatpush1.msra.mxu0 0.0
        %2190 = vmatprep.subr.mxu0 0.0
        %2191 = vmatpush1.msra.mxu0 0.0
        %2192 = vmatprep.subr.mxu0 0.0
        %2193 = vmatpush1.msra.mxu0 0.0
        %2194 = vmatprep.subr.mxu0 0.0
        %2195 = vmatpush1.msra.mxu0 0.0
        %2196 = vmatprep.subr.mxu0 0.0
        %2197 = vmatpush1.msra.mxu0 0.0
        %2198 = vmatprep.subr.mxu0 0.0
        %2199 = vmatpush1.msra.mxu0 0.0
        %2200 = vmatprep.subr.mxu0 0.0
        %2201 = vmatpush1.msra.mxu0 0.0
        %2202 = vmatprep.subr.mxu0 0.0
        %2203 = vmatpush1.msra.mxu0 0.0
        %2204 = vmatprep.subr.mxu0 0.0
        %2205 = vmatpush1.msra.mxu0 0.0
        %2206 = vmatprep.subr.mxu0 0.0
        %2207 = vmatpush1.msra.mxu0 0.0
        %2208 = vmatprep.subr.mxu0 0.0
        %2209 = vmatpush1.msra.mxu0 0.0
        %2210 = vmatprep.subr.mxu0 0.0
        %2211 = vmatpush1.msra.mxu0 0.0
        %2212 = vmatprep.subr.mxu0 0.0
        %2213 = vmatpush1.msra.mxu0 0.0
        %2214 = vmatprep.subr.mxu0 0.0
        %2215 = vmatpush1.msra.mxu0 0.0
        %2216 = vmatprep.subr.mxu0 0.0
        %2217 = vmatpush1.msra.mxu0 0.0
        %2218 = vmatprep.subr.mxu0 0.0
        %2219 = vmatpush1.msra.mxu0 0.0
        %2220 = vmatprep.subr.mxu0 0.0
        %2221 = vmatpush1.msra.mxu0 0.0
        %2222 = vmatprep.subr.mxu0 0.0
        %2223 = vmatpush1.msra.mxu0 0.0
        %2224 = vmatprep.subr.mxu0 0.0
        %2225 = vmatpush1.msra.mxu0 0.0
        %2226 = vmatprep.subr.mxu0 0.0
        %2227 = vmatpush1.msra.mxu0 0.0
        %2228 = vmatprep.subr.mxu0 0.0
        %2229 = vmatpush1.msra.mxu0 0.0
        %2230 = vmatprep.subr.mxu0 0.0
        %2231 = vmatpush1.msra.mxu0 0.0
        %2232 = vmatprep.subr.mxu0 0.0
        %2233 = vmatpush1.msra.mxu0 0.0
        %2234 = vmatprep.subr.mxu0 0.0
        %2235 = vmatpush1.msra.mxu0 0.0
        %2236 = vmatprep.subr.mxu0 0.0
        %2237 = vmatpush1.msra.mxu0 0.0
        %2238 = vmatprep.subr.mxu0 0.0
        %2239 = vmatpush1.msra.mxu0 0.0
        %2240 = vmatprep.subr.mxu0 0.0
        %2241 = vmatpush1.msra.mxu0 0.0
        %2242 = vmatprep.subr.mxu0 0.0
        %2243 = vmatpush1.msra.mxu0 0.0
        %2244 = vmatprep.mubr.f32.mxu0 0.0
        %2245 = vmatmul.mubr.f32.gmra.mrb[0].mxu0 %v1944
        %v2246 = vpop.f32.mrb[0].mxu0
        %v2247 = vadd.f32 %v1890, %v2246
        %v2248 = vpop.f32.mrb[0].mxu0
        %v2249 = vadd.f32 %v1894, %v2248
        %2250 = vmatprep.mubr.f32.mxu0 0.0
        %2251 = vmatmul.mubr.f32.gmra.mrb[0].mxu0 %v1947
        %v2252 = vpop.f32.mrb[0].mxu0
        %v2253 = vadd.f32 %v1890, %v2252
        %v2254 = vpop.f32.mrb[0].mxu0
        %v2255 = vadd.f32 %v1894, %v2254
        %2256 = vdwg.mxu0
        %2257 = vmatprep.subr.mxu0 %v1804
        %2258 = vmatpush1.msra.mxu0 %v1803
        %2259 = vmatprep.subr.mxu0 %v1820
        %2260 = vmatpush1.msra.mxu0 %v1819
        %2261 = vmatprep.subr.mxu0 %v1836
        %2262 = vmatpush1.msra.mxu0 %v1835
        %2263 = vmatprep.subr.mxu0 %v1852
        %2264 = vmatpush1.msra.mxu0 %v1851
        %2265 = vmatprep.subr.mxu0 0.0
        %2266 = vmatpush1.msra.mxu0 0.0
        %2267 = vmatprep.subr.mxu0 0.0
        %2268 = vmatpush1.msra.mxu0 0.0
        %2269 = vmatprep.subr.mxu0 0.0
        %2270 = vmatpush1.msra.mxu0 0.0
        %2271 = vmatprep.subr.mxu0 0.0
        %2272 = vmatpush1.msra.mxu0 0.0
        %2273 = vmatprep.subr.mxu0 0.0
        %2274 = vmatpush1.msra.mxu0 0.0
        %2275 = vmatprep.subr.mxu0 0.0
        %2276 = vmatpush1.msra.mxu0 0.0
        %2277 = vmatprep.subr.mxu0 0.0
        %2278 = vmatpush1.msra.mxu0 0.0
        %2279 = vmatprep.subr.mxu0 0.0
        %2280 = vmatpush1.msra.mxu0 0.0
        %2281 = vmatprep.subr.mxu0 0.0
        %2282 = vmatpush1.msra.mxu0 0.0
        %2283 = vmatprep.subr.mxu0 0.0
        %2284 = vmatpush1.msra.mxu0 0.0
        %2285 = vmatprep.subr.mxu0 0.0
        %2286 = vmatpush1.msra.mxu0 0.0
        %2287 = vmatprep.subr.mxu0 0.0
        %2288 = vmatpush1.msra.mxu0 0.0
        %2289 = vmatprep.subr.mxu0 0.0
        %2290 = vmatpush1.msra.mxu0 0.0
        %2291 = vmatprep.subr.mxu0 0.0
        %2292 = vmatpush1.msra.mxu0 0.0
        %2293 = vmatprep.subr.mxu0 0.0
        %2294 = vmatpush1.msra.mxu0 0.0
        %2295 = vmatprep.subr.mxu0 0.0
        %2296 = vmatpush1.msra.mxu0 0.0
        %2297 = vmatprep.subr.mxu0 0.0
        %2298 = vmatpush1.msra.mxu0 0.0
        %2299 = vmatprep.subr.mxu0 0.0
        %2300 = vmatpush1.msra.mxu0 0.0
        %2301 = vmatprep.subr.mxu0 0.0
        %2302 = vmatpush1.msra.mxu0 0.0
        %2303 = vmatprep.subr.mxu0 0.0
        %2304 = vmatpush1.msra.mxu0 0.0
        %2305 = vmatprep.subr.mxu0 0.0
        %2306 = vmatpush1.msra.mxu0 0.0
        %2307 = vmatprep.subr.mxu0 0.0
        %2308 = vmatpush1.msra.mxu0 0.0
        %2309 = vmatprep.subr.mxu0 0.0
        %2310 = vmatpush1.msra.mxu0 0.0
        %2311 = vmatprep.subr.mxu0 0.0
        %2312 = vmatpush1.msra.mxu0 0.0
        %2313 = vmatprep.subr.mxu0 0.0
        %2314 = vmatpush1.msra.mxu0 0.0
        %2315 = vmatprep.subr.mxu0 0.0
        %2316 = vmatpush1.msra.mxu0 0.0
        %2317 = vmatprep.subr.mxu0 0.0
        %2318 = vmatpush1.msra.mxu0 0.0
        %2319 = vmatprep.subr.mxu0 0.0
        %2320 = vmatpush1.msra.mxu0 0.0
        %2321 = vmatprep.mubr.f32.mxu0 0.0
        %2322 = vmatmul.mubr.f32.gmra.mrb[0].mxu0 %v1944
        %v2323 = vpop.f32.mrb[0].mxu0
        %v2324 = vadd.f32 %v1898, %v2323
        %v2325 = vpop.f32.mrb[0].mxu0
        %v2326 = vadd.f32 %v1902, %v2325
        %2327 = vmatprep.mubr.f32.mxu0 0.0
        %2328 = vmatmul.mubr.f32.gmra.mrb[0].mxu0 %v1947
        %v2329 = vpop.f32.mrb[0].mxu0
        %v2330 = vadd.f32 %v1898, %v2329
        %v2331 = vpop.f32.mrb[0].mxu0
        %v2332 = vadd.f32 %v1902, %v2331
        %2333 = vdwg.mxu0
        %2334 = vmatprep.subr.mxu0 %v1806
        %2335 = vmatpush1.msra.mxu0 %v1805
        %2336 = vmatprep.subr.mxu0 %v1822
        %2337 = vmatpush1.msra.mxu0 %v1821
        %2338 = vmatprep.subr.mxu0 %v1838
        %2339 = vmatpush1.msra.mxu0 %v1837
        %2340 = vmatprep.subr.mxu0 %v1854
        %2341 = vmatpush1.msra.mxu0 %v1853
        %2342 = vmatprep.subr.mxu0 0.0
        %2343 = vmatpush1.msra.mxu0 0.0
        %2344 = vmatprep.subr.mxu0 0.0
        %2345 = vmatpush1.msra.mxu0 0.0
        %2346 = vmatprep.subr.mxu0 0.0
        %2347 = vmatpush1.msra.mxu0 0.0
        %2348 = vmatprep.subr.mxu0 0.0
        %2349 = vmatpush1.msra.mxu0 0.0
        %2350 = vmatprep.subr.mxu0 0.0
        %2351 = vmatpush1.msra.mxu0 0.0
        %2352 = vmatprep.subr.mxu0 0.0
        %2353 = vmatpush1.msra.mxu0 0.0
        %2354 = vmatprep.subr.mxu0 0.0
        %2355 = vmatpush1.msra.mxu0 0.0
        %2356 = vmatprep.subr.mxu0 0.0
        %2357 = vmatpush1.msra.mxu0 0.0
        %2358 = vmatprep.subr.mxu0 0.0
        %2359 = vmatpush1.msra.mxu0 0.0
        %2360 = vmatprep.subr.mxu0 0.0
        %2361 = vmatpush1.msra.mxu0 0.0
        %2362 = vmatprep.subr.mxu0 0.0
        %2363 = vmatpush1.msra.mxu0 0.0
        %2364 = vmatprep.subr.mxu0 0.0
        %2365 = vmatpush1.msra.mxu0 0.0
        %2366 = vmatprep.subr.mxu0 0.0
        %2367 = vmatpush1.msra.mxu0 0.0
        %2368 = vmatprep.subr.mxu0 0.0
        %2369 = vmatpush1.msra.mxu0 0.0
        %2370 = vmatprep.subr.mxu0 0.0
        %2371 = vmatpush1.msra.mxu0 0.0
        %2372 = vmatprep.subr.mxu0 0.0
        %2373 = vmatpush1.msra.mxu0 0.0
        %2374 = vmatprep.subr.mxu0 0.0
        %2375 = vmatpush1.msra.mxu0 0.0
        %2376 = vmatprep.subr.mxu0 0.0
        %2377 = vmatpush1.msra.mxu0 0.0
        %2378 = vmatprep.subr.mxu0 0.0
        %2379 = vmatpush1.msra.mxu0 0.0
        %2380 = vmatprep.subr.mxu0 0.0
        %2381 = vmatpush1.msra.mxu0 0.0
        %2382 = vmatprep.subr.mxu0 0.0
        %2383 = vmatpush1.msra.mxu0 0.0
        %2384 = vmatprep.subr.mxu0 0.0
        %2385 = vmatpush1.msra.mxu0 0.0
        %2386 = vmatprep.subr.mxu0 0.0
        %2387 = vmatpush1.msra.mxu0 0.0
        %2388 = vmatprep.subr.mxu0 0.0
        %2389 = vmatpush1.msra.mxu0 0.0
        %2390 = vmatprep.subr.mxu0 0.0
        %2391 = vmatpush1.msra.mxu0 0.0
        %2392 = vmatprep.subr.mxu0 0.0
        %2393 = vmatpush1.msra.mxu0 0.0
        %2394 = vmatprep.subr.mxu0 0.0
        %2395 = vmatpush1.msra.mxu0 0.0
        %2396 = vmatprep.subr.mxu0 0.0
        %2397 = vmatpush1.msra.mxu0 0.0
        %2398 = vmatprep.mubr.f32.mxu0 0.0
        %2399 = vmatmul.mubr.f32.gmra.mrb[0].mxu0 %v1944
        %v2400 = vpop.f32.mrb[0].mxu0
        %v2401 = vadd.f32 %v1906, %v2400
        %v2402 = vpop.f32.mrb[0].mxu0
        %v2403 = vadd.f32 %v1910, %v2402
        %2404 = vmatprep.mubr.f32.mxu0 0.0
        %2405 = vmatmul.mubr.f32.gmra.mrb[0].mxu0 %v1947
        %v2406 = vpop.f32.mrb[0].mxu0
        %v2407 = vadd.f32 %v1906, %v2406
        %v2408 = vpop.f32.mrb[0].mxu0
        %v2409 = vadd.f32 %v1910, %v2408
        %2410 = vdwg.mxu0
        %2411 = vmatprep.subr.mxu0 %v1808
        %2412 = vmatpush1.msra.mxu0 %v1807
        %2413 = vmatprep.subr.mxu0 %v1824
        %2414 = vmatpush1.msra.mxu0 %v1823
        %2415 = vmatprep.subr.mxu0 %v1840
        %2416 = vmatpush1.msra.mxu0 %v1839
        %2417 = vmatprep.subr.mxu0 %v1856
        %2418 = vmatpush1.msra.mxu0 %v1855
        %2419 = vmatprep.subr.mxu0 0.0
        %2420 = vmatpush1.msra.mxu0 0.0
        %2421 = vmatprep.subr.mxu0 0.0
        %2422 = vmatpush1.msra.mxu0 0.0
        %2423 = vmatprep.subr.mxu0 0.0
        %2424 = vmatpush1.msra.mxu0 0.0
        %2425 = vmatprep.subr.mxu0 0.0
        %2426 = vmatpush1.msra.mxu0 0.0
        %2427 = vmatprep.subr.mxu0 0.0
        %2428 = vmatpush1.msra.mxu0 0.0
        %2429 = vmatprep.subr.mxu0 0.0
        %2430 = vmatpush1.msra.mxu0 0.0
        %2431 = vmatprep.subr.mxu0 0.0
        %2432 = vmatpush1.msra.mxu0 0.0
        %2433 = vmatprep.subr.mxu0 0.0
        %2434 = vmatpush1.msra.mxu0 0.0
        %2435 = vmatprep.subr.mxu0 0.0
        %2436 = vmatpush1.msra.mxu0 0.0
        %2437 = vmatprep.subr.mxu0 0.0
        %2438 = vmatpush1.msra.mxu0 0.0
        %2439 = vmatprep.subr.mxu0 0.0
        %2440 = vmatpush1.msra.mxu0 0.0
        %2441 = vmatprep.subr.mxu0 0.0
        %2442 = vmatpush1.msra.mxu0 0.0
        %2443 = vmatprep.subr.mxu0 0.0
        %2444 = vmatpush1.msra.mxu0 0.0
        %2445 = vmatprep.subr.mxu0 0.0
        %2446 = vmatpush1.msra.mxu0 0.0
        %2447 = vmatprep.subr.mxu0 0.0
        %2448 = vmatpush1.msra.mxu0 0.0
        %2449 = vmatprep.subr.mxu0 0.0
        %2450 = vmatpush1.msra.mxu0 0.0
        %2451 = vmatprep.subr.mxu0 0.0
        %2452 = vmatpush1.msra.mxu0 0.0
        %2453 = vmatprep.subr.mxu0 0.0
        %2454 = vmatpush1.msra.mxu0 0.0
        %2455 = vmatprep.subr.mxu0 0.0
        %2456 = vmatpush1.msra.mxu0 0.0
        %2457 = vmatprep.subr.mxu0 0.0
        %2458 = vmatpush1.msra.mxu0 0.0
        %2459 = vmatprep.subr.mxu0 0.0
        %2460 = vmatpush1.msra.mxu0 0.0
        %2461 = vmatprep.subr.mxu0 0.0
        %2462 = vmatpush1.msra.mxu0 0.0
        %2463 = vmatprep.subr.mxu0 0.0
        %2464 = vmatpush1.msra.mxu0 0.0
        %2465 = vmatprep.subr.mxu0 0.0
        %2466 = vmatpush1.msra.mxu0 0.0
        %2467 = vmatprep.subr.mxu0 0.0
        %2468 = vmatpush1.msra.mxu0 0.0
        %2469 = vmatprep.subr.mxu0 0.0
        %2470 = vmatpush1.msra.mxu0 0.0
        %2471 = vmatprep.subr.mxu0 0.0
        %2472 = vmatpush1.msra.mxu0 0.0
        %2473 = vmatprep.subr.mxu0 0.0
        %2474 = vmatpush1.msra.mxu0 0.0
        %2475 = vmatprep.mubr.f32.mxu0 0.0
        %2476 = vmatmul.mubr.f32.gmra.mrb[0].mxu0 %v1944
        %v2477 = vpop.f32.mrb[0].mxu0
        %v2478 = vadd.f32 %v1914, %v2477
        %v2479 = vpop.f32.mrb[0].mxu0
        %v2480 = vadd.f32 %v1918, %v2479
        %2481 = vmatprep.mubr.f32.mxu0 0.0
        %2482 = vmatmul.mubr.f32.gmra.mrb[0].mxu0 %v1947
        %v2483 = vpop.f32.mrb[0].mxu0
        %v2484 = vadd.f32 %v1914, %v2483
        %v2485 = vpop.f32.mrb[0].mxu0
        %v2486 = vadd.f32 %v1918, %v2485
        %2487 = vdwg.mxu0
        %2488 = vmatprep.subr.mxu0 %v1810
        %2489 = vmatpush1.msra.mxu0 %v1809
        %2490 = vmatprep.subr.mxu0 %v1826
        %2491 = vmatpush1.msra.mxu0 %v1825
        %2492 = vmatprep.subr.mxu0 %v1842
        %2493 = vmatpush1.msra.mxu0 %v1841
        %2494 = vmatprep.subr.mxu0 %v1858
        %2495 = vmatpush1.msra.mxu0 %v1857
        %2496 = vmatprep.subr.mxu0 0.0
        %2497 = vmatpush1.msra.mxu0 0.0
        %2498 = vmatprep.subr.mxu0 0.0
        %2499 = vmatpush1.msra.mxu0 0.0
        %2500 = vmatprep.subr.mxu0 0.0
        %2501 = vmatpush1.msra.mxu0 0.0
        %2502 = vmatprep.subr.mxu0 0.0
        %2503 = vmatpush1.msra.mxu0 0.0
        %2504 = vmatprep.subr.mxu0 0.0
        %2505 = vmatpush1.msra.mxu0 0.0
        %2506 = vmatprep.subr.mxu0 0.0
        %2507 = vmatpush1.msra.mxu0 0.0
        %2508 = vmatprep.subr.mxu0 0.0
        %2509 = vmatpush1.msra.mxu0 0.0
        %2510 = vmatprep.subr.mxu0 0.0
        %2511 = vmatpush1.msra.mxu0 0.0
        %2512 = vmatprep.subr.mxu0 0.0
        %2513 = vmatpush1.msra.mxu0 0.0
        %2514 = vmatprep.subr.mxu0 0.0
        %2515 = vmatpush1.msra.mxu0 0.0
        %2516 = vmatprep.subr.mxu0 0.0
        %2517 = vmatpush1.msra.mxu0 0.0
        %2518 = vmatprep.subr.mxu0 0.0
        %2519 = vmatpush1.msra.mxu0 0.0
        %2520 = vmatprep.subr.mxu0 0.0
        %2521 = vmatpush1.msra.mxu0 0.0
        %2522 = vmatprep.subr.mxu0 0.0
        %2523 = vmatpush1.msra.mxu0 0.0
        %2524 = vmatprep.subr.mxu0 0.0
        %2525 = vmatpush1.msra.mxu0 0.0
        %2526 = vmatprep.subr.mxu0 0.0
        %2527 = vmatpush1.msra.mxu0 0.0
        %2528 = vmatprep.subr.mxu0 0.0
        %2529 = vmatpush1.msra.mxu0 0.0
        %2530 = vmatprep.subr.mxu0 0.0
        %2531 = vmatpush1.msra.mxu0 0.0
        %2532 = vmatprep.subr.mxu0 0.0
        %2533 = vmatpush1.msra.mxu0 0.0
        %2534 = vmatprep.subr.mxu0 0.0
        %2535 = vmatpush1.msra.mxu0 0.0
        %2536 = vmatprep.subr.mxu0 0.0
        %2537 = vmatpush1.msra.mxu0 0.0
        %2538 = vmatprep.subr.mxu0 0.0
        %2539 = vmatpush1.msra.mxu0 0.0
        %2540 = vmatprep.subr.mxu0 0.0
        %2541 = vmatpush1.msra.mxu0 0.0
        %2542 = vmatprep.subr.mxu0 0.0
        %2543 = vmatpush1.msra.mxu0 0.0
        %2544 = vmatprep.subr.mxu0 0.0
        %2545 = vmatpush1.msra.mxu0 0.0
        %2546 = vmatprep.subr.mxu0 0.0
        %2547 = vmatpush1.msra.mxu0 0.0
        %2548 = vmatprep.subr.mxu0 0.0
        %2549 = vmatpush1.msra.mxu0 0.0
        %2550 = vmatprep.subr.mxu0 0.0
        %2551 = vmatpush1.msra.mxu0 0.0
        %2552 = vmatprep.mubr.f32.mxu0 0.0
        %2553 = vmatmul.mubr.f32.gmra.mrb[0].mxu0 %v1944
        %v2554 = vpop.f32.mrb[0].mxu0
        %v2555 = vadd.f32 %v1922, %v2554
        %v2556 = vpop.f32.mrb[0].mxu0
        %v2557 = vadd.f32 %v1926, %v2556
        %2558 = vmatprep.mubr.f32.mxu0 0.0
        %2559 = vmatmul.mubr.f32.gmra.mrb[0].mxu0 %v1947
        %v2560 = vpop.f32.mrb[0].mxu0
        %v2561 = vadd.f32 %v1922, %v2560
        %v2562 = vpop.f32.mrb[0].mxu0
        %v2563 = vadd.f32 %v1926, %v2562
        %2564 = vdwg.mxu0
        %v2565 = vmax.f32 %v2016, 0.0
        %v2566 = vmax.f32 %v2018, 0.0
        %v2567 = vmax.f32 %v2093, 0.0
        %v2568 = vmax.f32 %v2095, 0.0
        %v2569 = vmax.f32 %v2170, 0.0
        %v2570 = vmax.f32 %v2172, 0.0
        %v2571 = vmax.f32 %v2247, 0.0
        %v2572 = vmax.f32 %v2249, 0.0
        %v2573 = vmax.f32 %v2324, 0.0
        %v2574 = vmax.f32 %v2326, 0.0
        %v2575 = vmax.f32 %v2401, 0.0
        %v2576 = vmax.f32 %v2403, 0.0
        %v2577 = vmax.f32 %v2478, 0.0
        %v2578 = vmax.f32 %v2480, 0.0
        %v2579 = vmax.f32 %v2555, 0.0
        %v2580 = vmax.f32 %v2557, 0.0
        %v2581 = vmax.f32 %v2022, 0.0
        %v2582 = vmax.f32 %v2024, 0.0
        %v2583 = vmax.f32 %v2099, 0.0
        %v2584 = vmax.f32 %v2101, 0.0
        %v2585 = vmax.f32 %v2176, 0.0
        %v2586 = vmax.f32 %v2178, 0.0
        %v2587 = vmax.f32 %v2253, 0.0
        %v2588 = vmax.f32 %v2255, 0.0
        %v2589 = vmax.f32 %v2330, 0.0
        %v2590 = vmax.f32 %v2332, 0.0
        %v2591 = vmax.f32 %v2407, 0.0
        %v2592 = vmax.f32 %v2409, 0.0
        %v2593 = vmax.f32 %v2484, 0.0
        %v2594 = vmax.f32 %v2486, 0.0
        %v2595 = vmax.f32 %v2561, 0.0
        %v2596 = vmax.f32 %v2563, 0.0
        %v2597 = vld [vmem:[%s14] sm:$0xff]
        %v2598 = vld [vmem:[%s14 + $0x8] sm:$0xff]
        %v2599 = vld [vmem:[%s14 + $0x10] sm:$0xff]
        %v2600 = vld [vmem:[%s14 + $0x18] sm:$0xff]
        %v2601 = vld [vmem:[%s14 + $0x20] sm:$0xff]
        %v2602 = vld [vmem:[%s14 + $0x28] sm:$0xff]
        %v2603 = vld [vmem:[%s14 + $0x30] sm:$0xff]
        %v2604 = vld [vmem:[%s14 + $0x38] sm:$0xff]
        %v2605 = vld [vmem:[%s14 + $0x40] sm:$0xff]
        %v2606 = vld [vmem:[%s14 + $0x48] sm:$0xff]
        %v2607 = vld [vmem:[%s14 + $0x50] sm:$0xff]
        %v2608 = vld [vmem:[%s14 + $0x58] sm:$0xff]
        %v2609 = vld [vmem:[%s14 + $0x60] sm:$0xff]
        %v2610 = vld [vmem:[%s14 + $0x68] sm:$0xff]
        %v2611 = vld [vmem:[%s14 + $0x70] sm:$0xff]
        %v2612 = vld [vmem:[%s14 + $0x78] sm:$0xff]
        %v2613 = vld [vmem:[%s14 + $0x80] sm:$0xff]
        %v2614 = vld [vmem:[%s14 + $0x88] sm:$0xff]
        %v2615 = vld [vmem:[%s14 + $0x90] sm:$0xff]
        %v2616 = vld [vmem:[%s14 + $0x98] sm:$0xff]
        %v2617 = vld [vmem:[%s14 + $0xa0] sm:$0xff]
        %v2618 = vld [vmem:[%s14 + $0xa8] sm:$0xff]
        %v2619 = vld [vmem:[%s14 + $0xb0] sm:$0xff]
        %v2620 = vld [vmem:[%s14 + $0xb8] sm:$0xff]
        %v2621 = vld [vmem:[%s14 + $0xc0] sm:$0xff]
        %v2622 = vld [vmem:[%s14 + $0xc8] sm:$0xff]
        %v2623 = vld [vmem:[%s14 + $0xd0] sm:$0xff]
        %v2624 = vld [vmem:[%s14 + $0xd8] sm:$0xff]
        %v2625 = vld [vmem:[%s14 + $0xe0] sm:$0xff]
        %v2626 = vld [vmem:[%s14 + $0xe8] sm:$0xff]
        %v2627 = vld [vmem:[%s14 + $0xf0] sm:$0xff]
        %v2628 = vld [vmem:[%s14 + $0xf8] sm:$0xff]
        %v2629 = vld [vmem:[%s14 + $0x100] sm:$0xff]
        %v2630 = vld [vmem:[%s14 + $0x108] sm:$0xff]
        %v2631 = vld [vmem:[%s14 + $0x110] sm:$0xff]
        %v2632 = vld [vmem:[%s14 + $0x118] sm:$0xff]
        %v2633 = vld [vmem:[%s14 + $0x120] sm:$0xff]
        %v2634 = vld [vmem:[%s14 + $0x128] sm:$0xff]
        %v2635 = vld [vmem:[%s14 + $0x130] sm:$0xff]
        %v2636 = vld [vmem:[%s14 + $0x138] sm:$0xff]
        %v2637 = vld [vmem:[%s14 + $0x140] sm:$0xff]
        %v2638 = vld [vmem:[%s14 + $0x148] sm:$0xff]
        %v2639 = vld [vmem:[%s14 + $0x150] sm:$0xff]
        %v2640 = vld [vmem:[%s14 + $0x158] sm:$0xff]
        %v2641 = vld [vmem:[%s14 + $0x160] sm:$0xff]
        %v2642 = vld [vmem:[%s14 + $0x168] sm:$0xff]
        %v2643 = vld [vmem:[%s14 + $0x170] sm:$0xff]
        %v2644 = vld [vmem:[%s14 + $0x178] sm:$0xff]
        %v2645 = vld [vmem:[%s14 + $0x180] sm:$0xff]
        %v2646 = vld [vmem:[%s14 + $0x188] sm:$0xff]
        %v2647 = vld [vmem:[%s14 + $0x190] sm:$0xff]
        %v2648 = vld [vmem:[%s14 + $0x198] sm:$0xff]
        %v2649 = vld [vmem:[%s14 + $0x1a0] sm:$0xff]
        %v2650 = vld [vmem:[%s14 + $0x1a8] sm:$0xff]
        %v2651 = vld [vmem:[%s14 + $0x1b0] sm:$0xff]
        %v2652 = vld [vmem:[%s14 + $0x1b8] sm:$0xff]
        %v2653 = vld [vmem:[%s14 + $0x1c0] sm:$0xff]
        %v2654 = vld [vmem:[%s14 + $0x1c8] sm:$0xff]
        %v2655 = vld [vmem:[%s14 + $0x1d0] sm:$0xff]
        %v2656 = vld [vmem:[%s14 + $0x1d8] sm:$0xff]
        %v2657 = vld [vmem:[%s14 + $0x1e0] sm:$0xff]
        %v2658 = vld [vmem:[%s14 + $0x1e8] sm:$0xff]
        %v2659 = vld [vmem:[%s14 + $0x1f0] sm:$0xff]
        %v2660 = vld [vmem:[%s14 + $0x1f8] sm:$0xff]
        %v2661 = vld [vmem:[%s14 + $0x200] sm:$0xff]
        %v2662 = vld [vmem:[%s14 + $0x208] sm:$0xff]
        %v2663 = vld [vmem:[%s14 + $0x210] sm:$0xff]
        %v2664 = vld [vmem:[%s14 + $0x218] sm:$0xff]
        %v2665 = vld [vmem:[%s14 + $0x220] sm:$0xff]
        %v2666 = vld [vmem:[%s14 + $0x228] sm:$0xff]
        %v2667 = vld [vmem:[%s14 + $0x230] sm:$0xff]
        %v2668 = vld [vmem:[%s14 + $0x238] sm:$0xff]
        %v2669 = vld [vmem:[%s14 + $0x240] sm:$0xff]
        %v2670 = vld [vmem:[%s14 + $0x248] sm:$0xff]
        %v2671 = vld [vmem:[%s14 + $0x250] sm:$0xff]
        %v2672 = vld [vmem:[%s14 + $0x258] sm:$0xff]
        %v2673 = vld [vmem:[%s14 + $0x260] sm:$0xff]
        %v2674 = vld [vmem:[%s14 + $0x268] sm:$0xff]
        %v2675 = vld [vmem:[%s14 + $0x270] sm:$0xff]
        %v2676 = vld [vmem:[%s14 + $0x278] sm:$0xff]
        %v2677 = vld [vmem:[%s14 + $0x280] sm:$0xff]
        %v2678 = vld [vmem:[%s14 + $0x288] sm:$0xff]
        %v2679 = vld [vmem:[%s14 + $0x290] sm:$0xff]
        %v2680 = vld [vmem:[%s14 + $0x298] sm:$0xff]
        %v2681 = vld [vmem:[%s14 + $0x2a0] sm:$0xff]
        %v2682 = vld [vmem:[%s14 + $0x2a8] sm:$0xff]
        %v2683 = vld [vmem:[%s14 + $0x2b0] sm:$0xff]
        %v2684 = vld [vmem:[%s14 + $0x2b8] sm:$0xff]
        %v2685 = vld [vmem:[%s14 + $0x2c0] sm:$0xff]
        %v2686 = vld [vmem:[%s14 + $0x2c8] sm:$0xff]
        %v2687 = vld [vmem:[%s14 + $0x2d0] sm:$0xff]
        %v2688 = vld [vmem:[%s14 + $0x2d8] sm:$0xff]
        %v2689 = vld [vmem:[%s14 + $0x2e0] sm:$0xff]
        %v2690 = vld [vmem:[%s14 + $0x2e8] sm:$0xff]
        %v2691 = vld [vmem:[%s14 + $0x2f0] sm:$0xff]
        %v2692 = vld [vmem:[%s14 + $0x2f8] sm:$0xff]
        %v2693 = vld [vmem:[%s14 + $0x300] sm:$0xff]
        %v2694 = vld [vmem:[%s14 + $0x308] sm:$0xff]
        %v2695 = vld [vmem:[%s14 + $0x310] sm:$0xff]
        %v2696 = vld [vmem:[%s14 + $0x318] sm:$0xff]
        %v2697 = vld [vmem:[%s14 + $0x320] sm:$0xff]
        %v2698 = vld [vmem:[%s14 + $0x328] sm:$0xff]
        %v2699 = vld [vmem:[%s14 + $0x330] sm:$0xff]
        %v2700 = vld [vmem:[%s14 + $0x338] sm:$0xff]
        %v2701 = vld [vmem:[%s14 + $0x340] sm:$0xff]
        %v2702 = vld [vmem:[%s14 + $0x348] sm:$0xff]
        %v2703 = vld [vmem:[%s14 + $0x350] sm:$0xff]
        %v2704 = vld [vmem:[%s14 + $0x358] sm:$0xff]
        %v2705 = vld [vmem:[%s14 + $0x360] sm:$0xff]
        %v2706 = vld [vmem:[%s14 + $0x368] sm:$0xff]
        %v2707 = vld [vmem:[%s14 + $0x370] sm:$0xff]
        %v2708 = vld [vmem:[%s14 + $0x378] sm:$0xff]
        %v2709 = vld [vmem:[%s14 + $0x380] sm:$0xff]
        %v2710 = vld [vmem:[%s14 + $0x388] sm:$0xff]
        %v2711 = vld [vmem:[%s14 + $0x390] sm:$0xff]
        %v2712 = vld [vmem:[%s14 + $0x398] sm:$0xff]
        %v2713 = vld [vmem:[%s14 + $0x3a0] sm:$0xff]
        %v2714 = vld [vmem:[%s14 + $0x3a8] sm:$0xff]
        %v2715 = vld [vmem:[%s14 + $0x3b0] sm:$0xff]
        %v2716 = vld [vmem:[%s14 + $0x3b8] sm:$0xff]
        %v2717 = vld [vmem:[%s14 + $0x3c0] sm:$0xff]
        %v2718 = vld [vmem:[%s14 + $0x3c8] sm:$0xff]
        %v2719 = vld [vmem:[%s14 + $0x3d0] sm:$0xff]
        %v2720 = vld [vmem:[%s14 + $0x3d8] sm:$0xff]
        %v2721 = vld [vmem:[%s14 + $0x3e0] sm:$0xff]
        %v2722 = vld [vmem:[%s14 + $0x3e8] sm:$0xff]
        %v2723 = vld [vmem:[%s14 + $0x3f0] sm:$0xff]
        %v2724 = vld [vmem:[%s14 + $0x3f8] sm:$0xff]
        %v2725 = vld [vmem:[%s14 + $0x400] sm:$0xff]
        %v2726 = vld [vmem:[%s14 + $0x408] sm:$0xff]
        %v2727 = vld [vmem:[%s14 + $0x410] sm:$0xff]
        %v2728 = vld [vmem:[%s14 + $0x418] sm:$0xff]
        %v2729 = vld [vmem:[%s14 + $0x420] sm:$0xff]
        %v2730 = vld [vmem:[%s14 + $0x428] sm:$0xff]
        %v2731 = vld [vmem:[%s14 + $0x430] sm:$0xff]
        %v2732 = vld [vmem:[%s14 + $0x438] sm:$0xff]
        %v2733 = vld [vmem:[%s14 + $0x440] sm:$0xff]
        %v2734 = vld [vmem:[%s14 + $0x448] sm:$0xff]
        %v2735 = vld [vmem:[%s14 + $0x450] sm:$0xff]
        %v2736 = vld [vmem:[%s14 + $0x458] sm:$0xff]
        %v2737 = vld [vmem:[%s14 + $0x460] sm:$0xff]
        %v2738 = vld [vmem:[%s14 + $0x468] sm:$0xff]
        %v2739 = vld [vmem:[%s14 + $0x470] sm:$0xff]
        %v2740 = vld [vmem:[%s14 + $0x478] sm:$0xff]
        %v2741 = vld [vmem:[%s14 + $0x480] sm:$0xff]
        %v2742 = vld [vmem:[%s14 + $0x488] sm:$0xff]
        %v2743 = vld [vmem:[%s14 + $0x490] sm:$0xff]
        %v2744 = vld [vmem:[%s14 + $0x498] sm:$0xff]
        %v2745 = vld [vmem:[%s14 + $0x4a0] sm:$0xff]
        %v2746 = vld [vmem:[%s14 + $0x4a8] sm:$0xff]
        %v2747 = vld [vmem:[%s14 + $0x4b0] sm:$0xff]
        %v2748 = vld [vmem:[%s14 + $0x4b8] sm:$0xff]
        %v2749 = vld [vmem:[%s14 + $0x4c0] sm:$0xff]
        %v2750 = vld [vmem:[%s14 + $0x4c8] sm:$0xff]
        %v2751 = vld [vmem:[%s14 + $0x4d0] sm:$0xff]
        %v2752 = vld [vmem:[%s14 + $0x4d8] sm:$0xff]
        %v2753 = vld [vmem:[%s14 + $0x4e0] sm:$0xff]
        %v2754 = vld [vmem:[%s14 + $0x4e8] sm:$0xff]
        %v2755 = vld [vmem:[%s14 + $0x4f0] sm:$0xff]
        %v2756 = vld [vmem:[%s14 + $0x4f8] sm:$0xff]
        %v2757 = vld [vmem:[%s14 + $0x500] sm:$0xff]
        %v2758 = vld [vmem:[%s14 + $0x508] sm:$0xff]
        %v2759 = vld [vmem:[%s14 + $0x510] sm:$0xff]
        %v2760 = vld [vmem:[%s14 + $0x518] sm:$0xff]
        %v2761 = vld [vmem:[%s14 + $0x520] sm:$0xff]
        %v2762 = vld [vmem:[%s14 + $0x528] sm:$0xff]
        %v2763 = vld [vmem:[%s14 + $0x530] sm:$0xff]
        %v2764 = vld [vmem:[%s14 + $0x538] sm:$0xff]
        %v2765 = vld [vmem:[%s14 + $0x540] sm:$0xff]
        %v2766 = vld [vmem:[%s14 + $0x548] sm:$0xff]
        %v2767 = vld [vmem:[%s14 + $0x550] sm:$0xff]
        %v2768 = vld [vmem:[%s14 + $0x558] sm:$0xff]
        %v2769 = vld [vmem:[%s14 + $0x560] sm:$0xff]
        %v2770 = vld [vmem:[%s14 + $0x568] sm:$0xff]
        %v2771 = vld [vmem:[%s14 + $0x570] sm:$0xff]
        %v2772 = vld [vmem:[%s14 + $0x578] sm:$0xff]
        %v2773 = vld [vmem:[%s14 + $0x580] sm:$0xff]
        %v2774 = vld [vmem:[%s14 + $0x588] sm:$0xff]
        %v2775 = vld [vmem:[%s14 + $0x590] sm:$0xff]
        %v2776 = vld [vmem:[%s14 + $0x598] sm:$0xff]
        %v2777 = vld [vmem:[%s14 + $0x5a0] sm:$0xff]
        %v2778 = vld [vmem:[%s14 + $0x5a8] sm:$0xff]
        %v2779 = vld [vmem:[%s14 + $0x5b0] sm:$0xff]
        %v2780 = vld [vmem:[%s14 + $0x5b8] sm:$0xff]
        %v2781 = vld [vmem:[%s14 + $0x5c0] sm:$0xff]
        %v2782 = vld [vmem:[%s14 + $0x5c8] sm:$0xff]
        %v2783 = vld [vmem:[%s14 + $0x5d0] sm:$0xff]
        %v2784 = vld [vmem:[%s14 + $0x5d8] sm:$0xff]
        %v2785 = vld [vmem:[%s14 + $0x5e0] sm:$0xff]
        %v2786 = vld [vmem:[%s14 + $0x5e8] sm:$0xff]
        %v2787 = vld [vmem:[%s14 + $0x5f0] sm:$0xff]
        %v2788 = vld [vmem:[%s14 + $0x5f8] sm:$0xff]
        %v2789 = vld [vmem:[%s14 + $0x600] sm:$0xff]
        %v2790 = vld [vmem:[%s14 + $0x608] sm:$0xff]
        %v2791 = vld [vmem:[%s14 + $0x610] sm:$0xff]
        %v2792 = vld [vmem:[%s14 + $0x618] sm:$0xff]
        %v2793 = vld [vmem:[%s14 + $0x620] sm:$0xff]
        %v2794 = vld [vmem:[%s14 + $0x628] sm:$0xff]
        %v2795 = vld [vmem:[%s14 + $0x630] sm:$0xff]
        %v2796 = vld [vmem:[%s14 + $0x638] sm:$0xff]
        %v2797 = vld [vmem:[%s14 + $0x640] sm:$0xff]
        %v2798 = vld [vmem:[%s14 + $0x648] sm:$0xff]
        %v2799 = vld [vmem:[%s14 + $0x650] sm:$0xff]
        %v2800 = vld [vmem:[%s14 + $0x658] sm:$0xff]
        %v2801 = vld [vmem:[%s14 + $0x660] sm:$0xff]
        %v2802 = vld [vmem:[%s14 + $0x668] sm:$0xff]
        %v2803 = vld [vmem:[%s14 + $0x670] sm:$0xff]
        %v2804 = vld [vmem:[%s14 + $0x678] sm:$0xff]
        %v2805 = vld [vmem:[%s14 + $0x680] sm:$0xff]
        %v2806 = vld [vmem:[%s14 + $0x688] sm:$0xff]
        %v2807 = vld [vmem:[%s14 + $0x690] sm:$0xff]
        %v2808 = vld [vmem:[%s14 + $0x698] sm:$0xff]
        %v2809 = vld [vmem:[%s14 + $0x6a0] sm:$0xff]
        %v2810 = vld [vmem:[%s14 + $0x6a8] sm:$0xff]
        %v2811 = vld [vmem:[%s14 + $0x6b0] sm:$0xff]
        %v2812 = vld [vmem:[%s14 + $0x6b8] sm:$0xff]
        %v2813 = vld [vmem:[%s14 + $0x6c0] sm:$0xff]
        %v2814 = vld [vmem:[%s14 + $0x6c8] sm:$0xff]
        %v2815 = vld [vmem:[%s14 + $0x6d0] sm:$0xff]
        %v2816 = vld [vmem:[%s14 + $0x6d8] sm:$0xff]
        %v2817 = vld [vmem:[%s14 + $0x6e0] sm:$0xff]
        %v2818 = vld [vmem:[%s14 + $0x6e8] sm:$0xff]
        %v2819 = vld [vmem:[%s14 + $0x6f0] sm:$0xff]
        %v2820 = vld [vmem:[%s14 + $0x6f8] sm:$0xff]
        %v2821 = vld [vmem:[%s14 + $0x700] sm:$0xff]
        %v2822 = vld [vmem:[%s14 + $0x708] sm:$0xff]
        %v2823 = vld [vmem:[%s14 + $0x710] sm:$0xff]
        %v2824 = vld [vmem:[%s14 + $0x718] sm:$0xff]
        %v2825 = vld [vmem:[%s14 + $0x720] sm:$0xff]
        %v2826 = vld [vmem:[%s14 + $0x728] sm:$0xff]
        %v2827 = vld [vmem:[%s14 + $0x730] sm:$0xff]
        %v2828 = vld [vmem:[%s14 + $0x738] sm:$0xff]
        %v2829 = vld [vmem:[%s14 + $0x740] sm:$0xff]
        %v2830 = vld [vmem:[%s14 + $0x748] sm:$0xff]
        %v2831 = vld [vmem:[%s14 + $0x750] sm:$0xff]
        %v2832 = vld [vmem:[%s14 + $0x758] sm:$0xff]
        %v2833 = vld [vmem:[%s14 + $0x760] sm:$0xff]
        %v2834 = vld [vmem:[%s14 + $0x768] sm:$0xff]
        %v2835 = vld [vmem:[%s14 + $0x770] sm:$0xff]
        %v2836 = vld [vmem:[%s14 + $0x778] sm:$0xff]
        %v2837 = vld [vmem:[%s14 + $0x780] sm:$0xff]
        %v2838 = vld [vmem:[%s14 + $0x788] sm:$0xff]
        %v2839 = vld [vmem:[%s14 + $0x790] sm:$0xff]
        %v2840 = vld [vmem:[%s14 + $0x798] sm:$0xff]
        %v2841 = vld [vmem:[%s14 + $0x7a0] sm:$0xff]
        %v2842 = vld [vmem:[%s14 + $0x7a8] sm:$0xff]
        %v2843 = vld [vmem:[%s14 + $0x7b0] sm:$0xff]
        %v2844 = vld [vmem:[%s14 + $0x7b8] sm:$0xff]
        %v2845 = vld [vmem:[%s14 + $0x7c0] sm:$0xff]
        %v2846 = vld [vmem:[%s14 + $0x7c8] sm:$0xff]
        %v2847 = vld [vmem:[%s14 + $0x7d0] sm:$0xff]
        %v2848 = vld [vmem:[%s14 + $0x7d8] sm:$0xff]
        %v2849 = vld [vmem:[%s14 + $0x7e0] sm:$0xff]
        %v2850 = vld [vmem:[%s14 + $0x7e8] sm:$0xff]
        %v2851 = vld [vmem:[%s14 + $0x7f0] sm:$0xff]
        %v2852 = vld [vmem:[%s14 + $0x7f8] sm:$0xff]
        %v2853 = vld [vmem:[%s15] sm:$0x1]
        %v2855 = vlaneseq
        %v2856 = vshrl.u32 %v2855, 7
        %v2857 = vsub.s32 0, %v2856
        %v2858 = vrot.slane %v2853, %v2857
        %2860 = vmatprep.subr.mxu0 0.0
        %2861 = vmatpush1.msra.mxu0 %v2597
        %2862 = vmatprep.subr.mxu0 0.0
        %2863 = vmatpush1.msra.mxu0 %v2598
        %2864 = vmatprep.subr.mxu0 0.0
        %2865 = vmatpush1.msra.mxu0 %v2599
        %2866 = vmatprep.subr.mxu0 0.0
        %2867 = vmatpush1.msra.mxu0 %v2600
        %2868 = vmatprep.subr.mxu0 0.0
        %2869 = vmatpush1.msra.mxu0 %v2601
        %2870 = vmatprep.subr.mxu0 0.0
        %2871 = vmatpush1.msra.mxu0 %v2602
        %2872 = vmatprep.subr.mxu0 0.0
        %2873 = vmatpush1.msra.mxu0 %v2603
        %2874 = vmatprep.subr.mxu0 0.0
        %2875 = vmatpush1.msra.mxu0 %v2604
        %2876 = vmatprep.subr.mxu0 0.0
        %2877 = vmatpush1.msra.mxu0 %v2605
        %2878 = vmatprep.subr.mxu0 0.0
        %2879 = vmatpush1.msra.mxu0 %v2606
        %2880 = vmatprep.subr.mxu0 0.0
        %2881 = vmatpush1.msra.mxu0 %v2607
        %2882 = vmatprep.subr.mxu0 0.0
        %2883 = vmatpush1.msra.mxu0 %v2608
        %2884 = vmatprep.subr.mxu0 0.0
        %2885 = vmatpush1.msra.mxu0 %v2609
        %2886 = vmatprep.subr.mxu0 0.0
        %2887 = vmatpush1.msra.mxu0 %v2610
        %2888 = vmatprep.subr.mxu0 0.0
        %2889 = vmatpush1.msra.mxu0 %v2611
        %2890 = vmatprep.subr.mxu0 0.0
        %2891 = vmatpush1.msra.mxu0 %v2612
        %2892 = vmatprep.subr.mxu0 0.0
        %2893 = vmatpush1.msra.mxu0 %v2613
        %2894 = vmatprep.subr.mxu0 0.0
        %2895 = vmatpush1.msra.mxu0 %v2614
        %2896 = vmatprep.subr.mxu0 0.0
        %2897 = vmatpush1.msra.mxu0 %v2615
        %2898 = vmatprep.subr.mxu0 0.0
        %2899 = vmatpush1.msra.mxu0 %v2616
        %2900 = vmatprep.subr.mxu0 0.0
        %2901 = vmatpush1.msra.mxu0 %v2617
        %2902 = vmatprep.subr.mxu0 0.0
        %2903 = vmatpush1.msra.mxu0 %v2618
        %2904 = vmatprep.subr.mxu0 0.0
        %2905 = vmatpush1.msra.mxu0 %v2619
        %2906 = vmatprep.subr.mxu0 0.0
        %2907 = vmatpush1.msra.mxu0 %v2620
        %2908 = vmatprep.subr.mxu0 0.0
        %2909 = vmatpush1.msra.mxu0 %v2621
        %2910 = vmatprep.subr.mxu0 0.0
        %2911 = vmatpush1.msra.mxu0 %v2622
        %2912 = vmatprep.subr.mxu0 0.0
        %2913 = vmatpush1.msra.mxu0 %v2623
        %2914 = vmatprep.subr.mxu0 0.0
        %2915 = vmatpush1.msra.mxu0 %v2624
        %2916 = vmatprep.subr.mxu0 0.0
        %2917 = vmatpush1.msra.mxu0 %v2625
        %2918 = vmatprep.subr.mxu0 0.0
        %2919 = vmatpush1.msra.mxu0 %v2626
        %2920 = vmatprep.subr.mxu0 0.0
        %2921 = vmatpush1.msra.mxu0 %v2627
        %2922 = vmatprep.subr.mxu0 0.0
        %2923 = vmatpush1.msra.mxu0 %v2628
        %2924 = vmatprep.mubr.f32.mxu0 %v2566
        %2925 = vmatmul.mubr.f32.gmra.mrb[0].mxu0 %v2565
        %v2926 = vpop.f32.mrb[0].mxu0
        %v2927 = vadd.f32 %v2858, %v2926
        %v2928 = vpop.f32.mrb[0].mxu0
        %2929 = vmatprep.mubr.f32.mxu0 %v2582
        %2930 = vmatmul.mubr.f32.gmra.mrb[0].mxu0 %v2581
        %v2931 = vpop.f32.mrb[0].mxu0
        %v2932 = vadd.f32 %v2858, %v2931
        %v2933 = vpop.f32.mrb[0].mxu0
        %2934 = vdwg.mxu0
        %2935 = vmatprep.subr.mxu0 0.0
        %2936 = vmatpush1.msra.mxu0 %v2629
        %2937 = vmatprep.subr.mxu0 0.0
        %2938 = vmatpush1.msra.mxu0 %v2630
        %2939 = vmatprep.subr.mxu0 0.0
        %2940 = vmatpush1.msra.mxu0 %v2631
        %2941 = vmatprep.subr.mxu0 0.0
        %2942 = vmatpush1.msra.mxu0 %v2632
        %2943 = vmatprep.subr.mxu0 0.0
        %2944 = vmatpush1.msra.mxu0 %v2633
        %2945 = vmatprep.subr.mxu0 0.0
        %2946 = vmatpush1.msra.mxu0 %v2634
        %2947 = vmatprep.subr.mxu0 0.0
        %2948 = vmatpush1.msra.mxu0 %v2635
        %2949 = vmatprep.subr.mxu0 0.0
        %2950 = vmatpush1.msra.mxu0 %v2636
        %2951 = vmatprep.subr.mxu0 0.0
        %2952 = vmatpush1.msra.mxu0 %v2637
        %2953 = vmatprep.subr.mxu0 0.0
        %2954 = vmatpush1.msra.mxu0 %v2638
        %2955 = vmatprep.subr.mxu0 0.0
        %2956 = vmatpush1.msra.mxu0 %v2639
        %2957 = vmatprep.subr.mxu0 0.0
        %2958 = vmatpush1.msra.mxu0 %v2640
        %2959 = vmatprep.subr.mxu0 0.0
        %2960 = vmatpush1.msra.mxu0 %v2641
        %2961 = vmatprep.subr.mxu0 0.0
        %2962 = vmatpush1.msra.mxu0 %v2642
        %2963 = vmatprep.subr.mxu0 0.0
        %2964 = vmatpush1.msra.mxu0 %v2643
        %2965 = vmatprep.subr.mxu0 0.0
        %2966 = vmatpush1.msra.mxu0 %v2644
        %2967 = vmatprep.subr.mxu0 0.0
        %2968 = vmatpush1.msra.mxu0 %v2645
        %2969 = vmatprep.subr.mxu0 0.0
        %2970 = vmatpush1.msra.mxu0 %v2646
        %2971 = vmatprep.subr.mxu0 0.0
        %2972 = vmatpush1.msra.mxu0 %v2647
        %2973 = vmatprep.subr.mxu0 0.0
        %2974 = vmatpush1.msra.mxu0 %v2648
        %2975 = vmatprep.subr.mxu0 0.0
        %2976 = vmatpush1.msra.mxu0 %v2649
        %2977 = vmatprep.subr.mxu0 0.0
        %2978 = vmatpush1.msra.mxu0 %v2650
        %2979 = vmatprep.subr.mxu0 0.0
        %2980 = vmatpush1.msra.mxu0 %v2651
        %2981 = vmatprep.subr.mxu0 0.0
        %2982 = vmatpush1.msra.mxu0 %v2652
        %2983 = vmatprep.subr.mxu0 0.0
        %2984 = vmatpush1.msra.mxu0 %v2653
        %2985 = vmatprep.subr.mxu0 0.0
        %2986 = vmatpush1.msra.mxu0 %v2654
        %2987 = vmatprep.subr.mxu0 0.0
        %2988 = vmatpush1.msra.mxu0 %v2655
        %2989 = vmatprep.subr.mxu0 0.0
        %2990 = vmatpush1.msra.mxu0 %v2656
        %2991 = vmatprep.subr.mxu0 0.0
        %2992 = vmatpush1.msra.mxu0 %v2657
        %2993 = vmatprep.subr.mxu0 0.0
        %2994 = vmatpush1.msra.mxu0 %v2658
        %2995 = vmatprep.subr.mxu0 0.0
        %2996 = vmatpush1.msra.mxu0 %v2659
        %2997 = vmatprep.subr.mxu0 0.0
        %2998 = vmatpush1.msra.mxu0 %v2660
        %2999 = vmatprep.mubr.f32.mxu0 %v2568
        %3000 = vmatmul.mubr.f32.gmra.mrb[0].mxu0 %v2567
        %v3001 = vpop.f32.mrb[0].mxu0
        %v3002 = vadd.f32 %v2927, %v3001
        %v3003 = vpop.f32.mrb[0].mxu0
        %3004 = vmatprep.mubr.f32.mxu0 %v2584
        %3005 = vmatmul.mubr.f32.gmra.mrb[0].mxu0 %v2583
        %v3006 = vpop.f32.mrb[0].mxu0
        %v3007 = vadd.f32 %v2932, %v3006
        %v3008 = vpop.f32.mrb[0].mxu0
        %3009 = vdwg.mxu0
        %3010 = vmatprep.subr.mxu0 0.0
        %3011 = vmatpush1.msra.mxu0 %v2661
        %3012 = vmatprep.subr.mxu0 0.0
        %3013 = vmatpush1.msra.mxu0 %v2662
        %3014 = vmatprep.subr.mxu0 0.0
        %3015 = vmatpush1.msra.mxu0 %v2663
        %3016 = vmatprep.subr.mxu0 0.0
        %3017 = vmatpush1.msra.mxu0 %v2664
        %3018 = vmatprep.subr.mxu0 0.0
        %3019 = vmatpush1.msra.mxu0 %v2665
        %3020 = vmatprep.subr.mxu0 0.0
        %3021 = vmatpush1.msra.mxu0 %v2666
        %3022 = vmatprep.subr.mxu0 0.0
        %3023 = vmatpush1.msra.mxu0 %v2667
        %3024 = vmatprep.subr.mxu0 0.0
        %3025 = vmatpush1.msra.mxu0 %v2668
        %3026 = vmatprep.subr.mxu0 0.0
        %3027 = vmatpush1.msra.mxu0 %v2669
        %3028 = vmatprep.subr.mxu0 0.0
        %3029 = vmatpush1.msra.mxu0 %v2670
        %3030 = vmatprep.subr.mxu0 0.0
        %3031 = vmatpush1.msra.mxu0 %v2671
        %3032 = vmatprep.subr.mxu0 0.0
        %3033 = vmatpush1.msra.mxu0 %v2672
        %3034 = vmatprep.subr.mxu0 0.0
        %3035 = vmatpush1.msra.mxu0 %v2673
        %3036 = vmatprep.subr.mxu0 0.0
        %3037 = vmatpush1.msra.mxu0 %v2674
        %3038 = vmatprep.subr.mxu0 0.0
        %3039 = vmatpush1.msra.mxu0 %v2675
        %3040 = vmatprep.subr.mxu0 0.0
        %3041 = vmatpush1.msra.mxu0 %v2676
        %3042 = vmatprep.subr.mxu0 0.0
        %3043 = vmatpush1.msra.mxu0 %v2677
        %3044 = vmatprep.subr.mxu0 0.0
        %3045 = vmatpush1.msra.mxu0 %v2678
        %3046 = vmatprep.subr.mxu0 0.0
        %3047 = vmatpush1.msra.mxu0 %v2679
        %3048 = vmatprep.subr.mxu0 0.0
        %3049 = vmatpush1.msra.mxu0 %v2680
        %3050 = vmatprep.subr.mxu0 0.0
        %3051 = vmatpush1.msra.mxu0 %v2681
        %3052 = vmatprep.subr.mxu0 0.0
        %3053 = vmatpush1.msra.mxu0 %v2682
        %3054 = vmatprep.subr.mxu0 0.0
        %3055 = vmatpush1.msra.mxu0 %v2683
        %3056 = vmatprep.subr.mxu0 0.0
        %3057 = vmatpush1.msra.mxu0 %v2684
        %3058 = vmatprep.subr.mxu0 0.0
        %3059 = vmatpush1.msra.mxu0 %v2685
        %3060 = vmatprep.subr.mxu0 0.0
        %3061 = vmatpush1.msra.mxu0 %v2686
        %3062 = vmatprep.subr.mxu0 0.0
        %3063 = vmatpush1.msra.mxu0 %v2687
        %3064 = vmatprep.subr.mxu0 0.0
        %3065 = vmatpush1.msra.mxu0 %v2688
        %3066 = vmatprep.subr.mxu0 0.0
        %3067 = vmatpush1.msra.mxu0 %v2689
        %3068 = vmatprep.subr.mxu0 0.0
        %3069 = vmatpush1.msra.mxu0 %v2690
        %3070 = vmatprep.subr.mxu0 0.0
        %3071 = vmatpush1.msra.mxu0 %v2691
        %3072 = vmatprep.subr.mxu0 0.0
        %3073 = vmatpush1.msra.mxu0 %v2692
        %3074 = vmatprep.mubr.f32.mxu0 %v2570
        %3075 = vmatmul.mubr.f32.gmra.mrb[0].mxu0 %v2569
        %v3076 = vpop.f32.mrb[0].mxu0
        %v3077 = vadd.f32 %v3002, %v3076
        %v3078 = vpop.f32.mrb[0].mxu0
        %3079 = vmatprep.mubr.f32.mxu0 %v2586
        %3080 = vmatmul.mubr.f32.gmra.mrb[0].mxu0 %v2585
        %v3081 = vpop.f32.mrb[0].mxu0
        %v3082 = vadd.f32 %v3007, %v3081
        %v3083 = vpop.f32.mrb[0].mxu0
        %3084 = vdwg.mxu0
        %3085 = vmatprep.subr.mxu0 0.0
        %3086 = vmatpush1.msra.mxu0 %v2693
        %3087 = vmatprep.subr.mxu0 0.0
        %3088 = vmatpush1.msra.mxu0 %v2694
        %3089 = vmatprep.subr.mxu0 0.0
        %3090 = vmatpush1.msra.mxu0 %v2695
        %3091 = vmatprep.subr.mxu0 0.0
        %3092 = vmatpush1.msra.mxu0 %v2696
        %3093 = vmatprep.subr.mxu0 0.0
        %3094 = vmatpush1.msra.mxu0 %v2697
        %3095 = vmatprep.subr.mxu0 0.0
        %3096 = vmatpush1.msra.mxu0 %v2698
        %3097 = vmatprep.subr.mxu0 0.0
        %3098 = vmatpush1.msra.mxu0 %v2699
        %3099 = vmatprep.subr.mxu0 0.0
        %3100 = vmatpush1.msra.mxu0 %v2700
        %3101 = vmatprep.subr.mxu0 0.0
        %3102 = vmatpush1.msra.mxu0 %v2701
        %3103 = vmatprep.subr.mxu0 0.0
        %3104 = vmatpush1.msra.mxu0 %v2702
        %3105 = vmatprep.subr.mxu0 0.0
        %3106 = vmatpush1.msra.mxu0 %v2703
        %3107 = vmatprep.subr.mxu0 0.0
        %3108 = vmatpush1.msra.mxu0 %v2704
        %3109 = vmatprep.subr.mxu0 0.0
        %3110 = vmatpush1.msra.mxu0 %v2705
        %3111 = vmatprep.subr.mxu0 0.0
        %3112 = vmatpush1.msra.mxu0 %v2706
        %3113 = vmatprep.subr.mxu0 0.0
        %3114 = vmatpush1.msra.mxu0 %v2707
        %3115 = vmatprep.subr.mxu0 0.0
        %3116 = vmatpush1.msra.mxu0 %v2708
        %3117 = vmatprep.subr.mxu0 0.0
        %3118 = vmatpush1.msra.mxu0 %v2709
        %3119 = vmatprep.subr.mxu0 0.0
        %3120 = vmatpush1.msra.mxu0 %v2710
        %3121 = vmatprep.subr.mxu0 0.0
        %3122 = vmatpush1.msra.mxu0 %v2711
        %3123 = vmatprep.subr.mxu0 0.0
        %3124 = vmatpush1.msra.mxu0 %v2712
        %3125 = vmatprep.subr.mxu0 0.0
        %3126 = vmatpush1.msra.mxu0 %v2713
        %3127 = vmatprep.subr.mxu0 0.0
        %3128 = vmatpush1.msra.mxu0 %v2714
        %3129 = vmatprep.subr.mxu0 0.0
        %3130 = vmatpush1.msra.mxu0 %v2715
        %3131 = vmatprep.subr.mxu0 0.0
        %3132 = vmatpush1.msra.mxu0 %v2716
        %3133 = vmatprep.subr.mxu0 0.0
        %3134 = vmatpush1.msra.mxu0 %v2717
        %3135 = vmatprep.subr.mxu0 0.0
        %3136 = vmatpush1.msra.mxu0 %v2718
        %3137 = vmatprep.subr.mxu0 0.0
        %3138 = vmatpush1.msra.mxu0 %v2719
        %3139 = vmatprep.subr.mxu0 0.0
        %3140 = vmatpush1.msra.mxu0 %v2720
        %3141 = vmatprep.subr.mxu0 0.0
        %3142 = vmatpush1.msra.mxu0 %v2721
        %3143 = vmatprep.subr.mxu0 0.0
        %3144 = vmatpush1.msra.mxu0 %v2722
        %3145 = vmatprep.subr.mxu0 0.0
        %3146 = vmatpush1.msra.mxu0 %v2723
        %3147 = vmatprep.subr.mxu0 0.0
        %3148 = vmatpush1.msra.mxu0 %v2724
        %3149 = vmatprep.mubr.f32.mxu0 %v2572
        %3150 = vmatmul.mubr.f32.gmra.mrb[0].mxu0 %v2571
        %v3151 = vpop.f32.mrb[0].mxu0
        %v3152 = vadd.f32 %v3077, %v3151
        %v3153 = vpop.f32.mrb[0].mxu0
        %3154 = vmatprep.mubr.f32.mxu0 %v2588
        %3155 = vmatmul.mubr.f32.gmra.mrb[0].mxu0 %v2587
        %v3156 = vpop.f32.mrb[0].mxu0
        %v3157 = vadd.f32 %v3082, %v3156
        %v3158 = vpop.f32.mrb[0].mxu0
        %3159 = vdwg.mxu0
        %3160 = vmatprep.subr.mxu0 0.0
        %3161 = vmatpush1.msra.mxu0 %v2725
        %3162 = vmatprep.subr.mxu0 0.0
        %3163 = vmatpush1.msra.mxu0 %v2726
        %3164 = vmatprep.subr.mxu0 0.0
        %3165 = vmatpush1.msra.mxu0 %v2727
        %3166 = vmatprep.subr.mxu0 0.0
        %3167 = vmatpush1.msra.mxu0 %v2728
        %3168 = vmatprep.subr.mxu0 0.0
        %3169 = vmatpush1.msra.mxu0 %v2729
        %3170 = vmatprep.subr.mxu0 0.0
        %3171 = vmatpush1.msra.mxu0 %v2730
        %3172 = vmatprep.subr.mxu0 0.0
        %3173 = vmatpush1.msra.mxu0 %v2731
        %3174 = vmatprep.subr.mxu0 0.0
        %3175 = vmatpush1.msra.mxu0 %v2732
        %3176 = vmatprep.subr.mxu0 0.0
        %3177 = vmatpush1.msra.mxu0 %v2733
        %3178 = vmatprep.subr.mxu0 0.0
        %3179 = vmatpush1.msra.mxu0 %v2734
        %3180 = vmatprep.subr.mxu0 0.0
        %3181 = vmatpush1.msra.mxu0 %v2735
        %3182 = vmatprep.subr.mxu0 0.0
        %3183 = vmatpush1.msra.mxu0 %v2736
        %3184 = vmatprep.subr.mxu0 0.0
        %3185 = vmatpush1.msra.mxu0 %v2737
        %3186 = vmatprep.subr.mxu0 0.0
        %3187 = vmatpush1.msra.mxu0 %v2738
        %3188 = vmatprep.subr.mxu0 0.0
        %3189 = vmatpush1.msra.mxu0 %v2739
        %3190 = vmatprep.subr.mxu0 0.0
        %3191 = vmatpush1.msra.mxu0 %v2740
        %3192 = vmatprep.subr.mxu0 0.0
        %3193 = vmatpush1.msra.mxu0 %v2741
        %3194 = vmatprep.subr.mxu0 0.0
        %3195 = vmatpush1.msra.mxu0 %v2742
        %3196 = vmatprep.subr.mxu0 0.0
        %3197 = vmatpush1.msra.mxu0 %v2743
        %3198 = vmatprep.subr.mxu0 0.0
        %3199 = vmatpush1.msra.mxu0 %v2744
        %3200 = vmatprep.subr.mxu0 0.0
        %3201 = vmatpush1.msra.mxu0 %v2745
        %3202 = vmatprep.subr.mxu0 0.0
        %3203 = vmatpush1.msra.mxu0 %v2746
        %3204 = vmatprep.subr.mxu0 0.0
        %3205 = vmatpush1.msra.mxu0 %v2747
        %3206 = vmatprep.subr.mxu0 0.0
        %3207 = vmatpush1.msra.mxu0 %v2748
        %3208 = vmatprep.subr.mxu0 0.0
        %3209 = vmatpush1.msra.mxu0 %v2749
        %3210 = vmatprep.subr.mxu0 0.0
        %3211 = vmatpush1.msra.mxu0 %v2750
        %3212 = vmatprep.subr.mxu0 0.0
        %3213 = vmatpush1.msra.mxu0 %v2751
        %3214 = vmatprep.subr.mxu0 0.0
        %3215 = vmatpush1.msra.mxu0 %v2752
        %3216 = vmatprep.subr.mxu0 0.0
        %3217 = vmatpush1.msra.mxu0 %v2753
        %3218 = vmatprep.subr.mxu0 0.0
        %3219 = vmatpush1.msra.mxu0 %v2754
        %3220 = vmatprep.subr.mxu0 0.0
        %3221 = vmatpush1.msra.mxu0 %v2755
        %3222 = vmatprep.subr.mxu0 0.0
        %3223 = vmatpush1.msra.mxu0 %v2756
        %3224 = vmatprep.mubr.f32.mxu0 %v2574
        %3225 = vmatmul.mubr.f32.gmra.mrb[0].mxu0 %v2573
        %v3226 = vpop.f32.mrb[0].mxu0
        %v3227 = vadd.f32 %v3152, %v3226
        %v3228 = vpop.f32.mrb[0].mxu0
        %3229 = vmatprep.mubr.f32.mxu0 %v2590
        %3230 = vmatmul.mubr.f32.gmra.mrb[0].mxu0 %v2589
        %v3231 = vpop.f32.mrb[0].mxu0
        %v3232 = vadd.f32 %v3157, %v3231
        %v3233 = vpop.f32.mrb[0].mxu0
        %3234 = vdwg.mxu0
        %3235 = vmatprep.subr.mxu0 0.0
        %3236 = vmatpush1.msra.mxu0 %v2757
        %3237 = vmatprep.subr.mxu0 0.0
        %3238 = vmatpush1.msra.mxu0 %v2758
        %3239 = vmatprep.subr.mxu0 0.0
        %3240 = vmatpush1.msra.mxu0 %v2759
        %3241 = vmatprep.subr.mxu0 0.0
        %3242 = vmatpush1.msra.mxu0 %v2760
        %3243 = vmatprep.subr.mxu0 0.0
        %3244 = vmatpush1.msra.mxu0 %v2761
        %3245 = vmatprep.subr.mxu0 0.0
        %3246 = vmatpush1.msra.mxu0 %v2762
        %3247 = vmatprep.subr.mxu0 0.0
        %3248 = vmatpush1.msra.mxu0 %v2763
        %3249 = vmatprep.subr.mxu0 0.0
        %3250 = vmatpush1.msra.mxu0 %v2764
        %3251 = vmatprep.subr.mxu0 0.0
        %3252 = vmatpush1.msra.mxu0 %v2765
        %3253 = vmatprep.subr.mxu0 0.0
        %3254 = vmatpush1.msra.mxu0 %v2766
        %3255 = vmatprep.subr.mxu0 0.0
        %3256 = vmatpush1.msra.mxu0 %v2767
        %3257 = vmatprep.subr.mxu0 0.0
        %3258 = vmatpush1.msra.mxu0 %v2768
        %3259 = vmatprep.subr.mxu0 0.0
        %3260 = vmatpush1.msra.mxu0 %v2769
        %3261 = vmatprep.subr.mxu0 0.0
        %3262 = vmatpush1.msra.mxu0 %v2770
        %3263 = vmatprep.subr.mxu0 0.0
        %3264 = vmatpush1.msra.mxu0 %v2771
        %3265 = vmatprep.subr.mxu0 0.0
        %3266 = vmatpush1.msra.mxu0 %v2772
        %3267 = vmatprep.subr.mxu0 0.0
        %3268 = vmatpush1.msra.mxu0 %v2773
        %3269 = vmatprep.subr.mxu0 0.0
        %3270 = vmatpush1.msra.mxu0 %v2774
        %3271 = vmatprep.subr.mxu0 0.0
        %3272 = vmatpush1.msra.mxu0 %v2775
        %3273 = vmatprep.subr.mxu0 0.0
        %3274 = vmatpush1.msra.mxu0 %v2776
        %3275 = vmatprep.subr.mxu0 0.0
        %3276 = vmatpush1.msra.mxu0 %v2777
        %3277 = vmatprep.subr.mxu0 0.0
        %3278 = vmatpush1.msra.mxu0 %v2778
        %3279 = vmatprep.subr.mxu0 0.0
        %3280 = vmatpush1.msra.mxu0 %v2779
        %3281 = vmatprep.subr.mxu0 0.0
        %3282 = vmatpush1.msra.mxu0 %v2780
        %3283 = vmatprep.subr.mxu0 0.0
        %3284 = vmatpush1.msra.mxu0 %v2781
        %3285 = vmatprep.subr.mxu0 0.0
        %3286 = vmatpush1.msra.mxu0 %v2782
        %3287 = vmatprep.subr.mxu0 0.0
        %3288 = vmatpush1.msra.mxu0 %v2783
        %3289 = vmatprep.subr.mxu0 0.0
        %3290 = vmatpush1.msra.mxu0 %v2784
        %3291 = vmatprep.subr.mxu0 0.0
        %3292 = vmatpush1.msra.mxu0 %v2785
        %3293 = vmatprep.subr.mxu0 0.0
        %3294 = vmatpush1.msra.mxu0 %v2786
        %3295 = vmatprep.subr.mxu0 0.0
        %3296 = vmatpush1.msra.mxu0 %v2787
        %3297 = vmatprep.subr.mxu0 0.0
        %3298 = vmatpush1.msra.mxu0 %v2788
        %3299 = vmatprep.mubr.f32.mxu0 %v2576
        %3300 = vmatmul.mubr.f32.gmra.mrb[0].mxu0 %v2575
        %v3301 = vpop.f32.mrb[0].mxu0
        %v3302 = vadd.f32 %v3227, %v3301
        %v3303 = vpop.f32.mrb[0].mxu0
        %3304 = vmatprep.mubr.f32.mxu0 %v2592
        %3305 = vmatmul.mubr.f32.gmra.mrb[0].mxu0 %v2591
        %v3306 = vpop.f32.mrb[0].mxu0
        %v3307 = vadd.f32 %v3232, %v3306
        %v3308 = vpop.f32.mrb[0].mxu0
        %3309 = vdwg.mxu0
        %3310 = vmatprep.subr.mxu0 0.0
        %3311 = vmatpush1.msra.mxu0 %v2789
        %3312 = vmatprep.subr.mxu0 0.0
        %3313 = vmatpush1.msra.mxu0 %v2790
        %3314 = vmatprep.subr.mxu0 0.0
        %3315 = vmatpush1.msra.mxu0 %v2791
        %3316 = vmatprep.subr.mxu0 0.0
        %3317 = vmatpush1.msra.mxu0 %v2792
        %3318 = vmatprep.subr.mxu0 0.0
        %3319 = vmatpush1.msra.mxu0 %v2793
        %3320 = vmatprep.subr.mxu0 0.0
        %3321 = vmatpush1.msra.mxu0 %v2794
        %3322 = vmatprep.subr.mxu0 0.0
        %3323 = vmatpush1.msra.mxu0 %v2795
        %3324 = vmatprep.subr.mxu0 0.0
        %3325 = vmatpush1.msra.mxu0 %v2796
        %3326 = vmatprep.subr.mxu0 0.0
        %3327 = vmatpush1.msra.mxu0 %v2797
        %3328 = vmatprep.subr.mxu0 0.0
        %3329 = vmatpush1.msra.mxu0 %v2798
        %3330 = vmatprep.subr.mxu0 0.0
        %3331 = vmatpush1.msra.mxu0 %v2799
        %3332 = vmatprep.subr.mxu0 0.0
        %3333 = vmatpush1.msra.mxu0 %v2800
        %3334 = vmatprep.subr.mxu0 0.0
        %3335 = vmatpush1.msra.mxu0 %v2801
        %3336 = vmatprep.subr.mxu0 0.0
        %3337 = vmatpush1.msra.mxu0 %v2802
        %3338 = vmatprep.subr.mxu0 0.0
        %3339 = vmatpush1.msra.mxu0 %v2803
        %3340 = vmatprep.subr.mxu0 0.0
        %3341 = vmatpush1.msra.mxu0 %v2804
        %3342 = vmatprep.subr.mxu0 0.0
        %3343 = vmatpush1.msra.mxu0 %v2805
        %3344 = vmatprep.subr.mxu0 0.0
        %3345 = vmatpush1.msra.mxu0 %v2806
        %3346 = vmatprep.subr.mxu0 0.0
        %3347 = vmatpush1.msra.mxu0 %v2807
        %3348 = vmatprep.subr.mxu0 0.0
        %3349 = vmatpush1.msra.mxu0 %v2808
        %3350 = vmatprep.subr.mxu0 0.0
        %3351 = vmatpush1.msra.mxu0 %v2809
        %3352 = vmatprep.subr.mxu0 0.0
        %3353 = vmatpush1.msra.mxu0 %v2810
        %3354 = vmatprep.subr.mxu0 0.0
        %3355 = vmatpush1.msra.mxu0 %v2811
        %3356 = vmatprep.subr.mxu0 0.0
        %3357 = vmatpush1.msra.mxu0 %v2812
        %3358 = vmatprep.subr.mxu0 0.0
        %3359 = vmatpush1.msra.mxu0 %v2813
        %3360 = vmatprep.subr.mxu0 0.0
        %3361 = vmatpush1.msra.mxu0 %v2814
        %3362 = vmatprep.subr.mxu0 0.0
        %3363 = vmatpush1.msra.mxu0 %v2815
        %3364 = vmatprep.subr.mxu0 0.0
        %3365 = vmatpush1.msra.mxu0 %v2816
        %3366 = vmatprep.subr.mxu0 0.0
        %3367 = vmatpush1.msra.mxu0 %v2817
        %3368 = vmatprep.subr.mxu0 0.0
        %3369 = vmatpush1.msra.mxu0 %v2818
        %3370 = vmatprep.subr.mxu0 0.0
        %3371 = vmatpush1.msra.mxu0 %v2819
        %3372 = vmatprep.subr.mxu0 0.0
        %3373 = vmatpush1.msra.mxu0 %v2820
        %3374 = vmatprep.mubr.f32.mxu0 %v2578
        %3375 = vmatmul.mubr.f32.gmra.mrb[0].mxu0 %v2577
        %v3376 = vpop.f32.mrb[0].mxu0
        %v3377 = vadd.f32 %v3302, %v3376
        %v3378 = vpop.f32.mrb[0].mxu0
        %3379 = vmatprep.mubr.f32.mxu0 %v2594
        %3380 = vmatmul.mubr.f32.gmra.mrb[0].mxu0 %v2593
        %v3381 = vpop.f32.mrb[0].mxu0
        %v3382 = vadd.f32 %v3307, %v3381
        %v3383 = vpop.f32.mrb[0].mxu0
        %3384 = vdwg.mxu0
        %3385 = vmatprep.subr.mxu0 0.0
        %3386 = vmatpush1.msra.mxu0 %v2821
        %3387 = vmatprep.subr.mxu0 0.0
        %3388 = vmatpush1.msra.mxu0 %v2822
        %3389 = vmatprep.subr.mxu0 0.0
        %3390 = vmatpush1.msra.mxu0 %v2823
        %3391 = vmatprep.subr.mxu0 0.0
        %3392 = vmatpush1.msra.mxu0 %v2824
        %3393 = vmatprep.subr.mxu0 0.0
        %3394 = vmatpush1.msra.mxu0 %v2825
        %3395 = vmatprep.subr.mxu0 0.0
        %3396 = vmatpush1.msra.mxu0 %v2826
        %3397 = vmatprep.subr.mxu0 0.0
        %3398 = vmatpush1.msra.mxu0 %v2827
        %3399 = vmatprep.subr.mxu0 0.0
        %3400 = vmatpush1.msra.mxu0 %v2828
        %3401 = vmatprep.subr.mxu0 0.0
        %3402 = vmatpush1.msra.mxu0 %v2829
        %3403 = vmatprep.subr.mxu0 0.0
        %3404 = vmatpush1.msra.mxu0 %v2830
        %3405 = vmatprep.subr.mxu0 0.0
        %3406 = vmatpush1.msra.mxu0 %v2831
        %3407 = vmatprep.subr.mxu0 0.0
        %3408 = vmatpush1.msra.mxu0 %v2832
        %3409 = vmatprep.subr.mxu0 0.0
        %3410 = vmatpush1.msra.mxu0 %v2833
        %3411 = vmatprep.subr.mxu0 0.0
        %3412 = vmatpush1.msra.mxu0 %v2834
        %3413 = vmatprep.subr.mxu0 0.0
        %3414 = vmatpush1.msra.mxu0 %v2835
        %3415 = vmatprep.subr.mxu0 0.0
        %3416 = vmatpush1.msra.mxu0 %v2836
        %3417 = vmatprep.subr.mxu0 0.0
        %3418 = vmatpush1.msra.mxu0 %v2837
        %3419 = vmatprep.subr.mxu0 0.0
        %3420 = vmatpush1.msra.mxu0 %v2838
        %3421 = vmatprep.subr.mxu0 0.0
        %3422 = vmatpush1.msra.mxu0 %v2839
        %3423 = vmatprep.subr.mxu0 0.0
        %3424 = vmatpush1.msra.mxu0 %v2840
        %3425 = vmatprep.subr.mxu0 0.0
        %3426 = vmatpush1.msra.mxu0 %v2841
        %3427 = vmatprep.subr.mxu0 0.0
        %3428 = vmatpush1.msra.mxu0 %v2842
        %3429 = vmatprep.subr.mxu0 0.0
        %3430 = vmatpush1.msra.mxu0 %v2843
        %3431 = vmatprep.subr.mxu0 0.0
        %3432 = vmatpush1.msra.mxu0 %v2844
        %3433 = vmatprep.subr.mxu0 0.0
        %3434 = vmatpush1.msra.mxu0 %v2845
        %3435 = vmatprep.subr.mxu0 0.0
        %3436 = vmatpush1.msra.mxu0 %v2846
        %3437 = vmatprep.subr.mxu0 0.0
        %3438 = vmatpush1.msra.mxu0 %v2847
        %3439 = vmatprep.subr.mxu0 0.0
        %3440 = vmatpush1.msra.mxu0 %v2848
        %3441 = vmatprep.subr.mxu0 0.0
        %3442 = vmatpush1.msra.mxu0 %v2849
        %3443 = vmatprep.subr.mxu0 0.0
        %3444 = vmatpush1.msra.mxu0 %v2850
        %3445 = vmatprep.subr.mxu0 0.0
        %3446 = vmatpush1.msra.mxu0 %v2851
        %3447 = vmatprep.subr.mxu0 0.0
        %3448 = vmatpush1.msra.mxu0 %v2852
        %3449 = vmatprep.mubr.f32.mxu0 %v2580
        %3450 = vmatmul.mubr.f32.gmra.mrb[0].mxu0 %v2579
        %v3451 = vpop.f32.mrb[0].mxu0
        %v3452 = vadd.f32 %v3377, %v3451
        %v3453 = vpop.f32.mrb[0].mxu0
        %3454 = vmatprep.mubr.f32.mxu0 %v2596
        %3455 = vmatmul.mubr.f32.gmra.mrb[0].mxu0 %v2595
        %v3456 = vpop.f32.mrb[0].mxu0
        %v3457 = vadd.f32 %v3382, %v3456
        %v3458 = vpop.f32.mrb[0].mxu0
        %3459 = vdwg.mxu0
        %v3460 = vadd.f32 %v1793, %v3452
        %v3461 = vadd.f32 %v1794, %v3457
        %v3462 = vld [vmem:[%s16] sm:$0x1]
        %v3463 = vld [vmem:[%s17] sm:$0x1]
        %v3464 = vsel %vm665, %v3460, 0.0
        %3465 = vadd.xlane.f32.xlu0 %v3464
        %v3466 = vpop.xlane.xlu0 %3465
        %v3467 = vsel %vm665, %v3461, 0.0
        %3468 = vadd.xlane.f32.xlu0 %v3467
        %v3469 = vpop.xlane.xlu0 %3468
        %v3470 = vmul.f32 %v3466, %v1705
        %v3471 = vmul.f32 %v3469, %v1705
        %v3472 = vsub.f32 %v3460, %v3470
        %v3473 = vsub.f32 %v3461, %v3471
        %v3474 = vmul.f32 %v3472, %v3472
        %v3475 = vmul.f32 %v3473, %v3473
        %v3476 = vsel %vm665, %v3474, 0.0
        %3477 = vadd.xlane.f32.xlu0 %v3476
        %v3478 = vpop.xlane.xlu0 %3477
        %v3479 = vsel %vm665, %v3475, 0.0
        %3480 = vadd.xlane.f32.xlu0 %v3479
        %v3481 = vpop.xlane.xlu0 %3480
        %v3482 = vmul.f32 %v3478, %v1705
        %v3483 = vmul.f32 %v3481, %v1705
        %v3484 = vadd.f32 %v3482, 1e-05
        %v3485 = vadd.f32 %v3483, 1e-05
        %v3486 = vrsqrt.pop %v3484
        %v3487 = vrsqrt.pop %v3485
        %v3488 = vmul.f32 %v3472, %v3486
        %v3489 = vmul.f32 %v3473, %v3487
        %v3491 = vlaneseq
        %v3492 = vshrl.u32 %v3491, 7
        %v3493 = vsub.s32 0, %v3492
        %v3494 = vrot.slane %v3462, %v3493
        %v3496 = vmul.f32 %v3488, %v3494
        %v3497 = vmul.f32 %v3489, %v3494
        %v3499 = vlaneseq
        %v3500 = vshrl.u32 %v3499, 7
        %v3501 = vsub.s32 0, %v3500
        %v3502 = vrot.slane %v3463, %v3501
        %v3504 = vadd.f32 %v3496, %v3502
        %v3505 = vadd.f32 %v3497, %v3502
        %v3506 = vld [vmem:[%s18] sm:$0x1]
        %v3507 = vld [vmem:[#allocation2] sm:$0x1]
        %3509 = vset.pattern.permute.xlu0 0
        %3510 = vperm.xlu0 %3509, %v3507
        %v3511 = vpop.permute.xlu0 %3510
        %v3513 = vlaneseq
        %v3514 = vshrl.u32 %v3513, 7
        %v3515 = vsub.s32 0, %v3514
        %v3516 = vrot.slane %v3511, %v3515
        %v3518 = vsel %vm665, %v3506, 0
        %v3521 = vsel %vm665, %v3504, 0
        %v3524 = vsel %vm665, %v3505, 0
        %3526 = vmatprep.subr.mxu0 0.0
        %3527 = vmatpush1.xpose.msra.mxu0 %v3521
        %3528 = vmatprep.subr.mxu0 0.0
        %3529 = vmatpush1.xpose.msra.mxu0 %v3524
        %3530 = vmatprep.subr.mxu0 0.0
        %3531 = vmatpush1.xpose.msra.mxu0 0.0
        %3532 = vmatprep.subr.mxu0 0.0
        %3533 = vmatpush1.xpose.msra.mxu0 0.0
        %3534 = vmatprep.subr.mxu0 0.0
        %3535 = vmatpush1.xpose.msra.mxu0 0.0
        %3536 = vmatprep.subr.mxu0 0.0
        %3537 = vmatpush1.xpose.msra.mxu0 0.0
        %3538 = vmatprep.subr.mxu0 0.0
        %3539 = vmatpush1.xpose.msra.mxu0 0.0
        %3540 = vmatprep.subr.mxu0 0.0
        %3541 = vmatpush1.xpose.msra.mxu0 0.0
        %3542 = vmatprep.subr.mxu0 0.0
        %3543 = vmatpush1.xpose.msra.mxu0 0.0
        %3544 = vmatprep.subr.mxu0 0.0
        %3545 = vmatpush1.xpose.msra.mxu0 0.0
        %3546 = vmatprep.subr.mxu0 0.0
        %3547 = vmatpush1.xpose.msra.mxu0 0.0
        %3548 = vmatprep.subr.mxu0 0.0
        %3549 = vmatpush1.xpose.msra.mxu0 0.0
        %3550 = vmatprep.subr.mxu0 0.0
        %3551 = vmatpush1.xpose.msra.mxu0 0.0
        %3552 = vmatprep.subr.mxu0 0.0
        %3553 = vmatpush1.xpose.msra.mxu0 0.0
        %3554 = vmatprep.subr.mxu0 0.0
        %3555 = vmatpush1.xpose.msra.mxu0 0.0
        %3556 = vmatprep.subr.mxu0 0.0
        %3557 = vmatpush1.xpose.msra.mxu0 0.0
        %3558 = vmatprep.subr.mxu0 0.0
        %3559 = vmatpush1.xpose.msra.mxu0 0.0
        %3560 = vmatprep.subr.mxu0 0.0
        %3561 = vmatpush1.xpose.msra.mxu0 0.0
        %3562 = vmatprep.subr.mxu0 0.0
        %3563 = vmatpush1.xpose.msra.mxu0 0.0
        %3564 = vmatprep.subr.mxu0 0.0
        %3565 = vmatpush1.xpose.msra.mxu0 0.0
        %3566 = vmatprep.subr.mxu0 0.0
        %3567 = vmatpush1.xpose.msra.mxu0 0.0
        %3568 = vmatprep.subr.mxu0 0.0
        %3569 = vmatpush1.xpose.msra.mxu0 0.0
        %3570 = vmatprep.subr.mxu0 0.0
        %3571 = vmatpush1.xpose.msra.mxu0 0.0
        %3572 = vmatprep.subr.mxu0 0.0
        %3573 = vmatpush1.xpose.msra.mxu0 0.0
        %3574 = vmatprep.subr.mxu0 0.0
        %3575 = vmatpush1.xpose.msra.mxu0 0.0
        %3576 = vmatprep.subr.mxu0 0.0
        %3577 = vmatpush1.xpose.msra.mxu0 0.0
        %3578 = vmatprep.subr.mxu0 0.0
        %3579 = vmatpush1.xpose.msra.mxu0 0.0
        %3580 = vmatprep.subr.mxu0 0.0
        %3581 = vmatpush1.xpose.msra.mxu0 0.0
        %3582 = vmatprep.subr.mxu0 0.0
        %3583 = vmatpush1.xpose.msra.mxu0 0.0
        %3584 = vmatprep.subr.mxu0 0.0
        %3585 = vmatpush1.xpose.msra.mxu0 0.0
        %3586 = vmatprep.subr.mxu0 0.0
        %3587 = vmatpush1.xpose.msra.mxu0 0.0
        %3588 = vmatprep.subr.mxu0 0.0
        %3589 = vmatpush1.xpose.msra.mxu0 0.0
        %3590 = vmatprep.mubr.f32.mxu0 0.0
        %3591 = vmatmul.mubr.f32.gmra.mrb[0].mxu0 %v3518
        %v3592 = vpop.f32.mrb[0].mxu0
        %v3593 = vadd.f32 %v3516, %v3592
        %v3594 = vpop.f32.mrb[0].mxu0
        %3595 = vdwg.mxu0
        %vm3596 = vcmask 122880
        %3597 = vst.msk [vmem:[%s623] sm:$0x1] %vm3596, %v3593
        %s3598 = sand.u32 %s469, 1
        %s3599 = scalar_lea.sflag [#allocation4], %s3598
        %s3600 = sand.u32 %s469, 1
        %s3601 = scalar_lea.vmem [#allocation3], %s3600
        // Predicated region
        $region101: #{tpu_custom_call.1} parent=99 // pred_check
          %p3602 = pneg %p479
        $region102: #{tpu_custom_call.1} parent=99 // pred_check_branch
          %3604 = sbr.rel (%p3602) target = $region104
        $region103: #{tpu_custom_call.1} parent=99 // pred_region
          %s3606 = ssub.s32 16, 16
          %3607 = vsyncadd %s3599, %s3606
          %s3608 = smul.addr %s36, 16
          %s3609 = scalar_lea.hbm %s20, %s3608
          %s3611 = sshll.u32 %s3601, 4
          %s3612 = int_to_ptr.vmem [resolvable:$true] %s3611
          %3614 = dma.vmem_to_hbm [thread:$0]  %s3612, 16, %s3609, %s3599
        $region104: #{tpu_custom_call.1} parent=99 // pred_fallthru
          _
      $region100: #{tpu_custom_call.1} parent=5 // pred_fallthru
        _
      %p3615 = scmp.le.s32.totalorder 2, %s31
      // Predicated region
      $region105: #{tpu_custom_call.1} parent=5 // pred_check
        %p3616 = pneg %p3615
      $region106: #{tpu_custom_call.1} parent=5 // pred_check_branch
        %3618 = sbr.rel (%p3616) target = $region108
      $region107: #{tpu_custom_call.1} parent=5 // pred_region
        %s3619 = ssub.s32 %s31, 2
        // Predicated region
        $region109: #{tpu_custom_call.1} parent=107 // pred_check
          %p3620 = pneg %p485
        $region110: #{tpu_custom_call.1} parent=107 // pred_check_branch
          %3622 = sbr.rel (%p3620) target = $region112
        $region111: #{tpu_custom_call.1} parent=107 // pred_region
          %s3623 = sand.u32 %s470, 1
          %s3624 = scalar_lea.sflag [#allocation4], %s3623
          %s3625 = sand.u32 %s470, 1
          %s3626 = scalar_lea.vmem [#allocation3], %s3625
          %3627 = dma.done %s3624, 16
        $region112: #{tpu_custom_call.1} parent=107 // pred_fallthru
          _
      $region108: #{tpu_custom_call.1} parent=5 // pred_fallthru
        _
    $region6: #{tpu_custom_call.1} parent=1 // loop_footer
      %s35 = sadd.s32 1, %s31
    $region7: #{tpu_custom_call.1} parent=1 // loop_footer_branch
      %30 = sbr.rel target = $region3
    $region8: #{tpu_custom_call.1} parent=1 // loop_exit
      _
    %3628 = vsyncpa [#allocation4], 1
    %s3629 = scalar_lea.sflag [#allocation4], 1
    %3630 = vsyncpa %s3629, 1

// kernel: tpu_custom_call.1
$region0: #{tpu_custom_call.1}
  #allocation0 [shape = 'u32[]', space=smem, size = 0x4, offset = 0x4, fixed_abs, tag = 'smem constant byte address 0x4 - core index']
  #allocation1 [shape = 'u32[144,128]{1,0:T(1,128)}', space=vmem, size = 0x12000, scoped, tag = 'internal scratch']
  #allocation2 [shape = 'f32[1,1]{1,0:T(1,128)S(1)}', space=vmem, size = 0x200, scoped, tag = 'scoped memory for tpu_custom_call.1']
  %s0 = inlined_call_operand.vmem [shape: f32[2,16,1], index: 0, kind: input, shape index: {}]
  %s1 = inlined_call_operand.vmem [shape: f32[16,32], index: 1, kind: input, shape index: {}]
  %s2 = inlined_call_operand.vmem [shape: f32[1,32], index: 2, kind: input, shape index: {}]
  %s3 = inlined_call_operand.vmem [shape: f32[32,96], index: 3, kind: input, shape index: {}]
  %s4 = inlined_call_operand.vmem [shape: f32[1,96], index: 4, kind: input, shape index: {}]
  %s5 = inlined_call_operand.vmem [shape: f32[32,32], index: 5, kind: input, shape index: {}]
  %s6 = inlined_call_operand.vmem [shape: f32[1,32], index: 6, kind: input, shape index: {}]
  %s7 = inlined_call_operand.vmem [shape: f32[1,32], index: 7, kind: input, shape index: {}]
  %s8 = inlined_call_operand.vmem [shape: f32[1,32], index: 8, kind: input, shape index: {}]
  %s9 = inlined_call_operand.vmem [shape: f32[1,32], index: 9, kind: input, shape index: {}]
  %s10 = inlined_call_operand.vmem [shape: f32[1,32], index: 10, kind: input, shape index: {}]
  %s11 = inlined_call_operand.vmem [shape: f32[1,32], index: 11, kind: input, shape index: {}]
  %s12 = inlined_call_operand.vmem [shape: f32[32,2048], index: 12, kind: input, shape index: {}]
  %s13 = inlined_call_operand.vmem [shape: f32[1,2048], index: 13, kind: input, shape index: {}]
  %s14 = inlined_call_operand.vmem [shape: f32[2048,32], index: 14, kind: input, shape index: {}]
  %s15 = inlined_call_operand.vmem [shape: f32[1,32], index: 15, kind: input, shape index: {}]
  %s16 = inlined_call_operand.vmem [shape: f32[1,32], index: 16, kind: input, shape index: {}]
  %s17 = inlined_call_operand.vmem [shape: f32[1,32], index: 17, kind: input, shape index: {}]
  %s18 = inlined_call_operand.vmem [shape: f32[1,32], index: 18, kind: input, shape index: {}]
  %s19 = inlined_call_operand.<no memory space> [shape: f32[1,1], index: 19, kind: input, shape index: {}]
  %s20 = inlined_call_operand.hbm [shape: f32[2,1,16], index: 20, kind: output, shape index: {}]
  %s21 = sld [smem:[#allocation0]]
  $region113: #{tpu_custom_call.1} parent=0
    _
  %s23 = ssub.s32 1, %s21
  %s24 = scalar_select 0, %s23, %s21
  %v25 = vstv %s19
  %26 = vst [vmem:[#allocation2] sm:$0x1] %v25
  $region1: #{tpu_custom_call.1} parent=0
    #allocation3 [shape = 'u8[1024]{0}', space=vmem, size = 0x400, scoped, tag = 'output window, operand 0']
    #allocation4 [shape = 's32[2]{0}', space=sflag, size = 0x8, scoped, tag = 'scoped memory for tpu_custom_call.1']
    %27 = vsyncpa [#allocation4], 0
    %s28 = scalar_lea.sflag [#allocation4], 1
    %29 = vsyncpa %s28, 0
    loop: start=0, step=1, limit=4
    $region2: #{tpu_custom_call.1} parent=1 // loop_pre_header
      _
    $region3: #{tpu_custom_call.1} parent=1 // loop_header
      %s31 = sphi 0, %s35
      %p32 = scmp.ge.s32.totalorder %s31, 4
      %s41 = sphi 0, %s43
      %s44 = sphi 0, %s41
      %s45 = sphi 0, %s44
      %s61 = sphi 0, %s45
      %s65 = sphi 0, %s65
      %s67 = sphi 0, %s65
      %s68 = sphi 0, %s67
      %s82 = sphi 0, %s68
      %s86 = sphi 0, %s86
      %s88 = sphi 0, %s86
      %s89 = sphi 0, %s88
      %s103 = sphi 0, %s89
      %s107 = sphi 0, %s107
      %s109 = sphi 0, %s107
      %s110 = sphi 0, %s109
      %s124 = sphi 0, %s110
      %s128 = sphi 0, %s128
      %s130 = sphi 0, %s128
      %s131 = sphi 0, %s130
      %s145 = sphi 0, %s131
      %s149 = sphi 0, %s149
      %s151 = sphi 0, %s149
      %s152 = sphi 0, %s151
      %s166 = sphi 0, %s152
      %s170 = sphi 0, %s170
      %s172 = sphi 0, %s170
      %s173 = sphi 0, %s172
      %s187 = sphi 0, %s173
      %s191 = sphi 0, %s191
      %s193 = sphi 0, %s191
      %s194 = sphi 0, %s193
      %s208 = sphi 0, %s194
      %s212 = sphi 0, %s212
      %s214 = sphi 0, %s212
      %s215 = sphi 0, %s214
      %s229 = sphi 0, %s215
      %s233 = sphi 0, %s233
      %s235 = sphi 0, %s233
      %s236 = sphi 0, %s235
      %s250 = sphi 0, %s236
      %s254 = sphi 0, %s254
      %s256 = sphi 0, %s254
      %s257 = sphi 0, %s256
      %s271 = sphi 0, %s257
      %s275 = sphi 0, %s275
      %s277 = sphi 0, %s275
      %s278 = sphi 0, %s277
      %s292 = sphi 0, %s278
      %s296 = sphi 0, %s296
      %s298 = sphi 0, %s296
      %s299 = sphi 0, %s298
      %s313 = sphi 0, %s299
      %s317 = sphi 0, %s317
      %s319 = sphi 0, %s317
      %s320 = sphi 0, %s319
      %s334 = sphi 0, %s320
      %s338 = sphi 0, %s338
      %s340 = sphi 0, %s338
      %s341 = sphi 0, %s340
      %s355 = sphi 0, %s341
      %s359 = sphi 0, %s359
      %s361 = sphi 0, %s359
      %s362 = sphi 0, %s361
      %s376 = sphi 0, %s362
      %s380 = sphi 0, %s380
      %s382 = sphi 0, %s380
      %s383 = sphi 0, %s382
      %s397 = sphi 0, %s383
      %s401 = sphi 0, %s401
      %s403 = sphi 0, %s401
      %s404 = sphi 0, %s403
      %s418 = sphi 0, %s404
      %s422 = sphi 0, %s422
      %s424 = sphi 0, %s422
      %s425 = sphi 0, %s424
      %s439 = sphi 0, %s425
      %s443 = sphi 0, %s443
      %s445 = sphi 0, %s443
      %s446 = sphi 0, %s445
      %s460 = sphi 0, %s446
      %s466 = sphi 0, %s468
      %s469 = sphi 0, %s466
      %s470 = sphi 0, %s469
      %s486 = sphi 0, %s470
    $region4: #{tpu_custom_call.1} parent=1 // loop_header_branch
      %34 = sbr.rel (%p32) target = $region8
    $region5: #{tpu_custom_call.1} parent=1 // loop_body
      %s36 = ssub.s32 %s31, 1
      %s37 = ssub.s32 %s31, 2
      %s38 = sadd.s32 %s31, 1
      %s39 = ssub.s32 %s31, %s38
      %p40 = scmp.eq.s32.totalorder %s39, 0
      %s42 = sadd.s32 %s41, 1
      %s43 = scalar_select %p40, %s41, %s42
      %p46 = pneg %p40
      %p47 = scmp.eq.s32.totalorder %s31, 1
      %p48 = por %p46, %p47
      %p49 = scmp.ne.s32.totalorder %s41, %s44
      %p50 = scmp.eq.s32.totalorder %s31, 0
      %p51 = por %p49, %p50
      %p52 = scmp.ne.s32.totalorder %s41, %s44
      %p53 = scmp.eq.s32.totalorder %s36, 1
      %p54 = por %p52, %p53
      %p55 = scmp.ne.s32.totalorder %s44, %s45
      %p56 = scmp.eq.s32.totalorder %s36, 0
      %p57 = por %p55, %p56
      %p58 = scmp.ne.s32.totalorder %s44, %s45
      %p59 = scmp.eq.s32.totalorder %s37, 1
      %p60 = por %p58, %p59
      %p62 = scmp.ne.s32.totalorder %s45, %s61
      %p63 = scmp.eq.s32.totalorder %s37, 0
      %p64 = por %p62, %p63
      %s66 = sadd.s32 %s65, 1
      %p69 = scmp.eq.s32.totalorder %s31, 1
      %p70 = scmp.ne.s32.totalorder %s65, %s67
      %p71 = scmp.eq.s32.totalorder %s31, 0
      %p72 = por %p70, %p71
      %p73 = scmp.ne.s32.totalorder %s65, %s67
      %p74 = scmp.eq.s32.totalorder %s36, 1
      %p75 = por %p73, %p74
      %p76 = scmp.ne.s32.totalorder %s67, %s68
      %p77 = scmp.eq.s32.totalorder %s36, 0
      %p78 = por %p76, %p77
      %p79 = scmp.ne.s32.totalorder %s67, %s68
      %p80 = scmp.eq.s32.totalorder %s37, 1
      %p81 = por %p79, %p80
      %p83 = scmp.ne.s32.totalorder %s68, %s82
      %p84 = scmp.eq.s32.totalorder %s37, 0
      %p85 = por %p83, %p84
      %s87 = sadd.s32 %s86, 1
      %p90 = scmp.eq.s32.totalorder %s31, 1
      %p91 = scmp.ne.s32.totalorder %s86, %s88
      %p92 = scmp.eq.s32.totalorder %s31, 0
      %p93 = por %p91, %p92
      %p94 = scmp.ne.s32.totalorder %s86, %s88
      %p95 = scmp.eq.s32.totalorder %s36, 1
      %p96 = por %p94, %p95
      %p97 = scmp.ne.s32.totalorder %s88, %s89
      %p98 = scmp.eq.s32.totalorder %s36, 0
      %p99 = por %p97, %p98
      %p100 = scmp.ne.s32.totalorder %s88, %s89
      %p101 = scmp.eq.s32.totalorder %s37, 1
      %p102 = por %p100, %p101
      %p104 = scmp.ne.s32.totalorder %s89, %s103
      %p105 = scmp.eq.s32.totalorder %s37, 0
      %p106 = por %p104, %p105
      %s108 = sadd.s32 %s107, 1
      %p111 = scmp.eq.s32.totalorder %s31, 1
      %p112 = scmp.ne.s32.totalorder %s107, %s109
      %p113 = scmp.eq.s32.totalorder %s31, 0
      %p114 = por %p112, %p113
      %p115 = scmp.ne.s32.totalorder %s107, %s109
      %p116 = scmp.eq.s32.totalorder %s36, 1
      %p117 = por %p115, %p116
      %p118 = scmp.ne.s32.totalorder %s109, %s110
      %p119 = scmp.eq.s32.totalorder %s36, 0
      %p120 = por %p118, %p119
      %p121 = scmp.ne.s32.totalorder %s109, %s110
      %p122 = scmp.eq.s32.totalorder %s37, 1
      %p123 = por %p121, %p122
      %p125 = scmp.ne.s32.totalorder %s110, %s124
      %p126 = scmp.eq.s32.totalorder %s37, 0
      %p127 = por %p125, %p126
      %s129 = sadd.s32 %s128, 1
      %p132 = scmp.eq.s32.totalorder %s31, 1
      %p133 = scmp.ne.s32.totalorder %s128, %s130
      %p134 = scmp.eq.s32.totalorder %s31, 0
      %p135 = por %p133, %p134
      %p136 = scmp.ne.s32.totalorder %s128, %s130
      %p137 = scmp.eq.s32.totalorder %s36, 1
      %p138 = por %p136, %p137
      %p139 = scmp.ne.s32.totalorder %s130, %s131
      %p140 = scmp.eq.s32.totalorder %s36, 0
      %p141 = por %p139, %p140
      %p142 = scmp.ne.s32.totalorder %s130, %s131
      %p143 = scmp.eq.s32.totalorder %s37, 1
      %p144 = por %p142, %p143
      %p146 = scmp.ne.s32.totalorder %s131, %s145
      %p147 = scmp.eq.s32.totalorder %s37, 0
      %p148 = por %p146, %p147
      %s150 = sadd.s32 %s149, 1
      %p153 = scmp.eq.s32.totalorder %s31, 1
      %p154 = scmp.ne.s32.totalorder %s149, %s151
      %p155 = scmp.eq.s32.totalorder %s31, 0
      %p156 = por %p154, %p155
      %p157 = scmp.ne.s32.totalorder %s149, %s151
      %p158 = scmp.eq.s32.totalorder %s36, 1
      %p159 = por %p157, %p158
      %p160 = scmp.ne.s32.totalorder %s151, %s152
      %p161 = scmp.eq.s32.totalorder %s36, 0
      %p162 = por %p160, %p161
      %p163 = scmp.ne.s32.totalorder %s151, %s152
      %p164 = scmp.eq.s32.totalorder %s37, 1
      %p165 = por %p163, %p164
      %p167 = scmp.ne.s32.totalorder %s152, %s166
      %p168 = scmp.eq.s32.totalorder %s37, 0
      %p169 = por %p167, %p168
      %s171 = sadd.s32 %s170, 1
      %p174 = scmp.eq.s32.totalorder %s31, 1
      %p175 = scmp.ne.s32.totalorder %s170, %s172
      %p176 = scmp.eq.s32.totalorder %s31, 0
      %p177 = por %p175, %p176
      %p178 = scmp.ne.s32.totalorder %s170, %s172
      %p179 = scmp.eq.s32.totalorder %s36, 1
      %p180 = por %p178, %p179
      %p181 = scmp.ne.s32.totalorder %s172, %s173
      %p182 = scmp.eq.s32.totalorder %s36, 0
      %p183 = por %p181, %p182
      %p184 = scmp.ne.s32.totalorder %s172, %s173
      %p185 = scmp.eq.s32.totalorder %s37, 1
      %p186 = por %p184, %p185
      %p188 = scmp.ne.s32.totalorder %s173, %s187
      %p189 = scmp.eq.s32.totalorder %s37, 0
      %p190 = por %p188, %p189
      %s192 = sadd.s32 %s191, 1
      %p195 = scmp.eq.s32.totalorder %s31, 1
      %p196 = scmp.ne.s32.totalorder %s191, %s193
      %p197 = scmp.eq.s32.totalorder %s31, 0
      %p198 = por %p196, %p197
      %p199 = scmp.ne.s32.totalorder %s191, %s193
      %p200 = scmp.eq.s32.totalorder %s36, 1
      %p201 = por %p199, %p200
      %p202 = scmp.ne.s32.totalorder %s193, %s194
      %p203 = scmp.eq.s32.totalorder %s36, 0
      %p204 = por %p202, %p203
      %p205 = scmp.ne.s32.totalorder %s193, %s194
      %p206 = scmp.eq.s32.totalorder %s37, 1
      %p207 = por %p205, %p206
      %p209 = scmp.ne.s32.totalorder %s194, %s208
      %p210 = scmp.eq.s32.totalorder %s37, 0
      %p211 = por %p209, %p210
      %s213 = sadd.s32 %s212, 1
      %p216 = scmp.eq.s32.totalorder %s31, 1
      %p217 = scmp.ne.s32.totalorder %s212, %s214
      %p218 = scmp.eq.s32.totalorder %s31, 0
      %p219 = por %p217, %p218
      %p220 = scmp.ne.s32.totalorder %s212, %s214
      %p221 = scmp.eq.s32.totalorder %s36, 1
      %p222 = por %p220, %p221
      %p223 = scmp.ne.s32.totalorder %s214, %s215
      %p224 = scmp.eq.s32.totalorder %s36, 0
      %p225 = por %p223, %p224
      %p226 = scmp.ne.s32.totalorder %s214, %s215
      %p227 = scmp.eq.s32.totalorder %s37, 1
      %p228 = por %p226, %p227
      %p230 = scmp.ne.s32.totalorder %s215, %s229
      %p231 = scmp.eq.s32.totalorder %s37, 0
      %p232 = por %p230, %p231
      %s234 = sadd.s32 %s233, 1
      %p237 = scmp.eq.s32.totalorder %s31, 1
      %p238 = scmp.ne.s32.totalorder %s233, %s235
      %p239 = scmp.eq.s32.totalorder %s31, 0
      %p240 = por %p238, %p239
      %p241 = scmp.ne.s32.totalorder %s233, %s235
      %p242 = scmp.eq.s32.totalorder %s36, 1
      %p243 = por %p241, %p242
      %p244 = scmp.ne.s32.totalorder %s235, %s236
      %p245 = scmp.eq.s32.totalorder %s36, 0
      %p246 = por %p244, %p245
      %p247 = scmp.ne.s32.totalorder %s235, %s236
      %p248 = scmp.eq.s32.totalorder %s37, 1
      %p249 = por %p247, %p248
      %p251 = scmp.ne.s32.totalorder %s236, %s250
      %p252 = scmp.eq.s32.totalorder %s37, 0
      %p253 = por %p251, %p252
      %s255 = sadd.s32 %s254, 1
      %p258 = scmp.eq.s32.totalorder %s31, 1
      %p259 = scmp.ne.s32.totalorder %s254, %s256
      %p260 = scmp.eq.s32.totalorder %s31, 0
      %p261 = por %p259, %p260
      %p262 = scmp.ne.s32.totalorder %s254, %s256
      %p263 = scmp.eq.s32.totalorder %s36, 1
      %p264 = por %p262, %p263
      %p265 = scmp.ne.s32.totalorder %s256, %s257
      %p266 = scmp.eq.s32.totalorder %s36, 0
      %p267 = por %p265, %p266
      %p268 = scmp.ne.s32.totalorder %s256, %s257
      %p269 = scmp.eq.s32.totalorder %s37, 1
      %p270 = por %p268, %p269
      %p272 = scmp.ne.s32.totalorder %s257, %s271
      %p273 = scmp.eq.s32.totalorder %s37, 0
      %p274 = por %p272, %p273
      %s276 = sadd.s32 %s275, 1
      %p279 = scmp.eq.s32.totalorder %s31, 1
      %p280 = scmp.ne.s32.totalorder %s275, %s277
      %p281 = scmp.eq.s32.totalorder %s31, 0
      %p282 = por %p280, %p281
      %p283 = scmp.ne.s32.totalorder %s275, %s277
      %p284 = scmp.eq.s32.totalorder %s36, 1
      %p285 = por %p283, %p284
      %p286 = scmp.ne.s32.totalorder %s277, %s278
      %p287 = scmp.eq.s32.totalorder %s36, 0
      %p288 = por %p286, %p287
      %p289 = scmp.ne.s32.totalorder %s277, %s278
      %p290 = scmp.eq.s32.totalorder %s37, 1
      %p291 = por %p289, %p290
      %p293 = scmp.ne.s32.totalorder %s278, %s292
      %p294 = scmp.eq.s32.totalorder %s37, 0
      %p295 = por %p293, %p294
      %s297 = sadd.s32 %s296, 1
      %p300 = scmp.eq.s32.totalorder %s31, 1
      %p301 = scmp.ne.s32.totalorder %s296, %s298
      %p302 = scmp.eq.s32.totalorder %s31, 0
      %p303 = por %p301, %p302
      %p304 = scmp.ne.s32.totalorder %s296, %s298
      %p305 = scmp.eq.s32.totalorder %s36, 1
      %p306 = por %p304, %p305
      %p307 = scmp.ne.s32.totalorder %s298, %s299
      %p308 = scmp.eq.s32.totalorder %s36, 0
      %p309 = por %p307, %p308
      %p310 = scmp.ne.s32.totalorder %s298, %s299
      %p311 = scmp.eq.s32.totalorder %s37, 1
      %p312 = por %p310, %p311
      %p314 = scmp.ne.s32.totalorder %s299, %s313
      %p315 = scmp.eq.s32.totalorder %s37, 0
      %p316 = por %p314, %p315
      %s318 = sadd.s32 %s317, 1
      %p321 = scmp.eq.s32.totalorder %s31, 1
      %p322 = scmp.ne.s32.totalorder %s317, %s319
      %p323 = scmp.eq.s32.totalorder %s31, 0
      %p324 = por %p322, %p323
      %p325 = scmp.ne.s32.totalorder %s317, %s319
      %p326 = scmp.eq.s32.totalorder %s36, 1
      %p327 = por %p325, %p326
      %p328 = scmp.ne.s32.totalorder %s319, %s320
      %p329 = scmp.eq.s32.totalorder %s36, 0
      %p330 = por %p328, %p329
      %p331 = scmp.ne.s32.totalorder %s319, %s320
      %p332 = scmp.eq.s32.totalorder %s37, 1
      %p333 = por %p331, %p332
      %p335 = scmp.ne.s32.totalorder %s320, %s334
      %p336 = scmp.eq.s32.totalorder %s37, 0
      %p337 = por %p335, %p336
      %s339 = sadd.s32 %s338, 1
      %p342 = scmp.eq.s32.totalorder %s31, 1
      %p343 = scmp.ne.s32.totalorder %s338, %s340
      %p344 = scmp.eq.s32.totalorder %s31, 0
      %p345 = por %p343, %p344
      %p346 = scmp.ne.s32.totalorder %s338, %s340
      %p347 = scmp.eq.s32.totalorder %s36, 1
      %p348 = por %p346, %p347
      %p349 = scmp.ne.s32.totalorder %s340, %s341
      %p350 = scmp.eq.s32.totalorder %s36, 0
      %p351 = por %p349, %p350
      %p352 = scmp.ne.s32.totalorder %s340, %s341
      %p353 = scmp.eq.s32.totalorder %s37, 1
      %p354 = por %p352, %p353
      %p356 = scmp.ne.s32.totalorder %s341, %s355
      %p357 = scmp.eq.s32.totalorder %s37, 0
      %p358 = por %p356, %p357
      %s360 = sadd.s32 %s359, 1
      %p363 = scmp.eq.s32.totalorder %s31, 1
      %p364 = scmp.ne.s32.totalorder %s359, %s361
      %p365 = scmp.eq.s32.totalorder %s31, 0
      %p366 = por %p364, %p365
      %p367 = scmp.ne.s32.totalorder %s359, %s361
      %p368 = scmp.eq.s32.totalorder %s36, 1
      %p369 = por %p367, %p368
      %p370 = scmp.ne.s32.totalorder %s361, %s362
      %p371 = scmp.eq.s32.totalorder %s36, 0
      %p372 = por %p370, %p371
      %p373 = scmp.ne.s32.totalorder %s361, %s362
      %p374 = scmp.eq.s32.totalorder %s37, 1
      %p375 = por %p373, %p374
      %p377 = scmp.ne.s32.totalorder %s362, %s376
      %p378 = scmp.eq.s32.totalorder %s37, 0
      %p379 = por %p377, %p378
      %s381 = sadd.s32 %s380, 1
      %p384 = scmp.eq.s32.totalorder %s31, 1
      %p385 = scmp.ne.s32.totalorder %s380, %s382
      %p386 = scmp.eq.s32.totalorder %s31, 0
      %p387 = por %p385, %p386
      %p388 = scmp.ne.s32.totalorder %s380, %s382
      %p389 = scmp.eq.s32.totalorder %s36, 1
      %p390 = por %p388, %p389
      %p391 = scmp.ne.s32.totalorder %s382, %s383
      %p392 = scmp.eq.s32.totalorder %s36, 0
      %p393 = por %p391, %p392
      %p394 = scmp.ne.s32.totalorder %s382, %s383
      %p395 = scmp.eq.s32.totalorder %s37, 1
      %p396 = por %p394, %p395
      %p398 = scmp.ne.s32.totalorder %s383, %s397
      %p399 = scmp.eq.s32.totalorder %s37, 0
      %p400 = por %p398, %p399
      %s402 = sadd.s32 %s401, 1
      %p405 = scmp.eq.s32.totalorder %s31, 1
      %p406 = scmp.ne.s32.totalorder %s401, %s403
      %p407 = scmp.eq.s32.totalorder %s31, 0
      %p408 = por %p406, %p407
      %p409 = scmp.ne.s32.totalorder %s401, %s403
      %p410 = scmp.eq.s32.totalorder %s36, 1
      %p411 = por %p409, %p410
      %p412 = scmp.ne.s32.totalorder %s403, %s404
      %p413 = scmp.eq.s32.totalorder %s36, 0
      %p414 = por %p412, %p413
      %p415 = scmp.ne.s32.totalorder %s403, %s404
      %p416 = scmp.eq.s32.totalorder %s37, 1
      %p417 = por %p415, %p416
      %p419 = scmp.ne.s32.totalorder %s404, %s418
      %p420 = scmp.eq.s32.totalorder %s37, 0
      %p421 = por %p419, %p420
      %s423 = sadd.s32 %s422, 1
      %p426 = scmp.eq.s32.totalorder %s31, 1
      %p427 = scmp.ne.s32.totalorder %s422, %s424
      %p428 = scmp.eq.s32.totalorder %s31, 0
      %p429 = por %p427, %p428
      %p430 = scmp.ne.s32.totalorder %s422, %s424
      %p431 = scmp.eq.s32.totalorder %s36, 1
      %p432 = por %p430, %p431
      %p433 = scmp.ne.s32.totalorder %s424, %s425
      %p434 = scmp.eq.s32.totalorder %s36, 0
      %p435 = por %p433, %p434
      %p436 = scmp.ne.s32.totalorder %s424, %s425
      %p437 = scmp.eq.s32.totalorder %s37, 1
      %p438 = por %p436, %p437
      %p440 = scmp.ne.s32.totalorder %s425, %s439
      %p441 = scmp.eq.s32.totalorder %s37, 0
      %p442 = por %p440, %p441
      %s444 = sadd.s32 %s443, 1
      %p447 = scmp.eq.s32.totalorder %s31, 1
      %p448 = scmp.ne.s32.totalorder %s443, %s445
      %p449 = scmp.eq.s32.totalorder %s31, 0
      %p450 = por %p448, %p449
      %p451 = scmp.ne.s32.totalorder %s443, %s445
      %p452 = scmp.eq.s32.totalorder %s36, 1
      %p453 = por %p451, %p452
      %p454 = scmp.ne.s32.totalorder %s445, %s446
      %p455 = scmp.eq.s32.totalorder %s36, 0
      %p456 = por %p454, %p455
      %p457 = scmp.ne.s32.totalorder %s445, %s446
      %p458 = scmp.eq.s32.totalorder %s37, 1
      %p459 = por %p457, %p458
      %p461 = scmp.ne.s32.totalorder %s446, %s460
      %p462 = scmp.eq.s32.totalorder %s37, 0
      %p463 = por %p461, %p462
      %s464 = ssub.s32 %s31, %s38
      %p465 = scmp.eq.s32.totalorder %s464, 0
      %s467 = sadd.s32 %s466, 1
      %s468 = scalar_select %p465, %s466, %s467
      %p471 = pneg %p465
      %p472 = scmp.eq.s32.totalorder %s31, 1
      %p473 = por %p471, %p472
      %p474 = scmp.ne.s32.totalorder %s466, %s469
      %p475 = scmp.eq.s32.totalorder %s31, 0
      %p476 = por %p474, %p475
      %p477 = scmp.ne.s32.totalorder %s466, %s469
      %p478 = scmp.eq.s32.totalorder %s36, 1
      %p479 = por %p477, %p478
      %p480 = scmp.ne.s32.totalorder %s469, %s470
      %p481 = scmp.eq.s32.totalorder %s36, 0
      %p482 = por %p480, %p481
      %p483 = scmp.ne.s32.totalorder %s469, %s470
      %p484 = scmp.eq.s32.totalorder %s37, 1
      %p485 = por %p483, %p484
      %p487 = scmp.ne.s32.totalorder %s470, %s486
      %p488 = scmp.eq.s32.totalorder %s37, 0
      %p489 = por %p487, %p488
      %p490 = scmp.le.s32.totalorder 1, %s31
      %p491 = scmp.lt.s32.totalorder %s31, 3
      %p492 = pnand %p490, %p491
      %p493 = pneg %p492
      // Predicated region
      $region9: #{tpu_custom_call.1} parent=5 // pred_check
        _
      $region10: #{tpu_custom_call.1} parent=5 // pred_check_branch
        %495 = sbr.rel (%p492) target = $region12
      $region11: #{tpu_custom_call.1} parent=5 // pred_region
        %s496 = ssub.s32 %s31, 1
        // Predicated region
        $region13: #{tpu_custom_call.1} parent=11 // pred_check
          %p497 = pneg %p78
        $region14: #{tpu_custom_call.1} parent=11 // pred_check_branch
          %499 = sbr.rel (%p497) target = $region16
        $region15: #{tpu_custom_call.1} parent=11 // pred_region
          _
        $region16: #{tpu_custom_call.1} parent=11 // pred_fallthru
          _
        // Predicated region
        $region17: #{tpu_custom_call.1} parent=11 // pred_check
          %p500 = pneg %p99
        $region18: #{tpu_custom_call.1} parent=11 // pred_check_branch
          %502 = sbr.rel (%p500) target = $region20
        $region19: #{tpu_custom_call.1} parent=11 // pred_region
          _
        $region20: #{tpu_custom_call.1} parent=11 // pred_fallthru
          _
        // Predicated region
        $region21: #{tpu_custom_call.1} parent=11 // pred_check
          %p503 = pneg %p120
        $region22: #{tpu_custom_call.1} parent=11 // pred_check_branch
          %505 = sbr.rel (%p503) target = $region24
        $region23: #{tpu_custom_call.1} parent=11 // pred_region
          _
        $region24: #{tpu_custom_call.1} parent=11 // pred_fallthru
          _
        // Predicated region
        $region25: #{tpu_custom_call.1} parent=11 // pred_check
          %p506 = pneg %p141
        $region26: #{tpu_custom_call.1} parent=11 // pred_check_branch
          %508 = sbr.rel (%p506) target = $region28
        $region27: #{tpu_custom_call.1} parent=11 // pred_region
          _
        $region28: #{tpu_custom_call.1} parent=11 // pred_fallthru
          _
        // Predicated region
        $region29: #{tpu_custom_call.1} parent=11 // pred_check
          %p509 = pneg %p162
        $region30: #{tpu_custom_call.1} parent=11 // pred_check_branch
          %511 = sbr.rel (%p509) target = $region32
        $region31: #{tpu_custom_call.1} parent=11 // pred_region
          _
        $region32: #{tpu_custom_call.1} parent=11 // pred_fallthru
          _
        // Predicated region
        $region33: #{tpu_custom_call.1} parent=11 // pred_check
          %p512 = pneg %p183
        $region34: #{tpu_custom_call.1} parent=11 // pred_check_branch
          %514 = sbr.rel (%p512) target = $region36
        $region35: #{tpu_custom_call.1} parent=11 // pred_region
          _
        $region36: #{tpu_custom_call.1} parent=11 // pred_fallthru
          _
        // Predicated region
        $region37: #{tpu_custom_call.1} parent=11 // pred_check
          %p515 = pneg %p204
        $region38: #{tpu_custom_call.1} parent=11 // pred_check_branch
          %517 = sbr.rel (%p515) target = $region40
        $region39: #{tpu_custom_call.1} parent=11 // pred_region
          _
        $region40: #{tpu_custom_call.1} parent=11 // pred_fallthru
          _
        // Predicated region
        $region41: #{tpu_custom_call.1} parent=11 // pred_check
          %p518 = pneg %p225
        $region42: #{tpu_custom_call.1} parent=11 // pred_check_branch
          %520 = sbr.rel (%p518) target = $region44
        $region43: #{tpu_custom_call.1} parent=11 // pred_region
          _
        $region44: #{tpu_custom_call.1} parent=11 // pred_fallthru
          _
        // Predicated region
        $region45: #{tpu_custom_call.1} parent=11 // pred_check
          %p521 = pneg %p246
        $region46: #{tpu_custom_call.1} parent=11 // pred_check_branch
          %523 = sbr.rel (%p521) target = $region48
        $region47: #{tpu_custom_call.1} parent=11 // pred_region
          _
        $region48: #{tpu_custom_call.1} parent=11 // pred_fallthru
          _
        // Predicated region
        $region49: #{tpu_custom_call.1} parent=11 // pred_check
          %p524 = pneg %p267
        $region50: #{tpu_custom_call.1} parent=11 // pred_check_branch
          %526 = sbr.rel (%p524) target = $region52
        $region51: #{tpu_custom_call.1} parent=11 // pred_region
          _
        $region52: #{tpu_custom_call.1} parent=11 // pred_fallthru
          _
        // Predicated region
        $region53: #{tpu_custom_call.1} parent=11 // pred_check
          %p527 = pneg %p288
        $region54: #{tpu_custom_call.1} parent=11 // pred_check_branch
          %529 = sbr.rel (%p527) target = $region56
        $region55: #{tpu_custom_call.1} parent=11 // pred_region
          _
        $region56: #{tpu_custom_call.1} parent=11 // pred_fallthru
          _
        // Predicated region
        $region57: #{tpu_custom_call.1} parent=11 // pred_check
          %p530 = pneg %p309
        $region58: #{tpu_custom_call.1} parent=11 // pred_check_branch
          %532 = sbr.rel (%p530) target = $region60
        $region59: #{tpu_custom_call.1} parent=11 // pred_region
          _
        $region60: #{tpu_custom_call.1} parent=11 // pred_fallthru
          _
        // Predicated region
        $region61: #{tpu_custom_call.1} parent=11 // pred_check
          %p533 = pneg %p330
        $region62: #{tpu_custom_call.1} parent=11 // pred_check_branch
          %535 = sbr.rel (%p533) target = $region64
        $region63: #{tpu_custom_call.1} parent=11 // pred_region
          _
        $region64: #{tpu_custom_call.1} parent=11 // pred_fallthru
          _
        // Predicated region
        $region65: #{tpu_custom_call.1} parent=11 // pred_check
          %p536 = pneg %p351
        $region66: #{tpu_custom_call.1} parent=11 // pred_check_branch
          %538 = sbr.rel (%p536) target = $region68
        $region67: #{tpu_custom_call.1} parent=11 // pred_region
          _
        $region68: #{tpu_custom_call.1} parent=11 // pred_fallthru
          _
        // Predicated region
        $region69: #{tpu_custom_call.1} parent=11 // pred_check
          %p539 = pneg %p372
        $region70: #{tpu_custom_call.1} parent=11 // pred_check_branch
          %541 = sbr.rel (%p539) target = $region72
        $region71: #{tpu_custom_call.1} parent=11 // pred_region
          _
        $region72: #{tpu_custom_call.1} parent=11 // pred_fallthru
          _
        // Predicated region
        $region73: #{tpu_custom_call.1} parent=11 // pred_check
          %p542 = pneg %p393
        $region74: #{tpu_custom_call.1} parent=11 // pred_check_branch
          %544 = sbr.rel (%p542) target = $region76
        $region75: #{tpu_custom_call.1} parent=11 // pred_region
          _
        $region76: #{tpu_custom_call.1} parent=11 // pred_fallthru
          _
        // Predicated region
        $region77: #{tpu_custom_call.1} parent=11 // pred_check
          %p545 = pneg %p414
        $region78: #{tpu_custom_call.1} parent=11 // pred_check_branch
          %547 = sbr.rel (%p545) target = $region80
        $region79: #{tpu_custom_call.1} parent=11 // pred_region
          _
        $region80: #{tpu_custom_call.1} parent=11 // pred_fallthru
          _
        // Predicated region
        $region81: #{tpu_custom_call.1} parent=11 // pred_check
          %p548 = pneg %p435
        $region82: #{tpu_custom_call.1} parent=11 // pred_check_branch
          %550 = sbr.rel (%p548) target = $region84
        $region83: #{tpu_custom_call.1} parent=11 // pred_region
          _
        $region84: #{tpu_custom_call.1} parent=11 // pred_fallthru
          _
        // Predicated region
        $region85: #{tpu_custom_call.1} parent=11 // pred_check
          %p551 = pneg %p456
        $region86: #{tpu_custom_call.1} parent=11 // pred_check_branch
          %553 = sbr.rel (%p551) target = $region88
        $region87: #{tpu_custom_call.1} parent=11 // pred_region
          _
        $region88: #{tpu_custom_call.1} parent=11 // pred_fallthru
          _
      $region12: #{tpu_custom_call.1} parent=5 // pred_fallthru
        _
      %p554 = scmp.lt.s32.totalorder %s31, 2
      // Predicated region
      $region89: #{tpu_custom_call.1} parent=5 // pred_check
        %p555 = pneg %p554
      $region90: #{tpu_custom_call.1} parent=5 // pred_check_branch
        %557 = sbr.rel (%p555) target = $region92
      $region91: #{tpu_custom_call.1} parent=5 // pred_region
        // Predicated region
        $region93: #{tpu_custom_call.1} parent=91 // pred_check
          %p558 = pneg %p51
        $region94: #{tpu_custom_call.1} parent=91 // pred_check_branch
          %560 = sbr.rel (%p558) target = $region96
        $region95: #{tpu_custom_call.1} parent=91 // pred_region
          %p561 = scmp.lt.s32.totalorder %s31, 1
          %s562 = scalar_select %p561, %s31, 1
          %s563 = smul.addr %s562, 2
          %s564 = smul.addr %s563, 8
          %s565 = scalar_lea.vmem %s0, %s564
        $region96: #{tpu_custom_call.1} parent=91 // pred_fallthru
          _
      $region92: #{tpu_custom_call.1} parent=5 // pred_fallthru
        _
      %p566 = scmp.le.s32.totalorder 1, %s31
      %p567 = scmp.lt.s32.totalorder %s31, 3
      %p568 = pnand %p566, %p567
      %p569 = pneg %p568
      // Predicated region
      $region97: #{tpu_custom_call.1} parent=5 // pred_check
        _
      $region98: #{tpu_custom_call.1} parent=5 // pred_check_branch
        %571 = sbr.rel (%p568) target = $region100
      $region99: #{tpu_custom_call.1} parent=5 // pred_region
        %s572 = ssub.s32 %s31, 1
        %p573 = scmp.lt.s32.totalorder %s36, 1
        %s574 = scalar_select %p573, %s36, 1
        %s575 = smul.addr %s574, 2
        %s576 = smul.addr %s575, 8
        %s577 = scalar_lea.vmem %s0, %s576
        %p578 = pneg %p57
        %p579 = pneg %p54
        %p580 = pneg %p78
        %p581 = pneg %p75
        %p582 = pneg %p99
        %p583 = pneg %p96
        %p584 = pneg %p120
        %p585 = pneg %p117
        %p586 = pneg %p141
        %p587 = pneg %p138
        %p588 = pneg %p162
        %p589 = pneg %p159
        %p590 = pneg %p183
        %p591 = pneg %p180
        %p592 = pneg %p204
        %p593 = pneg %p201
        %p594 = pneg %p225
        %p595 = pneg %p222
        %p596 = pneg %p246
        %p597 = pneg %p243
        %p598 = pneg %p267
        %p599 = pneg %p264
        %p600 = pneg %p288
        %p601 = pneg %p285
        %p602 = pneg %p309
        %p603 = pneg %p306
        %p604 = pneg %p330
        %p605 = pneg %p327
        %p606 = pneg %p351
        %p607 = pneg %p348
        %p608 = pneg %p372
        %p609 = pneg %p369
        %p610 = pneg %p393
        %p611 = pneg %p390
        %p612 = pneg %p414
        %p613 = pneg %p411
        %p614 = pneg %p435
        %p615 = pneg %p432
        %p616 = pneg %p456
        %p617 = pneg %p453
        %p618 = pneg %p482
        %p619 = pneg %p479
        %s620 = sand.u32 %s469, 1
        %s621 = scalar_lea.sflag [#allocation4], %s620
        %s622 = sand.u32 %s469, 1
        %s623 = scalar_lea.vmem [#allocation3], %s622
        %p624 = scmp.lt.s32.totalorder %s36, 1
        %s625 = scalar_select %p624, %s36, 1
        %s626 = smul.addr %s625, 2
        %s627 = smul.addr %s626, 8
        %s628 = scalar_lea.vmem %s0, %s627
        %v629 = vld [vmem:[%s628] sm:$0xff]
        %v630 = vld [vmem:[%s628 + $0x8] sm:$0xff]
        %v631 = vld [vmem:[%s2] sm:$0x1]
        %633 = vset.pattern.permute.xlu0 0
        %634 = vperm.xlu0 %633, %v629
        %v635 = vpop.permute.xlu0 %634
        %638 = vset.pattern.permute.xlu0 0
        %639 = vperm.xlu0 %638, %v630
        %v640 = vpop.permute.xlu0 %639
        %v643 = vlaneseq
        %v644 = vshrl.u32 %v643, 7
        %v645 = vsub.s32 0, %v644
        %v646 = vrot.slane %v631, %v645
        %v648 = vmul.f32 %v635, %v646
        %v649 = vmul.f32 %v640, %v646
        %v650 = vld [vmem:[%s1] sm:$0xff]
        %v651 = vld [vmem:[%s1 + $0x8] sm:$0xff]
        %v652 = vadd.f32 %v648, %v650
        %v653 = vadd.f32 %v649, %v651
        %v654 = vld [vmem:[%s3] sm:$0xff]
        %v655 = vld [vmem:[%s3 + $0x8] sm:$0xff]
        %v656 = vld [vmem:[%s3 + $0x10] sm:$0xff]
        %v657 = vld [vmem:[%s3 + $0x18] sm:$0xff]
        %v658 = vld [vmem:[%s4] sm:$0x1]
        %v660 = vlaneseq
        %v661 = vshrl.u32 %v660, 7
        %v662 = vsub.s32 0, %v661
        %v663 = vrot.slane %v658, %v662
        %vm665 = vcmask 261120
        %v667 = vsel %vm665, %v652, 0
        %v670 = vsel %vm665, %v653, 0
        %672 = vmatprep.subr.mxu0 0.0
        %673 = vmatpush1.msra.mxu0 %v654
        %674 = vmatprep.subr.mxu0 0.0
        %675 = vmatpush1.msra.mxu0 %v655
        %676 = vmatprep.subr.mxu0 0.0
        %677 = vmatpush1.msra.mxu0 %v656
        %678 = vmatprep.subr.mxu0 0.0
        %679 = vmatpush1.msra.mxu0 %v657
        %680 = vmatprep.subr.mxu0 0.0
        %681 = vmatpush1.msra.mxu0 0.0
        %682 = vmatprep.subr.mxu0 0.0
        %683 = vmatpush1.msra.mxu0 0.0
        %684 = vmatprep.subr.mxu0 0.0
        %685 = vmatpush1.msra.mxu0 0.0
        %686 = vmatprep.subr.mxu0 0.0
        %687 = vmatpush1.msra.mxu0 0.0
        %688 = vmatprep.subr.mxu0 0.0
        %689 = vmatpush1.msra.mxu0 0.0
        %690 = vmatprep.subr.mxu0 0.0
        %691 = vmatpush1.msra.mxu0 0.0
        %692 = vmatprep.subr.mxu0 0.0
        %693 = vmatpush1.msra.mxu0 0.0
        %694 = vmatprep.subr.mxu0 0.0
        %695 = vmatpush1.msra.mxu0 0.0
        %696 = vmatprep.subr.mxu0 0.0
        %697 = vmatpush1.msra.mxu0 0.0
        %698 = vmatprep.subr.mxu0 0.0
        %699 = vmatpush1.msra.mxu0 0.0
        %700 = vmatprep.subr.mxu0 0.0
        %701 = vmatpush1.msra.mxu0 0.0
        %702 = vmatprep.subr.mxu0 0.0
        %703 = vmatpush1.msra.mxu0 0.0
        %704 = vmatprep.subr.mxu0 0.0
        %705 = vmatpush1.msra.mxu0 0.0
        %706 = vmatprep.subr.mxu0 0.0
        %707 = vmatpush1.msra.mxu0 0.0
        %708 = vmatprep.subr.mxu0 0.0
        %709 = vmatpush1.msra.mxu0 0.0
        %710 = vmatprep.subr.mxu0 0.0
        %711 = vmatpush1.msra.mxu0 0.0
        %712 = vmatprep.subr.mxu0 0.0
        %713 = vmatpush1.msra.mxu0 0.0
        %714 = vmatprep.subr.mxu0 0.0
        %715 = vmatpush1.msra.mxu0 0.0
        %716 = vmatprep.subr.mxu0 0.0
        %717 = vmatpush1.msra.mxu0 0.0
        %718 = vmatprep.subr.mxu0 0.0
        %719 = vmatpush1.msra.mxu0 0.0
        %720 = vmatprep.subr.mxu0 0.0
        %721 = vmatpush1.msra.mxu0 0.0
        %722 = vmatprep.subr.mxu0 0.0
        %723 = vmatpush1.msra.mxu0 0.0
        %724 = vmatprep.subr.mxu0 0.0
        %725 = vmatpush1.msra.mxu0 0.0
        %726 = vmatprep.subr.mxu0 0.0
        %727 = vmatpush1.msra.mxu0 0.0
        %728 = vmatprep.subr.mxu0 0.0
        %729 = vmatpush1.msra.mxu0 0.0
        %730 = vmatprep.subr.mxu0 0.0
        %731 = vmatpush1.msra.mxu0 0.0
        %732 = vmatprep.subr.mxu0 0.0
        %733 = vmatpush1.msra.mxu0 0.0
        %734 = vmatprep.subr.mxu0 0.0
        %735 = vmatpush1.msra.mxu0 0.0
        %736 = vmatprep.mubr.f32.mxu0 0.0
        %737 = vmatmul.mubr.f32.gmra.mrb[0].mxu0 %v667
        %v738 = vpop.f32.mrb[0].mxu0
        %v739 = vadd.f32 %v663, %v738
        %v740 = vpop.f32.mrb[0].mxu0
        %741 = vmatprep.mubr.f32.mxu0 0.0
        %742 = vmatmul.mubr.f32.gmra.mrb[0].mxu0 %v670
        %v743 = vpop.f32.mrb[0].mxu0
        %v744 = vadd.f32 %v663, %v743
        %v745 = vpop.f32.mrb[0].mxu0
        %746 = vdwg.mxu0
        %v747 = vlaneseq
        %v748 = vshrl.u32 %v747, 7
        %v749 = vadd.s32 %v748, 8
        %v750 = vlaneseq
        %v751 = vand.u32 %v750, 127
        %vm752 = vcmp.le.s32.totalorder %v751, %v748
        %vm753 = vcmp.le.s32.totalorder %v751, %v749
        %v754 = vsel %vm752, 0.0, -1e+30
        %v755 = vsel %vm753, 0.0, -1e+30
        %758 = vrot.lane.b32.xlu0 %v739, 96
        %v759 = vpop.permute.xlu0 %758
        %760 = vrot.lane.b32.xlu0 %v744, 96
        %v761 = vpop.permute.xlu0 %760
        %vm762 = vcmask 64512
        %v763 = vsel %vm762, %v739, 0
        %v765 = vsel %vm762, %v744, 0
        %v767 = vsel %vm762, %v759, 0
        %v769 = vsel %vm762, %v761, 0
        %771 = vmatprep.subr.mxu0 0.0
        %772 = vmatpush1.xpose.msra.mxu0 %v767
        %773 = vmatprep.subr.mxu0 0.0
        %774 = vmatpush1.xpose.msra.mxu0 %v769
        %775 = vmatprep.subr.mxu0 0.0
        %776 = vmatpush1.xpose.msra.mxu0 0.0
        %777 = vmatprep.subr.mxu0 0.0
        %778 = vmatpush1.xpose.msra.mxu0 0.0
        %779 = vmatprep.subr.mxu0 0.0
        %780 = vmatpush1.xpose.msra.mxu0 0.0
        %781 = vmatprep.subr.mxu0 0.0
        %782 = vmatpush1.xpose.msra.mxu0 0.0
        %783 = vmatprep.subr.mxu0 0.0
        %784 = vmatpush1.xpose.msra.mxu0 0.0
        %785 = vmatprep.subr.mxu0 0.0
        %786 = vmatpush1.xpose.msra.mxu0 0.0
        %787 = vmatprep.subr.mxu0 0.0
        %788 = vmatpush1.xpose.msra.mxu0 0.0
        %789 = vmatprep.subr.mxu0 0.0
        %790 = vmatpush1.xpose.msra.mxu0 0.0
        %791 = vmatprep.subr.mxu0 0.0
        %792 = vmatpush1.xpose.msra.mxu0 0.0
        %793 = vmatprep.subr.mxu0 0.0
        %794 = vmatpush1.xpose.msra.mxu0 0.0
        %795 = vmatprep.subr.mxu0 0.0
        %796 = vmatpush1.xpose.msra.mxu0 0.0
        %797 = vmatprep.subr.mxu0 0.0
        %798 = vmatpush1.xpose.msra.mxu0 0.0
        %799 = vmatprep.subr.mxu0 0.0
        %800 = vmatpush1.xpose.msra.mxu0 0.0
        %801 = vmatprep.subr.mxu0 0.0
        %802 = vmatpush1.xpose.msra.mxu0 0.0
        %803 = vmatprep.subr.mxu0 0.0
        %804 = vmatpush1.xpose.msra.mxu0 0.0
        %805 = vmatprep.subr.mxu0 0.0
        %806 = vmatpush1.xpose.msra.mxu0 0.0
        %807 = vmatprep.subr.mxu0 0.0
        %808 = vmatpush1.xpose.msra.mxu0 0.0
        %809 = vmatprep.subr.mxu0 0.0
        %810 = vmatpush1.xpose.msra.mxu0 0.0
        %811 = vmatprep.subr.mxu0 0.0
        %812 = vmatpush1.xpose.msra.mxu0 0.0
        %813 = vmatprep.subr.mxu0 0.0
        %814 = vmatpush1.xpose.msra.mxu0 0.0
        %815 = vmatprep.subr.mxu0 0.0
        %816 = vmatpush1.xpose.msra.mxu0 0.0
        %817 = vmatprep.subr.mxu0 0.0
        %818 = vmatpush1.xpose.msra.mxu0 0.0
        %819 = vmatprep.subr.mxu0 0.0
        %820 = vmatpush1.xpose.msra.mxu0 0.0
        %821 = vmatprep.subr.mxu0 0.0
        %822 = vmatpush1.xpose.msra.mxu0 0.0
        %823 = vmatprep.subr.mxu0 0.0
        %824 = vmatpush1.xpose.msra.mxu0 0.0
        %825 = vmatprep.subr.mxu0 0.0
        %826 = vmatpush1.xpose.msra.mxu0 0.0
        %827 = vmatprep.subr.mxu0 0.0
        %828 = vmatpush1.xpose.msra.mxu0 0.0
        %829 = vmatprep.subr.mxu0 0.0
        %830 = vmatpush1.xpose.msra.mxu0 0.0
        %831 = vmatprep.subr.mxu0 0.0
        %832 = vmatpush1.xpose.msra.mxu0 0.0
        %833 = vmatprep.subr.mxu0 0.0
        %834 = vmatpush1.xpose.msra.mxu0 0.0
        %835 = vmatprep.mubr.f32.mxu0 0.0
        %836 = vmatmul.mubr.f32.gmra.mrb[0].mxu0 %v763
        %v837 = vpop.f32.mrb[0].mxu0
        %v838 = vadd.f32 0.0, %v837
        %v839 = vpop.f32.mrb[0].mxu0
        %840 = vmatprep.mubr.f32.mxu0 0.0
        %841 = vmatmul.mubr.f32.gmra.mrb[0].mxu0 %v765
        %v842 = vpop.f32.mrb[0].mxu0
        %v843 = vadd.f32 0.0, %v842
        %v844 = vpop.f32.mrb[0].mxu0
        %845 = vdwg.mxu0
        %v846 = vmul.f32 %v838, 0.35355338
        %v847 = vmul.f32 %v843, 0.35355338
        %v848 = vadd.f32 %v846, %v754
        %v849 = vadd.f32 %v847, %v755
        %vm850 = vcmask 130048
        %v851 = vsel %vm850, %v848, -inf
        %852 = vmax.xlane.f32.xlu0 %v851
        %v853 = vpop.xlane.xlu0 %852
        %v854 = vsel %vm850, %v849, -inf
        %855 = vmax.xlane.f32.xlu0 %v854
        %v856 = vpop.xlane.xlu0 %855
        %v857 = vsub.f32 %v848, %v853
        %v858 = vsub.f32 %v849, %v856
        %v859 = vmul.f32 %v857, 1.442695
        %v860 = vpow.pop %v859
        %v861 = vmul.f32 %v858, 1.442695
        %v862 = vpow.pop %v861
        %v863 = vsel %vm850, %v860, 0.0
        %864 = vadd.xlane.f32.xlu0 %v863
        %v865 = vpop.xlane.xlu0 %864
        %v866 = vsel %vm850, %v862, 0.0
        %867 = vadd.xlane.f32.xlu0 %v866
        %v868 = vpop.xlane.xlu0 %867
        %v869 = vrcp.pop %v865
        %v870 = vrcp.pop %v868
        %v871 = vmul.f32 %v860, %v869
        %v872 = vmul.f32 %v862, %v870
        %873 = vrot.lane.b32.xlu0 %v739, 64
        %v874 = vpop.permute.xlu0 %873
        %875 = vrot.lane.b32.xlu0 %v744, 64
        %v876 = vpop.permute.xlu0 %875
        %v880 = vsel %vm850, %v871, 0
        %v883 = vsel %vm850, %v872, 0
        %885 = vmatprep.subr.mxu0 0.0
        %886 = vmatpush1.msra.mxu0 %v874
        %887 = vmatprep.subr.mxu0 0.0
        %888 = vmatpush1.msra.mxu0 %v876
        %889 = vmatprep.subr.mxu0 0.0
        %890 = vmatpush1.msra.mxu0 0.0
        %891 = vmatprep.subr.mxu0 0.0
        %892 = vmatpush1.msra.mxu0 0.0
        %893 = vmatprep.subr.mxu0 0.0
        %894 = vmatpush1.msra.mxu0 0.0
        %895 = vmatprep.subr.mxu0 0.0
        %896 = vmatpush1.msra.mxu0 0.0
        %897 = vmatprep.subr.mxu0 0.0
        %898 = vmatpush1.msra.mxu0 0.0
        %899 = vmatprep.subr.mxu0 0.0
        %900 = vmatpush1.msra.mxu0 0.0
        %901 = vmatprep.subr.mxu0 0.0
        %902 = vmatpush1.msra.mxu0 0.0
        %903 = vmatprep.subr.mxu0 0.0
        %904 = vmatpush1.msra.mxu0 0.0
        %905 = vmatprep.subr.mxu0 0.0
        %906 = vmatpush1.msra.mxu0 0.0
        %907 = vmatprep.subr.mxu0 0.0
        %908 = vmatpush1.msra.mxu0 0.0
        %909 = vmatprep.subr.mxu0 0.0
        %910 = vmatpush1.msra.mxu0 0.0
        %911 = vmatprep.subr.mxu0 0.0
        %912 = vmatpush1.msra.mxu0 0.0
        %913 = vmatprep.subr.mxu0 0.0
        %914 = vmatpush1.msra.mxu0 0.0
        %915 = vmatprep.subr.mxu0 0.0
        %916 = vmatpush1.msra.mxu0 0.0
        %917 = vmatprep.subr.mxu0 0.0
        %918 = vmatpush1.msra.mxu0 0.0
        %919 = vmatprep.subr.mxu0 0.0
        %920 = vmatpush1.msra.mxu0 0.0
        %921 = vmatprep.subr.mxu0 0.0
        %922 = vmatpush1.msra.mxu0 0.0
        %923 = vmatprep.subr.mxu0 0.0
        %924 = vmatpush1.msra.mxu0 0.0
        %925 = vmatprep.subr.mxu0 0.0
        %926 = vmatpush1.msra.mxu0 0.0
        %927 = vmatprep.subr.mxu0 0.0
        %928 = vmatpush1.msra.mxu0 0.0
        %929 = vmatprep.subr.mxu0 0.0
        %930 = vmatpush1.msra.mxu0 0.0
        %931 = vmatprep.subr.mxu0 0.0
        %932 = vmatpush1.msra.mxu0 0.0
        %933 = vmatprep.subr.mxu0 0.0
        %934 = vmatpush1.msra.mxu0 0.0
        %935 = vmatprep.subr.mxu0 0.0
        %936 = vmatpush1.msra.mxu0 0.0
        %937 = vmatprep.subr.mxu0 0.0
        %938 = vmatpush1.msra.mxu0 0.0
        %939 = vmatprep.subr.mxu0 0.0
        %940 = vmatpush1.msra.mxu0 0.0
        %941 = vmatprep.subr.mxu0 0.0
        %942 = vmatpush1.msra.mxu0 0.0
        %943 = vmatprep.subr.mxu0 0.0
        %944 = vmatpush1.msra.mxu0 0.0
        %945 = vmatprep.subr.mxu0 0.0
        %946 = vmatpush1.msra.mxu0 0.0
        %947 = vmatprep.subr.mxu0 0.0
        %948 = vmatpush1.msra.mxu0 0.0
        %949 = vmatprep.mubr.f32.mxu0 0.0
        %950 = vmatmul.mubr.f32.gmra.mrb[0].mxu0 %v880
        %v951 = vpop.f32.mrb[0].mxu0
        %v952 = vadd.f32 0.0, %v951
        %v953 = vpop.f32.mrb[0].mxu0
        %954 = vmatprep.mubr.f32.mxu0 0.0
        %955 = vmatmul.mubr.f32.gmra.mrb[0].mxu0 %v883
        %v956 = vpop.f32.mrb[0].mxu0
        %v957 = vadd.f32 0.0, %v956
        %v958 = vpop.f32.mrb[0].mxu0
        %959 = vdwg.mxu0
        %960 = vrot.lane.b32.xlu0 %v739, 120
        %v961 = vpop.permute.xlu0 %960
        %962 = vrot.lane.b32.xlu0 %v744, 120
        %v963 = vpop.permute.xlu0 %962
        %964 = vrot.lane.b32.xlu0 %v739, 88
        %v965 = vpop.permute.xlu0 %964
        %966 = vrot.lane.b32.xlu0 %v744, 88
        %v967 = vpop.permute.xlu0 %966
        %v968 = vsel %vm762, %v961, 0
        %v970 = vsel %vm762, %v963, 0
        %v972 = vsel %vm762, %v965, 0
        %v974 = vsel %vm762, %v967, 0
        %976 = vmatprep.subr.mxu0 0.0
        %977 = vmatpush1.xpose.msra.mxu0 %v972
        %978 = vmatprep.subr.mxu0 0.0
        %979 = vmatpush1.xpose.msra.mxu0 %v974
        %980 = vmatprep.subr.mxu0 0.0
        %981 = vmatpush1.xpose.msra.mxu0 0.0
        %982 = vmatprep.subr.mxu0 0.0
        %983 = vmatpush1.xpose.msra.mxu0 0.0
        %984 = vmatprep.subr.mxu0 0.0
        %985 = vmatpush1.xpose.msra.mxu0 0.0
        %986 = vmatprep.subr.mxu0 0.0
        %987 = vmatpush1.xpose.msra.mxu0 0.0
        %988 = vmatprep.subr.mxu0 0.0
        %989 = vmatpush1.xpose.msra.mxu0 0.0
        %990 = vmatprep.subr.mxu0 0.0
        %991 = vmatpush1.xpose.msra.mxu0 0.0
        %992 = vmatprep.subr.mxu0 0.0
        %993 = vmatpush1.xpose.msra.mxu0 0.0
        %994 = vmatprep.subr.mxu0 0.0
        %995 = vmatpush1.xpose.msra.mxu0 0.0
        %996 = vmatprep.subr.mxu0 0.0
        %997 = vmatpush1.xpose.msra.mxu0 0.0
        %998 = vmatprep.subr.mxu0 0.0
        %999 = vmatpush1.xpose.msra.mxu0 0.0
        %1000 = vmatprep.subr.mxu0 0.0
        %1001 = vmatpush1.xpose.msra.mxu0 0.0
        %1002 = vmatprep.subr.mxu0 0.0
        %1003 = vmatpush1.xpose.msra.mxu0 0.0
        %1004 = vmatprep.subr.mxu0 0.0
        %1005 = vmatpush1.xpose.msra.mxu0 0.0
        %1006 = vmatprep.subr.mxu0 0.0
        %1007 = vmatpush1.xpose.msra.mxu0 0.0
        %1008 = vmatprep.subr.mxu0 0.0
        %1009 = vmatpush1.xpose.msra.mxu0 0.0
        %1010 = vmatprep.subr.mxu0 0.0
        %1011 = vmatpush1.xpose.msra.mxu0 0.0
        %1012 = vmatprep.subr.mxu0 0.0
        %1013 = vmatpush1.xpose.msra.mxu0 0.0
        %1014 = vmatprep.subr.mxu0 0.0
        %1015 = vmatpush1.xpose.msra.mxu0 0.0
        %1016 = vmatprep.subr.mxu0 0.0
        %1017 = vmatpush1.xpose.msra.mxu0 0.0
        %1018 = vmatprep.subr.mxu0 0.0
        %1019 = vmatpush1.xpose.msra.mxu0 0.0
        %1020 = vmatprep.subr.mxu0 0.0
        %1021 = vmatpush1.xpose.msra.mxu0 0.0
        %1022 = vmatprep.subr.mxu0 0.0
        %1023 = vmatpush1.xpose.msra.mxu0 0.0
        %1024 = vmatprep.subr.mxu0 0.0
        %1025 = vmatpush1.xpose.msra.mxu0 0.0
        %1026 = vmatprep.subr.mxu0 0.0
        %1027 = vmatpush1.xpose.msra.mxu0 0.0
        %1028 = vmatprep.subr.mxu0 0.0
        %1029 = vmatpush1.xpose.msra.mxu0 0.0
        %1030 = vmatprep.subr.mxu0 0.0
        %1031 = vmatpush1.xpose.msra.mxu0 0.0
        %1032 = vmatprep.subr.mxu0 0.0
        %1033 = vmatpush1.xpose.msra.mxu0 0.0
        %1034 = vmatprep.subr.mxu0 0.0
        %1035 = vmatpush1.xpose.msra.mxu0 0.0
        %1036 = vmatprep.subr.mxu0 0.0
        %1037 = vmatpush1.xpose.msra.mxu0 0.0
        %1038 = vmatprep.subr.mxu0 0.0
        %1039 = vmatpush1.xpose.msra.mxu0 0.0
        %1040 = vmatprep.mubr.f32.mxu0 0.0
        %1041 = vmatmul.mubr.f32.gmra.mrb[0].mxu0 %v968
        %v1042 = vpop.f32.mrb[0].mxu0
        %v1043 = vadd.f32 0.0, %v1042
        %v1044 = vpop.f32.mrb[0].mxu0
        %1045 = vmatprep.mubr.f32.mxu0 0.0
        %1046 = vmatmul.mubr.f32.gmra.mrb[0].mxu0 %v970
        %v1047 = vpop.f32.mrb[0].mxu0
        %v1048 = vadd.f32 0.0, %v1047
        %v1049 = vpop.f32.mrb[0].mxu0
        %1050 = vdwg.mxu0
        %v1051 = vmul.f32 %v1043, 0.35355338
        %v1052 = vmul.f32 %v1048, 0.35355338
        %v1053 = vadd.f32 %v1051, %v754
        %v1054 = vadd.f32 %v1052, %v755
        %v1055 = vsel %vm850, %v1053, -inf
        %1056 = vmax.xlane.f32.xlu0 %v1055
        %v1057 = vpop.xlane.xlu0 %1056
        %v1058 = vsel %vm850, %v1054, -inf
        %1059 = vmax.xlane.f32.xlu0 %v1058
        %v1060 = vpop.xlane.xlu0 %1059
        %v1061 = vsub.f32 %v1053, %v1057
        %v1062 = vsub.f32 %v1054, %v1060
        %v1063 = vmul.f32 %v1061, 1.442695
        %v1064 = vpow.pop %v1063
        %v1065 = vmul.f32 %v1062, 1.442695
        %v1066 = vpow.pop %v1065
        %v1067 = vsel %vm850, %v1064, 0.0
        %1068 = vadd.xlane.f32.xlu0 %v1067
        %v1069 = vpop.xlane.xlu0 %1068
        %v1070 = vsel %vm850, %v1066, 0.0
        %1071 = vadd.xlane.f32.xlu0 %v1070
        %v1072 = vpop.xlane.xlu0 %1071
        %v1073 = vrcp.pop %v1069
        %v1074 = vrcp.pop %v1072
        %v1075 = vmul.f32 %v1064, %v1073
        %v1076 = vmul.f32 %v1066, %v1074
        %1077 = vrot.lane.b32.xlu0 %v739, 56
        %v1078 = vpop.permute.xlu0 %1077
        %1079 = vrot.lane.b32.xlu0 %v744, 56
        %v1080 = vpop.permute.xlu0 %1079
        %v1084 = vsel %vm850, %v1075, 0
        %v1087 = vsel %vm850, %v1076, 0
        %1089 = vmatprep.subr.mxu0 0.0
        %1090 = vmatpush1.msra.mxu0 %v1078
        %1091 = vmatprep.subr.mxu0 0.0
        %1092 = vmatpush1.msra.mxu0 %v1080
        %1093 = vmatprep.subr.mxu0 0.0
        %1094 = vmatpush1.msra.mxu0 0.0
        %1095 = vmatprep.subr.mxu0 0.0
        %1096 = vmatpush1.msra.mxu0 0.0
        %1097 = vmatprep.subr.mxu0 0.0
        %1098 = vmatpush1.msra.mxu0 0.0
        %1099 = vmatprep.subr.mxu0 0.0
        %1100 = vmatpush1.msra.mxu0 0.0
        %1101 = vmatprep.subr.mxu0 0.0
        %1102 = vmatpush1.msra.mxu0 0.0
        %1103 = vmatprep.subr.mxu0 0.0
        %1104 = vmatpush1.msra.mxu0 0.0
        %1105 = vmatprep.subr.mxu0 0.0
        %1106 = vmatpush1.msra.mxu0 0.0
        %1107 = vmatprep.subr.mxu0 0.0
        %1108 = vmatpush1.msra.mxu0 0.0
        %1109 = vmatprep.subr.mxu0 0.0
        %1110 = vmatpush1.msra.mxu0 0.0
        %1111 = vmatprep.subr.mxu0 0.0
        %1112 = vmatpush1.msra.mxu0 0.0
        %1113 = vmatprep.subr.mxu0 0.0
        %1114 = vmatpush1.msra.mxu0 0.0
        %1115 = vmatprep.subr.mxu0 0.0
        %1116 = vmatpush1.msra.mxu0 0.0
        %1117 = vmatprep.subr.mxu0 0.0
        %1118 = vmatpush1.msra.mxu0 0.0
        %1119 = vmatprep.subr.mxu0 0.0
        %1120 = vmatpush1.msra.mxu0 0.0
        %1121 = vmatprep.subr.mxu0 0.0
        %1122 = vmatpush1.msra.mxu0 0.0
        %1123 = vmatprep.subr.mxu0 0.0
        %1124 = vmatpush1.msra.mxu0 0.0
        %1125 = vmatprep.subr.mxu0 0.0
        %1126 = vmatpush1.msra.mxu0 0.0
        %1127 = vmatprep.subr.mxu0 0.0
        %1128 = vmatpush1.msra.mxu0 0.0
        %1129 = vmatprep.subr.mxu0 0.0
        %1130 = vmatpush1.msra.mxu0 0.0
        %1131 = vmatprep.subr.mxu0 0.0
        %1132 = vmatpush1.msra.mxu0 0.0
        %1133 = vmatprep.subr.mxu0 0.0
        %1134 = vmatpush1.msra.mxu0 0.0
        %1135 = vmatprep.subr.mxu0 0.0
        %1136 = vmatpush1.msra.mxu0 0.0
        %1137 = vmatprep.subr.mxu0 0.0
        %1138 = vmatpush1.msra.mxu0 0.0
        %1139 = vmatprep.subr.mxu0 0.0
        %1140 = vmatpush1.msra.mxu0 0.0
        %1141 = vmatprep.subr.mxu0 0.0
        %1142 = vmatpush1.msra.mxu0 0.0
        %1143 = vmatprep.subr.mxu0 0.0
        %1144 = vmatpush1.msra.mxu0 0.0
        %1145 = vmatprep.subr.mxu0 0.0
        %1146 = vmatpush1.msra.mxu0 0.0
        %1147 = vmatprep.subr.mxu0 0.0
        %1148 = vmatpush1.msra.mxu0 0.0
        %1149 = vmatprep.subr.mxu0 0.0
        %1150 = vmatpush1.msra.mxu0 0.0
        %1151 = vmatprep.subr.mxu0 0.0
        %1152 = vmatpush1.msra.mxu0 0.0
        %1153 = vmatprep.mubr.f32.mxu0 0.0
        %1154 = vmatmul.mubr.f32.gmra.mrb[0].mxu0 %v1084
        %v1155 = vpop.f32.mrb[0].mxu0
        %v1156 = vadd.f32 0.0, %v1155
        %v1157 = vpop.f32.mrb[0].mxu0
        %1158 = vmatprep.mubr.f32.mxu0 0.0
        %1159 = vmatmul.mubr.f32.gmra.mrb[0].mxu0 %v1087
        %v1160 = vpop.f32.mrb[0].mxu0
        %v1161 = vadd.f32 0.0, %v1160
        %v1162 = vpop.f32.mrb[0].mxu0
        %1163 = vdwg.mxu0
        %1164 = vrot.lane.b32.xlu0 %v739, 112
        %v1165 = vpop.permute.xlu0 %1164
        %1166 = vrot.lane.b32.xlu0 %v744, 112
        %v1167 = vpop.permute.xlu0 %1166
        %1168 = vrot.lane.b32.xlu0 %v739, 80
        %v1169 = vpop.permute.xlu0 %1168
        %1170 = vrot.lane.b32.xlu0 %v744, 80
        %v1171 = vpop.permute.xlu0 %1170
        %v1172 = vsel %vm762, %v1165, 0
        %v1174 = vsel %vm762, %v1167, 0
        %v1176 = vsel %vm762, %v1169, 0
        %v1178 = vsel %vm762, %v1171, 0
        %1180 = vmatprep.subr.mxu0 0.0
        %1181 = vmatpush1.xpose.msra.mxu0 %v1176
        %1182 = vmatprep.subr.mxu0 0.0
        %1183 = vmatpush1.xpose.msra.mxu0 %v1178
        %1184 = vmatprep.subr.mxu0 0.0
        %1185 = vmatpush1.xpose.msra.mxu0 0.0
        %1186 = vmatprep.subr.mxu0 0.0
        %1187 = vmatpush1.xpose.msra.mxu0 0.0
        %1188 = vmatprep.subr.mxu0 0.0
        %1189 = vmatpush1.xpose.msra.mxu0 0.0
        %1190 = vmatprep.subr.mxu0 0.0
        %1191 = vmatpush1.xpose.msra.mxu0 0.0
        %1192 = vmatprep.subr.mxu0 0.0
        %1193 = vmatpush1.xpose.msra.mxu0 0.0
        %1194 = vmatprep.subr.mxu0 0.0
        %1195 = vmatpush1.xpose.msra.mxu0 0.0
        %1196 = vmatprep.subr.mxu0 0.0
        %1197 = vmatpush1.xpose.msra.mxu0 0.0
        %1198 = vmatprep.subr.mxu0 0.0
        %1199 = vmatpush1.xpose.msra.mxu0 0.0
        %1200 = vmatprep.subr.mxu0 0.0
        %1201 = vmatpush1.xpose.msra.mxu0 0.0
        %1202 = vmatprep.subr.mxu0 0.0
        %1203 = vmatpush1.xpose.msra.mxu0 0.0
        %1204 = vmatprep.subr.mxu0 0.0
        %1205 = vmatpush1.xpose.msra.mxu0 0.0
        %1206 = vmatprep.subr.mxu0 0.0
        %1207 = vmatpush1.xpose.msra.mxu0 0.0
        %1208 = vmatprep.subr.mxu0 0.0
        %1209 = vmatpush1.xpose.msra.mxu0 0.0
        %1210 = vmatprep.subr.mxu0 0.0
        %1211 = vmatpush1.xpose.msra.mxu0 0.0
        %1212 = vmatprep.subr.mxu0 0.0
        %1213 = vmatpush1.xpose.msra.mxu0 0.0
        %1214 = vmatprep.subr.mxu0 0.0
        %1215 = vmatpush1.xpose.msra.mxu0 0.0
        %1216 = vmatprep.subr.mxu0 0.0
        %1217 = vmatpush1.xpose.msra.mxu0 0.0
        %1218 = vmatprep.subr.mxu0 0.0
        %1219 = vmatpush1.xpose.msra.mxu0 0.0
        %1220 = vmatprep.subr.mxu0 0.0
        %1221 = vmatpush1.xpose.msra.mxu0 0.0
        %1222 = vmatprep.subr.mxu0 0.0
        %1223 = vmatpush1.xpose.msra.mxu0 0.0
        %1224 = vmatprep.subr.mxu0 0.0
        %1225 = vmatpush1.xpose.msra.mxu0 0.0
        %1226 = vmatprep.subr.mxu0 0.0
        %1227 = vmatpush1.xpose.msra.mxu0 0.0
        %1228 = vmatprep.subr.mxu0 0.0
        %1229 = vmatpush1.xpose.msra.mxu0 0.0
        %1230 = vmatprep.subr.mxu0 0.0
        %1231 = vmatpush1.xpose.msra.mxu0 0.0
        %1232 = vmatprep.subr.mxu0 0.0
        %1233 = vmatpush1.xpose.msra.mxu0 0.0
        %1234 = vmatprep.subr.mxu0 0.0
        %1235 = vmatpush1.xpose.msra.mxu0 0.0
        %1236 = vmatprep.subr.mxu0 0.0
        %1237 = vmatpush1.xpose.msra.mxu0 0.0
        %1238 = vmatprep.subr.mxu0 0.0
        %1239 = vmatpush1.xpose.msra.mxu0 0.0
        %1240 = vmatprep.subr.mxu0 0.0
        %1241 = vmatpush1.xpose.msra.mxu0 0.0
        %1242 = vmatprep.subr.mxu0 0.0
        %1243 = vmatpush1.xpose.msra.mxu0 0.0
        %1244 = vmatprep.mubr.f32.mxu0 0.0
        %1245 = vmatmul.mubr.f32.gmra.mrb[0].mxu0 %v1172
        %v1246 = vpop.f32.mrb[0].mxu0
        %v1247 = vadd.f32 0.0, %v1246
        %v1248 = vpop.f32.mrb[0].mxu0
        %1249 = vmatprep.mubr.f32.mxu0 0.0
        %1250 = vmatmul.mubr.f32.gmra.mrb[0].mxu0 %v1174
        %v1251 = vpop.f32.mrb[0].mxu0
        %v1252 = vadd.f32 0.0, %v1251
        %v1253 = vpop.f32.mrb[0].mxu0
        %1254 = vdwg.mxu0
        %v1255 = vmul.f32 %v1247, 0.35355338
        %v1256 = vmul.f32 %v1252, 0.35355338
        %v1257 = vadd.f32 %v1255, %v754
        %v1258 = vadd.f32 %v1256, %v755
        %v1259 = vsel %vm850, %v1257, -inf
        %1260 = vmax.xlane.f32.xlu0 %v1259
        %v1261 = vpop.xlane.xlu0 %1260
        %v1262 = vsel %vm850, %v1258, -inf
        %1263 = vmax.xlane.f32.xlu0 %v1262
        %v1264 = vpop.xlane.xlu0 %1263
        %v1265 = vsub.f32 %v1257, %v1261
        %v1266 = vsub.f32 %v1258, %v1264
        %v1267 = vmul.f32 %v1265, 1.442695
        %v1268 = vpow.pop %v1267
        %v1269 = vmul.f32 %v1266, 1.442695
        %v1270 = vpow.pop %v1269
        %v1271 = vsel %vm850, %v1268, 0.0
        %1272 = vadd.xlane.f32.xlu0 %v1271
        %v1273 = vpop.xlane.xlu0 %1272
        %v1274 = vsel %vm850, %v1270, 0.0
        %1275 = vadd.xlane.f32.xlu0 %v1274
        %v1276 = vpop.xlane.xlu0 %1275
        %v1277 = vrcp.pop %v1273
        %v1278 = vrcp.pop %v1276
        %v1279 = vmul.f32 %v1268, %v1277
        %v1280 = vmul.f32 %v1270, %v1278
        %1281 = vrot.lane.b32.xlu0 %v739, 48
        %v1282 = vpop.permute.xlu0 %1281
        %1283 = vrot.lane.b32.xlu0 %v744, 48
        %v1284 = vpop.permute.xlu0 %1283
        %v1288 = vsel %vm850, %v1279, 0
        %v1291 = vsel %vm850, %v1280, 0
        %1293 = vmatprep.subr.mxu0 0.0
        %1294 = vmatpush1.msra.mxu0 %v1282
        %1295 = vmatprep.subr.mxu0 0.0
        %1296 = vmatpush1.msra.mxu0 %v1284
        %1297 = vmatprep.subr.mxu0 0.0
        %1298 = vmatpush1.msra.mxu0 0.0
        %1299 = vmatprep.subr.mxu0 0.0
        %1300 = vmatpush1.msra.mxu0 0.0
        %1301 = vmatprep.subr.mxu0 0.0
        %1302 = vmatpush1.msra.mxu0 0.0
        %1303 = vmatprep.subr.mxu0 0.0
        %1304 = vmatpush1.msra.mxu0 0.0
        %1305 = vmatprep.subr.mxu0 0.0
        %1306 = vmatpush1.msra.mxu0 0.0
        %1307 = vmatprep.subr.mxu0 0.0
        %1308 = vmatpush1.msra.mxu0 0.0
        %1309 = vmatprep.subr.mxu0 0.0
        %1310 = vmatpush1.msra.mxu0 0.0
        %1311 = vmatprep.subr.mxu0 0.0
        %1312 = vmatpush1.msra.mxu0 0.0
        %1313 = vmatprep.subr.mxu0 0.0
        %1314 = vmatpush1.msra.mxu0 0.0
        %1315 = vmatprep.subr.mxu0 0.0
        %1316 = vmatpush1.msra.mxu0 0.0
        %1317 = vmatprep.subr.mxu0 0.0
        %1318 = vmatpush1.msra.mxu0 0.0
        %1319 = vmatprep.subr.mxu0 0.0
        %1320 = vmatpush1.msra.mxu0 0.0
        %1321 = vmatprep.subr.mxu0 0.0
        %1322 = vmatpush1.msra.mxu0 0.0
        %1323 = vmatprep.subr.mxu0 0.0
        %1324 = vmatpush1.msra.mxu0 0.0
        %1325 = vmatprep.subr.mxu0 0.0
        %1326 = vmatpush1.msra.mxu0 0.0
        %1327 = vmatprep.subr.mxu0 0.0
        %1328 = vmatpush1.msra.mxu0 0.0
        %1329 = vmatprep.subr.mxu0 0.0
        %1330 = vmatpush1.msra.mxu0 0.0
        %1331 = vmatprep.subr.mxu0 0.0
        %1332 = vmatpush1.msra.mxu0 0.0
        %1333 = vmatprep.subr.mxu0 0.0
        %1334 = vmatpush1.msra.mxu0 0.0
        %1335 = vmatprep.subr.mxu0 0.0
        %1336 = vmatpush1.msra.mxu0 0.0
        %1337 = vmatprep.subr.mxu0 0.0
        %1338 = vmatpush1.msra.mxu0 0.0
        %1339 = vmatprep.subr.mxu0 0.0
        %1340 = vmatpush1.msra.mxu0 0.0
        %1341 = vmatprep.subr.mxu0 0.0
        %1342 = vmatpush1.msra.mxu0 0.0
        %1343 = vmatprep.subr.mxu0 0.0
        %1344 = vmatpush1.msra.mxu0 0.0
        %1345 = vmatprep.subr.mxu0 0.0
        %1346 = vmatpush1.msra.mxu0 0.0
        %1347 = vmatprep.subr.mxu0 0.0
        %1348 = vmatpush1.msra.mxu0 0.0
        %1349 = vmatprep.subr.mxu0 0.0
        %1350 = vmatpush1.msra.mxu0 0.0
        %1351 = vmatprep.subr.mxu0 0.0
        %1352 = vmatpush1.msra.mxu0 0.0
        %1353 = vmatprep.subr.mxu0 0.0
        %1354 = vmatpush1.msra.mxu0 0.0
        %1355 = vmatprep.subr.mxu0 0.0
        %1356 = vmatpush1.msra.mxu0 0.0
        %1357 = vmatprep.mubr.f32.mxu0 0.0
        %1358 = vmatmul.mubr.f32.gmra.mrb[0].mxu0 %v1288
        %v1359 = vpop.f32.mrb[0].mxu0
        %v1360 = vadd.f32 0.0, %v1359
        %v1361 = vpop.f32.mrb[0].mxu0
        %1362 = vmatprep.mubr.f32.mxu0 0.0
        %1363 = vmatmul.mubr.f32.gmra.mrb[0].mxu0 %v1291
        %v1364 = vpop.f32.mrb[0].mxu0
        %v1365 = vadd.f32 0.0, %v1364
        %v1366 = vpop.f32.mrb[0].mxu0
        %1367 = vdwg.mxu0
        %1368 = vrot.lane.b32.xlu0 %v739, 104
        %v1369 = vpop.permute.xlu0 %1368
        %1370 = vrot.lane.b32.xlu0 %v744, 104
        %v1371 = vpop.permute.xlu0 %1370
        %1372 = vrot.lane.b32.xlu0 %v739, 72
        %v1373 = vpop.permute.xlu0 %1372
        %1374 = vrot.lane.b32.xlu0 %v744, 72
        %v1375 = vpop.permute.xlu0 %1374
        %v1376 = vsel %vm762, %v1369, 0
        %v1378 = vsel %vm762, %v1371, 0
        %v1380 = vsel %vm762, %v1373, 0
        %v1382 = vsel %vm762, %v1375, 0
        %1384 = vmatprep.subr.mxu0 0.0
        %1385 = vmatpush1.xpose.msra.mxu0 %v1380
        %1386 = vmatprep.subr.mxu0 0.0
        %1387 = vmatpush1.xpose.msra.mxu0 %v1382
        %1388 = vmatprep.subr.mxu0 0.0
        %1389 = vmatpush1.xpose.msra.mxu0 0.0
        %1390 = vmatprep.subr.mxu0 0.0
        %1391 = vmatpush1.xpose.msra.mxu0 0.0
        %1392 = vmatprep.subr.mxu0 0.0
        %1393 = vmatpush1.xpose.msra.mxu0 0.0
        %1394 = vmatprep.subr.mxu0 0.0
        %1395 = vmatpush1.xpose.msra.mxu0 0.0
        %1396 = vmatprep.subr.mxu0 0.0
        %1397 = vmatpush1.xpose.msra.mxu0 0.0
        %1398 = vmatprep.subr.mxu0 0.0
        %1399 = vmatpush1.xpose.msra.mxu0 0.0
        %1400 = vmatprep.subr.mxu0 0.0
        %1401 = vmatpush1.xpose.msra.mxu0 0.0
        %1402 = vmatprep.subr.mxu0 0.0
        %1403 = vmatpush1.xpose.msra.mxu0 0.0
        %1404 = vmatprep.subr.mxu0 0.0
        %1405 = vmatpush1.xpose.msra.mxu0 0.0
        %1406 = vmatprep.subr.mxu0 0.0
        %1407 = vmatpush1.xpose.msra.mxu0 0.0
        %1408 = vmatprep.subr.mxu0 0.0
        %1409 = vmatpush1.xpose.msra.mxu0 0.0
        %1410 = vmatprep.subr.mxu0 0.0
        %1411 = vmatpush1.xpose.msra.mxu0 0.0
        %1412 = vmatprep.subr.mxu0 0.0
        %1413 = vmatpush1.xpose.msra.mxu0 0.0
        %1414 = vmatprep.subr.mxu0 0.0
        %1415 = vmatpush1.xpose.msra.mxu0 0.0
        %1416 = vmatprep.subr.mxu0 0.0
        %1417 = vmatpush1.xpose.msra.mxu0 0.0
        %1418 = vmatprep.subr.mxu0 0.0
        %1419 = vmatpush1.xpose.msra.mxu0 0.0
        %1420 = vmatprep.subr.mxu0 0.0
        %1421 = vmatpush1.xpose.msra.mxu0 0.0
        %1422 = vmatprep.subr.mxu0 0.0
        %1423 = vmatpush1.xpose.msra.mxu0 0.0
        %1424 = vmatprep.subr.mxu0 0.0
        %1425 = vmatpush1.xpose.msra.mxu0 0.0
        %1426 = vmatprep.subr.mxu0 0.0
        %1427 = vmatpush1.xpose.msra.mxu0 0.0
        %1428 = vmatprep.subr.mxu0 0.0
        %1429 = vmatpush1.xpose.msra.mxu0 0.0
        %1430 = vmatprep.subr.mxu0 0.0
        %1431 = vmatpush1.xpose.msra.mxu0 0.0
        %1432 = vmatprep.subr.mxu0 0.0
        %1433 = vmatpush1.xpose.msra.mxu0 0.0
        %1434 = vmatprep.subr.mxu0 0.0
        %1435 = vmatpush1.xpose.msra.mxu0 0.0
        %1436 = vmatprep.subr.mxu0 0.0
        %1437 = vmatpush1.xpose.msra.mxu0 0.0
        %1438 = vmatprep.subr.mxu0 0.0
        %1439 = vmatpush1.xpose.msra.mxu0 0.0
        %1440 = vmatprep.subr.mxu0 0.0
        %1441 = vmatpush1.xpose.msra.mxu0 0.0
        %1442 = vmatprep.subr.mxu0 0.0
        %1443 = vmatpush1.xpose.msra.mxu0 0.0
        %1444 = vmatprep.subr.mxu0 0.0
        %1445 = vmatpush1.xpose.msra.mxu0 0.0
        %1446 = vmatprep.subr.mxu0 0.0
        %1447 = vmatpush1.xpose.msra.mxu0 0.0
        %1448 = vmatprep.mubr.f32.mxu0 0.0
        %1449 = vmatmul.mubr.f32.gmra.mrb[0].mxu0 %v1376
        %v1450 = vpop.f32.mrb[0].mxu0
        %v1451 = vadd.f32 0.0, %v1450
        %v1452 = vpop.f32.mrb[0].mxu0
        %1453 = vmatprep.mubr.f32.mxu0 0.0
        %1454 = vmatmul.mubr.f32.gmra.mrb[0].mxu0 %v1378
        %v1455 = vpop.f32.mrb[0].mxu0
        %v1456 = vadd.f32 0.0, %v1455
        %v1457 = vpop.f32.mrb[0].mxu0
        %1458 = vdwg.mxu0
        %v1459 = vmul.f32 %v1451, 0.35355338
        %v1460 = vmul.f32 %v1456, 0.35355338
        %v1461 = vadd.f32 %v1459, %v754
        %v1462 = vadd.f32 %v1460, %v755
        %v1463 = vsel %vm850, %v1461, -inf
        %1464 = vmax.xlane.f32.xlu0 %v1463
        %v1465 = vpop.xlane.xlu0 %1464
        %v1466 = vsel %vm850, %v1462, -inf
        %1467 = vmax.xlane.f32.xlu0 %v1466
        %v1468 = vpop.xlane.xlu0 %1467
        %v1469 = vsub.f32 %v1461, %v1465
        %v1470 = vsub.f32 %v1462, %v1468
        %v1471 = vmul.f32 %v1469, 1.442695
        %v1472 = vpow.pop %v1471
        %v1473 = vmul.f32 %v1470, 1.442695
        %v1474 = vpow.pop %v1473
        %v1475 = vsel %vm850, %v1472, 0.0
        %1476 = vadd.xlane.f32.xlu0 %v1475
        %v1477 = vpop.xlane.xlu0 %1476
        %v1478 = vsel %vm850, %v1474, 0.0
        %1479 = vadd.xlane.f32.xlu0 %v1478
        %v1480 = vpop.xlane.xlu0 %1479
        %v1481 = vrcp.pop %v1477
        %v1482 = vrcp.pop %v1480
        %v1483 = vmul.f32 %v1472, %v1481
        %v1484 = vmul.f32 %v1474, %v1482
        %1485 = vrot.lane.b32.xlu0 %v739, 40
        %v1486 = vpop.permute.xlu0 %1485
        %1487 = vrot.lane.b32.xlu0 %v744, 40
        %v1488 = vpop.permute.xlu0 %1487
        %v1492 = vsel %vm850, %v1483, 0
        %v1495 = vsel %vm850, %v1484, 0
        %1497 = vmatprep.subr.mxu0 0.0
        %1498 = vmatpush1.msra.mxu0 %v1486
        %1499 = vmatprep.subr.mxu0 0.0
        %1500 = vmatpush1.msra.mxu0 %v1488
        %1501 = vmatprep.subr.mxu0 0.0
        %1502 = vmatpush1.msra.mxu0 0.0
        %1503 = vmatprep.subr.mxu0 0.0
        %1504 = vmatpush1.msra.mxu0 0.0
        %1505 = vmatprep.subr.mxu0 0.0
        %1506 = vmatpush1.msra.mxu0 0.0
        %1507 = vmatprep.subr.mxu0 0.0
        %1508 = vmatpush1.msra.mxu0 0.0
        %1509 = vmatprep.subr.mxu0 0.0
        %1510 = vmatpush1.msra.mxu0 0.0
        %1511 = vmatprep.subr.mxu0 0.0
        %1512 = vmatpush1.msra.mxu0 0.0
        %1513 = vmatprep.subr.mxu0 0.0
        %1514 = vmatpush1.msra.mxu0 0.0
        %1515 = vmatprep.subr.mxu0 0.0
        %1516 = vmatpush1.msra.mxu0 0.0
        %1517 = vmatprep.subr.mxu0 0.0
        %1518 = vmatpush1.msra.mxu0 0.0
        %1519 = vmatprep.subr.mxu0 0.0
        %1520 = vmatpush1.msra.mxu0 0.0
        %1521 = vmatprep.subr.mxu0 0.0
        %1522 = vmatpush1.msra.mxu0 0.0
        %1523 = vmatprep.subr.mxu0 0.0
        %1524 = vmatpush1.msra.mxu0 0.0
        %1525 = vmatprep.subr.mxu0 0.0
        %1526 = vmatpush1.msra.mxu0 0.0
        %1527 = vmatprep.subr.mxu0 0.0
        %1528 = vmatpush1.msra.mxu0 0.0
        %1529 = vmatprep.subr.mxu0 0.0
        %1530 = vmatpush1.msra.mxu0 0.0
        %1531 = vmatprep.subr.mxu0 0.0
        %1532 = vmatpush1.msra.mxu0 0.0
        %1533 = vmatprep.subr.mxu0 0.0
        %1534 = vmatpush1.msra.mxu0 0.0
        %1535 = vmatprep.subr.mxu0 0.0
        %1536 = vmatpush1.msra.mxu0 0.0
        %1537 = vmatprep.subr.mxu0 0.0
        %1538 = vmatpush1.msra.mxu0 0.0
        %1539 = vmatprep.subr.mxu0 0.0
        %1540 = vmatpush1.msra.mxu0 0.0
        %1541 = vmatprep.subr.mxu0 0.0
        %1542 = vmatpush1.msra.mxu0 0.0
        %1543 = vmatprep.subr.mxu0 0.0
        %1544 = vmatpush1.msra.mxu0 0.0
        %1545 = vmatprep.subr.mxu0 0.0
        %1546 = vmatpush1.msra.mxu0 0.0
        %1547 = vmatprep.subr.mxu0 0.0
        %1548 = vmatpush1.msra.mxu0 0.0
        %1549 = vmatprep.subr.mxu0 0.0
        %1550 = vmatpush1.msra.mxu0 0.0
        %1551 = vmatprep.subr.mxu0 0.0
        %1552 = vmatpush1.msra.mxu0 0.0
        %1553 = vmatprep.subr.mxu0 0.0
        %1554 = vmatpush1.msra.mxu0 0.0
        %1555 = vmatprep.subr.mxu0 0.0
        %1556 = vmatpush1.msra.mxu0 0.0
        %1557 = vmatprep.subr.mxu0 0.0
        %1558 = vmatpush1.msra.mxu0 0.0
        %1559 = vmatprep.subr.mxu0 0.0
        %1560 = vmatpush1.msra.mxu0 0.0
        %1561 = vmatprep.mubr.f32.mxu0 0.0
        %1562 = vmatmul.mubr.f32.gmra.mrb[0].mxu0 %v1492
        %v1563 = vpop.f32.mrb[0].mxu0
        %v1564 = vadd.f32 0.0, %v1563
        %v1565 = vpop.f32.mrb[0].mxu0
        %1566 = vmatprep.mubr.f32.mxu0 0.0
        %1567 = vmatmul.mubr.f32.gmra.mrb[0].mxu0 %v1495
        %v1568 = vpop.f32.mrb[0].mxu0
        %v1569 = vadd.f32 0.0, %v1568
        %v1570 = vpop.f32.mrb[0].mxu0
        %1571 = vdwg.mxu0
        %1574 = vrot.lane.b32.xlu0 %v1156, 8
        %v1575 = vpop.permute.xlu0 %1574
        %1576 = vrot.lane.b32.xlu0 %v1161, 8
        %v1577 = vpop.permute.xlu0 %1576
        %1582 = vrot.lane.b32.xlu0 %v1360, 16
        %v1583 = vpop.permute.xlu0 %1582
        %1584 = vrot.lane.b32.xlu0 %v1365, 16
        %v1585 = vpop.permute.xlu0 %1584
        %1590 = vrot.lane.b32.xlu0 %v1564, 24
        %v1591 = vpop.permute.xlu0 %1590
        %1592 = vrot.lane.b32.xlu0 %v1569, 24
        %v1593 = vpop.permute.xlu0 %1592
        %v1596 = vsel %vm762, %v952, %v1575
        %v1597 = vsel %vm762, %v957, %v1577
        %v1598 = vsel %vm850, %v1596, %v1583
        %v1599 = vsel %vm850, %v1597, %v1585
        %vm1600 = vcmask 195584
        %v1601 = vsel %vm1600, %v1598, %v1591
        %v1602 = vsel %vm1600, %v1599, %v1593
        %v1603 = vld [vmem:[%s5] sm:$0xff]
        %v1604 = vld [vmem:[%s5 + $0x8] sm:$0xff]
        %v1605 = vld [vmem:[%s5 + $0x10] sm:$0xff]
        %v1606 = vld [vmem:[%s5 + $0x18] sm:$0xff]
        %v1607 = vld [vmem:[%s6] sm:$0x1]
        %v1609 = vlaneseq
        %v1610 = vshrl.u32 %v1609, 7
        %v1611 = vsub.s32 0, %v1610
        %v1612 = vrot.slane %v1607, %v1611
        %v1615 = vsel %vm665, %v1601, 0
        %v1618 = vsel %vm665, %v1602, 0
        %1620 = vmatprep.subr.mxu0 0.0
        %1621 = vmatpush1.msra.mxu0 %v1603
        %1622 = vmatprep.subr.mxu0 0.0
        %1623 = vmatpush1.msra.mxu0 %v1604
        %1624 = vmatprep.subr.mxu0 0.0
        %1625 = vmatpush1.msra.mxu0 %v1605
        %1626 = vmatprep.subr.mxu0 0.0
        %1627 = vmatpush1.msra.mxu0 %v1606
        %1628 = vmatprep.subr.mxu0 0.0
        %1629 = vmatpush1.msra.mxu0 0.0
        %1630 = vmatprep.subr.mxu0 0.0
        %1631 = vmatpush1.msra.mxu0 0.0
        %1632 = vmatprep.subr.mxu0 0.0
        %1633 = vmatpush1.msra.mxu0 0.0
        %1634 = vmatprep.subr.mxu0 0.0
        %1635 = vmatpush1.msra.mxu0 0.0
        %1636 = vmatprep.subr.mxu0 0.0
        %1637 = vmatpush1.msra.mxu0 0.0
        %1638 = vmatprep.subr.mxu0 0.0
        %1639 = vmatpush1.msra.mxu0 0.0
        %1640 = vmatprep.subr.mxu0 0.0
        %1641 = vmatpush1.msra.mxu0 0.0
        %1642 = vmatprep.subr.mxu0 0.0
        %1643 = vmatpush1.msra.mxu0 0.0
        %1644 = vmatprep.subr.mxu0 0.0
        %1645 = vmatpush1.msra.mxu0 0.0
        %1646 = vmatprep.subr.mxu0 0.0
        %1647 = vmatpush1.msra.mxu0 0.0
        %1648 = vmatprep.subr.mxu0 0.0
        %1649 = vmatpush1.msra.mxu0 0.0
        %1650 = vmatprep.subr.mxu0 0.0
        %1651 = vmatpush1.msra.mxu0 0.0
        %1652 = vmatprep.subr.mxu0 0.0
        %1653 = vmatpush1.msra.mxu0 0.0
        %1654 = vmatprep.subr.mxu0 0.0
        %1655 = vmatpush1.msra.mxu0 0.0
        %1656 = vmatprep.subr.mxu0 0.0
        %1657 = vmatpush1.msra.mxu0 0.0
        %1658 = vmatprep.subr.mxu0 0.0
        %1659 = vmatpush1.msra.mxu0 0.0
        %1660 = vmatprep.subr.mxu0 0.0
        %1661 = vmatpush1.msra.mxu0 0.0
        %1662 = vmatprep.subr.mxu0 0.0
        %1663 = vmatpush1.msra.mxu0 0.0
        %1664 = vmatprep.subr.mxu0 0.0
        %1665 = vmatpush1.msra.mxu0 0.0
        %1666 = vmatprep.subr.mxu0 0.0
        %1667 = vmatpush1.msra.mxu0 0.0
        %1668 = vmatprep.subr.mxu0 0.0
        %1669 = vmatpush1.msra.mxu0 0.0
        %1670 = vmatprep.subr.mxu0 0.0
        %1671 = vmatpush1.msra.mxu0 0.0
        %1672 = vmatprep.subr.mxu0 0.0
        %1673 = vmatpush1.msra.mxu0 0.0
        %1674 = vmatprep.subr.mxu0 0.0
        %1675 = vmatpush1.msra.mxu0 0.0
        %1676 = vmatprep.subr.mxu0 0.0
        %1677 = vmatpush1.msra.mxu0 0.0
        %1678 = vmatprep.subr.mxu0 0.0
        %1679 = vmatpush1.msra.mxu0 0.0
        %1680 = vmatprep.subr.mxu0 0.0
        %1681 = vmatpush1.msra.mxu0 0.0
        %1682 = vmatprep.subr.mxu0 0.0
        %1683 = vmatpush1.msra.mxu0 0.0
        %1684 = vmatprep.mubr.f32.mxu0 0.0
        %1685 = vmatmul.mubr.f32.gmra.mrb[0].mxu0 %v1615
        %v1686 = vpop.f32.mrb[0].mxu0
        %v1687 = vadd.f32 %v1612, %v1686
        %v1688 = vpop.f32.mrb[0].mxu0
        %1689 = vmatprep.mubr.f32.mxu0 0.0
        %1690 = vmatmul.mubr.f32.gmra.mrb[0].mxu0 %v1618
        %v1691 = vpop.f32.mrb[0].mxu0
        %v1692 = vadd.f32 %v1612, %v1691
        %v1693 = vpop.f32.mrb[0].mxu0
        %1694 = vdwg.mxu0
        %v1695 = vadd.f32 %v652, %v1687
        %v1696 = vadd.f32 %v653, %v1692
        %v1697 = vld [vmem:[%s7] sm:$0x1]
        %v1698 = vld [vmem:[%s8] sm:$0x1]
        %v1699 = vsel %vm665, %v1695, 0.0
        %1700 = vadd.xlane.f32.xlu0 %v1699
        %v1701 = vpop.xlane.xlu0 %1700
        %v1702 = vsel %vm665, %v1696, 0.0
        %1703 = vadd.xlane.f32.xlu0 %v1702
        %v1704 = vpop.xlane.xlu0 %1703
        %v1705 = vrcp.pop 32.0
        %v1706 = vmul.f32 %v1701, %v1705
        %v1707 = vmul.f32 %v1704, %v1705
        %v1708 = vsub.f32 %v1695, %v1706
        %v1709 = vsub.f32 %v1696, %v1707
        %v1710 = vmul.f32 %v1708, %v1708
        %v1711 = vmul.f32 %v1709, %v1709
        %v1712 = vsel %vm665, %v1710, 0.0
        %1713 = vadd.xlane.f32.xlu0 %v1712
        %v1714 = vpop.xlane.xlu0 %1713
        %v1715 = vsel %vm665, %v1711, 0.0
        %1716 = vadd.xlane.f32.xlu0 %v1715
        %v1717 = vpop.xlane.xlu0 %1716
        %v1718 = vmul.f32 %v1714, %v1705
        %v1719 = vmul.f32 %v1717, %v1705
        %v1720 = vadd.f32 %v1718, 1e-05
        %v1721 = vadd.f32 %v1719, 1e-05
        %v1722 = vrsqrt.pop %v1720
        %v1723 = vrsqrt.pop %v1721
        %v1724 = vmul.f32 %v1708, %v1722
        %v1725 = vmul.f32 %v1709, %v1723
        %v1727 = vlaneseq
        %v1728 = vshrl.u32 %v1727, 7
        %v1729 = vsub.s32 0, %v1728
        %v1730 = vrot.slane %v1697, %v1729
        %v1732 = vmul.f32 %v1724, %v1730
        %v1733 = vmul.f32 %v1725, %v1730
        %v1735 = vlaneseq
        %v1736 = vshrl.u32 %v1735, 7
        %v1737 = vsub.s32 0, %v1736
        %v1738 = vrot.slane %v1698, %v1737
        %v1740 = vadd.f32 %v1732, %v1738
        %v1741 = vadd.f32 %v1733, %v1738
        %v1742 = vld [vmem:[%s9] sm:$0x1]
        %v1744 = vlaneseq
        %v1745 = vshrl.u32 %v1744, 7
        %v1746 = vsub.s32 0, %v1745
        %v1747 = vrot.slane %v1742, %v1746
        %v1749 = vadd.f32 %v1740, %v1747
        %v1750 = vadd.f32 %v1741, %v1747
        %v1751 = vld [vmem:[%s10] sm:$0x1]
        %v1752 = vld [vmem:[%s11] sm:$0x1]
        %v1753 = vsel %vm665, %v1749, 0.0
        %1754 = vadd.xlane.f32.xlu0 %v1753
        %v1755 = vpop.xlane.xlu0 %1754
        %v1756 = vsel %vm665, %v1750, 0.0
        %1757 = vadd.xlane.f32.xlu0 %v1756
        %v1758 = vpop.xlane.xlu0 %1757
        %v1759 = vmul.f32 %v1755, %v1705
        %v1760 = vmul.f32 %v1758, %v1705
        %v1761 = vsub.f32 %v1749, %v1759
        %v1762 = vsub.f32 %v1750, %v1760
        %v1763 = vmul.f32 %v1761, %v1761
        %v1764 = vmul.f32 %v1762, %v1762
        %v1765 = vsel %vm665, %v1763, 0.0
        %1766 = vadd.xlane.f32.xlu0 %v1765
        %v1767 = vpop.xlane.xlu0 %1766
        %v1768 = vsel %vm665, %v1764, 0.0
        %1769 = vadd.xlane.f32.xlu0 %v1768
        %v1770 = vpop.xlane.xlu0 %1769
        %v1771 = vmul.f32 %v1767, %v1705
        %v1772 = vmul.f32 %v1770, %v1705
        %v1773 = vadd.f32 %v1771, 1e-05
        %v1774 = vadd.f32 %v1772, 1e-05
        %v1775 = vrsqrt.pop %v1773
        %v1776 = vrsqrt.pop %v1774
        %v1777 = vmul.f32 %v1761, %v1775
        %v1778 = vmul.f32 %v1762, %v1776
        %v1780 = vlaneseq
        %v1781 = vshrl.u32 %v1780, 7
        %v1782 = vsub.s32 0, %v1781
        %v1783 = vrot.slane %v1751, %v1782
        %v1785 = vmul.f32 %v1777, %v1783
        %v1786 = vmul.f32 %v1778, %v1783
        %v1788 = vlaneseq
        %v1789 = vshrl.u32 %v1788, 7
        %v1790 = vsub.s32 0, %v1789
        %v1791 = vrot.slane %v1752, %v1790
        %v1793 = vadd.f32 %v1785, %v1791
        %v1794 = vadd.f32 %v1786, %v1791
        %v1795 = vld [vmem:[%s12] sm:$0xff]
        %v1796 = vld [vmem:[%s12 + $0x8] sm:$0xff]
        %v1797 = vld [vmem:[%s12 + $0x10] sm:$0xff]
        %v1798 = vld [vmem:[%s12 + $0x18] sm:$0xff]
        %v1799 = vld [vmem:[%s12 + $0x20] sm:$0xff]
        %v1800 = vld [vmem:[%s12 + $0x28] sm:$0xff]
        %v1801 = vld [vmem:[%s12 + $0x30] sm:$0xff]
        %v1802 = vld [vmem:[%s12 + $0x38] sm:$0xff]
        %v1803 = vld [vmem:[%s12 + $0x40] sm:$0xff]
        %v1804 = vld [vmem:[%s12 + $0x48] sm:$0xff]
        %v1805 = vld [vmem:[%s12 + $0x50] sm:$0xff]
        %v1806 = vld [vmem:[%s12 + $0x58] sm:$0xff]
        %v1807 = vld [vmem:[%s12 + $0x60] sm:$0xff]
        %v1808 = vld [vmem:[%s12 + $0x68] sm:$0xff]
        %v1809 = vld [vmem:[%s12 + $0x70] sm:$0xff]
        %v1810 = vld [vmem:[%s12 + $0x78] sm:$0xff]
        %v1811 = vld [vmem:[%s12 + $0x80] sm:$0xff]
        %v1812 = vld [vmem:[%s12 + $0x88] sm:$0xff]
        %v1813 = vld [vmem:[%s12 + $0x90] sm:$0xff]
        %v1814 = vld [vmem:[%s12 + $0x98] sm:$0xff]
        %v1815 = vld [vmem:[%s12 + $0xa0] sm:$0xff]
        %v1816 = vld [vmem:[%s12 + $0xa8] sm:$0xff]
        %v1817 = vld [vmem:[%s12 + $0xb0] sm:$0xff]
        %v1818 = vld [vmem:[%s12 + $0xb8] sm:$0xff]
        %v1819 = vld [vmem:[%s12 + $0xc0] sm:$0xff]
        %v1820 = vld [vmem:[%s12 + $0xc8] sm:$0xff]
        %v1821 = vld [vmem:[%s12 + $0xd0] sm:$0xff]
        %v1822 = vld [vmem:[%s12 + $0xd8] sm:$0xff]
        %v1823 = vld [vmem:[%s12 + $0xe0] sm:$0xff]
        %v1824 = vld [vmem:[%s12 + $0xe8] sm:$0xff]
        %v1825 = vld [vmem:[%s12 + $0xf0] sm:$0xff]
        %v1826 = vld [vmem:[%s12 + $0xf8] sm:$0xff]
        %v1827 = vld [vmem:[%s12 + $0x100] sm:$0xff]
        %v1828 = vld [vmem:[%s12 + $0x108] sm:$0xff]
        %v1829 = vld [vmem:[%s12 + $0x110] sm:$0xff]
        %v1830 = vld [vmem:[%s12 + $0x118] sm:$0xff]
        %v1831 = vld [vmem:[%s12 + $0x120] sm:$0xff]
        %v1832 = vld [vmem:[%s12 + $0x128] sm:$0xff]
        %v1833 = vld [vmem:[%s12 + $0x130] sm:$0xff]
        %v1834 = vld [vmem:[%s12 + $0x138] sm:$0xff]
        %v1835 = vld [vmem:[%s12 + $0x140] sm:$0xff]
        %v1836 = vld [vmem:[%s12 + $0x148] sm:$0xff]
        %v1837 = vld [vmem:[%s12 + $0x150] sm:$0xff]
        %v1838 = vld [vmem:[%s12 + $0x158] sm:$0xff]
        %v1839 = vld [vmem:[%s12 + $0x160] sm:$0xff]
        %v1840 = vld [vmem:[%s12 + $0x168] sm:$0xff]
        %v1841 = vld [vmem:[%s12 + $0x170] sm:$0xff]
        %v1842 = vld [vmem:[%s12 + $0x178] sm:$0xff]
        %v1843 = vld [vmem:[%s12 + $0x180] sm:$0xff]
        %v1844 = vld [vmem:[%s12 + $0x188] sm:$0xff]
        %v1845 = vld [vmem:[%s12 + $0x190] sm:$0xff]
        %v1846 = vld [vmem:[%s12 + $0x198] sm:$0xff]
        %v1847 = vld [vmem:[%s12 + $0x1a0] sm:$0xff]
        %v1848 = vld [vmem:[%s12 + $0x1a8] sm:$0xff]
        %v1849 = vld [vmem:[%s12 + $0x1b0] sm:$0xff]
        %v1850 = vld [vmem:[%s12 + $0x1b8] sm:$0xff]
        %v1851 = vld [vmem:[%s12 + $0x1c0] sm:$0xff]
        %v1852 = vld [vmem:[%s12 + $0x1c8] sm:$0xff]
        %v1853 = vld [vmem:[%s12 + $0x1d0] sm:$0xff]
        %v1854 = vld [vmem:[%s12 + $0x1d8] sm:$0xff]
        %v1855 = vld [vmem:[%s12 + $0x1e0] sm:$0xff]
        %v1856 = vld [vmem:[%s12 + $0x1e8] sm:$0xff]
        %v1857 = vld [vmem:[%s12 + $0x1f0] sm:$0xff]
        %v1858 = vld [vmem:[%s12 + $0x1f8] sm:$0xff]
        %v1859 = vld [vmem:[%s13] sm:$0xff]
        %v1860 = vld [vmem:[%s13 + $0x8] sm:$0xff]
        %v1863 = vlaneseq
        %v1864 = vshrl.u32 %v1863, 7
        %v1865 = vsub.s32 0, %v1864
        %v1866 = vrot.slane %v1859, %v1865
        %v1867 = vlaneseq
        %v1868 = vshrl.u32 %v1867, 7
        %v1869 = vsub.s32 1, %v1868
        %v1870 = vrot.slane %v1859, %v1869
        %v1871 = vlaneseq
        %v1872 = vshrl.u32 %v1871, 7
        %v1873 = vsub.s32 2, %v1872
        %v1874 = vrot.slane %v1859, %v1873
        %v1875 = vlaneseq
        %v1876 = vshrl.u32 %v1875, 7
        %v1877 = vsub.s32 3, %v1876
        %v1878 = vrot.slane %v1859, %v1877
        %v1879 = vlaneseq
        %v1880 = vshrl.u32 %v1879, 7
        %v1881 = vsub.s32 4, %v1880
        %v1882 = vrot.slane %v1859, %v1881
        %v1883 = vlaneseq
        %v1884 = vshrl.u32 %v1883, 7
        %v1885 = vsub.s32 5, %v1884
        %v1886 = vrot.slane %v1859, %v1885
        %v1887 = vlaneseq
        %v1888 = vshrl.u32 %v1887, 7
        %v1889 = vsub.s32 6, %v1888
        %v1890 = vrot.slane %v1859, %v1889
        %v1891 = vlaneseq
        %v1892 = vshrl.u32 %v1891, 7
        %v1893 = vsub.s32 7, %v1892
        %v1894 = vrot.slane %v1859, %v1893
        %v1895 = vlaneseq
        %v1896 = vshrl.u32 %v1895, 7
        %v1897 = vsub.s32 0, %v1896
        %v1898 = vrot.slane %v1860, %v1897
        %v1899 = vlaneseq
        %v1900 = vshrl.u32 %v1899, 7
        %v1901 = vsub.s32 1, %v1900
        %v1902 = vrot.slane %v1860, %v1901
        %v1903 = vlaneseq
        %v1904 = vshrl.u32 %v1903, 7
        %v1905 = vsub.s32 2, %v1904
        %v1906 = vrot.slane %v1860, %v1905
        %v1907 = vlaneseq
        %v1908 = vshrl.u32 %v1907, 7
        %v1909 = vsub.s32 3, %v1908
        %v1910 = vrot.slane %v1860, %v1909
        %v1911 = vlaneseq
        %v1912 = vshrl.u32 %v1911, 7
        %v1913 = vsub.s32 4, %v1912
        %v1914 = vrot.slane %v1860, %v1913
        %v1915 = vlaneseq
        %v1916 = vshrl.u32 %v1915, 7
        %v1917 = vsub.s32 5, %v1916
        %v1918 = vrot.slane %v1860, %v1917
        %v1919 = vlaneseq
        %v1920 = vshrl.u32 %v1919, 7
        %v1921 = vsub.s32 6, %v1920
        %v1922 = vrot.slane %v1860, %v1921
        %v1923 = vlaneseq
        %v1924 = vshrl.u32 %v1923, 7
        %v1925 = vsub.s32 7, %v1924
        %v1926 = vrot.slane %v1860, %v1925
        %v1944 = vsel %vm665, %v1793, 0
        %v1947 = vsel %vm665, %v1794, 0
        %1949 = vmatprep.subr.mxu0 %v1796
        %1950 = vmatpush1.msra.mxu0 %v1795
        %1951 = vmatprep.subr.mxu0 %v1812
        %1952 = vmatpush1.msra.mxu0 %v1811
        %1953 = vmatprep.subr.mxu0 %v1828
        %1954 = vmatpush1.msra.mxu0 %v1827
        %1955 = vmatprep.subr.mxu0 %v1844
        %1956 = vmatpush1.msra.mxu0 %v1843
        %1957 = vmatprep.subr.mxu0 0.0
        %1958 = vmatpush1.msra.mxu0 0.0
        %1959 = vmatprep.subr.mxu0 0.0
        %1960 = vmatpush1.msra.mxu0 0.0
        %1961 = vmatprep.subr.mxu0 0.0
        %1962 = vmatpush1.msra.mxu0 0.0
        %1963 = vmatprep.subr.mxu0 0.0
        %1964 = vmatpush1.msra.mxu0 0.0
        %1965 = vmatprep.subr.mxu0 0.0
        %1966 = vmatpush1.msra.mxu0 0.0
        %1967 = vmatprep.subr.mxu0 0.0
        %1968 = vmatpush1.msra.mxu0 0.0
        %1969 = vmatprep.subr.mxu0 0.0
        %1970 = vmatpush1.msra.mxu0 0.0
        %1971 = vmatprep.subr.mxu0 0.0
        %1972 = vmatpush1.msra.mxu0 0.0
        %1973 = vmatprep.subr.mxu0 0.0
        %1974 = vmatpush1.msra.mxu0 0.0
        %1975 = vmatprep.subr.mxu0 0.0
        %1976 = vmatpush1.msra.mxu0 0.0
        %1977 = vmatprep.subr.mxu0 0.0
        %1978 = vmatpush1.msra.mxu0 0.0
        %1979 = vmatprep.subr.mxu0 0.0
        %1980 = vmatpush1.msra.mxu0 0.0
        %1981 = vmatprep.subr.mxu0 0.0
        %1982 = vmatpush1.msra.mxu0 0.0
        %1983 = vmatprep.subr.mxu0 0.0
        %1984 = vmatpush1.msra.mxu0 0.0
        %1985 = vmatprep.subr.mxu0 0.0
        %1986 = vmatpush1.msra.mxu0 0.0
        %1987 = vmatprep.subr.mxu0 0.0
        %1988 = vmatpush1.msra.mxu0 0.0
        %1989 = vmatprep.subr.mxu0 0.0
        %1990 = vmatpush1.msra.mxu0 0.0
        %1991 = vmatprep.subr.mxu0 0.0
        %1992 = vmatpush1.msra.mxu0 0.0
        %1993 = vmatprep.subr.mxu0 0.0
        %1994 = vmatpush1.msra.mxu0 0.0
        %1995 = vmatprep.subr.mxu0 0.0
        %1996 = vmatpush1.msra.mxu0 0.0
        %1997 = vmatprep.subr.mxu0 0.0
        %1998 = vmatpush1.msra.mxu0 0.0
        %1999 = vmatprep.subr.mxu0 0.0
        %2000 = vmatpush1.msra.mxu0 0.0
        %2001 = vmatprep.subr.mxu0 0.0
        %2002 = vmatpush1.msra.mxu0 0.0
        %2003 = vmatprep.subr.mxu0 0.0
        %2004 = vmatpush1.msra.mxu0 0.0
        %2005 = vmatprep.subr.mxu0 0.0
        %2006 = vmatpush1.msra.mxu0 0.0
        %2007 = vmatprep.subr.mxu0 0.0
        %2008 = vmatpush1.msra.mxu0 0.0
        %2009 = vmatprep.subr.mxu0 0.0
        %2010 = vmatpush1.msra.mxu0 0.0
        %2011 = vmatprep.subr.mxu0 0.0
        %2012 = vmatpush1.msra.mxu0 0.0
        %2013 = vmatprep.mubr.f32.mxu0 0.0
        %2014 = vmatmul.mubr.f32.gmra.mrb[0].mxu0 %v1944
        %v2015 = vpop.f32.mrb[0].mxu0
        %v2016 = vadd.f32 %v1866, %v2015
        %v2017 = vpop.f32.mrb[0].mxu0
        %v2018 = vadd.f32 %v1870, %v2017
        %2019 = vmatprep.mubr.f32.mxu0 0.0
        %2020 = vmatmul.mubr.f32.gmra.mrb[0].mxu0 %v1947
        %v2021 = vpop.f32.mrb[0].mxu0
        %v2022 = vadd.f32 %v1866, %v2021
        %v2023 = vpop.f32.mrb[0].mxu0
        %v2024 = vadd.f32 %v1870, %v2023
        %2025 = vdwg.mxu0
        %2026 = vmatprep.subr.mxu0 %v1798
        %2027 = vmatpush1.msra.mxu0 %v1797
        %2028 = vmatprep.subr.mxu0 %v1814
        %2029 = vmatpush1.msra.mxu0 %v1813
        %2030 = vmatprep.subr.mxu0 %v1830
        %2031 = vmatpush1.msra.mxu0 %v1829
        %2032 = vmatprep.subr.mxu0 %v1846
        %2033 = vmatpush1.msra.mxu0 %v1845
        %2034 = vmatprep.subr.mxu0 0.0
        %2035 = vmatpush1.msra.mxu0 0.0
        %2036 = vmatprep.subr.mxu0 0.0
        %2037 = vmatpush1.msra.mxu0 0.0
        %2038 = vmatprep.subr.mxu0 0.0
        %2039 = vmatpush1.msra.mxu0 0.0
        %2040 = vmatprep.subr.mxu0 0.0
        %2041 = vmatpush1.msra.mxu0 0.0
        %2042 = vmatprep.subr.mxu0 0.0
        %2043 = vmatpush1.msra.mxu0 0.0
        %2044 = vmatprep.subr.mxu0 0.0
        %2045 = vmatpush1.msra.mxu0 0.0
        %2046 = vmatprep.subr.mxu0 0.0
        %2047 = vmatpush1.msra.mxu0 0.0
        %2048 = vmatprep.subr.mxu0 0.0
        %2049 = vmatpush1.msra.mxu0 0.0
        %2050 = vmatprep.subr.mxu0 0.0
        %2051 = vmatpush1.msra.mxu0 0.0
        %2052 = vmatprep.subr.mxu0 0.0
        %2053 = vmatpush1.msra.mxu0 0.0
        %2054 = vmatprep.subr.mxu0 0.0
        %2055 = vmatpush1.msra.mxu0 0.0
        %2056 = vmatprep.subr.mxu0 0.0
        %2057 = vmatpush1.msra.mxu0 0.0
        %2058 = vmatprep.subr.mxu0 0.0
        %2059 = vmatpush1.msra.mxu0 0.0
        %2060 = vmatprep.subr.mxu0 0.0
        %2061 = vmatpush1.msra.mxu0 0.0
        %2062 = vmatprep.subr.mxu0 0.0
        %2063 = vmatpush1.msra.mxu0 0.0
        %2064 = vmatprep.subr.mxu0 0.0
        %2065 = vmatpush1.msra.mxu0 0.0
        %2066 = vmatprep.subr.mxu0 0.0
        %2067 = vmatpush1.msra.mxu0 0.0
        %2068 = vmatprep.subr.mxu0 0.0
        %2069 = vmatpush1.msra.mxu0 0.0
        %2070 = vmatprep.subr.mxu0 0.0
        %2071 = vmatpush1.msra.mxu0 0.0
        %2072 = vmatprep.subr.mxu0 0.0
        %2073 = vmatpush1.msra.mxu0 0.0
        %2074 = vmatprep.subr.mxu0 0.0
        %2075 = vmatpush1.msra.mxu0 0.0
        %2076 = vmatprep.subr.mxu0 0.0
        %2077 = vmatpush1.msra.mxu0 0.0
        %2078 = vmatprep.subr.mxu0 0.0
        %2079 = vmatpush1.msra.mxu0 0.0
        %2080 = vmatprep.subr.mxu0 0.0
        %2081 = vmatpush1.msra.mxu0 0.0
        %2082 = vmatprep.subr.mxu0 0.0
        %2083 = vmatpush1.msra.mxu0 0.0
        %2084 = vmatprep.subr.mxu0 0.0
        %2085 = vmatpush1.msra.mxu0 0.0
        %2086 = vmatprep.subr.mxu0 0.0
        %2087 = vmatpush1.msra.mxu0 0.0
        %2088 = vmatprep.subr.mxu0 0.0
        %2089 = vmatpush1.msra.mxu0 0.0
        %2090 = vmatprep.mubr.f32.mxu0 0.0
        %2091 = vmatmul.mubr.f32.gmra.mrb[0].mxu0 %v1944
        %v2092 = vpop.f32.mrb[0].mxu0
        %v2093 = vadd.f32 %v1874, %v2092
        %v2094 = vpop.f32.mrb[0].mxu0
        %v2095 = vadd.f32 %v1878, %v2094
        %2096 = vmatprep.mubr.f32.mxu0 0.0
        %2097 = vmatmul.mubr.f32.gmra.mrb[0].mxu0 %v1947
        %v2098 = vpop.f32.mrb[0].mxu0
        %v2099 = vadd.f32 %v1874, %v2098
        %v2100 = vpop.f32.mrb[0].mxu0
        %v2101 = vadd.f32 %v1878, %v2100
        %2102 = vdwg.mxu0
        %2103 = vmatprep.subr.mxu0 %v1800
        %2104 = vmatpush1.msra.mxu0 %v1799
        %2105 = vmatprep.subr.mxu0 %v1816
        %2106 = vmatpush1.msra.mxu0 %v1815
        %2107 = vmatprep.subr.mxu0 %v1832
        %2108 = vmatpush1.msra.mxu0 %v1831
        %2109 = vmatprep.subr.mxu0 %v1848
        %2110 = vmatpush1.msra.mxu0 %v1847
        %2111 = vmatprep.subr.mxu0 0.0
        %2112 = vmatpush1.msra.mxu0 0.0
        %2113 = vmatprep.subr.mxu0 0.0
        %2114 = vmatpush1.msra.mxu0 0.0
        %2115 = vmatprep.subr.mxu0 0.0
        %2116 = vmatpush1.msra.mxu0 0.0
        %2117 = vmatprep.subr.mxu0 0.0
        %2118 = vmatpush1.msra.mxu0 0.0
        %2119 = vmatprep.subr.mxu0 0.0
        %2120 = vmatpush1.msra.mxu0 0.0
        %2121 = vmatprep.subr.mxu0 0.0
        %2122 = vmatpush1.msra.mxu0 0.0
        %2123 = vmatprep.subr.mxu0 0.0
        %2124 = vmatpush1.msra.mxu0 0.0
        %2125 = vmatprep.subr.mxu0 0.0
        %2126 = vmatpush1.msra.mxu0 0.0
        %2127 = vmatprep.subr.mxu0 0.0
        %2128 = vmatpush1.msra.mxu0 0.0
        %2129 = vmatprep.subr.mxu0 0.0
        %2130 = vmatpush1.msra.mxu0 0.0
        %2131 = vmatprep.subr.mxu0 0.0
        %2132 = vmatpush1.msra.mxu0 0.0
        %2133 = vmatprep.subr.mxu0 0.0
        %2134 = vmatpush1.msra.mxu0 0.0
        %2135 = vmatprep.subr.mxu0 0.0
        %2136 = vmatpush1.msra.mxu0 0.0
        %2137 = vmatprep.subr.mxu0 0.0
        %2138 = vmatpush1.msra.mxu0 0.0
        %2139 = vmatprep.subr.mxu0 0.0
        %2140 = vmatpush1.msra.mxu0 0.0
        %2141 = vmatprep.subr.mxu0 0.0
        %2142 = vmatpush1.msra.mxu0 0.0
        %2143 = vmatprep.subr.mxu0 0.0
        %2144 = vmatpush1.msra.mxu0 0.0
        %2145 = vmatprep.subr.mxu0 0.0
        %2146 = vmatpush1.msra.mxu0 0.0
        %2147 = vmatprep.subr.mxu0 0.0
        %2148 = vmatpush1.msra.mxu0 0.0
        %2149 = vmatprep.subr.mxu0 0.0
        %2150 = vmatpush1.msra.mxu0 0.0
        %2151 = vmatprep.subr.mxu0 0.0
        %2152 = vmatpush1.msra.mxu0 0.0
        %2153 = vmatprep.subr.mxu0 0.0
        %2154 = vmatpush1.msra.mxu0 0.0
        %2155 = vmatprep.subr.mxu0 0.0
        %2156 = vmatpush1.msra.mxu0 0.0
        %2157 = vmatprep.subr.mxu0 0.0
        %2158 = vmatpush1.msra.mxu0 0.0
        %2159 = vmatprep.subr.mxu0 0.0
        %2160 = vmatpush1.msra.mxu0 0.0
        %2161 = vmatprep.subr.mxu0 0.0
        %2162 = vmatpush1.msra.mxu0 0.0
        %2163 = vmatprep.subr.mxu0 0.0
        %2164 = vmatpush1.msra.mxu0 0.0
        %2165 = vmatprep.subr.mxu0 0.0
        %2166 = vmatpush1.msra.mxu0 0.0
        %2167 = vmatprep.mubr.f32.mxu0 0.0
        %2168 = vmatmul.mubr.f32.gmra.mrb[0].mxu0 %v1944
        %v2169 = vpop.f32.mrb[0].mxu0
        %v2170 = vadd.f32 %v1882, %v2169
        %v2171 = vpop.f32.mrb[0].mxu0
        %v2172 = vadd.f32 %v1886, %v2171
        %2173 = vmatprep.mubr.f32.mxu0 0.0
        %2174 = vmatmul.mubr.f32.gmra.mrb[0].mxu0 %v1947
        %v2175 = vpop.f32.mrb[0].mxu0
        %v2176 = vadd.f32 %v1882, %v2175
        %v2177 = vpop.f32.mrb[0].mxu0
        %v2178 = vadd.f32 %v1886, %v2177
        %2179 = vdwg.mxu0
        %2180 = vmatprep.subr.mxu0 %v1802
        %2181 = vmatpush1.msra.mxu0 %v1801
        %2182 = vmatprep.subr.mxu0 %v1818
        %2183 = vmatpush1.msra.mxu0 %v1817
        %2184 = vmatprep.subr.mxu0 %v1834
        %2185 = vmatpush1.msra.mxu0 %v1833
        %2186 = vmatprep.subr.mxu0 %v1850
        %2187 = vmatpush1.msra.mxu0 %v1849
        %2188 = vmatprep.subr.mxu0 0.0
        %2189 = vmatpush1.msra.mxu0 0.0
        %2190 = vmatprep.subr.mxu0 0.0
        %2191 = vmatpush1.msra.mxu0 0.0
        %2192 = vmatprep.subr.mxu0 0.0
        %2193 = vmatpush1.msra.mxu0 0.0
        %2194 = vmatprep.subr.mxu0 0.0
        %2195 = vmatpush1.msra.mxu0 0.0
        %2196 = vmatprep.subr.mxu0 0.0
        %2197 = vmatpush1.msra.mxu0 0.0
        %2198 = vmatprep.subr.mxu0 0.0
        %2199 = vmatpush1.msra.mxu0 0.0
        %2200 = vmatprep.subr.mxu0 0.0
        %2201 = vmatpush1.msra.mxu0 0.0
        %2202 = vmatprep.subr.mxu0 0.0
        %2203 = vmatpush1.msra.mxu0 0.0
        %2204 = vmatprep.subr.mxu0 0.0
        %2205 = vmatpush1.msra.mxu0 0.0
        %2206 = vmatprep.subr.mxu0 0.0
        %2207 = vmatpush1.msra.mxu0 0.0
        %2208 = vmatprep.subr.mxu0 0.0
        %2209 = vmatpush1.msra.mxu0 0.0
        %2210 = vmatprep.subr.mxu0 0.0
        %2211 = vmatpush1.msra.mxu0 0.0
        %2212 = vmatprep.subr.mxu0 0.0
        %2213 = vmatpush1.msra.mxu0 0.0
        %2214 = vmatprep.subr.mxu0 0.0
        %2215 = vmatpush1.msra.mxu0 0.0
        %2216 = vmatprep.subr.mxu0 0.0
        %2217 = vmatpush1.msra.mxu0 0.0
        %2218 = vmatprep.subr.mxu0 0.0
        %2219 = vmatpush1.msra.mxu0 0.0
        %2220 = vmatprep.subr.mxu0 0.0
        %2221 = vmatpush1.msra.mxu0 0.0
        %2222 = vmatprep.subr.mxu0 0.0
        %2223 = vmatpush1.msra.mxu0 0.0
        %2224 = vmatprep.subr.mxu0 0.0
        %2225 = vmatpush1.msra.mxu0 0.0
        %2226 = vmatprep.subr.mxu0 0.0
        %2227 = vmatpush1.msra.mxu0 0.0
        %2228 = vmatprep.subr.mxu0 0.0
        %2229 = vmatpush1.msra.mxu0 0.0
        %2230 = vmatprep.subr.mxu0 0.0
        %2231 = vmatpush1.msra.mxu0 0.0
        %2232 = vmatprep.subr.mxu0 0.0
        %2233 = vmatpush1.msra.mxu0 0.0
        %2234 = vmatprep.subr.mxu0 0.0
        %2235 = vmatpush1.msra.mxu0 0.0
        %2236 = vmatprep.subr.mxu0 0.0
        %2237 = vmatpush1.msra.mxu0 0.0
        %2238 = vmatprep.subr.mxu0 0.0
        %2239 = vmatpush1.msra.mxu0 0.0
        %2240 = vmatprep.subr.mxu0 0.0
        %2241 = vmatpush1.msra.mxu0 0.0
        %2242 = vmatprep.subr.mxu0 0.0
        %2243 = vmatpush1.msra.mxu0 0.0
        %2244 = vmatprep.mubr.f32.mxu0 0.0
        %2245 = vmatmul.mubr.f32.gmra.mrb[0].mxu0 %v1944
        %v2246 = vpop.f32.mrb[0].mxu0
        %v2247 = vadd.f32 %v1890, %v2246
        %v2248 = vpop.f32.mrb[0].mxu0
        %v2249 = vadd.f32 %v1894, %v2248
        %2250 = vmatprep.mubr.f32.mxu0 0.0
        %2251 = vmatmul.mubr.f32.gmra.mrb[0].mxu0 %v1947
        %v2252 = vpop.f32.mrb[0].mxu0
        %v2253 = vadd.f32 %v1890, %v2252
        %v2254 = vpop.f32.mrb[0].mxu0
        %v2255 = vadd.f32 %v1894, %v2254
        %2256 = vdwg.mxu0
        %2257 = vmatprep.subr.mxu0 %v1804
        %2258 = vmatpush1.msra.mxu0 %v1803
        %2259 = vmatprep.subr.mxu0 %v1820
        %2260 = vmatpush1.msra.mxu0 %v1819
        %2261 = vmatprep.subr.mxu0 %v1836
        %2262 = vmatpush1.msra.mxu0 %v1835
        %2263 = vmatprep.subr.mxu0 %v1852
        %2264 = vmatpush1.msra.mxu0 %v1851
        %2265 = vmatprep.subr.mxu0 0.0
        %2266 = vmatpush1.msra.mxu0 0.0
        %2267 = vmatprep.subr.mxu0 0.0
        %2268 = vmatpush1.msra.mxu0 0.0
        %2269 = vmatprep.subr.mxu0 0.0
        %2270 = vmatpush1.msra.mxu0 0.0
        %2271 = vmatprep.subr.mxu0 0.0
        %2272 = vmatpush1.msra.mxu0 0.0
        %2273 = vmatprep.subr.mxu0 0.0
        %2274 = vmatpush1.msra.mxu0 0.0
        %2275 = vmatprep.subr.mxu0 0.0
        %2276 = vmatpush1.msra.mxu0 0.0
        %2277 = vmatprep.subr.mxu0 0.0
        %2278 = vmatpush1.msra.mxu0 0.0
        %2279 = vmatprep.subr.mxu0 0.0
        %2280 = vmatpush1.msra.mxu0 0.0
        %2281 = vmatprep.subr.mxu0 0.0
        %2282 = vmatpush1.msra.mxu0 0.0
        %2283 = vmatprep.subr.mxu0 0.0
        %2284 = vmatpush1.msra.mxu0 0.0
        %2285 = vmatprep.subr.mxu0 0.0
        %2286 = vmatpush1.msra.mxu0 0.0
        %2287 = vmatprep.subr.mxu0 0.0
        %2288 = vmatpush1.msra.mxu0 0.0
        %2289 = vmatprep.subr.mxu0 0.0
        %2290 = vmatpush1.msra.mxu0 0.0
        %2291 = vmatprep.subr.mxu0 0.0
        %2292 = vmatpush1.msra.mxu0 0.0
        %2293 = vmatprep.subr.mxu0 0.0
        %2294 = vmatpush1.msra.mxu0 0.0
        %2295 = vmatprep.subr.mxu0 0.0
        %2296 = vmatpush1.msra.mxu0 0.0
        %2297 = vmatprep.subr.mxu0 0.0
        %2298 = vmatpush1.msra.mxu0 0.0
        %2299 = vmatprep.subr.mxu0 0.0
        %2300 = vmatpush1.msra.mxu0 0.0
        %2301 = vmatprep.subr.mxu0 0.0
        %2302 = vmatpush1.msra.mxu0 0.0
        %2303 = vmatprep.subr.mxu0 0.0
        %2304 = vmatpush1.msra.mxu0 0.0
        %2305 = vmatprep.subr.mxu0 0.0
        %2306 = vmatpush1.msra.mxu0 0.0
        %2307 = vmatprep.subr.mxu0 0.0
        %2308 = vmatpush1.msra.mxu0 0.0
        %2309 = vmatprep.subr.mxu0 0.0
        %2310 = vmatpush1.msra.mxu0 0.0
        %2311 = vmatprep.subr.mxu0 0.0
        %2312 = vmatpush1.msra.mxu0 0.0
        %2313 = vmatprep.subr.mxu0 0.0
        %2314 = vmatpush1.msra.mxu0 0.0
        %2315 = vmatprep.subr.mxu0 0.0
        %2316 = vmatpush1.msra.mxu0 0.0
        %2317 = vmatprep.subr.mxu0 0.0
        %2318 = vmatpush1.msra.mxu0 0.0
        %2319 = vmatprep.subr.mxu0 0.0
        %2320 = vmatpush1.msra.mxu0 0.0
        %2321 = vmatprep.mubr.f32.mxu0 0.0
        %2322 = vmatmul.mubr.f32.gmra.mrb[0].mxu0 %v1944
        %v2323 = vpop.f32.mrb[0].mxu0
        %v2324 = vadd.f32 %v1898, %v2323
        %v2325 = vpop.f32.mrb[0].mxu0
        %v2326 = vadd.f32 %v1902, %v2325
        %2327 = vmatprep.mubr.f32.mxu0 0.0
        %2328 = vmatmul.mubr.f32.gmra.mrb[0].mxu0 %v1947
        %v2329 = vpop.f32.mrb[0].mxu0
        %v2330 = vadd.f32 %v1898, %v2329
        %v2331 = vpop.f32.mrb[0].mxu0
        %v2332 = vadd.f32 %v1902, %v2331
        %2333 = vdwg.mxu0
        %2334 = vmatprep.subr.mxu0 %v1806
        %2335 = vmatpush1.msra.mxu0 %v1805
        %2336 = vmatprep.subr.mxu0 %v1822
        %2337 = vmatpush1.msra.mxu0 %v1821
        %2338 = vmatprep.subr.mxu0 %v1838
        %2339 = vmatpush1.msra.mxu0 %v1837
        %2340 = vmatprep.subr.mxu0 %v1854
        %2341 = vmatpush1.msra.mxu0 %v1853
        %2342 = vmatprep.subr.mxu0 0.0
        %2343 = vmatpush1.msra.mxu0 0.0
        %2344 = vmatprep.subr.mxu0 0.0
        %2345 = vmatpush1.msra.mxu0 0.0
        %2346 = vmatprep.subr.mxu0 0.0
        %2347 = vmatpush1.msra.mxu0 0.0
        %2348 = vmatprep.subr.mxu0 0.0
        %2349 = vmatpush1.msra.mxu0 0.0
        %2350 = vmatprep.subr.mxu0 0.0
        %2351 = vmatpush1.msra.mxu0 0.0
        %2352 = vmatprep.subr.mxu0 0.0
        %2353 = vmatpush1.msra.mxu0 0.0
        %2354 = vmatprep.subr.mxu0 0.0
        %2355 = vmatpush1.msra.mxu0 0.0
        %2356 = vmatprep.subr.mxu0 0.0
        %2357 = vmatpush1.msra.mxu0 0.0
        %2358 = vmatprep.subr.mxu0 0.0
        %2359 = vmatpush1.msra.mxu0 0.0
        %2360 = vmatprep.subr.mxu0 0.0
        %2361 = vmatpush1.msra.mxu0 0.0
        %2362 = vmatprep.subr.mxu0 0.0
        %2363 = vmatpush1.msra.mxu0 0.0
        %2364 = vmatprep.subr.mxu0 0.0
        %2365 = vmatpush1.msra.mxu0 0.0
        %2366 = vmatprep.subr.mxu0 0.0
        %2367 = vmatpush1.msra.mxu0 0.0
        %2368 = vmatprep.subr.mxu0 0.0
        %2369 = vmatpush1.msra.mxu0 0.0
        %2370 = vmatprep.subr.mxu0 0.0
        %2371 = vmatpush1.msra.mxu0 0.0
        %2372 = vmatprep.subr.mxu0 0.0
        %2373 = vmatpush1.msra.mxu0 0.0
        %2374 = vmatprep.subr.mxu0 0.0
        %2375 = vmatpush1.msra.mxu0 0.0
        %2376 = vmatprep.subr.mxu0 0.0
        %2377 = vmatpush1.msra.mxu0 0.0
        %2378 = vmatprep.subr.mxu0 0.0
        %2379 = vmatpush1.msra.mxu0 0.0
        %2380 = vmatprep.subr.mxu0 0.0
        %2381 = vmatpush1.msra.mxu0 0.0
        %2382 = vmatprep.subr.mxu0 0.0
        %2383 = vmatpush1.msra.mxu0 0.0
        %2384 = vmatprep.subr.mxu0 0.0
        %2385 = vmatpush1.msra.mxu0 0.0
        %2386 = vmatprep.subr.mxu0 0.0
        %2387 = vmatpush1.msra.mxu0 0.0
        %2388 = vmatprep.subr.mxu0 0.0
        %2389 = vmatpush1.msra.mxu0 0.0
        %2390 = vmatprep.subr.mxu0 0.0
        %2391 = vmatpush1.msra.mxu0 0.0
        %2392 = vmatprep.subr.mxu0 0.0
        %2393 = vmatpush1.msra.mxu0 0.0
        %2394 = vmatprep.subr.mxu0 0.0
        %2395 = vmatpush1.msra.mxu0 0.0
        %2396 = vmatprep.subr.mxu0 0.0
        %2397 = vmatpush1.msra.mxu0 0.0
        %2398 = vmatprep.mubr.f32.mxu0 0.0
        %2399 = vmatmul.mubr.f32.gmra.mrb[0].mxu0 %v1944
        %v2400 = vpop.f32.mrb[0].mxu0
        %v2401 = vadd.f32 %v1906, %v2400
        %v2402 = vpop.f32.mrb[0].mxu0
        %v2403 = vadd.f32 %v1910, %v2402
        %2404 = vmatprep.mubr.f32.mxu0 0.0
        %2405 = vmatmul.mubr.f32.gmra.mrb[0].mxu0 %v1947
        %v2406 = vpop.f32.mrb[0].mxu0
        %v2407 = vadd.f32 %v1906, %v2406
        %v2408 = vpop.f32.mrb[0].mxu0
        %v2409 = vadd.f32 %v1910, %v2408
        %2410 = vdwg.mxu0
        %2411 = vmatprep.subr.mxu0 %v1808
        %2412 = vmatpush1.msra.mxu0 %v1807
        %2413 = vmatprep.subr.mxu0 %v1824
        %2414 = vmatpush1.msra.mxu0 %v1823
        %2415 = vmatprep.subr.mxu0 %v1840
        %2416 = vmatpush1.msra.mxu0 %v1839
        %2417 = vmatprep.subr.mxu0 %v1856
        %2418 = vmatpush1.msra.mxu0 %v1855
        %2419 = vmatprep.subr.mxu0 0.0
        %2420 = vmatpush1.msra.mxu0 0.0
        %2421 = vmatprep.subr.mxu0 0.0
        %2422 = vmatpush1.msra.mxu0 0.0
        %2423 = vmatprep.subr.mxu0 0.0
        %2424 = vmatpush1.msra.mxu0 0.0
        %2425 = vmatprep.subr.mxu0 0.0
        %2426 = vmatpush1.msra.mxu0 0.0
        %2427 = vmatprep.subr.mxu0 0.0
        %2428 = vmatpush1.msra.mxu0 0.0
        %2429 = vmatprep.subr.mxu0 0.0
        %2430 = vmatpush1.msra.mxu0 0.0
        %2431 = vmatprep.subr.mxu0 0.0
        %2432 = vmatpush1.msra.mxu0 0.0
        %2433 = vmatprep.subr.mxu0 0.0
        %2434 = vmatpush1.msra.mxu0 0.0
        %2435 = vmatprep.subr.mxu0 0.0
        %2436 = vmatpush1.msra.mxu0 0.0
        %2437 = vmatprep.subr.mxu0 0.0
        %2438 = vmatpush1.msra.mxu0 0.0
        %2439 = vmatprep.subr.mxu0 0.0
        %2440 = vmatpush1.msra.mxu0 0.0
        %2441 = vmatprep.subr.mxu0 0.0
        %2442 = vmatpush1.msra.mxu0 0.0
        %2443 = vmatprep.subr.mxu0 0.0
        %2444 = vmatpush1.msra.mxu0 0.0
        %2445 = vmatprep.subr.mxu0 0.0
        %2446 = vmatpush1.msra.mxu0 0.0
        %2447 = vmatprep.subr.mxu0 0.0
        %2448 = vmatpush1.msra.mxu0 0.0
        %2449 = vmatprep.subr.mxu0 0.0
        %2450 = vmatpush1.msra.mxu0 0.0
        %2451 = vmatprep.subr.mxu0 0.0
        %2452 = vmatpush1.msra.mxu0 0.0
        %2453 = vmatprep.subr.mxu0 0.0
        %2454 = vmatpush1.msra.mxu0 0.0
        %2455 = vmatprep.subr.mxu0 0.0
        %2456 = vmatpush1.msra.mxu0 0.0
        %2457 = vmatprep.subr.mxu0 0.0
        %2458 = vmatpush1.msra.mxu0 0.0
        %2459 = vmatprep.subr.mxu0 0.0
        %2460 = vmatpush1.msra.mxu0 0.0
        %2461 = vmatprep.subr.mxu0 0.0
        %2462 = vmatpush1.msra.mxu0 0.0
        %2463 = vmatprep.subr.mxu0 0.0
        %2464 = vmatpush1.msra.mxu0 0.0
        %2465 = vmatprep.subr.mxu0 0.0
        %2466 = vmatpush1.msra.mxu0 0.0
        %2467 = vmatprep.subr.mxu0 0.0
        %2468 = vmatpush1.msra.mxu0 0.0
        %2469 = vmatprep.subr.mxu0 0.0
        %2470 = vmatpush1.msra.mxu0 0.0
        %2471 = vmatprep.subr.mxu0 0.0
        %2472 = vmatpush1.msra.mxu0 0.0
        %2473 = vmatprep.subr.mxu0 0.0
        %2474 = vmatpush1.msra.mxu0 0.0
        %2475 = vmatprep.mubr.f32.mxu0 0.0
        %2476 = vmatmul.mubr.f32.gmra.mrb[0].mxu0 %v1944
        %v2477 = vpop.f32.mrb[0].mxu0
        %v2478 = vadd.f32 %v1914, %v2477
        %v2479 = vpop.f32.mrb[0].mxu0
        %v2480 = vadd.f32 %v1918, %v2479
        %2481 = vmatprep.mubr.f32.mxu0 0.0
        %2482 = vmatmul.mubr.f32.gmra.mrb[0].mxu0 %v1947
        %v2483 = vpop.f32.mrb[0].mxu0
        %v2484 = vadd.f32 %v1914, %v2483
        %v2485 = vpop.f32.mrb[0].mxu0
        %v2486 = vadd.f32 %v1918, %v2485
        %2487 = vdwg.mxu0
        %2488 = vmatprep.subr.mxu0 %v1810
        %2489 = vmatpush1.msra.mxu0 %v1809
        %2490 = vmatprep.subr.mxu0 %v1826
        %2491 = vmatpush1.msra.mxu0 %v1825
        %2492 = vmatprep.subr.mxu0 %v1842
        %2493 = vmatpush1.msra.mxu0 %v1841
        %2494 = vmatprep.subr.mxu0 %v1858
        %2495 = vmatpush1.msra.mxu0 %v1857
        %2496 = vmatprep.subr.mxu0 0.0
        %2497 = vmatpush1.msra.mxu0 0.0
        %2498 = vmatprep.subr.mxu0 0.0
        %2499 = vmatpush1.msra.mxu0 0.0
        %2500 = vmatprep.subr.mxu0 0.0
        %2501 = vmatpush1.msra.mxu0 0.0
        %2502 = vmatprep.subr.mxu0 0.0
        %2503 = vmatpush1.msra.mxu0 0.0
        %2504 = vmatprep.subr.mxu0 0.0
        %2505 = vmatpush1.msra.mxu0 0.0
        %2506 = vmatprep.subr.mxu0 0.0
        %2507 = vmatpush1.msra.mxu0 0.0
        %2508 = vmatprep.subr.mxu0 0.0
        %2509 = vmatpush1.msra.mxu0 0.0
        %2510 = vmatprep.subr.mxu0 0.0
        %2511 = vmatpush1.msra.mxu0 0.0
        %2512 = vmatprep.subr.mxu0 0.0
        %2513 = vmatpush1.msra.mxu0 0.0
        %2514 = vmatprep.subr.mxu0 0.0
        %2515 = vmatpush1.msra.mxu0 0.0
        %2516 = vmatprep.subr.mxu0 0.0
        %2517 = vmatpush1.msra.mxu0 0.0
        %2518 = vmatprep.subr.mxu0 0.0
        %2519 = vmatpush1.msra.mxu0 0.0
        %2520 = vmatprep.subr.mxu0 0.0
        %2521 = vmatpush1.msra.mxu0 0.0
        %2522 = vmatprep.subr.mxu0 0.0
        %2523 = vmatpush1.msra.mxu0 0.0
        %2524 = vmatprep.subr.mxu0 0.0
        %2525 = vmatpush1.msra.mxu0 0.0
        %2526 = vmatprep.subr.mxu0 0.0
        %2527 = vmatpush1.msra.mxu0 0.0
        %2528 = vmatprep.subr.mxu0 0.0
        %2529 = vmatpush1.msra.mxu0 0.0
        %2530 = vmatprep.subr.mxu0 0.0
        %2531 = vmatpush1.msra.mxu0 0.0
        %2532 = vmatprep.subr.mxu0 0.0
        %2533 = vmatpush1.msra.mxu0 0.0
        %2534 = vmatprep.subr.mxu0 0.0
        %2535 = vmatpush1.msra.mxu0 0.0
        %2536 = vmatprep.subr.mxu0 0.0
        %2537 = vmatpush1.msra.mxu0 0.0
        %2538 = vmatprep.subr.mxu0 0.0
        %2539 = vmatpush1.msra.mxu0 0.0
        %2540 = vmatprep.subr.mxu0 0.0
        %2541 = vmatpush1.msra.mxu0 0.0
        %2542 = vmatprep.subr.mxu0 0.0
        %2543 = vmatpush1.msra.mxu0 0.0
        %2544 = vmatprep.subr.mxu0 0.0
        %2545 = vmatpush1.msra.mxu0 0.0
        %2546 = vmatprep.subr.mxu0 0.0
        %2547 = vmatpush1.msra.mxu0 0.0
        %2548 = vmatprep.subr.mxu0 0.0
        %2549 = vmatpush1.msra.mxu0 0.0
        %2550 = vmatprep.subr.mxu0 0.0
        %2551 = vmatpush1.msra.mxu0 0.0
        %2552 = vmatprep.mubr.f32.mxu0 0.0
        %2553 = vmatmul.mubr.f32.gmra.mrb[0].mxu0 %v1944
        %v2554 = vpop.f32.mrb[0].mxu0
        %v2555 = vadd.f32 %v1922, %v2554
        %v2556 = vpop.f32.mrb[0].mxu0
        %v2557 = vadd.f32 %v1926, %v2556
        %2558 = vmatprep.mubr.f32.mxu0 0.0
        %2559 = vmatmul.mubr.f32.gmra.mrb[0].mxu0 %v1947
        %v2560 = vpop.f32.mrb[0].mxu0
        %v2561 = vadd.f32 %v1922, %v2560
        %v2562 = vpop.f32.mrb[0].mxu0
        %v2563 = vadd.f32 %v1926, %v2562
        %2564 = vdwg.mxu0
        %v2565 = vmax.f32 %v2016, 0.0
        %v2566 = vmax.f32 %v2018, 0.0
        %v2567 = vmax.f32 %v2093, 0.0
        %v2568 = vmax.f32 %v2095, 0.0
        %v2569 = vmax.f32 %v2170, 0.0
        %v2570 = vmax.f32 %v2172, 0.0
        %v2571 = vmax.f32 %v2247, 0.0
        %v2572 = vmax.f32 %v2249, 0.0
        %v2573 = vmax.f32 %v2324, 0.0
        %v2574 = vmax.f32 %v2326, 0.0
        %v2575 = vmax.f32 %v2401, 0.0
        %v2576 = vmax.f32 %v2403, 0.0
        %v2577 = vmax.f32 %v2478, 0.0
        %v2578 = vmax.f32 %v2480, 0.0
        %v2579 = vmax.f32 %v2555, 0.0
        %v2580 = vmax.f32 %v2557, 0.0
        %v2581 = vmax.f32 %v2022, 0.0
        %v2582 = vmax.f32 %v2024, 0.0
        %v2583 = vmax.f32 %v2099, 0.0
        %v2584 = vmax.f32 %v2101, 0.0
        %v2585 = vmax.f32 %v2176, 0.0
        %v2586 = vmax.f32 %v2178, 0.0
        %v2587 = vmax.f32 %v2253, 0.0
        %v2588 = vmax.f32 %v2255, 0.0
        %v2589 = vmax.f32 %v2330, 0.0
        %v2590 = vmax.f32 %v2332, 0.0
        %v2591 = vmax.f32 %v2407, 0.0
        %v2592 = vmax.f32 %v2409, 0.0
        %v2593 = vmax.f32 %v2484, 0.0
        %v2594 = vmax.f32 %v2486, 0.0
        %v2595 = vmax.f32 %v2561, 0.0
        %v2596 = vmax.f32 %v2563, 0.0
        %v2597 = vld [vmem:[%s14] sm:$0xff]
        %v2598 = vld [vmem:[%s14 + $0x8] sm:$0xff]
        %v2599 = vld [vmem:[%s14 + $0x10] sm:$0xff]
        %v2600 = vld [vmem:[%s14 + $0x18] sm:$0xff]
        %v2601 = vld [vmem:[%s14 + $0x20] sm:$0xff]
        %v2602 = vld [vmem:[%s14 + $0x28] sm:$0xff]
        %v2603 = vld [vmem:[%s14 + $0x30] sm:$0xff]
        %v2604 = vld [vmem:[%s14 + $0x38] sm:$0xff]
        %v2605 = vld [vmem:[%s14 + $0x40] sm:$0xff]
        %v2606 = vld [vmem:[%s14 + $0x48] sm:$0xff]
        %v2607 = vld [vmem:[%s14 + $0x50] sm:$0xff]
        %v2608 = vld [vmem:[%s14 + $0x58] sm:$0xff]
        %v2609 = vld [vmem:[%s14 + $0x60] sm:$0xff]
        %v2610 = vld [vmem:[%s14 + $0x68] sm:$0xff]
        %v2611 = vld [vmem:[%s14 + $0x70] sm:$0xff]
        %v2612 = vld [vmem:[%s14 + $0x78] sm:$0xff]
        %v2613 = vld [vmem:[%s14 + $0x80] sm:$0xff]
        %v2614 = vld [vmem:[%s14 + $0x88] sm:$0xff]
        %v2615 = vld [vmem:[%s14 + $0x90] sm:$0xff]
        %v2616 = vld [vmem:[%s14 + $0x98] sm:$0xff]
        %v2617 = vld [vmem:[%s14 + $0xa0] sm:$0xff]
        %v2618 = vld [vmem:[%s14 + $0xa8] sm:$0xff]
        %v2619 = vld [vmem:[%s14 + $0xb0] sm:$0xff]
        %v2620 = vld [vmem:[%s14 + $0xb8] sm:$0xff]
        %v2621 = vld [vmem:[%s14 + $0xc0] sm:$0xff]
        %v2622 = vld [vmem:[%s14 + $0xc8] sm:$0xff]
        %v2623 = vld [vmem:[%s14 + $0xd0] sm:$0xff]
        %v2624 = vld [vmem:[%s14 + $0xd8] sm:$0xff]
        %v2625 = vld [vmem:[%s14 + $0xe0] sm:$0xff]
        %v2626 = vld [vmem:[%s14 + $0xe8] sm:$0xff]
        %v2627 = vld [vmem:[%s14 + $0xf0] sm:$0xff]
        %v2628 = vld [vmem:[%s14 + $0xf8] sm:$0xff]
        %v2629 = vld [vmem:[%s14 + $0x100] sm:$0xff]
        %v2630 = vld [vmem:[%s14 + $0x108] sm:$0xff]
        %v2631 = vld [vmem:[%s14 + $0x110] sm:$0xff]
        %v2632 = vld [vmem:[%s14 + $0x118] sm:$0xff]
        %v2633 = vld [vmem:[%s14 + $0x120] sm:$0xff]
        %v2634 = vld [vmem:[%s14 + $0x128] sm:$0xff]
        %v2635 = vld [vmem:[%s14 + $0x130] sm:$0xff]
        %v2636 = vld [vmem:[%s14 + $0x138] sm:$0xff]
        %v2637 = vld [vmem:[%s14 + $0x140] sm:$0xff]
        %v2638 = vld [vmem:[%s14 + $0x148] sm:$0xff]
        %v2639 = vld [vmem:[%s14 + $0x150] sm:$0xff]
        %v2640 = vld [vmem:[%s14 + $0x158] sm:$0xff]
        %v2641 = vld [vmem:[%s14 + $0x160] sm:$0xff]
        %v2642 = vld [vmem:[%s14 + $0x168] sm:$0xff]
        %v2643 = vld [vmem:[%s14 + $0x170] sm:$0xff]
        %v2644 = vld [vmem:[%s14 + $0x178] sm:$0xff]
        %v2645 = vld [vmem:[%s14 + $0x180] sm:$0xff]
        %v2646 = vld [vmem:[%s14 + $0x188] sm:$0xff]
        %v2647 = vld [vmem:[%s14 + $0x190] sm:$0xff]
        %v2648 = vld [vmem:[%s14 + $0x198] sm:$0xff]
        %v2649 = vld [vmem:[%s14 + $0x1a0] sm:$0xff]
        %v2650 = vld [vmem:[%s14 + $0x1a8] sm:$0xff]
        %v2651 = vld [vmem:[%s14 + $0x1b0] sm:$0xff]
        %v2652 = vld [vmem:[%s14 + $0x1b8] sm:$0xff]
        %v2653 = vld [vmem:[%s14 + $0x1c0] sm:$0xff]
        %v2654 = vld [vmem:[%s14 + $0x1c8] sm:$0xff]
        %v2655 = vld [vmem:[%s14 + $0x1d0] sm:$0xff]
        %v2656 = vld [vmem:[%s14 + $0x1d8] sm:$0xff]
        %v2657 = vld [vmem:[%s14 + $0x1e0] sm:$0xff]
        %v2658 = vld [vmem:[%s14 + $0x1e8] sm:$0xff]
        %v2659 = vld [vmem:[%s14 + $0x1f0] sm:$0xff]
        %v2660 = vld [vmem:[%s14 + $0x1f8] sm:$0xff]
        %v2661 = vld [vmem:[%s14 + $0x200] sm:$0xff]
        %v2662 = vld [vmem:[%s14 + $0x208] sm:$0xff]
        %v2663 = vld [vmem:[%s14 + $0x210] sm:$0xff]
        %v2664 = vld [vmem:[%s14 + $0x218] sm:$0xff]
        %v2665 = vld [vmem:[%s14 + $0x220] sm:$0xff]
        %v2666 = vld [vmem:[%s14 + $0x228] sm:$0xff]
        %v2667 = vld [vmem:[%s14 + $0x230] sm:$0xff]
        %v2668 = vld [vmem:[%s14 + $0x238] sm:$0xff]
        %v2669 = vld [vmem:[%s14 + $0x240] sm:$0xff]
        %v2670 = vld [vmem:[%s14 + $0x248] sm:$0xff]
        %v2671 = vld [vmem:[%s14 + $0x250] sm:$0xff]
        %v2672 = vld [vmem:[%s14 + $0x258] sm:$0xff]
        %v2673 = vld [vmem:[%s14 + $0x260] sm:$0xff]
        %v2674 = vld [vmem:[%s14 + $0x268] sm:$0xff]
        %v2675 = vld [vmem:[%s14 + $0x270] sm:$0xff]
        %v2676 = vld [vmem:[%s14 + $0x278] sm:$0xff]
        %v2677 = vld [vmem:[%s14 + $0x280] sm:$0xff]
        %v2678 = vld [vmem:[%s14 + $0x288] sm:$0xff]
        %v2679 = vld [vmem:[%s14 + $0x290] sm:$0xff]
        %v2680 = vld [vmem:[%s14 + $0x298] sm:$0xff]
        %v2681 = vld [vmem:[%s14 + $0x2a0] sm:$0xff]
        %v2682 = vld [vmem:[%s14 + $0x2a8] sm:$0xff]
        %v2683 = vld [vmem:[%s14 + $0x2b0] sm:$0xff]
        %v2684 = vld [vmem:[%s14 + $0x2b8] sm:$0xff]
        %v2685 = vld [vmem:[%s14 + $0x2c0] sm:$0xff]
        %v2686 = vld [vmem:[%s14 + $0x2c8] sm:$0xff]
        %v2687 = vld [vmem:[%s14 + $0x2d0] sm:$0xff]
        %v2688 = vld [vmem:[%s14 + $0x2d8] sm:$0xff]
        %v2689 = vld [vmem:[%s14 + $0x2e0] sm:$0xff]
        %v2690 = vld [vmem:[%s14 + $0x2e8] sm:$0xff]
        %v2691 = vld [vmem:[%s14 + $0x2f0] sm:$0xff]
        %v2692 = vld [vmem:[%s14 + $0x2f8] sm:$0xff]
        %v2693 = vld [vmem:[%s14 + $0x300] sm:$0xff]
        %v2694 = vld [vmem:[%s14 + $0x308] sm:$0xff]
        %v2695 = vld [vmem:[%s14 + $0x310] sm:$0xff]
        %v2696 = vld [vmem:[%s14 + $0x318] sm:$0xff]
        %v2697 = vld [vmem:[%s14 + $0x320] sm:$0xff]
        %v2698 = vld [vmem:[%s14 + $0x328] sm:$0xff]
        %v2699 = vld [vmem:[%s14 + $0x330] sm:$0xff]
        %v2700 = vld [vmem:[%s14 + $0x338] sm:$0xff]
        %v2701 = vld [vmem:[%s14 + $0x340] sm:$0xff]
        %v2702 = vld [vmem:[%s14 + $0x348] sm:$0xff]
        %v2703 = vld [vmem:[%s14 + $0x350] sm:$0xff]
        %v2704 = vld [vmem:[%s14 + $0x358] sm:$0xff]
        %v2705 = vld [vmem:[%s14 + $0x360] sm:$0xff]
        %v2706 = vld [vmem:[%s14 + $0x368] sm:$0xff]
        %v2707 = vld [vmem:[%s14 + $0x370] sm:$0xff]
        %v2708 = vld [vmem:[%s14 + $0x378] sm:$0xff]
        %v2709 = vld [vmem:[%s14 + $0x380] sm:$0xff]
        %v2710 = vld [vmem:[%s14 + $0x388] sm:$0xff]
        %v2711 = vld [vmem:[%s14 + $0x390] sm:$0xff]
        %v2712 = vld [vmem:[%s14 + $0x398] sm:$0xff]
        %v2713 = vld [vmem:[%s14 + $0x3a0] sm:$0xff]
        %v2714 = vld [vmem:[%s14 + $0x3a8] sm:$0xff]
        %v2715 = vld [vmem:[%s14 + $0x3b0] sm:$0xff]
        %v2716 = vld [vmem:[%s14 + $0x3b8] sm:$0xff]
        %v2717 = vld [vmem:[%s14 + $0x3c0] sm:$0xff]
        %v2718 = vld [vmem:[%s14 + $0x3c8] sm:$0xff]
        %v2719 = vld [vmem:[%s14 + $0x3d0] sm:$0xff]
        %v2720 = vld [vmem:[%s14 + $0x3d8] sm:$0xff]
        %v2721 = vld [vmem:[%s14 + $0x3e0] sm:$0xff]
        %v2722 = vld [vmem:[%s14 + $0x3e8] sm:$0xff]
        %v2723 = vld [vmem:[%s14 + $0x3f0] sm:$0xff]
        %v2724 = vld [vmem:[%s14 + $0x3f8] sm:$0xff]
        %v2725 = vld [vmem:[%s14 + $0x400] sm:$0xff]
        %v2726 = vld [vmem:[%s14 + $0x408] sm:$0xff]
        %v2727 = vld [vmem:[%s14 + $0x410] sm:$0xff]
        %v2728 = vld [vmem:[%s14 + $0x418] sm:$0xff]
        %v2729 = vld [vmem:[%s14 + $0x420] sm:$0xff]
        %v2730 = vld [vmem:[%s14 + $0x428] sm:$0xff]
        %v2731 = vld [vmem:[%s14 + $0x430] sm:$0xff]
        %v2732 = vld [vmem:[%s14 + $0x438] sm:$0xff]
        %v2733 = vld [vmem:[%s14 + $0x440] sm:$0xff]
        %v2734 = vld [vmem:[%s14 + $0x448] sm:$0xff]
        %v2735 = vld [vmem:[%s14 + $0x450] sm:$0xff]
        %v2736 = vld [vmem:[%s14 + $0x458] sm:$0xff]
        %v2737 = vld [vmem:[%s14 + $0x460] sm:$0xff]
        %v2738 = vld [vmem:[%s14 + $0x468] sm:$0xff]
        %v2739 = vld [vmem:[%s14 + $0x470] sm:$0xff]
        %v2740 = vld [vmem:[%s14 + $0x478] sm:$0xff]
        %v2741 = vld [vmem:[%s14 + $0x480] sm:$0xff]
        %v2742 = vld [vmem:[%s14 + $0x488] sm:$0xff]
        %v2743 = vld [vmem:[%s14 + $0x490] sm:$0xff]
        %v2744 = vld [vmem:[%s14 + $0x498] sm:$0xff]
        %v2745 = vld [vmem:[%s14 + $0x4a0] sm:$0xff]
        %v2746 = vld [vmem:[%s14 + $0x4a8] sm:$0xff]
        %v2747 = vld [vmem:[%s14 + $0x4b0] sm:$0xff]
        %v2748 = vld [vmem:[%s14 + $0x4b8] sm:$0xff]
        %v2749 = vld [vmem:[%s14 + $0x4c0] sm:$0xff]
        %v2750 = vld [vmem:[%s14 + $0x4c8] sm:$0xff]
        %v2751 = vld [vmem:[%s14 + $0x4d0] sm:$0xff]
        %v2752 = vld [vmem:[%s14 + $0x4d8] sm:$0xff]
        %v2753 = vld [vmem:[%s14 + $0x4e0] sm:$0xff]
        %v2754 = vld [vmem:[%s14 + $0x4e8] sm:$0xff]
        %v2755 = vld [vmem:[%s14 + $0x4f0] sm:$0xff]
        %v2756 = vld [vmem:[%s14 + $0x4f8] sm:$0xff]
        %v2757 = vld [vmem:[%s14 + $0x500] sm:$0xff]
        %v2758 = vld [vmem:[%s14 + $0x508] sm:$0xff]
        %v2759 = vld [vmem:[%s14 + $0x510] sm:$0xff]
        %v2760 = vld [vmem:[%s14 + $0x518] sm:$0xff]
        %v2761 = vld [vmem:[%s14 + $0x520] sm:$0xff]
        %v2762 = vld [vmem:[%s14 + $0x528] sm:$0xff]
        %v2763 = vld [vmem:[%s14 + $0x530] sm:$0xff]
        %v2764 = vld [vmem:[%s14 + $0x538] sm:$0xff]
        %v2765 = vld [vmem:[%s14 + $0x540] sm:$0xff]
        %v2766 = vld [vmem:[%s14 + $0x548] sm:$0xff]
        %v2767 = vld [vmem:[%s14 + $0x550] sm:$0xff]
        %v2768 = vld [vmem:[%s14 + $0x558] sm:$0xff]
        %v2769 = vld [vmem:[%s14 + $0x560] sm:$0xff]
        %v2770 = vld [vmem:[%s14 + $0x568] sm:$0xff]
        %v2771 = vld [vmem:[%s14 + $0x570] sm:$0xff]
        %v2772 = vld [vmem:[%s14 + $0x578] sm:$0xff]
        %v2773 = vld [vmem:[%s14 + $0x580] sm:$0xff]
        %v2774 = vld [vmem:[%s14 + $0x588] sm:$0xff]
        %v2775 = vld [vmem:[%s14 + $0x590] sm:$0xff]
        %v2776 = vld [vmem:[%s14 + $0x598] sm:$0xff]
        %v2777 = vld [vmem:[%s14 + $0x5a0] sm:$0xff]
        %v2778 = vld [vmem:[%s14 + $0x5a8] sm:$0xff]
        %v2779 = vld [vmem:[%s14 + $0x5b0] sm:$0xff]
        %v2780 = vld [vmem:[%s14 + $0x5b8] sm:$0xff]
        %v2781 = vld [vmem:[%s14 + $0x5c0] sm:$0xff]
        %v2782 = vld [vmem:[%s14 + $0x5c8] sm:$0xff]
        %v2783 = vld [vmem:[%s14 + $0x5d0] sm:$0xff]
        %v2784 = vld [vmem:[%s14 + $0x5d8] sm:$0xff]
        %v2785 = vld [vmem:[%s14 + $0x5e0] sm:$0xff]
        %v2786 = vld [vmem:[%s14 + $0x5e8] sm:$0xff]
        %v2787 = vld [vmem:[%s14 + $0x5f0] sm:$0xff]
        %v2788 = vld [vmem:[%s14 + $0x5f8] sm:$0xff]
        %v2789 = vld [vmem:[%s14 + $0x600] sm:$0xff]
        %v2790 = vld [vmem:[%s14 + $0x608] sm:$0xff]
        %v2791 = vld [vmem:[%s14 + $0x610] sm:$0xff]
        %v2792 = vld [vmem:[%s14 + $0x618] sm:$0xff]
        %v2793 = vld [vmem:[%s14 + $0x620] sm:$0xff]
        %v2794 = vld [vmem:[%s14 + $0x628] sm:$0xff]
        %v2795 = vld [vmem:[%s14 + $0x630] sm:$0xff]
        %v2796 = vld [vmem:[%s14 + $0x638] sm:$0xff]
        %v2797 = vld [vmem:[%s14 + $0x640] sm:$0xff]
        %v2798 = vld [vmem:[%s14 + $0x648] sm:$0xff]
        %v2799 = vld [vmem:[%s14 + $0x650] sm:$0xff]
        %v2800 = vld [vmem:[%s14 + $0x658] sm:$0xff]
        %v2801 = vld [vmem:[%s14 + $0x660] sm:$0xff]
        %v2802 = vld [vmem:[%s14 + $0x668] sm:$0xff]
        %v2803 = vld [vmem:[%s14 + $0x670] sm:$0xff]
        %v2804 = vld [vmem:[%s14 + $0x678] sm:$0xff]
        %v2805 = vld [vmem:[%s14 + $0x680] sm:$0xff]
        %v2806 = vld [vmem:[%s14 + $0x688] sm:$0xff]
        %v2807 = vld [vmem:[%s14 + $0x690] sm:$0xff]
        %v2808 = vld [vmem:[%s14 + $0x698] sm:$0xff]
        %v2809 = vld [vmem:[%s14 + $0x6a0] sm:$0xff]
        %v2810 = vld [vmem:[%s14 + $0x6a8] sm:$0xff]
        %v2811 = vld [vmem:[%s14 + $0x6b0] sm:$0xff]
        %v2812 = vld [vmem:[%s14 + $0x6b8] sm:$0xff]
        %v2813 = vld [vmem:[%s14 + $0x6c0] sm:$0xff]
        %v2814 = vld [vmem:[%s14 + $0x6c8] sm:$0xff]
        %v2815 = vld [vmem:[%s14 + $0x6d0] sm:$0xff]
        %v2816 = vld [vmem:[%s14 + $0x6d8] sm:$0xff]
        %v2817 = vld [vmem:[%s14 + $0x6e0] sm:$0xff]
        %v2818 = vld [vmem:[%s14 + $0x6e8] sm:$0xff]
        %v2819 = vld [vmem:[%s14 + $0x6f0] sm:$0xff]
        %v2820 = vld [vmem:[%s14 + $0x6f8] sm:$0xff]
        %v2821 = vld [vmem:[%s14 + $0x700] sm:$0xff]
        %v2822 = vld [vmem:[%s14 + $0x708] sm:$0xff]
        %v2823 = vld [vmem:[%s14 + $0x710] sm:$0xff]
        %v2824 = vld [vmem:[%s14 + $0x718] sm:$0xff]
        %v2825 = vld [vmem:[%s14 + $0x720] sm:$0xff]
        %v2826 = vld [vmem:[%s14 + $0x728] sm:$0xff]
        %v2827 = vld [vmem:[%s14 + $0x730] sm:$0xff]
        %v2828 = vld [vmem:[%s14 + $0x738] sm:$0xff]
        %v2829 = vld [vmem:[%s14 + $0x740] sm:$0xff]
        %v2830 = vld [vmem:[%s14 + $0x748] sm:$0xff]
        %v2831 = vld [vmem:[%s14 + $0x750] sm:$0xff]
        %v2832 = vld [vmem:[%s14 + $0x758] sm:$0xff]
        %v2833 = vld [vmem:[%s14 + $0x760] sm:$0xff]
        %v2834 = vld [vmem:[%s14 + $0x768] sm:$0xff]
        %v2835 = vld [vmem:[%s14 + $0x770] sm:$0xff]
        %v2836 = vld [vmem:[%s14 + $0x778] sm:$0xff]
        %v2837 = vld [vmem:[%s14 + $0x780] sm:$0xff]
        %v2838 = vld [vmem:[%s14 + $0x788] sm:$0xff]
        %v2839 = vld [vmem:[%s14 + $0x790] sm:$0xff]
        %v2840 = vld [vmem:[%s14 + $0x798] sm:$0xff]
        %v2841 = vld [vmem:[%s14 + $0x7a0] sm:$0xff]
        %v2842 = vld [vmem:[%s14 + $0x7a8] sm:$0xff]
        %v2843 = vld [vmem:[%s14 + $0x7b0] sm:$0xff]
        %v2844 = vld [vmem:[%s14 + $0x7b8] sm:$0xff]
        %v2845 = vld [vmem:[%s14 + $0x7c0] sm:$0xff]
        %v2846 = vld [vmem:[%s14 + $0x7c8] sm:$0xff]
        %v2847 = vld [vmem:[%s14 + $0x7d0] sm:$0xff]
        %v2848 = vld [vmem:[%s14 + $0x7d8] sm:$0xff]
        %v2849 = vld [vmem:[%s14 + $0x7e0] sm:$0xff]
        %v2850 = vld [vmem:[%s14 + $0x7e8] sm:$0xff]
        %v2851 = vld [vmem:[%s14 + $0x7f0] sm:$0xff]
        %v2852 = vld [vmem:[%s14 + $0x7f8] sm:$0xff]
        %v2853 = vld [vmem:[%s15] sm:$0x1]
        %v2855 = vlaneseq
        %v2856 = vshrl.u32 %v2855, 7
        %v2857 = vsub.s32 0, %v2856
        %v2858 = vrot.slane %v2853, %v2857
        %2860 = vmatprep.subr.mxu0 0.0
        %2861 = vmatpush1.msra.mxu0 %v2597
        %2862 = vmatprep.subr.mxu0 0.0
        %2863 = vmatpush1.msra.mxu0 %v2598
        %2864 = vmatprep.subr.mxu0 0.0
        %2865 = vmatpush1.msra.mxu0 %v2599
        %2866 = vmatprep.subr.mxu0 0.0
        %2867 = vmatpush1.msra.mxu0 %v2600
        %2868 = vmatprep.subr.mxu0 0.0
        %2869 = vmatpush1.msra.mxu0 %v2601
        %2870 = vmatprep.subr.mxu0 0.0
        %2871 = vmatpush1.msra.mxu0 %v2602
        %2872 = vmatprep.subr.mxu0 0.0
        %2873 = vmatpush1.msra.mxu0 %v2603
        %2874 = vmatprep.subr.mxu0 0.0
        %2875 = vmatpush1.msra.mxu0 %v2604
        %2876 = vmatprep.subr.mxu0 0.0
        %2877 = vmatpush1.msra.mxu0 %v2605
        %2878 = vmatprep.subr.mxu0 0.0
        %2879 = vmatpush1.msra.mxu0 %v2606
        %2880 = vmatprep.subr.mxu0 0.0
        %2881 = vmatpush1.msra.mxu0 %v2607
        %2882 = vmatprep.subr.mxu0 0.0
        %2883 = vmatpush1.msra.mxu0 %v2608
        %2884 = vmatprep.subr.mxu0 0.0
        %2885 = vmatpush1.msra.mxu0 %v2609
        %2886 = vmatprep.subr.mxu0 0.0
        %2887 = vmatpush1.msra.mxu0 %v2610
        %2888 = vmatprep.subr.mxu0 0.0
        %2889 = vmatpush1.msra.mxu0 %v2611
        %2890 = vmatprep.subr.mxu0 0.0
        %2891 = vmatpush1.msra.mxu0 %v2612
        %2892 = vmatprep.subr.mxu0 0.0
        %2893 = vmatpush1.msra.mxu0 %v2613
        %2894 = vmatprep.subr.mxu0 0.0
        %2895 = vmatpush1.msra.mxu0 %v2614
        %2896 = vmatprep.subr.mxu0 0.0
        %2897 = vmatpush1.msra.mxu0 %v2615
        %2898 = vmatprep.subr.mxu0 0.0
        %2899 = vmatpush1.msra.mxu0 %v2616
        %2900 = vmatprep.subr.mxu0 0.0
        %2901 = vmatpush1.msra.mxu0 %v2617
        %2902 = vmatprep.subr.mxu0 0.0
        %2903 = vmatpush1.msra.mxu0 %v2618
        %2904 = vmatprep.subr.mxu0 0.0
        %2905 = vmatpush1.msra.mxu0 %v2619
        %2906 = vmatprep.subr.mxu0 0.0
        %2907 = vmatpush1.msra.mxu0 %v2620
        %2908 = vmatprep.subr.mxu0 0.0
        %2909 = vmatpush1.msra.mxu0 %v2621
        %2910 = vmatprep.subr.mxu0 0.0
        %2911 = vmatpush1.msra.mxu0 %v2622
        %2912 = vmatprep.subr.mxu0 0.0
        %2913 = vmatpush1.msra.mxu0 %v2623
        %2914 = vmatprep.subr.mxu0 0.0
        %2915 = vmatpush1.msra.mxu0 %v2624
        %2916 = vmatprep.subr.mxu0 0.0
        %2917 = vmatpush1.msra.mxu0 %v2625
        %2918 = vmatprep.subr.mxu0 0.0
        %2919 = vmatpush1.msra.mxu0 %v2626
        %2920 = vmatprep.subr.mxu0 0.0
        %2921 = vmatpush1.msra.mxu0 %v2627
        %2922 = vmatprep.subr.mxu0 0.0
        %2923 = vmatpush1.msra.mxu0 %v2628
        %2924 = vmatprep.mubr.f32.mxu0 %v2566
        %2925 = vmatmul.mubr.f32.gmra.mrb[0].mxu0 %v2565
        %v2926 = vpop.f32.mrb[0].mxu0
        %v2927 = vadd.f32 %v2858, %v2926
        %v2928 = vpop.f32.mrb[0].mxu0
        %2929 = vmatprep.mubr.f32.mxu0 %v2582
        %2930 = vmatmul.mubr.f32.gmra.mrb[0].mxu0 %v2581
        %v2931 = vpop.f32.mrb[0].mxu0
        %v2932 = vadd.f32 %v2858, %v2931
        %v2933 = vpop.f32.mrb[0].mxu0
        %2934 = vdwg.mxu0
        %2935 = vmatprep.subr.mxu0 0.0
        %2936 = vmatpush1.msra.mxu0 %v2629
        %2937 = vmatprep.subr.mxu0 0.0
        %2938 = vmatpush1.msra.mxu0 %v2630
        %2939 = vmatprep.subr.mxu0 0.0
        %2940 = vmatpush1.msra.mxu0 %v2631
        %2941 = vmatprep.subr.mxu0 0.0
        %2942 = vmatpush1.msra.mxu0 %v2632
        %2943 = vmatprep.subr.mxu0 0.0
        %2944 = vmatpush1.msra.mxu0 %v2633
        %2945 = vmatprep.subr.mxu0 0.0
        %2946 = vmatpush1.msra.mxu0 %v2634
        %2947 = vmatprep.subr.mxu0 0.0
        %2948 = vmatpush1.msra.mxu0 %v2635
        %2949 = vmatprep.subr.mxu0 0.0
        %2950 = vmatpush1.msra.mxu0 %v2636
        %2951 = vmatprep.subr.mxu0 0.0
        %2952 = vmatpush1.msra.mxu0 %v2637
        %2953 = vmatprep.subr.mxu0 0.0
        %2954 = vmatpush1.msra.mxu0 %v2638
        %2955 = vmatprep.subr.mxu0 0.0
        %2956 = vmatpush1.msra.mxu0 %v2639
        %2957 = vmatprep.subr.mxu0 0.0
        %2958 = vmatpush1.msra.mxu0 %v2640
        %2959 = vmatprep.subr.mxu0 0.0
        %2960 = vmatpush1.msra.mxu0 %v2641
        %2961 = vmatprep.subr.mxu0 0.0
        %2962 = vmatpush1.msra.mxu0 %v2642
        %2963 = vmatprep.subr.mxu0 0.0
        %2964 = vmatpush1.msra.mxu0 %v2643
        %2965 = vmatprep.subr.mxu0 0.0
        %2966 = vmatpush1.msra.mxu0 %v2644
        %2967 = vmatprep.subr.mxu0 0.0
        %2968 = vmatpush1.msra.mxu0 %v2645
        %2969 = vmatprep.subr.mxu0 0.0
        %2970 = vmatpush1.msra.mxu0 %v2646
        %2971 = vmatprep.subr.mxu0 0.0
        %2972 = vmatpush1.msra.mxu0 %v2647
        %2973 = vmatprep.subr.mxu0 0.0
        %2974 = vmatpush1.msra.mxu0 %v2648
        %2975 = vmatprep.subr.mxu0 0.0
        %2976 = vmatpush1.msra.mxu0 %v2649
        %2977 = vmatprep.subr.mxu0 0.0
        %2978 = vmatpush1.msra.mxu0 %v2650
        %2979 = vmatprep.subr.mxu0 0.0
        %2980 = vmatpush1.msra.mxu0 %v2651
        %2981 = vmatprep.subr.mxu0 0.0
        %2982 = vmatpush1.msra.mxu0 %v2652
        %2983 = vmatprep.subr.mxu0 0.0
        %2984 = vmatpush1.msra.mxu0 %v2653
        %2985 = vmatprep.subr.mxu0 0.0
        %2986 = vmatpush1.msra.mxu0 %v2654
        %2987 = vmatprep.subr.mxu0 0.0
        %2988 = vmatpush1.msra.mxu0 %v2655
        %2989 = vmatprep.subr.mxu0 0.0
        %2990 = vmatpush1.msra.mxu0 %v2656
        %2991 = vmatprep.subr.mxu0 0.0
        %2992 = vmatpush1.msra.mxu0 %v2657
        %2993 = vmatprep.subr.mxu0 0.0
        %2994 = vmatpush1.msra.mxu0 %v2658
        %2995 = vmatprep.subr.mxu0 0.0
        %2996 = vmatpush1.msra.mxu0 %v2659
        %2997 = vmatprep.subr.mxu0 0.0
        %2998 = vmatpush1.msra.mxu0 %v2660
        %2999 = vmatprep.mubr.f32.mxu0 %v2568
        %3000 = vmatmul.mubr.f32.gmra.mrb[0].mxu0 %v2567
        %v3001 = vpop.f32.mrb[0].mxu0
        %v3002 = vadd.f32 %v2927, %v3001
        %v3003 = vpop.f32.mrb[0].mxu0
        %3004 = vmatprep.mubr.f32.mxu0 %v2584
        %3005 = vmatmul.mubr.f32.gmra.mrb[0].mxu0 %v2583
        %v3006 = vpop.f32.mrb[0].mxu0
        %v3007 = vadd.f32 %v2932, %v3006
        %v3008 = vpop.f32.mrb[0].mxu0
        %3009 = vdwg.mxu0
        %3010 = vmatprep.subr.mxu0 0.0
        %3011 = vmatpush1.msra.mxu0 %v2661
        %3012 = vmatprep.subr.mxu0 0.0
        %3013 = vmatpush1.msra.mxu0 %v2662
        %3014 = vmatprep.subr.mxu0 0.0
        %3015 = vmatpush1.msra.mxu0 %v2663
        %3016 = vmatprep.subr.mxu0 0.0
        %3017 = vmatpush1.msra.mxu0 %v2664
        %3018 = vmatprep.subr.mxu0 0.0
        %3019 = vmatpush1.msra.mxu0 %v2665
        %3020 = vmatprep.subr.mxu0 0.0
        %3021 = vmatpush1.msra.mxu0 %v2666
        %3022 = vmatprep.subr.mxu0 0.0
        %3023 = vmatpush1.msra.mxu0 %v2667
        %3024 = vmatprep.subr.mxu0 0.0
        %3025 = vmatpush1.msra.mxu0 %v2668
        %3026 = vmatprep.subr.mxu0 0.0
        %3027 = vmatpush1.msra.mxu0 %v2669
        %3028 = vmatprep.subr.mxu0 0.0
        %3029 = vmatpush1.msra.mxu0 %v2670
        %3030 = vmatprep.subr.mxu0 0.0
        %3031 = vmatpush1.msra.mxu0 %v2671
        %3032 = vmatprep.subr.mxu0 0.0
        %3033 = vmatpush1.msra.mxu0 %v2672
        %3034 = vmatprep.subr.mxu0 0.0
        %3035 = vmatpush1.msra.mxu0 %v2673
        %3036 = vmatprep.subr.mxu0 0.0
        %3037 = vmatpush1.msra.mxu0 %v2674
        %3038 = vmatprep.subr.mxu0 0.0
        %3039 = vmatpush1.msra.mxu0 %v2675
        %3040 = vmatprep.subr.mxu0 0.0
        %3041 = vmatpush1.msra.mxu0 %v2676
        %3042 = vmatprep.subr.mxu0 0.0
        %3043 = vmatpush1.msra.mxu0 %v2677
        %3044 = vmatprep.subr.mxu0 0.0
        %3045 = vmatpush1.msra.mxu0 %v2678
        %3046 = vmatprep.subr.mxu0 0.0
        %3047 = vmatpush1.msra.mxu0 %v2679
        %3048 = vmatprep.subr.mxu0 0.0
        %3049 = vmatpush1.msra.mxu0 %v2680
        %3050 = vmatprep.subr.mxu0 0.0
        %3051 = vmatpush1.msra.mxu0 %v2681
        %3052 = vmatprep.subr.mxu0 0.0
        %3053 = vmatpush1.msra.mxu0 %v2682
        %3054 = vmatprep.subr.mxu0 0.0
        %3055 = vmatpush1.msra.mxu0 %v2683
        %3056 = vmatprep.subr.mxu0 0.0
        %3057 = vmatpush1.msra.mxu0 %v2684
        %3058 = vmatprep.subr.mxu0 0.0
        %3059 = vmatpush1.msra.mxu0 %v2685
        %3060 = vmatprep.subr.mxu0 0.0
        %3061 = vmatpush1.msra.mxu0 %v2686
        %3062 = vmatprep.subr.mxu0 0.0
        %3063 = vmatpush1.msra.mxu0 %v2687
        %3064 = vmatprep.subr.mxu0 0.0
        %3065 = vmatpush1.msra.mxu0 %v2688
        %3066 = vmatprep.subr.mxu0 0.0
        %3067 = vmatpush1.msra.mxu0 %v2689
        %3068 = vmatprep.subr.mxu0 0.0
        %3069 = vmatpush1.msra.mxu0 %v2690
        %3070 = vmatprep.subr.mxu0 0.0
        %3071 = vmatpush1.msra.mxu0 %v2691
        %3072 = vmatprep.subr.mxu0 0.0
        %3073 = vmatpush1.msra.mxu0 %v2692
        %3074 = vmatprep.mubr.f32.mxu0 %v2570
        %3075 = vmatmul.mubr.f32.gmra.mrb[0].mxu0 %v2569
        %v3076 = vpop.f32.mrb[0].mxu0
        %v3077 = vadd.f32 %v3002, %v3076
        %v3078 = vpop.f32.mrb[0].mxu0
        %3079 = vmatprep.mubr.f32.mxu0 %v2586
        %3080 = vmatmul.mubr.f32.gmra.mrb[0].mxu0 %v2585
        %v3081 = vpop.f32.mrb[0].mxu0
        %v3082 = vadd.f32 %v3007, %v3081
        %v3083 = vpop.f32.mrb[0].mxu0
        %3084 = vdwg.mxu0
        %3085 = vmatprep.subr.mxu0 0.0
        %3086 = vmatpush1.msra.mxu0 %v2693
        %3087 = vmatprep.subr.mxu0 0.0
        %3088 = vmatpush1.msra.mxu0 %v2694
        %3089 = vmatprep.subr.mxu0 0.0
        %3090 = vmatpush1.msra.mxu0 %v2695
        %3091 = vmatprep.subr.mxu0 0.0
        %3092 = vmatpush1.msra.mxu0 %v2696
        %3093 = vmatprep.subr.mxu0 0.0
        %3094 = vmatpush1.msra.mxu0 %v2697
        %3095 = vmatprep.subr.mxu0 0.0
        %3096 = vmatpush1.msra.mxu0 %v2698
        %3097 = vmatprep.subr.mxu0 0.0
        %3098 = vmatpush1.msra.mxu0 %v2699
        %3099 = vmatprep.subr.mxu0 0.0
        %3100 = vmatpush1.msra.mxu0 %v2700
        %3101 = vmatprep.subr.mxu0 0.0
        %3102 = vmatpush1.msra.mxu0 %v2701
        %3103 = vmatprep.subr.mxu0 0.0
        %3104 = vmatpush1.msra.mxu0 %v2702
        %3105 = vmatprep.subr.mxu0 0.0
        %3106 = vmatpush1.msra.mxu0 %v2703
        %3107 = vmatprep.subr.mxu0 0.0
        %3108 = vmatpush1.msra.mxu0 %v2704
        %3109 = vmatprep.subr.mxu0 0.0
        %3110 = vmatpush1.msra.mxu0 %v2705
        %3111 = vmatprep.subr.mxu0 0.0
        %3112 = vmatpush1.msra.mxu0 %v2706
        %3113 = vmatprep.subr.mxu0 0.0
        %3114 = vmatpush1.msra.mxu0 %v2707
        %3115 = vmatprep.subr.mxu0 0.0
        %3116 = vmatpush1.msra.mxu0 %v2708
        %3117 = vmatprep.subr.mxu0 0.0
        %3118 = vmatpush1.msra.mxu0 %v2709
        %3119 = vmatprep.subr.mxu0 0.0
        %3120 = vmatpush1.msra.mxu0 %v2710
        %3121 = vmatprep.subr.mxu0 0.0
        %3122 = vmatpush1.msra.mxu0 %v2711
        %3123 = vmatprep.subr.mxu0 0.0
        %3124 = vmatpush1.msra.mxu0 %v2712
        %3125 = vmatprep.subr.mxu0 0.0
        %3126 = vmatpush1.msra.mxu0 %v2713
        %3127 = vmatprep.subr.mxu0 0.0
        %3128 = vmatpush1.msra.mxu0 %v2714
        %3129 = vmatprep.subr.mxu0 0.0
        %3130 = vmatpush1.msra.mxu0 %v2715
        %3131 = vmatprep.subr.mxu0 0.0
        %3132 = vmatpush1.msra.mxu0 %v2716
        %3133 = vmatprep.subr.mxu0 0.0
        %3134 = vmatpush1.msra.mxu0 %v2717
        %3135 = vmatprep.subr.mxu0 0.0
        %3136 = vmatpush1.msra.mxu0 %v2718
        %3137 = vmatprep.subr.mxu0 0.0
        %3138 = vmatpush1.msra.mxu0 %v2719
        %3139 = vmatprep.subr.mxu0 0.0
        %3140 = vmatpush1.msra.mxu0 %v2720
        %3141 = vmatprep.subr.mxu0 0.0
        %3142 = vmatpush1.msra.mxu0 %v2721
        %3143 = vmatprep.subr.mxu0 0.0
        %3144 = vmatpush1.msra.mxu0 %v2722
        %3145 = vmatprep.subr.mxu0 0.0
        %3146 = vmatpush1.msra.mxu0 %v2723
        %3147 = vmatprep.subr.mxu0 0.0
        %3148 = vmatpush1.msra.mxu0 %v2724
        %3149 = vmatprep.mubr.f32.mxu0 %v2572
        %3150 = vmatmul.mubr.f32.gmra.mrb[0].mxu0 %v2571
        %v3151 = vpop.f32.mrb[0].mxu0
        %v3152 = vadd.f32 %v3077, %v3151
        %v3153 = vpop.f32.mrb[0].mxu0
        %3154 = vmatprep.mubr.f32.mxu0 %v2588
        %3155 = vmatmul.mubr.f32.gmra.mrb[0].mxu0 %v2587
        %v3156 = vpop.f32.mrb[0].mxu0
        %v3157 = vadd.f32 %v3082, %v3156
        %v3158 = vpop.f32.mrb[0].mxu0
        %3159 = vdwg.mxu0
        %3160 = vmatprep.subr.mxu0 0.0
        %3161 = vmatpush1.msra.mxu0 %v2725
        %3162 = vmatprep.subr.mxu0 0.0
        %3163 = vmatpush1.msra.mxu0 %v2726
        %3164 = vmatprep.subr.mxu0 0.0
        %3165 = vmatpush1.msra.mxu0 %v2727
        %3166 = vmatprep.subr.mxu0 0.0
        %3167 = vmatpush1.msra.mxu0 %v2728
        %3168 = vmatprep.subr.mxu0 0.0
        %3169 = vmatpush1.msra.mxu0 %v2729
        %3170 = vmatprep.subr.mxu0 0.0
        %3171 = vmatpush1.msra.mxu0 %v2730
        %3172 = vmatprep.subr.mxu0 0.0
        %3173 = vmatpush1.msra.mxu0 %v2731
        %3174 = vmatprep.subr.mxu0 0.0
        %3175 = vmatpush1.msra.mxu0 %v2732
        %3176 = vmatprep.subr.mxu0 0.0
        %3177 = vmatpush1.msra.mxu0 %v2733
        %3178 = vmatprep.subr.mxu0 0.0
        %3179 = vmatpush1.msra.mxu0 %v2734
        %3180 = vmatprep.subr.mxu0 0.0
        %3181 = vmatpush1.msra.mxu0 %v2735
        %3182 = vmatprep.subr.mxu0 0.0
        %3183 = vmatpush1.msra.mxu0 %v2736
        %3184 = vmatprep.subr.mxu0 0.0
        %3185 = vmatpush1.msra.mxu0 %v2737
        %3186 = vmatprep.subr.mxu0 0.0
        %3187 = vmatpush1.msra.mxu0 %v2738
        %3188 = vmatprep.subr.mxu0 0.0
        %3189 = vmatpush1.msra.mxu0 %v2739
        %3190 = vmatprep.subr.mxu0 0.0
        %3191 = vmatpush1.msra.mxu0 %v2740
        %3192 = vmatprep.subr.mxu0 0.0
        %3193 = vmatpush1.msra.mxu0 %v2741
        %3194 = vmatprep.subr.mxu0 0.0
        %3195 = vmatpush1.msra.mxu0 %v2742
        %3196 = vmatprep.subr.mxu0 0.0
        %3197 = vmatpush1.msra.mxu0 %v2743
        %3198 = vmatprep.subr.mxu0 0.0
        %3199 = vmatpush1.msra.mxu0 %v2744
        %3200 = vmatprep.subr.mxu0 0.0
        %3201 = vmatpush1.msra.mxu0 %v2745
        %3202 = vmatprep.subr.mxu0 0.0
        %3203 = vmatpush1.msra.mxu0 %v2746
        %3204 = vmatprep.subr.mxu0 0.0
        %3205 = vmatpush1.msra.mxu0 %v2747
        %3206 = vmatprep.subr.mxu0 0.0
        %3207 = vmatpush1.msra.mxu0 %v2748
        %3208 = vmatprep.subr.mxu0 0.0
        %3209 = vmatpush1.msra.mxu0 %v2749
        %3210 = vmatprep.subr.mxu0 0.0
        %3211 = vmatpush1.msra.mxu0 %v2750
        %3212 = vmatprep.subr.mxu0 0.0
        %3213 = vmatpush1.msra.mxu0 %v2751
        %3214 = vmatprep.subr.mxu0 0.0
        %3215 = vmatpush1.msra.mxu0 %v2752
        %3216 = vmatprep.subr.mxu0 0.0
        %3217 = vmatpush1.msra.mxu0 %v2753
        %3218 = vmatprep.subr.mxu0 0.0
        %3219 = vmatpush1.msra.mxu0 %v2754
        %3220 = vmatprep.subr.mxu0 0.0
        %3221 = vmatpush1.msra.mxu0 %v2755
        %3222 = vmatprep.subr.mxu0 0.0
        %3223 = vmatpush1.msra.mxu0 %v2756
        %3224 = vmatprep.mubr.f32.mxu0 %v2574
        %3225 = vmatmul.mubr.f32.gmra.mrb[0].mxu0 %v2573
        %v3226 = vpop.f32.mrb[0].mxu0
        %v3227 = vadd.f32 %v3152, %v3226
        %v3228 = vpop.f32.mrb[0].mxu0
        %3229 = vmatprep.mubr.f32.mxu0 %v2590
        %3230 = vmatmul.mubr.f32.gmra.mrb[0].mxu0 %v2589
        %v3231 = vpop.f32.mrb[0].mxu0
        %v3232 = vadd.f32 %v3157, %v3231
        %v3233 = vpop.f32.mrb[0].mxu0
        %3234 = vdwg.mxu0
        %3235 = vmatprep.subr.mxu0 0.0
        %3236 = vmatpush1.msra.mxu0 %v2757
        %3237 = vmatprep.subr.mxu0 0.0
        %3238 = vmatpush1.msra.mxu0 %v2758
        %3239 = vmatprep.subr.mxu0 0.0
        %3240 = vmatpush1.msra.mxu0 %v2759
        %3241 = vmatprep.subr.mxu0 0.0
        %3242 = vmatpush1.msra.mxu0 %v2760
        %3243 = vmatprep.subr.mxu0 0.0
        %3244 = vmatpush1.msra.mxu0 %v2761
        %3245 = vmatprep.subr.mxu0 0.0
        %3246 = vmatpush1.msra.mxu0 %v2762
        %3247 = vmatprep.subr.mxu0 0.0
        %3248 = vmatpush1.msra.mxu0 %v2763
        %3249 = vmatprep.subr.mxu0 0.0
        %3250 = vmatpush1.msra.mxu0 %v2764
        %3251 = vmatprep.subr.mxu0 0.0
        %3252 = vmatpush1.msra.mxu0 %v2765
        %3253 = vmatprep.subr.mxu0 0.0
        %3254 = vmatpush1.msra.mxu0 %v2766
        %3255 = vmatprep.subr.mxu0 0.0
        %3256 = vmatpush1.msra.mxu0 %v2767
        %3257 = vmatprep.subr.mxu0 0.0
        %3258 = vmatpush1.msra.mxu0 %v2768
        %3259 = vmatprep.subr.mxu0 0.0
        %3260 = vmatpush1.msra.mxu0 %v2769
        %3261 = vmatprep.subr.mxu0 0.0
        %3262 = vmatpush1.msra.mxu0 %v2770
        %3263 = vmatprep.subr.mxu0 0.0
        %3264 = vmatpush1.msra.mxu0 %v2771
        %3265 = vmatprep.subr.mxu0 0.0
        %3266 = vmatpush1.msra.mxu0 %v2772
        %3267 = vmatprep.subr.mxu0 0.0
        %3268 = vmatpush1.msra.mxu0 %v2773
        %3269 = vmatprep.subr.mxu0 0.0
        %3270 = vmatpush1.msra.mxu0 %v2774
        %3271 = vmatprep.subr.mxu0 0.0
        %3272 = vmatpush1.msra.mxu0 %v2775
        %3273 = vmatprep.subr.mxu0 0.0
        %3274 = vmatpush1.msra.mxu0 %v2776
        %3275 = vmatprep.subr.mxu0 0.0
        %3276 = vmatpush1.msra.mxu0 %v2777
        %3277 = vmatprep.subr.mxu0 0.0
        %3278 = vmatpush1.msra.mxu0 %v2778
        %3279 = vmatprep.subr.mxu0 0.0
        %3280 = vmatpush1.msra.mxu0 %v2779
        %3281 = vmatprep.subr.mxu0 0.0
        %3282 = vmatpush1.msra.mxu0 %v2780
        %3283 = vmatprep.subr.mxu0 0.0
        %3284 = vmatpush1.msra.mxu0 %v2781
        %3285 = vmatprep.subr.mxu0 0.0
        %3286 = vmatpush1.msra.mxu0 %v2782
        %3287 = vmatprep.subr.mxu0 0.0
        %3288 = vmatpush1.msra.mxu0 %v2783
        %3289 = vmatprep.subr.mxu0 0.0
        %3290 = vmatpush1.msra.mxu0 %v2784
        %3291 = vmatprep.subr.mxu0 0.0
        %3292 = vmatpush1.msra.mxu0 %v2785
        %3293 = vmatprep.subr.mxu0 0.0
        %3294 = vmatpush1.msra.mxu0 %v2786
        %3295 = vmatprep.subr.mxu0 0.0
        %3296 = vmatpush1.msra.mxu0 %v2787
        %3297 = vmatprep.subr.mxu0 0.0
        %3298 = vmatpush1.msra.mxu0 %v2788
        %3299 = vmatprep.mubr.f32.mxu0 %v2576
        %3300 = vmatmul.mubr.f32.gmra.mrb[0].mxu0 %v2575
        %v3301 = vpop.f32.mrb[0].mxu0
        %v3302 = vadd.f32 %v3227, %v3301
        %v3303 = vpop.f32.mrb[0].mxu0
        %3304 = vmatprep.mubr.f32.mxu0 %v2592
        %3305 = vmatmul.mubr.f32.gmra.mrb[0].mxu0 %v2591
        %v3306 = vpop.f32.mrb[0].mxu0
        %v3307 = vadd.f32 %v3232, %v3306
        %v3308 = vpop.f32.mrb[0].mxu0
        %3309 = vdwg.mxu0
        %3310 = vmatprep.subr.mxu0 0.0
        %3311 = vmatpush1.msra.mxu0 %v2789
        %3312 = vmatprep.subr.mxu0 0.0
        %3313 = vmatpush1.msra.mxu0 %v2790
        %3314 = vmatprep.subr.mxu0 0.0
        %3315 = vmatpush1.msra.mxu0 %v2791
        %3316 = vmatprep.subr.mxu0 0.0
        %3317 = vmatpush1.msra.mxu0 %v2792
        %3318 = vmatprep.subr.mxu0 0.0
        %3319 = vmatpush1.msra.mxu0 %v2793
        %3320 = vmatprep.subr.mxu0 0.0
        %3321 = vmatpush1.msra.mxu0 %v2794
        %3322 = vmatprep.subr.mxu0 0.0
        %3323 = vmatpush1.msra.mxu0 %v2795
        %3324 = vmatprep.subr.mxu0 0.0
        %3325 = vmatpush1.msra.mxu0 %v2796
        %3326 = vmatprep.subr.mxu0 0.0
        %3327 = vmatpush1.msra.mxu0 %v2797
        %3328 = vmatprep.subr.mxu0 0.0
        %3329 = vmatpush1.msra.mxu0 %v2798
        %3330 = vmatprep.subr.mxu0 0.0
        %3331 = vmatpush1.msra.mxu0 %v2799
        %3332 = vmatprep.subr.mxu0 0.0
        %3333 = vmatpush1.msra.mxu0 %v2800
        %3334 = vmatprep.subr.mxu0 0.0
        %3335 = vmatpush1.msra.mxu0 %v2801
        %3336 = vmatprep.subr.mxu0 0.0
        %3337 = vmatpush1.msra.mxu0 %v2802
        %3338 = vmatprep.subr.mxu0 0.0
        %3339 = vmatpush1.msra.mxu0 %v2803
        %3340 = vmatprep.subr.mxu0 0.0
        %3341 = vmatpush1.msra.mxu0 %v2804
        %3342 = vmatprep.subr.mxu0 0.0
        %3343 = vmatpush1.msra.mxu0 %v2805
        %3344 = vmatprep.subr.mxu0 0.0
        %3345 = vmatpush1.msra.mxu0 %v2806
        %3346 = vmatprep.subr.mxu0 0.0
        %3347 = vmatpush1.msra.mxu0 %v2807
        %3348 = vmatprep.subr.mxu0 0.0
        %3349 = vmatpush1.msra.mxu0 %v2808
        %3350 = vmatprep.subr.mxu0 0.0
        %3351 = vmatpush1.msra.mxu0 %v2809
        %3352 = vmatprep.subr.mxu0 0.0
        %3353 = vmatpush1.msra.mxu0 %v2810
        %3354 = vmatprep.subr.mxu0 0.0
        %3355 = vmatpush1.msra.mxu0 %v2811
        %3356 = vmatprep.subr.mxu0 0.0
        %3357 = vmatpush1.msra.mxu0 %v2812
        %3358 = vmatprep.subr.mxu0 0.0
        %3359 = vmatpush1.msra.mxu0 %v2813
        %3360 = vmatprep.subr.mxu0 0.0
        %3361 = vmatpush1.msra.mxu0 %v2814
        %3362 = vmatprep.subr.mxu0 0.0
        %3363 = vmatpush1.msra.mxu0 %v2815
        %3364 = vmatprep.subr.mxu0 0.0
        %3365 = vmatpush1.msra.mxu0 %v2816
        %3366 = vmatprep.subr.mxu0 0.0
        %3367 = vmatpush1.msra.mxu0 %v2817
        %3368 = vmatprep.subr.mxu0 0.0
        %3369 = vmatpush1.msra.mxu0 %v2818
        %3370 = vmatprep.subr.mxu0 0.0
        %3371 = vmatpush1.msra.mxu0 %v2819
        %3372 = vmatprep.subr.mxu0 0.0
        %3373 = vmatpush1.msra.mxu0 %v2820
        %3374 = vmatprep.mubr.f32.mxu0 %v2578
        %3375 = vmatmul.mubr.f32.gmra.mrb[0].mxu0 %v2577
        %v3376 = vpop.f32.mrb[0].mxu0
        %v3377 = vadd.f32 %v3302, %v3376
        %v3378 = vpop.f32.mrb[0].mxu0
        %3379 = vmatprep.mubr.f32.mxu0 %v2594
        %3380 = vmatmul.mubr.f32.gmra.mrb[0].mxu0 %v2593
        %v3381 = vpop.f32.mrb[0].mxu0
        %v3382 = vadd.f32 %v3307, %v3381
        %v3383 = vpop.f32.mrb[0].mxu0
        %3384 = vdwg.mxu0
        %3385 = vmatprep.subr.mxu0 0.0
        %3386 = vmatpush1.msra.mxu0 %v2821
        %3387 = vmatprep.subr.mxu0 0.0
        %3388 = vmatpush1.msra.mxu0 %v2822
        %3389 = vmatprep.subr.mxu0 0.0
        %3390 = vmatpush1.msra.mxu0 %v2823
        %3391 = vmatprep.subr.mxu0 0.0
        %3392 = vmatpush1.msra.mxu0 %v2824
        %3393 = vmatprep.subr.mxu0 0.0
        %3394 = vmatpush1.msra.mxu0 %v2825
        %3395 = vmatprep.subr.mxu0 0.0
        %3396 = vmatpush1.msra.mxu0 %v2826
        %3397 = vmatprep.subr.mxu0 0.0
        %3398 = vmatpush1.msra.mxu0 %v2827
        %3399 = vmatprep.subr.mxu0 0.0
        %3400 = vmatpush1.msra.mxu0 %v2828
        %3401 = vmatprep.subr.mxu0 0.0
        %3402 = vmatpush1.msra.mxu0 %v2829
        %3403 = vmatprep.subr.mxu0 0.0
        %3404 = vmatpush1.msra.mxu0 %v2830
        %3405 = vmatprep.subr.mxu0 0.0
        %3406 = vmatpush1.msra.mxu0 %v2831
        %3407 = vmatprep.subr.mxu0 0.0
        %3408 = vmatpush1.msra.mxu0 %v2832
        %3409 = vmatprep.subr.mxu0 0.0
        %3410 = vmatpush1.msra.mxu0 %v2833
        %3411 = vmatprep.subr.mxu0 0.0
        %3412 = vmatpush1.msra.mxu0 %v2834
        %3413 = vmatprep.subr.mxu0 0.0
        %3414 = vmatpush1.msra.mxu0 %v2835
        %3415 = vmatprep.subr.mxu0 0.0
        %3416 = vmatpush1.msra.mxu0 %v2836
        %3417 = vmatprep.subr.mxu0 0.0
        %3418 = vmatpush1.msra.mxu0 %v2837
        %3419 = vmatprep.subr.mxu0 0.0
        %3420 = vmatpush1.msra.mxu0 %v2838
        %3421 = vmatprep.subr.mxu0 0.0
        %3422 = vmatpush1.msra.mxu0 %v2839
        %3423 = vmatprep.subr.mxu0 0.0
        %3424 = vmatpush1.msra.mxu0 %v2840
        %3425 = vmatprep.subr.mxu0 0.0
        %3426 = vmatpush1.msra.mxu0 %v2841
        %3427 = vmatprep.subr.mxu0 0.0
        %3428 = vmatpush1.msra.mxu0 %v2842
        %3429 = vmatprep.subr.mxu0 0.0
        %3430 = vmatpush1.msra.mxu0 %v2843
        %3431 = vmatprep.subr.mxu0 0.0
        %3432 = vmatpush1.msra.mxu0 %v2844
        %3433 = vmatprep.subr.mxu0 0.0
        %3434 = vmatpush1.msra.mxu0 %v2845
        %3435 = vmatprep.subr.mxu0 0.0
        %3436 = vmatpush1.msra.mxu0 %v2846
        %3437 = vmatprep.subr.mxu0 0.0
        %3438 = vmatpush1.msra.mxu0 %v2847
        %3439 = vmatprep.subr.mxu0 0.0
        %3440 = vmatpush1.msra.mxu0 %v2848
        %3441 = vmatprep.subr.mxu0 0.0
        %3442 = vmatpush1.msra.mxu0 %v2849
        %3443 = vmatprep.subr.mxu0 0.0
        %3444 = vmatpush1.msra.mxu0 %v2850
        %3445 = vmatprep.subr.mxu0 0.0
        %3446 = vmatpush1.msra.mxu0 %v2851
        %3447 = vmatprep.subr.mxu0 0.0
        %3448 = vmatpush1.msra.mxu0 %v2852
        %3449 = vmatprep.mubr.f32.mxu0 %v2580
        %3450 = vmatmul.mubr.f32.gmra.mrb[0].mxu0 %v2579
        %v3451 = vpop.f32.mrb[0].mxu0
        %v3452 = vadd.f32 %v3377, %v3451
        %v3453 = vpop.f32.mrb[0].mxu0
        %3454 = vmatprep.mubr.f32.mxu0 %v2596
        %3455 = vmatmul.mubr.f32.gmra.mrb[0].mxu0 %v2595
        %v3456 = vpop.f32.mrb[0].mxu0
        %v3457 = vadd.f32 %v3382, %v3456
        %v3458 = vpop.f32.mrb[0].mxu0
        %3459 = vdwg.mxu0
        %v3460 = vadd.f32 %v1793, %v3452
        %v3461 = vadd.f32 %v1794, %v3457
        %v3462 = vld [vmem:[%s16] sm:$0x1]
        %v3463 = vld [vmem:[%s17] sm:$0x1]
        %v3464 = vsel %vm665, %v3460, 0.0
        %3465 = vadd.xlane.f32.xlu0 %v3464
        %v3466 = vpop.xlane.xlu0 %3465
        %v3467 = vsel %vm665, %v3461, 0.0
        %3468 = vadd.xlane.f32.xlu0 %v3467
        %v3469 = vpop.xlane.xlu0 %3468
        %v3470 = vmul.f32 %v3466, %v1705
        %v3471 = vmul.f32 %v3469, %v1705
        %v3472 = vsub.f32 %v3460, %v3470
        %v3473 = vsub.f32 %v3461, %v3471
        %v3474 = vmul.f32 %v3472, %v3472
        %v3475 = vmul.f32 %v3473, %v3473
        %v3476 = vsel %vm665, %v3474, 0.0
        %3477 = vadd.xlane.f32.xlu0 %v3476
        %v3478 = vpop.xlane.xlu0 %3477
        %v3479 = vsel %vm665, %v3475, 0.0
        %3480 = vadd.xlane.f32.xlu0 %v3479
        %v3481 = vpop.xlane.xlu0 %3480
        %v3482 = vmul.f32 %v3478, %v1705
        %v3483 = vmul.f32 %v3481, %v1705
        %v3484 = vadd.f32 %v3482, 1e-05
        %v3485 = vadd.f32 %v3483, 1e-05
        %v3486 = vrsqrt.pop %v3484
        %v3487 = vrsqrt.pop %v3485
        %v3488 = vmul.f32 %v3472, %v3486
        %v3489 = vmul.f32 %v3473, %v3487
        %v3491 = vlaneseq
        %v3492 = vshrl.u32 %v3491, 7
        %v3493 = vsub.s32 0, %v3492
        %v3494 = vrot.slane %v3462, %v3493
        %v3496 = vmul.f32 %v3488, %v3494
        %v3497 = vmul.f32 %v3489, %v3494
        %v3499 = vlaneseq
        %v3500 = vshrl.u32 %v3499, 7
        %v3501 = vsub.s32 0, %v3500
        %v3502 = vrot.slane %v3463, %v3501
        %v3504 = vadd.f32 %v3496, %v3502
        %v3505 = vadd.f32 %v3497, %v3502
        %v3506 = vld [vmem:[%s18] sm:$0x1]
        %v3507 = vld [vmem:[#allocation2] sm:$0x1]
        %3509 = vset.pattern.permute.xlu0 0
        %3510 = vperm.xlu0 %3509, %v3507
        %v3511 = vpop.permute.xlu0 %3510
        %v3513 = vlaneseq
        %v3514 = vshrl.u32 %v3513, 7
        %v3515 = vsub.s32 0, %v3514
        %v3516 = vrot.slane %v3511, %v3515
        %v3518 = vsel %vm665, %v3506, 0
        %v3521 = vsel %vm665, %v3504, 0
        %v3524 = vsel %vm665, %v3505, 0
        %3526 = vmatprep.subr.mxu0 0.0
        %3527 = vmatpush1.xpose.msra.mxu0 %v3521
        %3528 = vmatprep.subr.mxu0 0.0
        %3529 = vmatpush1.xpose.msra.mxu0 %v3524
        %3530 = vmatprep.subr.mxu0 0.0
        %3531 = vmatpush1.xpose.msra.mxu0 0.0
        %3532 = vmatprep.subr.mxu0 0.0
        %3533 = vmatpush1.xpose.msra.mxu0 0.0
        %3534 = vmatprep.subr.mxu0 0.0
        %3535 = vmatpush1.xpose.msra.mxu0 0.0
        %3536 = vmatprep.subr.mxu0 0.0
        %3537 = vmatpush1.xpose.msra.mxu0 0.0
        %3538 = vmatprep.subr.mxu0 0.0
        %3539 = vmatpush1.xpose.msra.mxu0 0.0
        %3540 = vmatprep.subr.mxu0 0.0
        %3541 = vmatpush1.xpose.msra.mxu0 0.0
        %3542 = vmatprep.subr.mxu0 0.0
        %3543 = vmatpush1.xpose.msra.mxu0 0.0
        %3544 = vmatprep.subr.mxu0 0.0
        %3545 = vmatpush1.xpose.msra.mxu0 0.0
        %3546 = vmatprep.subr.mxu0 0.0
        %3547 = vmatpush1.xpose.msra.mxu0 0.0
        %3548 = vmatprep.subr.mxu0 0.0
        %3549 = vmatpush1.xpose.msra.mxu0 0.0
        %3550 = vmatprep.subr.mxu0 0.0
        %3551 = vmatpush1.xpose.msra.mxu0 0.0
        %3552 = vmatprep.subr.mxu0 0.0
        %3553 = vmatpush1.xpose.msra.mxu0 0.0
        %3554 = vmatprep.subr.mxu0 0.0
        %3555 = vmatpush1.xpose.msra.mxu0 0.0
        %3556 = vmatprep.subr.mxu0 0.0
        %3557 = vmatpush1.xpose.msra.mxu0 0.0
        %3558 = vmatprep.subr.mxu0 0.0
        %3559 = vmatpush1.xpose.msra.mxu0 0.0
        %3560 = vmatprep.subr.mxu0 0.0
        %3561 = vmatpush1.xpose.msra.mxu0 0.0
        %3562 = vmatprep.subr.mxu0 0.0
        %3563 = vmatpush1.xpose.msra.mxu0 0.0
        %3564 = vmatprep.subr.mxu0 0.0
        %3565 = vmatpush1.xpose.msra.mxu0 0.0
        %3566 = vmatprep.subr.mxu0 0.0
        %3567 = vmatpush1.xpose.msra.mxu0 0.0
        %3568 = vmatprep.subr.mxu0 0.0
        %3569 = vmatpush1.xpose.msra.mxu0 0.0
        %3570 = vmatprep.subr.mxu0 0.0
        %3571 = vmatpush1.xpose.msra.mxu0 0.0
        %3572 = vmatprep.subr.mxu0 0.0
        %3573 = vmatpush1.xpose.msra.mxu0 0.0
        %3574 = vmatprep.subr.mxu0 0.0
        %3575 = vmatpush1.xpose.msra.mxu0 0.0
        %3576 = vmatprep.subr.mxu0 0.0
        %3577 = vmatpush1.xpose.msra.mxu0 0.0
        %3578 = vmatprep.subr.mxu0 0.0
        %3579 = vmatpush1.xpose.msra.mxu0 0.0
        %3580 = vmatprep.subr.mxu0 0.0
        %3581 = vmatpush1.xpose.msra.mxu0 0.0
        %3582 = vmatprep.subr.mxu0 0.0
        %3583 = vmatpush1.xpose.msra.mxu0 0.0
        %3584 = vmatprep.subr.mxu0 0.0
        %3585 = vmatpush1.xpose.msra.mxu0 0.0
        %3586 = vmatprep.subr.mxu0 0.0
        %3587 = vmatpush1.xpose.msra.mxu0 0.0
        %3588 = vmatprep.subr.mxu0 0.0
        %3589 = vmatpush1.xpose.msra.mxu0 0.0
        %3590 = vmatprep.mubr.f32.mxu0 0.0
        %3591 = vmatmul.mubr.f32.gmra.mrb[0].mxu0 %v3518
        %v3592 = vpop.f32.mrb[0].mxu0
        %v3593 = vadd.f32 %v3516, %v3592
        %v3594 = vpop.f32.mrb[0].mxu0
        %3595 = vdwg.mxu0
        %vm3596 = vcmask 122880
        %3597 = vst.msk [vmem:[%s623] sm:$0x1] %vm3596, %v3593
        %s3598 = sand.u32 %s469, 1
        %s3599 = scalar_lea.sflag [#allocation4], %s3598
        %s3600 = sand.u32 %s469, 1
        %s3601 = scalar_lea.vmem [#allocation3], %s3600
        // Predicated region
        $region101: #{tpu_custom_call.1} parent=99 // pred_check
          %p3602 = pneg %p479
        $region102: #{tpu_custom_call.1} parent=99 // pred_check_branch
          %3604 = sbr.rel (%p3602) target = $region104
        $region103: #{tpu_custom_call.1} parent=99 // pred_region
          %s3606 = ssub.s32 16, 16
          %3607 = vsyncadd %s3599, %s3606
          %s3608 = smul.addr %s36, 16
          %s3609 = scalar_lea.hbm %s20, %s3608
          %s3611 = sshll.u32 %s3601, 4
          %s3612 = int_to_ptr.vmem [resolvable:$true] %s3611
          %3614 = dma.vmem_to_hbm [thread:$0]  %s3612, 16, %s3609, %s3599
        $region104: #{tpu_custom_call.1} parent=99 // pred_fallthru
          _
      $region100: #{tpu_custom_call.1} parent=5 // pred_fallthru
        _
      %p3615 = scmp.le.s32.totalorder 2, %s31
      // Predicated region
      $region105: #{tpu_custom_call.1} parent=5 // pred_check
        %p3616 = pneg %p3615
      $region106: #{tpu_custom_call.1} parent=5 // pred_check_branch
        %3618 = sbr.rel (%p3616) target = $region108
      $region107: #{tpu_custom_call.1} parent=5 // pred_region
        %s3619 = ssub.s32 %s31, 2
        // Predicated region
        $region109: #{tpu_custom_call.1} parent=107 // pred_check
          %p3620 = pneg %p485
        $region110: #{tpu_custom_call.1} parent=107 // pred_check_branch
          %3622 = sbr.rel (%p3620) target = $region112
        $region111: #{tpu_custom_call.1} parent=107 // pred_region
          %s3623 = sand.u32 %s470, 1
          %s3624 = scalar_lea.sflag [#allocation4], %s3623
          %s3625 = sand.u32 %s470, 1
          %s3626 = scalar_lea.vmem [#allocation3], %s3625
          %3627 = dma.done %s3624, 16
        $region112: #{tpu_custom_call.1} parent=107 // pred_fallthru
          _
      $region108: #{tpu_custom_call.1} parent=5 // pred_fallthru
        _
    $region6: #{tpu_custom_call.1} parent=1 // loop_footer
      %s35 = sadd.s32 1, %s31
    $region7: #{tpu_custom_call.1} parent=1 // loop_footer_branch
      %30 = sbr.rel target = $region3
    $region8: #{tpu_custom_call.1} parent=1 // loop_exit
      _
    %3628 = vsyncpa [#allocation4], 1
    %s3629 = scalar_lea.sflag [#allocation4], 1
    %3630 = vsyncpa %s3629, 1

</llo_original>
